<compile_context>
chip_gen: v7x
topology: tpu7x:2x2x1
jax: 0.10.0
libtpu: 0.0.40
codegen_flags: <defaults>
</compile_context>

<pallas_src>
import jax
import jax.numpy as jnp
from jax.experimental import pallas as pl
from jax.experimental.pallas import tpu as pltpu


def generator_param_count(latent, chans, out_ch, k=4):
    """Parameter count of the DCGAN-style Generator (ConvTranspose2d bias=False + BN)."""
    dims = [latent] + chans
    n = 0
    for i in range(len(chans)):
        n += dims[i] * dims[i + 1] * k * k   # ConvTranspose2d weight (no bias)
        n += 2 * dims[i + 1]                 # BatchNorm2d weight + bias
    n += dims[-1] * out_ch * k * k           # final ConvTranspose2d (no bias)
    return n


def hypernet_kernel(x_ref, w1_ref, b1_ref, w2_ref, b2_ref, w3_ref, b3_ref, o_ref):
    # Tiny hidden layers (B=8): recompute each grid step; this is ~2.5 MFLOP and
    # is completely hidden under the W3 tile DMA.  Keeping steps independent
    # lets the output axis run "parallel" across v7x's two TensorCores.
    h1 = jnp.dot(x_ref[...], w1_ref[...],
                 preferred_element_type=jnp.float32) + b1_ref[...]
    h1 = jnp.maximum(h1, 0.0)                 # ReLU
    h2 = jnp.dot(h1, w2_ref[...],
                 preferred_element_type=jnp.float32) + b2_ref[...]
    h2 = jnp.maximum(h2, 0.0)                 # ReLU
    # Final (large) Linear layer, tiled along the output-feature axis.
    # bf16 x bf16 -> f32 accumulation on the MXU; bias added in f32.
    o_ref[...] = (jnp.dot(h2.astype(jnp.bfloat16), w3_ref[...],
                          preferred_element_type=jnp.float32)
                  + b3_ref[...]).astype(o_ref.dtype)


def init_linear(key, d_in, d_out):
    """Deterministic nn.Linear-style init: U(-1/sqrt(fan_in), 1/sqrt(fan_in))."""
    kw, kb = jax.random.split(key)
    bound = 1.0 / jnp.sqrt(jnp.float32(d_in))
    w = jax.random.uniform(kw, (d_in, d_out), jnp.float32, -bound, bound)
    b = jax.random.uniform(kb, (1, d_out), jnp.float32, -bound, bound)
    return w, b


def prepare_params(params, tile_n):
    """Pad + cast the final layer ONCE (outside the per-call forward path).

    W3 is stored in bf16 (halves the dominant HBM stream); b3 stays f32 (tiny).
    """
    (w1, b1), (w2, b2), (w3, b3) = params
    out_dim = w3.shape[1]
    out_pad = pl.cdiv(out_dim, tile_n) * tile_n
    w3p = jnp.pad(w3, ((0, 0), (0, out_pad - out_dim))).astype(jnp.bfloat16)
    b3p = jnp.pad(b3, ((0, 0), (0, out_pad - out_dim)))
    return (w1, b1), (w2, b2), (w3p, b3p), out_dim


def hypernetwork_forward_padded(x, padded_params, *, tile_n=3840):
    """Returns the PADDED (B, out_pad) output slab; slice [:, :out_dim] downstream.

    Keeping the un-pad slice out of the forward path avoids an extra
    materialized copy after the kernel (matters on v7x where the kernel itself
    is only a few microseconds).
    """
    (w1, b1), (w2, b2), (w3p, b3p), out_dim = padded_params
    B, d_in = x.shape
    h1_dim = w1.shape[1]
    h2_dim = w2.shape[1]
    out_pad = w3p.shape[1]
    assert out_pad % tile_n == 0
    n_steps = out_pad // tile_n

    # Advisory cost estimate: dominated by the bf16 W3 stream + f32 output.
    flops = (n_steps * 2 * B * (d_in * h1_dim + h1_dim * h2_dim)
             + 2 * B * h2_dim * out_pad)
    bytes_accessed = (w3p.size * 2                       # bf16 W3 stream
                      + b3p.size * 4 + B * out_pad * 4   # b3 + output
                      + n_steps * 4 * (x.size + w1.size + b1.size
                                       + w2.size + b2.size))

    out = pl.pallas_call(
        hypernet_kernel,
        out_shape=jax.ShapeDtypeStruct((B, out_pad), jnp.float32),
        grid_spec=pltpu.PrefetchScalarGridSpec(
            num_scalar_prefetch=0,
            grid=(n_steps,),
            in_specs=[
                pl.BlockSpec((B, d_in),        lambda j: (0, 0)),  # x
                pl.BlockSpec((d_in, h1_dim),   lambda j: (0, 0)),  # W1
                pl.BlockSpec((1, h1_dim),      lambda j: (0, 0)),  # b1
                pl.BlockSpec((h1_dim, h2_dim), lambda j: (0, 0)),  # W2
                pl.BlockSpec((1, h2_dim),      lambda j: (0, 0)),  # b2
                pl.BlockSpec((h2_dim, tile_n), lambda j: (0, j)),  # W3 tile (bf16)
                pl.BlockSpec((1, tile_n),      lambda j: (0, j)),  # b3 tile
            ],
            out_specs=pl.BlockSpec((B, tile_n), lambda j: (0, j)),
        ),
        compiler_params=pltpu.CompilerParams(
            dimension_semantics=("parallel",)),   # independent output tiles
        cost_estimate=pl.CostEstimate(
            flops=flops, transcendentals=0, bytes_accessed=bytes_accessed),
    )(x, w1, b1, w2, b2, w3p, b3p)
    return out


def reference_forward_f32(x, params):
    (w1, b1), (w2, b2), (w3, b3) = params
    h1 = jnp.maximum(x @ w1 + b1, 0.0)
    h2 = jnp.maximum(h1 @ w2 + b2, 0.0)
    return h2 @ w3 + b3


def reference_forward_bf16_w3(x, params):
    """Same math as the kernel: f32 hidden layers, bf16 x bf16 -> f32 final layer."""
    (w1, b1), (w2, b2), (w3, b3) = params
    h1 = jnp.maximum(x @ w1 + b1, 0.0)
    h2 = jnp.maximum(h1 @ w2 + b2, 0.0)
    y = jnp.dot(h2.astype(jnp.bfloat16), w3.astype(jnp.bfloat16),
                preferred_element_type=jnp.float32)
    return y + b3


if __name__ == "__main__":
    input_dim = 100
    hidden_dims = [256, 512]
    # Small-scale Generator config (same architecture, reduced channels) keeps
    # the demo W3 small: output_dim = 15160 -> W3 is 512 x 15160 (~15.5 MB bf16).
    # TODO(synk): the full-size Generator gives output_dim = 3,806,080 (W3 ~7.8 GB
    # f32) -- same kernel/tiling applies, just more grid steps.
    output_dim = generator_param_count(latent=8, chans=[32, 16, 8, 4], out_ch=3)
    assert output_dim == 15160, output_dim

    key = jax.random.PRNGKey(0)
    k_x, k1, k2, k3 = jax.random.split(key, 4)

    params = [
        init_linear(k1, input_dim, hidden_dims[0]),
        init_linear(k2, hidden_dims[0], hidden_dims[1]),
        init_linear(k3, hidden_dims[1], output_dim),
    ]

    # TILE_N = 3840 (30*128): out_pad = 15360, 4 grid steps, ~1.3% pad waste.
    # bf16 W3 tile = 3.75 MiB (7.5 MiB double-buffered) -> fits v5e's 16 MiB
    # default scoped VMEM; 2 steps per TensorCore on v7x.
    TILE_N = 3840
    padded_params = jax.tree_util.tree_map(jax.block_until_ready,
                                           prepare_params(params, TILE_N))

    batch = 8
    x = jax.random.normal(k_x, (batch, input_dim), jnp.float32)

    fwd = jax.jit(lambda xx: hypernetwork_forward_padded(xx, padded_params,
                                                         tile_n=TILE_N))
    out_padded = jax.block_until_ready(fwd(x))
    assert out_padded.shape == (batch, (output_dim + TILE_N - 1) // TILE_N * TILE_N)

    out = out_padded[:, :output_dim]   # un-pad outside the hot path (test only)

    # Exact-path reference (bf16 W3, f32 accumulation) -- tight tolerance.
    ref_bf16 = reference_forward_bf16_w3(x, params)
    assert out.shape == (batch, output_dim), out.shape
    assert jnp.allclose(out, ref_bf16, atol=5e-3, rtol=5e-3), "mismatch vs bf16-W3 reference"

    # Sanity check vs the full-f32 PyTorch-equivalent forward (looser: bf16 W3).
    ref_f32 = reference_forward_f32(x, params)
    assert jnp.allclose(out, ref_f32, atol=3e-2, rtol=3e-2), "mismatch vs f32 reference"

    print("KERNEL_OK")
</pallas_src>

<mosaic_0001>
module attributes {stable_mosaic.version = 11 : i64} {
  func.func @hypernet_kernel(%arg0: i32, %arg1: memref<8x100xf32, #tpu.memory_space<vmem>>, %arg2: memref<100x256xf32, #tpu.memory_space<vmem>>, %arg3: memref<1x256xf32, #tpu.memory_space<vmem>>, %arg4: memref<256x512xf32, #tpu.memory_space<vmem>>, %arg5: memref<1x512xf32, #tpu.memory_space<vmem>>, %arg6: memref<512x3840xbf16, #tpu.memory_space<vmem>>, %arg7: memref<1x3840xf32, #tpu.memory_space<vmem>>, %arg8: memref<8x3840xf32, #tpu.memory_space<vmem>>) attributes {dimension_semantics = [#tpu.dimension_semantics<parallel>], iteration_bounds = array<i64: 4>, scalar_prefetch = 0 : i64, scratch_operands = 0 : i64, tpu.core_type = #tpu.core_type<tc>, window_params = [{pipeline_mode = #tpu.pipeline_mode<synchronous>, transform_indices = @transform_0, window_bounds = array<i64: 8, 100>}, {pipeline_mode = #tpu.pipeline_mode<synchronous>, transform_indices = @transform_1, window_bounds = array<i64: 100, 256>}, {pipeline_mode = #tpu.pipeline_mode<synchronous>, transform_indices = @transform_2, window_bounds = array<i64: 1, 256>}, {pipeline_mode = #tpu.pipeline_mode<synchronous>, transform_indices = @transform_3, window_bounds = array<i64: 256, 512>}, {pipeline_mode = #tpu.pipeline_mode<synchronous>, transform_indices = @transform_4, window_bounds = array<i64: 1, 512>}, {transform_indices = @transform_5, window_bounds = array<i64: 512, 3840>}, {transform_indices = @transform_6, window_bounds = array<i64: 1, 3840>}, {transform_indices = @transform_7, window_bounds = array<i64: 8, 3840>}]} {
    %c0 = arith.constant 0 : index
    %c0_0 = arith.constant 0 : index
    %0 = vector.load %arg1[%c0, %c0_0] : memref<8x100xf32, #tpu.memory_space<vmem>>, vector<8x100xf32>
    %c0_1 = arith.constant 0 : index
    %c0_2 = arith.constant 0 : index
    %1 = vector.load %arg2[%c0_1, %c0_2] : memref<100x256xf32, #tpu.memory_space<vmem>>, vector<100x256xf32>
    %cst = arith.constant dense<0.000000e+00> : vector<8x256xf32>
    %2 = tpu.matmul %0, %1, %cst {dimension_numbers = #tpu.dot_dimension_numbers<[1], [0], [0], [1], [0, 0, 1, 1], [], []>} : vector<8x100xf32>, vector<100x256xf32>, vector<8x256xf32> -> vector<8x256xf32>
    %c0_3 = arith.constant 0 : index
    %c0_4 = arith.constant 0 : index
    %3 = vector.load %arg3[%c0_3, %c0_4] : memref<1x256xf32, #tpu.memory_space<vmem>>, vector<1x256xf32>
    %4 = vector.broadcast %3 : vector<1x256xf32> to vector<8x256xf32>
    %5 = arith.addf %2, %4 : vector<8x256xf32>
    %cst_5 = arith.constant 0.000000e+00 : f32
    %6 = vector.broadcast %cst_5 : f32 to vector<8x256xf32>
    %7 = arith.maximumf %5, %6 : vector<8x256xf32>
    %c0_6 = arith.constant 0 : index
    %c0_7 = arith.constant 0 : index
    %8 = vector.load %arg4[%c0_6, %c0_7] : memref<256x512xf32, #tpu.memory_space<vmem>>, vector<256x512xf32>
    %cst_8 = arith.constant dense<0.000000e+00> : vector<8x512xf32>
    %9 = tpu.matmul %7, %8, %cst_8 {dimension_numbers = #tpu.dot_dimension_numbers<[1], [0], [0], [1], [0, 0, 1, 1], [], []>} : vector<8x256xf32>, vector<256x512xf32>, vector<8x512xf32> -> vector<8x512xf32>
    %c0_9 = arith.constant 0 : index
    %c0_10 = arith.constant 0 : index
    %10 = vector.load %arg5[%c0_9, %c0_10] : memref<1x512xf32, #tpu.memory_space<vmem>>, vector<1x512xf32>
    %11 = vector.broadcast %10 : vector<1x512xf32> to vector<8x512xf32>
    %12 = arith.addf %9, %11 : vector<8x512xf32>
    %cst_11 = arith.constant 0.000000e+00 : f32
    %13 = vector.broadcast %cst_11 : f32 to vector<8x512xf32>
    %14 = arith.maximumf %12, %13 : vector<8x512xf32>
    %15 = arith.truncf %14 : vector<8x512xf32> to vector<8x512xbf16>
    %c0_12 = arith.constant 0 : index
    %c0_13 = arith.constant 0 : index
    %16 = vector.load %arg6[%c0_12, %c0_13] : memref<512x3840xbf16, #tpu.memory_space<vmem>>, vector<512x3840xbf16>
    %cst_14 = arith.constant dense<0.000000e+00> : vector<8x3840xf32>
    %17 = tpu.matmul %15, %16, %cst_14 {dimension_numbers = #tpu.dot_dimension_numbers<[1], [0], [0], [1], [0, 0, 1, 1], [], []>} : vector<8x512xbf16>, vector<512x3840xbf16>, vector<8x3840xf32> -> vector<8x3840xf32>
    %c0_15 = arith.constant 0 : index
    %c0_16 = arith.constant 0 : index
    %18 = vector.load %arg7[%c0_15, %c0_16] : memref<1x3840xf32, #tpu.memory_space<vmem>>, vector<1x3840xf32>
    %19 = vector.broadcast %18 : vector<1x3840xf32> to vector<8x3840xf32>
    %20 = arith.addf %17, %19 : vector<8x3840xf32>
    %c0_17 = arith.constant 0 : index
    %c0_18 = arith.constant 0 : index
    %21 = vector.load %arg8[%c0_17, %c0_18] : memref<8x3840xf32, #tpu.memory_space<vmem>>, vector<8x3840xf32>
    tpu.vector_store %arg8[%c0_17, %c0_18], %20 {strides = array<i32>} : memref<8x3840xf32, #tpu.memory_space<vmem>>, vector<8x3840xf32>,
    return
  }
  func.func @transform_0(%arg0: i32) -> (i32, i32) {
    %c0_i32 = arith.constant 0 : i32
    %c0_i32_0 = arith.constant 0 : i32
    %c0_i32_1 = arith.constant 0 : i32
    return %c0_i32, %c0_i32_0 : i32, i32
  }
  func.func @transform_1(%arg0: i32) -> (i32, i32) {
    %c0_i32 = arith.constant 0 : i32
    %c0_i32_0 = arith.constant 0 : i32
    %c0_i32_1 = arith.constant 0 : i32
    return %c0_i32, %c0_i32_0 : i32, i32
  }
  func.func @transform_2(%arg0: i32) -> (i32, i32) {
    %c0_i32 = arith.constant 0 : i32
    %c0_i32_0 = arith.constant 0 : i32
    %c0_i32_1 = arith.constant 0 : i32
    return %c0_i32, %c0_i32_0 : i32, i32
  }
  func.func @transform_3(%arg0: i32) -> (i32, i32) {
    %c0_i32 = arith.constant 0 : i32
    %c0_i32_0 = arith.constant 0 : i32
    %c0_i32_1 = arith.constant 0 : i32
    return %c0_i32, %c0_i32_0 : i32, i32
  }
  func.func @transform_4(%arg0: i32) -> (i32, i32) {
    %c0_i32 = arith.constant 0 : i32
    %c0_i32_0 = arith.constant 0 : i32
    %c0_i32_1 = arith.constant 0 : i32
    return %c0_i32, %c0_i32_0 : i32, i32
  }
  func.func @transform_5(%arg0: i32) -> (i32, i32) {
    %c0_i32 = arith.constant 0 : i32
    %c0_i32_0 = arith.constant 0 : i32
    return %c0_i32, %arg0 : i32, i32
  }
  func.func @transform_6(%arg0: i32) -> (i32, i32) {
    %c0_i32 = arith.constant 0 : i32
    %c0_i32_0 = arith.constant 0 : i32
    return %c0_i32, %arg0 : i32, i32
  }
  func.func @transform_7(%arg0: i32) -> (i32, i32) {
    %c0_i32 = arith.constant 0 : i32
    %c0_i32_0 = arith.constant 0 : i32
    return %c0_i32, %arg0 : i32, i32
  }
}

</mosaic_0001>

<llo_original>
// kernel: _lambda_.1
$region0: #{_lambda_.1}
  #allocation0 [shape = 'u32[]', space=smem, size = 0x4, offset = 0x4, fixed_abs, tag = 'smem constant byte address 0x4 - core index']
  #allocation1 [shape = 'u32[144,128]{1,0:T(1,128)}', space=vmem, size = 0x12000, scoped, tag = 'internal scratch']
  %s0 = inlined_call_operand.vmem [shape: f32[8,100], index: 0, kind: input, shape index: {}]
  %s1 = inlined_call_operand.vmem [shape: f32[100,256], index: 1, kind: input, shape index: {}]
  %s2 = inlined_call_operand.vmem [shape: f32[1,256], index: 2, kind: input, shape index: {}]
  %s3 = inlined_call_operand.vmem [shape: f32[256,512], index: 3, kind: input, shape index: {}]
  %s4 = inlined_call_operand.vmem [shape: f32[1,512], index: 4, kind: input, shape index: {}]
  %s5 = inlined_call_operand.vmem [shape: bf16[512,15360], index: 5, kind: input, shape index: {}]
  %s6 = inlined_call_operand.vmem [shape: f32[1,15360], index: 6, kind: input, shape index: {}]
  %s7 = inlined_call_operand.hbm [shape: f32[8,15360], index: 7, kind: output, shape index: {}]
  %s8 = sld [smem:[#allocation0]]
  $region84: #{_lambda_.1} parent=0
    _
  %s10 = ssub.s32 1, %s8
  %s11 = scalar_select 0, %s10, %s8
  $region1: #{_lambda_.1} parent=0
    #allocation2 [shape = 'u8[7864320]{0}', space=vmem, size = 0x780000, scoped, tag = 'input window, operand 5']
    #allocation3 [shape = 'u8[245760]{0}', space=vmem, size = 0x3c000, scoped, tag = 'output window, operand 0']
    #allocation4 [shape = 's32[2]{0}', space=sflag, size = 0x8, scoped, tag = 'scoped memory for _lambda_.1']
    %12 = vsyncpa [#allocation4], 0
    %s13 = scalar_lea.sflag [#allocation4], 1
    %14 = vsyncpa %s13, 0
    loop: start=0, step=1, limit=6
    $region2: #{_lambda_.1} parent=1 // loop_pre_header
      _
    $region3: #{_lambda_.1} parent=1 // loop_header
      %s16 = sphi 0, %s20
      %p17 = scmp.ge.s32.totalorder %s16, 6
      %s24 = sphi 0, %s24
      %s26 = sphi 0, %s24
      %s27 = sphi 0, %s26
      %s41 = sphi 0, %s27
      %s45 = sphi 0, %s45
      %s47 = sphi 0, %s45
      %s48 = sphi 0, %s47
      %s62 = sphi 0, %s48
      %s66 = sphi 0, %s66
      %s68 = sphi 0, %s66
      %s69 = sphi 0, %s68
      %s83 = sphi 0, %s69
      %s87 = sphi 0, %s87
      %s89 = sphi 0, %s87
      %s90 = sphi 0, %s89
      %s104 = sphi 0, %s90
      %s108 = sphi 0, %s108
      %s110 = sphi 0, %s108
      %s111 = sphi 0, %s110
      %s125 = sphi 0, %s111
      %s131 = sphi 0, %s133
      %s134 = sphi 0, %s131
      %s135 = sphi 0, %s134
      %s151 = sphi 0, %s135
      %s157 = sphi 0, %s159
      %s160 = sphi 0, %s157
      %s161 = sphi 0, %s160
      %s177 = sphi 0, %s161
      %s183 = sphi 0, %s185
      %s186 = sphi 0, %s183
      %s187 = sphi 0, %s186
      %s203 = sphi 0, %s187
    $region4: #{_lambda_.1} parent=1 // loop_header_branch
      %19 = sbr.rel (%p17) target = $region8
    $region5: #{_lambda_.1} parent=1 // loop_body
      %s21 = ssub.s32 %s16, 1
      %s22 = ssub.s32 %s16, 2
      %s23 = sadd.s32 %s16, 1
      %s25 = sadd.s32 %s24, 1
      %p28 = scmp.eq.s32.totalorder %s16, 3
      %p29 = scmp.ne.s32.totalorder %s24, %s26
      %p30 = scmp.eq.s32.totalorder %s16, 0
      %p31 = por %p29, %p30
      %p32 = scmp.ne.s32.totalorder %s24, %s26
      %p33 = scmp.eq.s32.totalorder %s21, 3
      %p34 = por %p32, %p33
      %p35 = scmp.ne.s32.totalorder %s26, %s27
      %p36 = scmp.eq.s32.totalorder %s21, 0
      %p37 = por %p35, %p36
      %p38 = scmp.ne.s32.totalorder %s26, %s27
      %p39 = scmp.eq.s32.totalorder %s22, 3
      %p40 = por %p38, %p39
      %p42 = scmp.ne.s32.totalorder %s27, %s41
      %p43 = scmp.eq.s32.totalorder %s22, 0
      %p44 = por %p42, %p43
      %s46 = sadd.s32 %s45, 1
      %p49 = scmp.eq.s32.totalorder %s16, 3
      %p50 = scmp.ne.s32.totalorder %s45, %s47
      %p51 = scmp.eq.s32.totalorder %s16, 0
      %p52 = por %p50, %p51
      %p53 = scmp.ne.s32.totalorder %s45, %s47
      %p54 = scmp.eq.s32.totalorder %s21, 3
      %p55 = por %p53, %p54
      %p56 = scmp.ne.s32.totalorder %s47, %s48
      %p57 = scmp.eq.s32.totalorder %s21, 0
      %p58 = por %p56, %p57
      %p59 = scmp.ne.s32.totalorder %s47, %s48
      %p60 = scmp.eq.s32.totalorder %s22, 3
      %p61 = por %p59, %p60
      %p63 = scmp.ne.s32.totalorder %s48, %s62
      %p64 = scmp.eq.s32.totalorder %s22, 0
      %p65 = por %p63, %p64
      %s67 = sadd.s32 %s66, 1
      %p70 = scmp.eq.s32.totalorder %s16, 3
      %p71 = scmp.ne.s32.totalorder %s66, %s68
      %p72 = scmp.eq.s32.totalorder %s16, 0
      %p73 = por %p71, %p72
      %p74 = scmp.ne.s32.totalorder %s66, %s68
      %p75 = scmp.eq.s32.totalorder %s21, 3
      %p76 = por %p74, %p75
      %p77 = scmp.ne.s32.totalorder %s68, %s69
      %p78 = scmp.eq.s32.totalorder %s21, 0
      %p79 = por %p77, %p78
      %p80 = scmp.ne.s32.totalorder %s68, %s69
      %p81 = scmp.eq.s32.totalorder %s22, 3
      %p82 = por %p80, %p81
      %p84 = scmp.ne.s32.totalorder %s69, %s83
      %p85 = scmp.eq.s32.totalorder %s22, 0
      %p86 = por %p84, %p85
      %s88 = sadd.s32 %s87, 1
      %p91 = scmp.eq.s32.totalorder %s16, 3
      %p92 = scmp.ne.s32.totalorder %s87, %s89
      %p93 = scmp.eq.s32.totalorder %s16, 0
      %p94 = por %p92, %p93
      %p95 = scmp.ne.s32.totalorder %s87, %s89
      %p96 = scmp.eq.s32.totalorder %s21, 3
      %p97 = por %p95, %p96
      %p98 = scmp.ne.s32.totalorder %s89, %s90
      %p99 = scmp.eq.s32.totalorder %s21, 0
      %p100 = por %p98, %p99
      %p101 = scmp.ne.s32.totalorder %s89, %s90
      %p102 = scmp.eq.s32.totalorder %s22, 3
      %p103 = por %p101, %p102
      %p105 = scmp.ne.s32.totalorder %s90, %s104
      %p106 = scmp.eq.s32.totalorder %s22, 0
      %p107 = por %p105, %p106
      %s109 = sadd.s32 %s108, 1
      %p112 = scmp.eq.s32.totalorder %s16, 3
      %p113 = scmp.ne.s32.totalorder %s108, %s110
      %p114 = scmp.eq.s32.totalorder %s16, 0
      %p115 = por %p113, %p114
      %p116 = scmp.ne.s32.totalorder %s108, %s110
      %p117 = scmp.eq.s32.totalorder %s21, 3
      %p118 = por %p116, %p117
      %p119 = scmp.ne.s32.totalorder %s110, %s111
      %p120 = scmp.eq.s32.totalorder %s21, 0
      %p121 = por %p119, %p120
      %p122 = scmp.ne.s32.totalorder %s110, %s111
      %p123 = scmp.eq.s32.totalorder %s22, 3
      %p124 = por %p122, %p123
      %p126 = scmp.ne.s32.totalorder %s111, %s125
      %p127 = scmp.eq.s32.totalorder %s22, 0
      %p128 = por %p126, %p127
      %s129 = ssub.s32 %s16, %s23
      %p130 = scmp.eq.s32.totalorder %s129, 0
      %s132 = sadd.s32 %s131, 1
      %s133 = scalar_select %p130, %s131, %s132
      %p136 = pneg %p130
      %p137 = scmp.eq.s32.totalorder %s16, 3
      %p138 = por %p136, %p137
      %p139 = scmp.ne.s32.totalorder %s131, %s134
      %p140 = scmp.eq.s32.totalorder %s16, 0
      %p141 = por %p139, %p140
      %p142 = scmp.ne.s32.totalorder %s131, %s134
      %p143 = scmp.eq.s32.totalorder %s21, 3
      %p144 = por %p142, %p143
      %p145 = scmp.ne.s32.totalorder %s134, %s135
      %p146 = scmp.eq.s32.totalorder %s21, 0
      %p147 = por %p145, %p146
      %p148 = scmp.ne.s32.totalorder %s134, %s135
      %p149 = scmp.eq.s32.totalorder %s22, 3
      %p150 = por %p148, %p149
      %p152 = scmp.ne.s32.totalorder %s135, %s151
      %p153 = scmp.eq.s32.totalorder %s22, 0
      %p154 = por %p152, %p153
      %s155 = ssub.s32 %s16, %s23
      %p156 = scmp.eq.s32.totalorder %s155, 0
      %s158 = sadd.s32 %s157, 1
      %s159 = scalar_select %p156, %s157, %s158
      %p162 = pneg %p156
      %p163 = scmp.eq.s32.totalorder %s16, 3
      %p164 = por %p162, %p163
      %p165 = scmp.ne.s32.totalorder %s157, %s160
      %p166 = scmp.eq.s32.totalorder %s16, 0
      %p167 = por %p165, %p166
      %p168 = scmp.ne.s32.totalorder %s157, %s160
      %p169 = scmp.eq.s32.totalorder %s21, 3
      %p170 = por %p168, %p169
      %p171 = scmp.ne.s32.totalorder %s160, %s161
      %p172 = scmp.eq.s32.totalorder %s21, 0
      %p173 = por %p171, %p172
      %p174 = scmp.ne.s32.totalorder %s160, %s161
      %p175 = scmp.eq.s32.totalorder %s22, 3
      %p176 = por %p174, %p175
      %p178 = scmp.ne.s32.totalorder %s161, %s177
      %p179 = scmp.eq.s32.totalorder %s22, 0
      %p180 = por %p178, %p179
      %s181 = ssub.s32 %s16, %s23
      %p182 = scmp.eq.s32.totalorder %s181, 0
      %s184 = sadd.s32 %s183, 1
      %s185 = scalar_select %p182, %s183, %s184
      %p188 = pneg %p182
      %p189 = scmp.eq.s32.totalorder %s16, 3
      %p190 = por %p188, %p189
      %p191 = scmp.ne.s32.totalorder %s183, %s186
      %p192 = scmp.eq.s32.totalorder %s16, 0
      %p193 = por %p191, %p192
      %p194 = scmp.ne.s32.totalorder %s183, %s186
      %p195 = scmp.eq.s32.totalorder %s21, 3
      %p196 = por %p194, %p195
      %p197 = scmp.ne.s32.totalorder %s186, %s187
      %p198 = scmp.eq.s32.totalorder %s21, 0
      %p199 = por %p197, %p198
      %p200 = scmp.ne.s32.totalorder %s186, %s187
      %p201 = scmp.eq.s32.totalorder %s22, 3
      %p202 = por %p200, %p201
      %p204 = scmp.ne.s32.totalorder %s187, %s203
      %p205 = scmp.eq.s32.totalorder %s22, 0
      %p206 = por %p204, %p205
      %p207 = scmp.le.s32.totalorder 1, %s16
      %p208 = scmp.lt.s32.totalorder %s16, 5
      %p209 = pnand %p207, %p208
      %p210 = pneg %p209
      // Predicated region
      $region9: #{_lambda_.1} parent=5 // pred_check
        _
      $region10: #{_lambda_.1} parent=5 // pred_check_branch
        %212 = sbr.rel (%p209) target = $region12
      $region11: #{_lambda_.1} parent=5 // pred_region
        %s213 = ssub.s32 %s16, 1
        // Predicated region
        $region13: #{_lambda_.1} parent=11 // pred_check
          %p214 = pneg %p37
        $region14: #{_lambda_.1} parent=11 // pred_check_branch
          %216 = sbr.rel (%p214) target = $region16
        $region15: #{_lambda_.1} parent=11 // pred_region
          _
        $region16: #{_lambda_.1} parent=11 // pred_fallthru
          _
        // Predicated region
        $region17: #{_lambda_.1} parent=11 // pred_check
          %p217 = pneg %p58
        $region18: #{_lambda_.1} parent=11 // pred_check_branch
          %219 = sbr.rel (%p217) target = $region20
        $region19: #{_lambda_.1} parent=11 // pred_region
          _
        $region20: #{_lambda_.1} parent=11 // pred_fallthru
          _
        // Predicated region
        $region21: #{_lambda_.1} parent=11 // pred_check
          %p220 = pneg %p79
        $region22: #{_lambda_.1} parent=11 // pred_check_branch
          %222 = sbr.rel (%p220) target = $region24
        $region23: #{_lambda_.1} parent=11 // pred_region
          _
        $region24: #{_lambda_.1} parent=11 // pred_fallthru
          _
        // Predicated region
        $region25: #{_lambda_.1} parent=11 // pred_check
          %p223 = pneg %p100
        $region26: #{_lambda_.1} parent=11 // pred_check_branch
          %225 = sbr.rel (%p223) target = $region28
        $region27: #{_lambda_.1} parent=11 // pred_region
          _
        $region28: #{_lambda_.1} parent=11 // pred_fallthru
          _
        // Predicated region
        $region29: #{_lambda_.1} parent=11 // pred_check
          %p226 = pneg %p121
        $region30: #{_lambda_.1} parent=11 // pred_check_branch
          %228 = sbr.rel (%p226) target = $region32
        $region31: #{_lambda_.1} parent=11 // pred_region
          _
        $region32: #{_lambda_.1} parent=11 // pred_fallthru
          _
      $region12: #{_lambda_.1} parent=5 // pred_fallthru
        _
      %p229 = scmp.lt.s32.totalorder %s16, 4
      // Predicated region
      $region33: #{_lambda_.1} parent=5 // pred_check
        %p230 = pneg %p229
      $region34: #{_lambda_.1} parent=5 // pred_check_branch
        %232 = sbr.rel (%p230) target = $region36
      $region35: #{_lambda_.1} parent=5 // pred_region
        // Predicated region
        $region37: #{_lambda_.1} parent=35 // pred_check
          %p233 = pneg %p141
        $region38: #{_lambda_.1} parent=35 // pred_check_branch
          %235 = sbr.rel (%p233) target = $region40
        $region39: #{_lambda_.1} parent=35 // pred_region
          %s236 = sand.u32 %s131, 1
          %s237 = sand.u32 %s131, 1
          %s238 = smul.addr %s237, 7680
          %s239 = scalar_lea.vmem [#allocation2], %s238
          %s240 = smul.u32 30, %s16
          %s241 = smul.addr %s240, 4
          %s242 = scalar_lea.vmem %s5, %s241
          // Predicated region
          $region41: #{_lambda_.1} parent=39 // pred_check
            _
          $region42: #{_lambda_.1} parent=39 // pred_check_branch
            %244 = sbr.rel (0) target = $region44
          $region43: #{_lambda_.1} parent=39 // pred_region
            // Predicated region
            $region45: #{_lambda_.1} parent=43 // pred_check
              _
            $region46: #{_lambda_.1} parent=43 // pred_check_branch
              %246 = sbr.rel (0) target = $region48
            $region47: #{_lambda_.1} parent=43 // pred_region
              loop: start=0, step=1, limit=1
              $region49: #{_lambda_.1} parent=47 // loop_pre_header
                _
              $region50: #{_lambda_.1} parent=47 // loop_header
                %s248 = sphi 0, %s252
                %p249 = scmp.ge.s32.totalorder %s248, 1
                %s253 = sphi %s242, %s242
                %s254 = sphi %s239, %s239
              $region51: #{_lambda_.1} parent=47 // loop_header_branch
                %251 = sbr.rel (%p249) target = $region55
              $region52: #{_lambda_.1} parent=47 // loop_body
                %v255 = vld [vmem:[%s253] sm:$0xff]
                %256 = vst [vmem:[%s254] sm:$0xff] %v255
                %v257 = vld [vmem:[%s253 + $0x8] sm:$0xff]
                %258 = vst [vmem:[%s254 + $0x8] sm:$0xff] %v257
                %v259 = vld [vmem:[%s253 + $0x10] sm:$0xff]
                %260 = vst [vmem:[%s254 + $0x10] sm:$0xff] %v259
                %v261 = vld [vmem:[%s253 + $0x18] sm:$0xff]
                %262 = vst [vmem:[%s254 + $0x18] sm:$0xff] %v261
                %v263 = vld [vmem:[%s253 + $0x20] sm:$0xff]
                %264 = vst [vmem:[%s254 + $0x20] sm:$0xff] %v263
                %v265 = vld [vmem:[%s253 + $0x28] sm:$0xff]
                %266 = vst [vmem:[%s254 + $0x28] sm:$0xff] %v265
                %v267 = vld [vmem:[%s253 + $0x30] sm:$0xff]
                %268 = vst [vmem:[%s254 + $0x30] sm:$0xff] %v267
                %v269 = vld [vmem:[%s253 + $0x38] sm:$0xff]
                %270 = vst [vmem:[%s254 + $0x38] sm:$0xff] %v269
                %v271 = vld [vmem:[%s253 + $0x40] sm:$0xff]
                %272 = vst [vmem:[%s254 + $0x40] sm:$0xff] %v271
                %v273 = vld [vmem:[%s253 + $0x48] sm:$0xff]
                %274 = vst [vmem:[%s254 + $0x48] sm:$0xff] %v273
                %v275 = vld [vmem:[%s253 + $0x50] sm:$0xff]
                %276 = vst [vmem:[%s254 + $0x50] sm:$0xff] %v275
                %v277 = vld [vmem:[%s253 + $0x58] sm:$0xff]
                %278 = vst [vmem:[%s254 + $0x58] sm:$0xff] %v277
                %v279 = vld [vmem:[%s253 + $0x60] sm:$0xff]
                %280 = vst [vmem:[%s254 + $0x60] sm:$0xff] %v279
                %v281 = vld [vmem:[%s253 + $0x68] sm:$0xff]
                %282 = vst [vmem:[%s254 + $0x68] sm:$0xff] %v281
                %v283 = vld [vmem:[%s253 + $0x70] sm:$0xff]
                %284 = vst [vmem:[%s254 + $0x70] sm:$0xff] %v283
                %v285 = vld [vmem:[%s253 + $0x1e0] sm:$0xff]
                %286 = vst [vmem:[%s254 + $0x78] sm:$0xff] %v285
                %v287 = vld [vmem:[%s253 + $0x1e8] sm:$0xff]
                %288 = vst [vmem:[%s254 + $0x80] sm:$0xff] %v287
                %v289 = vld [vmem:[%s253 + $0x1f0] sm:$0xff]
                %290 = vst [vmem:[%s254 + $0x88] sm:$0xff] %v289
                %v291 = vld [vmem:[%s253 + $0x1f8] sm:$0xff]
                %292 = vst [vmem:[%s254 + $0x90] sm:$0xff] %v291
                %v293 = vld [vmem:[%s253 + $0x200] sm:$0xff]
                %294 = vst [vmem:[%s254 + $0x98] sm:$0xff] %v293
                %v295 = vld [vmem:[%s253 + $0x208] sm:$0xff]
                %296 = vst [vmem:[%s254 + $0xa0] sm:$0xff] %v295
                %v297 = vld [vmem:[%s253 + $0x210] sm:$0xff]
                %298 = vst [vmem:[%s254 + $0xa8] sm:$0xff] %v297
                %v299 = vld [vmem:[%s253 + $0x218] sm:$0xff]
                %300 = vst [vmem:[%s254 + $0xb0] sm:$0xff] %v299
                %v301 = vld [vmem:[%s253 + $0x220] sm:$0xff]
                %302 = vst [vmem:[%s254 + $0xb8] sm:$0xff] %v301
                %v303 = vld [vmem:[%s253 + $0x228] sm:$0xff]
                %304 = vst [vmem:[%s254 + $0xc0] sm:$0xff] %v303
                %v305 = vld [vmem:[%s253 + $0x230] sm:$0xff]
                %306 = vst [vmem:[%s254 + $0xc8] sm:$0xff] %v305
                %v307 = vld [vmem:[%s253 + $0x238] sm:$0xff]
                %308 = vst [vmem:[%s254 + $0xd0] sm:$0xff] %v307
                %v309 = vld [vmem:[%s253 + $0x240] sm:$0xff]
                %310 = vst [vmem:[%s254 + $0xd8] sm:$0xff] %v309
                %v311 = vld [vmem:[%s253 + $0x248] sm:$0xff]
                %312 = vst [vmem:[%s254 + $0xe0] sm:$0xff] %v311
                %v313 = vld [vmem:[%s253 + $0x250] sm:$0xff]
                %314 = vst [vmem:[%s254 + $0xe8] sm:$0xff] %v313
                %v315 = vld [vmem:[%s253 + $0x3c0] sm:$0xff]
                %316 = vst [vmem:[%s254 + $0xf0] sm:$0xff] %v315
                %v317 = vld [vmem:[%s253 + $0x3c8] sm:$0xff]
                %318 = vst [vmem:[%s254 + $0xf8] sm:$0xff] %v317
                %v319 = vld [vmem:[%s253 + $0x3d0] sm:$0xff]
                %320 = vst [vmem:[%s254 + $0x100] sm:$0xff] %v319
                %v321 = vld [vmem:[%s253 + $0x3d8] sm:$0xff]
                %322 = vst [vmem:[%s254 + $0x108] sm:$0xff] %v321
                %v323 = vld [vmem:[%s253 + $0x3e0] sm:$0xff]
                %324 = vst [vmem:[%s254 + $0x110] sm:$0xff] %v323
                %v325 = vld [vmem:[%s253 + $0x3e8] sm:$0xff]
                %326 = vst [vmem:[%s254 + $0x118] sm:$0xff] %v325
                %v327 = vld [vmem:[%s253 + $0x3f0] sm:$0xff]
                %328 = vst [vmem:[%s254 + $0x120] sm:$0xff] %v327
                %v329 = vld [vmem:[%s253 + $0x3f8] sm:$0xff]
                %330 = vst [vmem:[%s254 + $0x128] sm:$0xff] %v329
                %v331 = vld [vmem:[%s253 + $0x400] sm:$0xff]
                %332 = vst [vmem:[%s254 + $0x130] sm:$0xff] %v331
                %v333 = vld [vmem:[%s253 + $0x408] sm:$0xff]
                %334 = vst [vmem:[%s254 + $0x138] sm:$0xff] %v333
                %v335 = vld [vmem:[%s253 + $0x410] sm:$0xff]
                %336 = vst [vmem:[%s254 + $0x140] sm:$0xff] %v335
                %v337 = vld [vmem:[%s253 + $0x418] sm:$0xff]
                %338 = vst [vmem:[%s254 + $0x148] sm:$0xff] %v337
                %v339 = vld [vmem:[%s253 + $0x420] sm:$0xff]
                %340 = vst [vmem:[%s254 + $0x150] sm:$0xff] %v339
                %v341 = vld [vmem:[%s253 + $0x428] sm:$0xff]
                %342 = vst [vmem:[%s254 + $0x158] sm:$0xff] %v341
                %v343 = vld [vmem:[%s253 + $0x430] sm:$0xff]
                %344 = vst [vmem:[%s254 + $0x160] sm:$0xff] %v343
                %v345 = vld [vmem:[%s253 + $0x5a0] sm:$0xff]
                %346 = vst [vmem:[%s254 + $0x168] sm:$0xff] %v345
                %v347 = vld [vmem:[%s253 + $0x5a8] sm:$0xff]
                %348 = vst [vmem:[%s254 + $0x170] sm:$0xff] %v347
                %v349 = vld [vmem:[%s253 + $0x5b0] sm:$0xff]
                %350 = vst [vmem:[%s254 + $0x178] sm:$0xff] %v349
                %v351 = vld [vmem:[%s253 + $0x5b8] sm:$0xff]
                %352 = vst [vmem:[%s254 + $0x180] sm:$0xff] %v351
                %v353 = vld [vmem:[%s253 + $0x5c0] sm:$0xff]
                %354 = vst [vmem:[%s254 + $0x188] sm:$0xff] %v353
                %v355 = vld [vmem:[%s253 + $0x5c8] sm:$0xff]
                %356 = vst [vmem:[%s254 + $0x190] sm:$0xff] %v355
                %v357 = vld [vmem:[%s253 + $0x5d0] sm:$0xff]
                %358 = vst [vmem:[%s254 + $0x198] sm:$0xff] %v357
                %v359 = vld [vmem:[%s253 + $0x5d8] sm:$0xff]
                %360 = vst [vmem:[%s254 + $0x1a0] sm:$0xff] %v359
                %v361 = vld [vmem:[%s253 + $0x5e0] sm:$0xff]
                %362 = vst [vmem:[%s254 + $0x1a8] sm:$0xff] %v361
                %v363 = vld [vmem:[%s253 + $0x5e8] sm:$0xff]
                %364 = vst [vmem:[%s254 + $0x1b0] sm:$0xff] %v363
                %v365 = vld [vmem:[%s253 + $0x5f0] sm:$0xff]
                %366 = vst [vmem:[%s254 + $0x1b8] sm:$0xff] %v365
                %v367 = vld [vmem:[%s253 + $0x5f8] sm:$0xff]
                %368 = vst [vmem:[%s254 + $0x1c0] sm:$0xff] %v367
                %v369 = vld [vmem:[%s253 + $0x600] sm:$0xff]
                %370 = vst [vmem:[%s254 + $0x1c8] sm:$0xff] %v369
                %v371 = vld [vmem:[%s253 + $0x608] sm:$0xff]
                %372 = vst [vmem:[%s254 + $0x1d0] sm:$0xff] %v371
                %v373 = vld [vmem:[%s253 + $0x610] sm:$0xff]
                %374 = vst [vmem:[%s254 + $0x1d8] sm:$0xff] %v373
                %v375 = vld [vmem:[%s253 + $0x780] sm:$0xff]
                %376 = vst [vmem:[%s254 + $0x1e0] sm:$0xff] %v375
                %v377 = vld [vmem:[%s253 + $0x788] sm:$0xff]
                %378 = vst [vmem:[%s254 + $0x1e8] sm:$0xff] %v377
                %v379 = vld [vmem:[%s253 + $0x790] sm:$0xff]
                %380 = vst [vmem:[%s254 + $0x1f0] sm:$0xff] %v379
                %v381 = vld [vmem:[%s253 + $0x798] sm:$0xff]
                %382 = vst [vmem:[%s254 + $0x1f8] sm:$0xff] %v381
                %v383 = vld [vmem:[%s253 + $0x7a0] sm:$0xff]
                %384 = vst [vmem:[%s254 + $0x200] sm:$0xff] %v383
                %v385 = vld [vmem:[%s253 + $0x7a8] sm:$0xff]
                %386 = vst [vmem:[%s254 + $0x208] sm:$0xff] %v385
                %v387 = vld [vmem:[%s253 + $0x7b0] sm:$0xff]
                %388 = vst [vmem:[%s254 + $0x210] sm:$0xff] %v387
                %v389 = vld [vmem:[%s253 + $0x7b8] sm:$0xff]
                %390 = vst [vmem:[%s254 + $0x218] sm:$0xff] %v389
                %v391 = vld [vmem:[%s253 + $0x7c0] sm:$0xff]
                %392 = vst [vmem:[%s254 + $0x220] sm:$0xff] %v391
                %v393 = vld [vmem:[%s253 + $0x7c8] sm:$0xff]
                %394 = vst [vmem:[%s254 + $0x228] sm:$0xff] %v393
                %v395 = vld [vmem:[%s253 + $0x7d0] sm:$0xff]
                %396 = vst [vmem:[%s254 + $0x230] sm:$0xff] %v395
                %v397 = vld [vmem:[%s253 + $0x7d8] sm:$0xff]
                %398 = vst [vmem:[%s254 + $0x238] sm:$0xff] %v397
                %v399 = vld [vmem:[%s253 + $0x7e0] sm:$0xff]
                %400 = vst [vmem:[%s254 + $0x240] sm:$0xff] %v399
                %v401 = vld [vmem:[%s253 + $0x7e8] sm:$0xff]
                %402 = vst [vmem:[%s254 + $0x248] sm:$0xff] %v401
                %v403 = vld [vmem:[%s253 + $0x7f0] sm:$0xff]
                %404 = vst [vmem:[%s254 + $0x250] sm:$0xff] %v403
                %v405 = vld [vmem:[%s253 + $0x960] sm:$0xff]
                %406 = vst [vmem:[%s254 + $0x258] sm:$0xff] %v405
                %v407 = vld [vmem:[%s253 + $0x968] sm:$0xff]
                %408 = vst [vmem:[%s254 + $0x260] sm:$0xff] %v407
                %v409 = vld [vmem:[%s253 + $0x970] sm:$0xff]
                %410 = vst [vmem:[%s254 + $0x268] sm:$0xff] %v409
                %v411 = vld [vmem:[%s253 + $0x978] sm:$0xff]
                %412 = vst [vmem:[%s254 + $0x270] sm:$0xff] %v411
                %v413 = vld [vmem:[%s253 + $0x980] sm:$0xff]
                %414 = vst [vmem:[%s254 + $0x278] sm:$0xff] %v413
                %v415 = vld [vmem:[%s253 + $0x988] sm:$0xff]
                %416 = vst [vmem:[%s254 + $0x280] sm:$0xff] %v415
                %v417 = vld [vmem:[%s253 + $0x990] sm:$0xff]
                %418 = vst [vmem:[%s254 + $0x288] sm:$0xff] %v417
                %v419 = vld [vmem:[%s253 + $0x998] sm:$0xff]
                %420 = vst [vmem:[%s254 + $0x290] sm:$0xff] %v419
                %v421 = vld [vmem:[%s253 + $0x9a0] sm:$0xff]
                %422 = vst [vmem:[%s254 + $0x298] sm:$0xff] %v421
                %v423 = vld [vmem:[%s253 + $0x9a8] sm:$0xff]
                %424 = vst [vmem:[%s254 + $0x2a0] sm:$0xff] %v423
                %v425 = vld [vmem:[%s253 + $0x9b0] sm:$0xff]
                %426 = vst [vmem:[%s254 + $0x2a8] sm:$0xff] %v425
                %v427 = vld [vmem:[%s253 + $0x9b8] sm:$0xff]
                %428 = vst [vmem:[%s254 + $0x2b0] sm:$0xff] %v427
                %v429 = vld [vmem:[%s253 + $0x9c0] sm:$0xff]
                %430 = vst [vmem:[%s254 + $0x2b8] sm:$0xff] %v429
                %v431 = vld [vmem:[%s253 + $0x9c8] sm:$0xff]
                %432 = vst [vmem:[%s254 + $0x2c0] sm:$0xff] %v431
                %v433 = vld [vmem:[%s253 + $0x9d0] sm:$0xff]
                %434 = vst [vmem:[%s254 + $0x2c8] sm:$0xff] %v433
                %v435 = vld [vmem:[%s253 + $0xb40] sm:$0xff]
                %436 = vst [vmem:[%s254 + $0x2d0] sm:$0xff] %v435
                %v437 = vld [vmem:[%s253 + $0xb48] sm:$0xff]
                %438 = vst [vmem:[%s254 + $0x2d8] sm:$0xff] %v437
                %v439 = vld [vmem:[%s253 + $0xb50] sm:$0xff]
                %440 = vst [vmem:[%s254 + $0x2e0] sm:$0xff] %v439
                %v441 = vld [vmem:[%s253 + $0xb58] sm:$0xff]
                %442 = vst [vmem:[%s254 + $0x2e8] sm:$0xff] %v441
                %v443 = vld [vmem:[%s253 + $0xb60] sm:$0xff]
                %444 = vst [vmem:[%s254 + $0x2f0] sm:$0xff] %v443
                %v445 = vld [vmem:[%s253 + $0xb68] sm:$0xff]
                %446 = vst [vmem:[%s254 + $0x2f8] sm:$0xff] %v445
                %v447 = vld [vmem:[%s253 + $0xb70] sm:$0xff]
                %448 = vst [vmem:[%s254 + $0x300] sm:$0xff] %v447
                %v449 = vld [vmem:[%s253 + $0xb78] sm:$0xff]
                %450 = vst [vmem:[%s254 + $0x308] sm:$0xff] %v449
                %v451 = vld [vmem:[%s253 + $0xb80] sm:$0xff]
                %452 = vst [vmem:[%s254 + $0x310] sm:$0xff] %v451
                %v453 = vld [vmem:[%s253 + $0xb88] sm:$0xff]
                %454 = vst [vmem:[%s254 + $0x318] sm:$0xff] %v453
                %v455 = vld [vmem:[%s253 + $0xb90] sm:$0xff]
                %456 = vst [vmem:[%s254 + $0x320] sm:$0xff] %v455
                %v457 = vld [vmem:[%s253 + $0xb98] sm:$0xff]
                %458 = vst [vmem:[%s254 + $0x328] sm:$0xff] %v457
                %v459 = vld [vmem:[%s253 + $0xba0] sm:$0xff]
                %460 = vst [vmem:[%s254 + $0x330] sm:$0xff] %v459
                %v461 = vld [vmem:[%s253 + $0xba8] sm:$0xff]
                %462 = vst [vmem:[%s254 + $0x338] sm:$0xff] %v461
                %v463 = vld [vmem:[%s253 + $0xbb0] sm:$0xff]
                %464 = vst [vmem:[%s254 + $0x340] sm:$0xff] %v463
                %v465 = vld [vmem:[%s253 + $0xd20] sm:$0xff]
                %466 = vst [vmem:[%s254 + $0x348] sm:$0xff] %v465
                %v467 = vld [vmem:[%s253 + $0xd28] sm:$0xff]
                %468 = vst [vmem:[%s254 + $0x350] sm:$0xff] %v467
                %v469 = vld [vmem:[%s253 + $0xd30] sm:$0xff]
                %470 = vst [vmem:[%s254 + $0x358] sm:$0xff] %v469
                %v471 = vld [vmem:[%s253 + $0xd38] sm:$0xff]
                %472 = vst [vmem:[%s254 + $0x360] sm:$0xff] %v471
                %v473 = vld [vmem:[%s253 + $0xd40] sm:$0xff]
                %474 = vst [vmem:[%s254 + $0x368] sm:$0xff] %v473
                %v475 = vld [vmem:[%s253 + $0xd48] sm:$0xff]
                %476 = vst [vmem:[%s254 + $0x370] sm:$0xff] %v475
                %v477 = vld [vmem:[%s253 + $0xd50] sm:$0xff]
                %478 = vst [vmem:[%s254 + $0x378] sm:$0xff] %v477
                %v479 = vld [vmem:[%s253 + $0xd58] sm:$0xff]
                %480 = vst [vmem:[%s254 + $0x380] sm:$0xff] %v479
                %v481 = vld [vmem:[%s253 + $0xd60] sm:$0xff]
                %482 = vst [vmem:[%s254 + $0x388] sm:$0xff] %v481
                %v483 = vld [vmem:[%s253 + $0xd68] sm:$0xff]
                %484 = vst [vmem:[%s254 + $0x390] sm:$0xff] %v483
                %v485 = vld [vmem:[%s253 + $0xd70] sm:$0xff]
                %486 = vst [vmem:[%s254 + $0x398] sm:$0xff] %v485
                %v487 = vld [vmem:[%s253 + $0xd78] sm:$0xff]
                %488 = vst [vmem:[%s254 + $0x3a0] sm:$0xff] %v487
                %v489 = vld [vmem:[%s253 + $0xd80] sm:$0xff]
                %490 = vst [vmem:[%s254 + $0x3a8] sm:$0xff] %v489
                %v491 = vld [vmem:[%s253 + $0xd88] sm:$0xff]
                %492 = vst [vmem:[%s254 + $0x3b0] sm:$0xff] %v491
                %v493 = vld [vmem:[%s253 + $0xd90] sm:$0xff]
                %494 = vst [vmem:[%s254 + $0x3b8] sm:$0xff] %v493
                %v495 = vld [vmem:[%s253 + $0xf00] sm:$0xff]
                %496 = vst [vmem:[%s254 + $0x3c0] sm:$0xff] %v495
                %v497 = vld [vmem:[%s253 + $0xf08] sm:$0xff]
                %498 = vst [vmem:[%s254 + $0x3c8] sm:$0xff] %v497
                %v499 = vld [vmem:[%s253 + $0xf10] sm:$0xff]
                %500 = vst [vmem:[%s254 + $0x3d0] sm:$0xff] %v499
                %v501 = vld [vmem:[%s253 + $0xf18] sm:$0xff]
                %502 = vst [vmem:[%s254 + $0x3d8] sm:$0xff] %v501
                %v503 = vld [vmem:[%s253 + $0xf20] sm:$0xff]
                %504 = vst [vmem:[%s254 + $0x3e0] sm:$0xff] %v503
                %v505 = vld [vmem:[%s253 + $0xf28] sm:$0xff]
                %506 = vst [vmem:[%s254 + $0x3e8] sm:$0xff] %v505
                %v507 = vld [vmem:[%s253 + $0xf30] sm:$0xff]
                %508 = vst [vmem:[%s254 + $0x3f0] sm:$0xff] %v507
                %v509 = vld [vmem:[%s253 + $0xf38] sm:$0xff]
                %510 = vst [vmem:[%s254 + $0x3f8] sm:$0xff] %v509
                %v511 = vld [vmem:[%s253 + $0xf40] sm:$0xff]
                %512 = vst [vmem:[%s254 + $0x400] sm:$0xff] %v511
                %v513 = vld [vmem:[%s253 + $0xf48] sm:$0xff]
                %514 = vst [vmem:[%s254 + $0x408] sm:$0xff] %v513
                %v515 = vld [vmem:[%s253 + $0xf50] sm:$0xff]
                %516 = vst [vmem:[%s254 + $0x410] sm:$0xff] %v515
                %v517 = vld [vmem:[%s253 + $0xf58] sm:$0xff]
                %518 = vst [vmem:[%s254 + $0x418] sm:$0xff] %v517
                %v519 = vld [vmem:[%s253 + $0xf60] sm:$0xff]
                %520 = vst [vmem:[%s254 + $0x420] sm:$0xff] %v519
                %v521 = vld [vmem:[%s253 + $0xf68] sm:$0xff]
                %522 = vst [vmem:[%s254 + $0x428] sm:$0xff] %v521
                %v523 = vld [vmem:[%s253 + $0xf70] sm:$0xff]
                %524 = vst [vmem:[%s254 + $0x430] sm:$0xff] %v523
                %v525 = vld [vmem:[%s253 + $0x10e0] sm:$0xff]
                %526 = vst [vmem:[%s254 + $0x438] sm:$0xff] %v525
                %v527 = vld [vmem:[%s253 + $0x10e8] sm:$0xff]
                %528 = vst [vmem:[%s254 + $0x440] sm:$0xff] %v527
                %v529 = vld [vmem:[%s253 + $0x10f0] sm:$0xff]
                %530 = vst [vmem:[%s254 + $0x448] sm:$0xff] %v529
                %v531 = vld [vmem:[%s253 + $0x10f8] sm:$0xff]
                %532 = vst [vmem:[%s254 + $0x450] sm:$0xff] %v531
                %v533 = vld [vmem:[%s253 + $0x1100] sm:$0xff]
                %534 = vst [vmem:[%s254 + $0x458] sm:$0xff] %v533
                %v535 = vld [vmem:[%s253 + $0x1108] sm:$0xff]
                %536 = vst [vmem:[%s254 + $0x460] sm:$0xff] %v535
                %v537 = vld [vmem:[%s253 + $0x1110] sm:$0xff]
                %538 = vst [vmem:[%s254 + $0x468] sm:$0xff] %v537
                %v539 = vld [vmem:[%s253 + $0x1118] sm:$0xff]
                %540 = vst [vmem:[%s254 + $0x470] sm:$0xff] %v539
                %v541 = vld [vmem:[%s253 + $0x1120] sm:$0xff]
                %542 = vst [vmem:[%s254 + $0x478] sm:$0xff] %v541
                %v543 = vld [vmem:[%s253 + $0x1128] sm:$0xff]
                %544 = vst [vmem:[%s254 + $0x480] sm:$0xff] %v543
                %v545 = vld [vmem:[%s253 + $0x1130] sm:$0xff]
                %546 = vst [vmem:[%s254 + $0x488] sm:$0xff] %v545
                %v547 = vld [vmem:[%s253 + $0x1138] sm:$0xff]
                %548 = vst [vmem:[%s254 + $0x490] sm:$0xff] %v547
                %v549 = vld [vmem:[%s253 + $0x1140] sm:$0xff]
                %550 = vst [vmem:[%s254 + $0x498] sm:$0xff] %v549
                %v551 = vld [vmem:[%s253 + $0x1148] sm:$0xff]
                %552 = vst [vmem:[%s254 + $0x4a0] sm:$0xff] %v551
                %v553 = vld [vmem:[%s253 + $0x1150] sm:$0xff]
                %554 = vst [vmem:[%s254 + $0x4a8] sm:$0xff] %v553
                %v555 = vld [vmem:[%s253 + $0x12c0] sm:$0xff]
                %556 = vst [vmem:[%s254 + $0x4b0] sm:$0xff] %v555
                %v557 = vld [vmem:[%s253 + $0x12c8] sm:$0xff]
                %558 = vst [vmem:[%s254 + $0x4b8] sm:$0xff] %v557
                %v559 = vld [vmem:[%s253 + $0x12d0] sm:$0xff]
                %560 = vst [vmem:[%s254 + $0x4c0] sm:$0xff] %v559
                %v561 = vld [vmem:[%s253 + $0x12d8] sm:$0xff]
                %562 = vst [vmem:[%s254 + $0x4c8] sm:$0xff] %v561
                %v563 = vld [vmem:[%s253 + $0x12e0] sm:$0xff]
                %564 = vst [vmem:[%s254 + $0x4d0] sm:$0xff] %v563
                %v565 = vld [vmem:[%s253 + $0x12e8] sm:$0xff]
                %566 = vst [vmem:[%s254 + $0x4d8] sm:$0xff] %v565
                %v567 = vld [vmem:[%s253 + $0x12f0] sm:$0xff]
                %568 = vst [vmem:[%s254 + $0x4e0] sm:$0xff] %v567
                %v569 = vld [vmem:[%s253 + $0x12f8] sm:$0xff]
                %570 = vst [vmem:[%s254 + $0x4e8] sm:$0xff] %v569
                %v571 = vld [vmem:[%s253 + $0x1300] sm:$0xff]
                %572 = vst [vmem:[%s254 + $0x4f0] sm:$0xff] %v571
                %v573 = vld [vmem:[%s253 + $0x1308] sm:$0xff]
                %574 = vst [vmem:[%s254 + $0x4f8] sm:$0xff] %v573
                %v575 = vld [vmem:[%s253 + $0x1310] sm:$0xff]
                %576 = vst [vmem:[%s254 + $0x500] sm:$0xff] %v575
                %v577 = vld [vmem:[%s253 + $0x1318] sm:$0xff]
                %578 = vst [vmem:[%s254 + $0x508] sm:$0xff] %v577
                %v579 = vld [vmem:[%s253 + $0x1320] sm:$0xff]
                %580 = vst [vmem:[%s254 + $0x510] sm:$0xff] %v579
                %v581 = vld [vmem:[%s253 + $0x1328] sm:$0xff]
                %582 = vst [vmem:[%s254 + $0x518] sm:$0xff] %v581
                %v583 = vld [vmem:[%s253 + $0x1330] sm:$0xff]
                %584 = vst [vmem:[%s254 + $0x520] sm:$0xff] %v583
                %v585 = vld [vmem:[%s253 + $0x14a0] sm:$0xff]
                %586 = vst [vmem:[%s254 + $0x528] sm:$0xff] %v585
                %v587 = vld [vmem:[%s253 + $0x14a8] sm:$0xff]
                %588 = vst [vmem:[%s254 + $0x530] sm:$0xff] %v587
                %v589 = vld [vmem:[%s253 + $0x14b0] sm:$0xff]
                %590 = vst [vmem:[%s254 + $0x538] sm:$0xff] %v589
                %v591 = vld [vmem:[%s253 + $0x14b8] sm:$0xff]
                %592 = vst [vmem:[%s254 + $0x540] sm:$0xff] %v591
                %v593 = vld [vmem:[%s253 + $0x14c0] sm:$0xff]
                %594 = vst [vmem:[%s254 + $0x548] sm:$0xff] %v593
                %v595 = vld [vmem:[%s253 + $0x14c8] sm:$0xff]
                %596 = vst [vmem:[%s254 + $0x550] sm:$0xff] %v595
                %v597 = vld [vmem:[%s253 + $0x14d0] sm:$0xff]
                %598 = vst [vmem:[%s254 + $0x558] sm:$0xff] %v597
                %v599 = vld [vmem:[%s253 + $0x14d8] sm:$0xff]
                %600 = vst [vmem:[%s254 + $0x560] sm:$0xff] %v599
                %v601 = vld [vmem:[%s253 + $0x14e0] sm:$0xff]
                %602 = vst [vmem:[%s254 + $0x568] sm:$0xff] %v601
                %v603 = vld [vmem:[%s253 + $0x14e8] sm:$0xff]
                %604 = vst [vmem:[%s254 + $0x570] sm:$0xff] %v603
                %v605 = vld [vmem:[%s253 + $0x14f0] sm:$0xff]
                %606 = vst [vmem:[%s254 + $0x578] sm:$0xff] %v605
                %v607 = vld [vmem:[%s253 + $0x14f8] sm:$0xff]
                %608 = vst [vmem:[%s254 + $0x580] sm:$0xff] %v607
                %v609 = vld [vmem:[%s253 + $0x1500] sm:$0xff]
                %610 = vst [vmem:[%s254 + $0x588] sm:$0xff] %v609
                %v611 = vld [vmem:[%s253 + $0x1508] sm:$0xff]
                %612 = vst [vmem:[%s254 + $0x590] sm:$0xff] %v611
                %v613 = vld [vmem:[%s253 + $0x1510] sm:$0xff]
                %614 = vst [vmem:[%s254 + $0x598] sm:$0xff] %v613
                %v615 = vld [vmem:[%s253 + $0x1680] sm:$0xff]
                %616 = vst [vmem:[%s254 + $0x5a0] sm:$0xff] %v615
                %v617 = vld [vmem:[%s253 + $0x1688] sm:$0xff]
                %618 = vst [vmem:[%s254 + $0x5a8] sm:$0xff] %v617
                %v619 = vld [vmem:[%s253 + $0x1690] sm:$0xff]
                %620 = vst [vmem:[%s254 + $0x5b0] sm:$0xff] %v619
                %v621 = vld [vmem:[%s253 + $0x1698] sm:$0xff]
                %622 = vst [vmem:[%s254 + $0x5b8] sm:$0xff] %v621
                %v623 = vld [vmem:[%s253 + $0x16a0] sm:$0xff]
                %624 = vst [vmem:[%s254 + $0x5c0] sm:$0xff] %v623
                %v625 = vld [vmem:[%s253 + $0x16a8] sm:$0xff]
                %626 = vst [vmem:[%s254 + $0x5c8] sm:$0xff] %v625
                %v627 = vld [vmem:[%s253 + $0x16b0] sm:$0xff]
                %628 = vst [vmem:[%s254 + $0x5d0] sm:$0xff] %v627
                %v629 = vld [vmem:[%s253 + $0x16b8] sm:$0xff]
                %630 = vst [vmem:[%s254 + $0x5d8] sm:$0xff] %v629
                %v631 = vld [vmem:[%s253 + $0x16c0] sm:$0xff]
                %632 = vst [vmem:[%s254 + $0x5e0] sm:$0xff] %v631
                %v633 = vld [vmem:[%s253 + $0x16c8] sm:$0xff]
                %634 = vst [vmem:[%s254 + $0x5e8] sm:$0xff] %v633
                %v635 = vld [vmem:[%s253 + $0x16d0] sm:$0xff]
                %636 = vst [vmem:[%s254 + $0x5f0] sm:$0xff] %v635
                %v637 = vld [vmem:[%s253 + $0x16d8] sm:$0xff]
                %638 = vst [vmem:[%s254 + $0x5f8] sm:$0xff] %v637
                %v639 = vld [vmem:[%s253 + $0x16e0] sm:$0xff]
                %640 = vst [vmem:[%s254 + $0x600] sm:$0xff] %v639
                %v641 = vld [vmem:[%s253 + $0x16e8] sm:$0xff]
                %642 = vst [vmem:[%s254 + $0x608] sm:$0xff] %v641
                %v643 = vld [vmem:[%s253 + $0x16f0] sm:$0xff]
                %644 = vst [vmem:[%s254 + $0x610] sm:$0xff] %v643
                %v645 = vld [vmem:[%s253 + $0x1860] sm:$0xff]
                %646 = vst [vmem:[%s254 + $0x618] sm:$0xff] %v645
                %v647 = vld [vmem:[%s253 + $0x1868] sm:$0xff]
                %648 = vst [vmem:[%s254 + $0x620] sm:$0xff] %v647
                %v649 = vld [vmem:[%s253 + $0x1870] sm:$0xff]
                %650 = vst [vmem:[%s254 + $0x628] sm:$0xff] %v649
                %v651 = vld [vmem:[%s253 + $0x1878] sm:$0xff]
                %652 = vst [vmem:[%s254 + $0x630] sm:$0xff] %v651
                %v653 = vld [vmem:[%s253 + $0x1880] sm:$0xff]
                %654 = vst [vmem:[%s254 + $0x638] sm:$0xff] %v653
                %v655 = vld [vmem:[%s253 + $0x1888] sm:$0xff]
                %656 = vst [vmem:[%s254 + $0x640] sm:$0xff] %v655
                %v657 = vld [vmem:[%s253 + $0x1890] sm:$0xff]
                %658 = vst [vmem:[%s254 + $0x648] sm:$0xff] %v657
                %v659 = vld [vmem:[%s253 + $0x1898] sm:$0xff]
                %660 = vst [vmem:[%s254 + $0x650] sm:$0xff] %v659
                %v661 = vld [vmem:[%s253 + $0x18a0] sm:$0xff]
                %662 = vst [vmem:[%s254 + $0x658] sm:$0xff] %v661
                %v663 = vld [vmem:[%s253 + $0x18a8] sm:$0xff]
                %664 = vst [vmem:[%s254 + $0x660] sm:$0xff] %v663
                %v665 = vld [vmem:[%s253 + $0x18b0] sm:$0xff]
                %666 = vst [vmem:[%s254 + $0x668] sm:$0xff] %v665
                %v667 = vld [vmem:[%s253 + $0x18b8] sm:$0xff]
                %668 = vst [vmem:[%s254 + $0x670] sm:$0xff] %v667
                %v669 = vld [vmem:[%s253 + $0x18c0] sm:$0xff]
                %670 = vst [vmem:[%s254 + $0x678] sm:$0xff] %v669
                %v671 = vld [vmem:[%s253 + $0x18c8] sm:$0xff]
                %672 = vst [vmem:[%s254 + $0x680] sm:$0xff] %v671
                %v673 = vld [vmem:[%s253 + $0x18d0] sm:$0xff]
                %674 = vst [vmem:[%s254 + $0x688] sm:$0xff] %v673
                %v675 = vld [vmem:[%s253 + $0x1a40] sm:$0xff]
                %676 = vst [vmem:[%s254 + $0x690] sm:$0xff] %v675
                %v677 = vld [vmem:[%s253 + $0x1a48] sm:$0xff]
                %678 = vst [vmem:[%s254 + $0x698] sm:$0xff] %v677
                %v679 = vld [vmem:[%s253 + $0x1a50] sm:$0xff]
                %680 = vst [vmem:[%s254 + $0x6a0] sm:$0xff] %v679
                %v681 = vld [vmem:[%s253 + $0x1a58] sm:$0xff]
                %682 = vst [vmem:[%s254 + $0x6a8] sm:$0xff] %v681
                %v683 = vld [vmem:[%s253 + $0x1a60] sm:$0xff]
                %684 = vst [vmem:[%s254 + $0x6b0] sm:$0xff] %v683
                %v685 = vld [vmem:[%s253 + $0x1a68] sm:$0xff]
                %686 = vst [vmem:[%s254 + $0x6b8] sm:$0xff] %v685
                %v687 = vld [vmem:[%s253 + $0x1a70] sm:$0xff]
                %688 = vst [vmem:[%s254 + $0x6c0] sm:$0xff] %v687
                %v689 = vld [vmem:[%s253 + $0x1a78] sm:$0xff]
                %690 = vst [vmem:[%s254 + $0x6c8] sm:$0xff] %v689
                %v691 = vld [vmem:[%s253 + $0x1a80] sm:$0xff]
                %692 = vst [vmem:[%s254 + $0x6d0] sm:$0xff] %v691
                %v693 = vld [vmem:[%s253 + $0x1a88] sm:$0xff]
                %694 = vst [vmem:[%s254 + $0x6d8] sm:$0xff] %v693
                %v695 = vld [vmem:[%s253 + $0x1a90] sm:$0xff]
                %696 = vst [vmem:[%s254 + $0x6e0] sm:$0xff] %v695
                %v697 = vld [vmem:[%s253 + $0x1a98] sm:$0xff]
                %698 = vst [vmem:[%s254 + $0x6e8] sm:$0xff] %v697
                %v699 = vld [vmem:[%s253 + $0x1aa0] sm:$0xff]
                %700 = vst [vmem:[%s254 + $0x6f0] sm:$0xff] %v699
                %v701 = vld [vmem:[%s253 + $0x1aa8] sm:$0xff]
                %702 = vst [vmem:[%s254 + $0x6f8] sm:$0xff] %v701
                %v703 = vld [vmem:[%s253 + $0x1ab0] sm:$0xff]
                %704 = vst [vmem:[%s254 + $0x700] sm:$0xff] %v703
                %v705 = vld [vmem:[%s253 + $0x1c20] sm:$0xff]
                %706 = vst [vmem:[%s254 + $0x708] sm:$0xff] %v705
                %v707 = vld [vmem:[%s253 + $0x1c28] sm:$0xff]
                %708 = vst [vmem:[%s254 + $0x710] sm:$0xff] %v707
                %v709 = vld [vmem:[%s253 + $0x1c30] sm:$0xff]
                %710 = vst [vmem:[%s254 + $0x718] sm:$0xff] %v709
                %v711 = vld [vmem:[%s253 + $0x1c38] sm:$0xff]
                %712 = vst [vmem:[%s254 + $0x720] sm:$0xff] %v711
                %v713 = vld [vmem:[%s253 + $0x1c40] sm:$0xff]
                %714 = vst [vmem:[%s254 + $0x728] sm:$0xff] %v713
                %v715 = vld [vmem:[%s253 + $0x1c48] sm:$0xff]
                %716 = vst [vmem:[%s254 + $0x730] sm:$0xff] %v715
                %v717 = vld [vmem:[%s253 + $0x1c50] sm:$0xff]
                %718 = vst [vmem:[%s254 + $0x738] sm:$0xff] %v717
                %v719 = vld [vmem:[%s253 + $0x1c58] sm:$0xff]
                %720 = vst [vmem:[%s254 + $0x740] sm:$0xff] %v719
                %v721 = vld [vmem:[%s253 + $0x1c60] sm:$0xff]
                %722 = vst [vmem:[%s254 + $0x748] sm:$0xff] %v721
                %v723 = vld [vmem:[%s253 + $0x1c68] sm:$0xff]
                %724 = vst [vmem:[%s254 + $0x750] sm:$0xff] %v723
                %v725 = vld [vmem:[%s253 + $0x1c70] sm:$0xff]
                %726 = vst [vmem:[%s254 + $0x758] sm:$0xff] %v725
                %v727 = vld [vmem:[%s253 + $0x1c78] sm:$0xff]
                %728 = vst [vmem:[%s254 + $0x760] sm:$0xff] %v727
                %v729 = vld [vmem:[%s253 + $0x1c80] sm:$0xff]
                %730 = vst [vmem:[%s254 + $0x768] sm:$0xff] %v729
                %v731 = vld [vmem:[%s253 + $0x1c88] sm:$0xff]
                %732 = vst [vmem:[%s254 + $0x770] sm:$0xff] %v731
                %v733 = vld [vmem:[%s253 + $0x1c90] sm:$0xff]
                %734 = vst [vmem:[%s254 + $0x778] sm:$0xff] %v733
                %v735 = vld [vmem:[%s253 + $0x1e00] sm:$0xff]
                %736 = vst [vmem:[%s254 + $0x780] sm:$0xff] %v735
                %v737 = vld [vmem:[%s253 + $0x1e08] sm:$0xff]
                %738 = vst [vmem:[%s254 + $0x788] sm:$0xff] %v737
                %v739 = vld [vmem:[%s253 + $0x1e10] sm:$0xff]
                %740 = vst [vmem:[%s254 + $0x790] sm:$0xff] %v739
                %v741 = vld [vmem:[%s253 + $0x1e18] sm:$0xff]
                %742 = vst [vmem:[%s254 + $0x798] sm:$0xff] %v741
                %v743 = vld [vmem:[%s253 + $0x1e20] sm:$0xff]
                %744 = vst [vmem:[%s254 + $0x7a0] sm:$0xff] %v743
                %v745 = vld [vmem:[%s253 + $0x1e28] sm:$0xff]
                %746 = vst [vmem:[%s254 + $0x7a8] sm:$0xff] %v745
                %v747 = vld [vmem:[%s253 + $0x1e30] sm:$0xff]
                %748 = vst [vmem:[%s254 + $0x7b0] sm:$0xff] %v747
                %v749 = vld [vmem:[%s253 + $0x1e38] sm:$0xff]
                %750 = vst [vmem:[%s254 + $0x7b8] sm:$0xff] %v749
                %v751 = vld [vmem:[%s253 + $0x1e40] sm:$0xff]
                %752 = vst [vmem:[%s254 + $0x7c0] sm:$0xff] %v751
                %v753 = vld [vmem:[%s253 + $0x1e48] sm:$0xff]
                %754 = vst [vmem:[%s254 + $0x7c8] sm:$0xff] %v753
                %v755 = vld [vmem:[%s253 + $0x1e50] sm:$0xff]
                %756 = vst [vmem:[%s254 + $0x7d0] sm:$0xff] %v755
                %v757 = vld [vmem:[%s253 + $0x1e58] sm:$0xff]
                %758 = vst [vmem:[%s254 + $0x7d8] sm:$0xff] %v757
                %v759 = vld [vmem:[%s253 + $0x1e60] sm:$0xff]
                %760 = vst [vmem:[%s254 + $0x7e0] sm:$0xff] %v759
                %v761 = vld [vmem:[%s253 + $0x1e68] sm:$0xff]
                %762 = vst [vmem:[%s254 + $0x7e8] sm:$0xff] %v761
                %v763 = vld [vmem:[%s253 + $0x1e70] sm:$0xff]
                %764 = vst [vmem:[%s254 + $0x7f0] sm:$0xff] %v763
                %v765 = vld [vmem:[%s253 + $0x1fe0] sm:$0xff]
                %766 = vst [vmem:[%s254 + $0x7f8] sm:$0xff] %v765
                %v767 = vld [vmem:[%s253 + $0x1fe8] sm:$0xff]
                %768 = vst [vmem:[%s254 + $0x800] sm:$0xff] %v767
                %v769 = vld [vmem:[%s253 + $0x1ff0] sm:$0xff]
                %770 = vst [vmem:[%s254 + $0x808] sm:$0xff] %v769
                %v771 = vld [vmem:[%s253 + $0x1ff8] sm:$0xff]
                %772 = vst [vmem:[%s254 + $0x810] sm:$0xff] %v771
                %v773 = vld [vmem:[%s253 + $0x2000] sm:$0xff]
                %774 = vst [vmem:[%s254 + $0x818] sm:$0xff] %v773
                %v775 = vld [vmem:[%s253 + $0x2008] sm:$0xff]
                %776 = vst [vmem:[%s254 + $0x820] sm:$0xff] %v775
                %v777 = vld [vmem:[%s253 + $0x2010] sm:$0xff]
                %778 = vst [vmem:[%s254 + $0x828] sm:$0xff] %v777
                %v779 = vld [vmem:[%s253 + $0x2018] sm:$0xff]
                %780 = vst [vmem:[%s254 + $0x830] sm:$0xff] %v779
                %v781 = vld [vmem:[%s253 + $0x2020] sm:$0xff]
                %782 = vst [vmem:[%s254 + $0x838] sm:$0xff] %v781
                %v783 = vld [vmem:[%s253 + $0x2028] sm:$0xff]
                %784 = vst [vmem:[%s254 + $0x840] sm:$0xff] %v783
                %v785 = vld [vmem:[%s253 + $0x2030] sm:$0xff]
                %786 = vst [vmem:[%s254 + $0x848] sm:$0xff] %v785
                %v787 = vld [vmem:[%s253 + $0x2038] sm:$0xff]
                %788 = vst [vmem:[%s254 + $0x850] sm:$0xff] %v787
                %v789 = vld [vmem:[%s253 + $0x2040] sm:$0xff]
                %790 = vst [vmem:[%s254 + $0x858] sm:$0xff] %v789
                %v791 = vld [vmem:[%s253 + $0x2048] sm:$0xff]
                %792 = vst [vmem:[%s254 + $0x860] sm:$0xff] %v791
                %v793 = vld [vmem:[%s253 + $0x2050] sm:$0xff]
                %794 = vst [vmem:[%s254 + $0x868] sm:$0xff] %v793
                %v795 = vld [vmem:[%s253 + $0x21c0] sm:$0xff]
                %796 = vst [vmem:[%s254 + $0x870] sm:$0xff] %v795
                %v797 = vld [vmem:[%s253 + $0x21c8] sm:$0xff]
                %798 = vst [vmem:[%s254 + $0x878] sm:$0xff] %v797
                %v799 = vld [vmem:[%s253 + $0x21d0] sm:$0xff]
                %800 = vst [vmem:[%s254 + $0x880] sm:$0xff] %v799
                %v801 = vld [vmem:[%s253 + $0x21d8] sm:$0xff]
                %802 = vst [vmem:[%s254 + $0x888] sm:$0xff] %v801
                %v803 = vld [vmem:[%s253 + $0x21e0] sm:$0xff]
                %804 = vst [vmem:[%s254 + $0x890] sm:$0xff] %v803
                %v805 = vld [vmem:[%s253 + $0x21e8] sm:$0xff]
                %806 = vst [vmem:[%s254 + $0x898] sm:$0xff] %v805
                %v807 = vld [vmem:[%s253 + $0x21f0] sm:$0xff]
                %808 = vst [vmem:[%s254 + $0x8a0] sm:$0xff] %v807
                %v809 = vld [vmem:[%s253 + $0x21f8] sm:$0xff]
                %810 = vst [vmem:[%s254 + $0x8a8] sm:$0xff] %v809
                %v811 = vld [vmem:[%s253 + $0x2200] sm:$0xff]
                %812 = vst [vmem:[%s254 + $0x8b0] sm:$0xff] %v811
                %v813 = vld [vmem:[%s253 + $0x2208] sm:$0xff]
                %814 = vst [vmem:[%s254 + $0x8b8] sm:$0xff] %v813
                %v815 = vld [vmem:[%s253 + $0x2210] sm:$0xff]
                %816 = vst [vmem:[%s254 + $0x8c0] sm:$0xff] %v815
                %v817 = vld [vmem:[%s253 + $0x2218] sm:$0xff]
                %818 = vst [vmem:[%s254 + $0x8c8] sm:$0xff] %v817
                %v819 = vld [vmem:[%s253 + $0x2220] sm:$0xff]
                %820 = vst [vmem:[%s254 + $0x8d0] sm:$0xff] %v819
                %v821 = vld [vmem:[%s253 + $0x2228] sm:$0xff]
                %822 = vst [vmem:[%s254 + $0x8d8] sm:$0xff] %v821
                %v823 = vld [vmem:[%s253 + $0x2230] sm:$0xff]
                %824 = vst [vmem:[%s254 + $0x8e0] sm:$0xff] %v823
                %v825 = vld [vmem:[%s253 + $0x23a0] sm:$0xff]
                %826 = vst [vmem:[%s254 + $0x8e8] sm:$0xff] %v825
                %v827 = vld [vmem:[%s253 + $0x23a8] sm:$0xff]
                %828 = vst [vmem:[%s254 + $0x8f0] sm:$0xff] %v827
                %v829 = vld [vmem:[%s253 + $0x23b0] sm:$0xff]
                %830 = vst [vmem:[%s254 + $0x8f8] sm:$0xff] %v829
                %v831 = vld [vmem:[%s253 + $0x23b8] sm:$0xff]
                %832 = vst [vmem:[%s254 + $0x900] sm:$0xff] %v831
                %v833 = vld [vmem:[%s253 + $0x23c0] sm:$0xff]
                %834 = vst [vmem:[%s254 + $0x908] sm:$0xff] %v833
                %v835 = vld [vmem:[%s253 + $0x23c8] sm:$0xff]
                %836 = vst [vmem:[%s254 + $0x910] sm:$0xff] %v835
                %v837 = vld [vmem:[%s253 + $0x23d0] sm:$0xff]
                %838 = vst [vmem:[%s254 + $0x918] sm:$0xff] %v837
                %v839 = vld [vmem:[%s253 + $0x23d8] sm:$0xff]
                %840 = vst [vmem:[%s254 + $0x920] sm:$0xff] %v839
                %v841 = vld [vmem:[%s253 + $0x23e0] sm:$0xff]
                %842 = vst [vmem:[%s254 + $0x928] sm:$0xff] %v841
                %v843 = vld [vmem:[%s253 + $0x23e8] sm:$0xff]
                %844 = vst [vmem:[%s254 + $0x930] sm:$0xff] %v843
                %v845 = vld [vmem:[%s253 + $0x23f0] sm:$0xff]
                %846 = vst [vmem:[%s254 + $0x938] sm:$0xff] %v845
                %v847 = vld [vmem:[%s253 + $0x23f8] sm:$0xff]
                %848 = vst [vmem:[%s254 + $0x940] sm:$0xff] %v847
                %v849 = vld [vmem:[%s253 + $0x2400] sm:$0xff]
                %850 = vst [vmem:[%s254 + $0x948] sm:$0xff] %v849
                %v851 = vld [vmem:[%s253 + $0x2408] sm:$0xff]
                %852 = vst [vmem:[%s254 + $0x950] sm:$0xff] %v851
                %v853 = vld [vmem:[%s253 + $0x2410] sm:$0xff]
                %854 = vst [vmem:[%s254 + $0x958] sm:$0xff] %v853
                %v855 = vld [vmem:[%s253 + $0x2580] sm:$0xff]
                %856 = vst [vmem:[%s254 + $0x960] sm:$0xff] %v855
                %v857 = vld [vmem:[%s253 + $0x2588] sm:$0xff]
                %858 = vst [vmem:[%s254 + $0x968] sm:$0xff] %v857
                %v859 = vld [vmem:[%s253 + $0x2590] sm:$0xff]
                %860 = vst [vmem:[%s254 + $0x970] sm:$0xff] %v859
                %v861 = vld [vmem:[%s253 + $0x2598] sm:$0xff]
                %862 = vst [vmem:[%s254 + $0x978] sm:$0xff] %v861
                %v863 = vld [vmem:[%s253 + $0x25a0] sm:$0xff]
                %864 = vst [vmem:[%s254 + $0x980] sm:$0xff] %v863
                %v865 = vld [vmem:[%s253 + $0x25a8] sm:$0xff]
                %866 = vst [vmem:[%s254 + $0x988] sm:$0xff] %v865
                %v867 = vld [vmem:[%s253 + $0x25b0] sm:$0xff]
                %868 = vst [vmem:[%s254 + $0x990] sm:$0xff] %v867
                %v869 = vld [vmem:[%s253 + $0x25b8] sm:$0xff]
                %870 = vst [vmem:[%s254 + $0x998] sm:$0xff] %v869
                %v871 = vld [vmem:[%s253 + $0x25c0] sm:$0xff]
                %872 = vst [vmem:[%s254 + $0x9a0] sm:$0xff] %v871
                %v873 = vld [vmem:[%s253 + $0x25c8] sm:$0xff]
                %874 = vst [vmem:[%s254 + $0x9a8] sm:$0xff] %v873
                %v875 = vld [vmem:[%s253 + $0x25d0] sm:$0xff]
                %876 = vst [vmem:[%s254 + $0x9b0] sm:$0xff] %v875
                %v877 = vld [vmem:[%s253 + $0x25d8] sm:$0xff]
                %878 = vst [vmem:[%s254 + $0x9b8] sm:$0xff] %v877
                %v879 = vld [vmem:[%s253 + $0x25e0] sm:$0xff]
                %880 = vst [vmem:[%s254 + $0x9c0] sm:$0xff] %v879
                %v881 = vld [vmem:[%s253 + $0x25e8] sm:$0xff]
                %882 = vst [vmem:[%s254 + $0x9c8] sm:$0xff] %v881
                %v883 = vld [vmem:[%s253 + $0x25f0] sm:$0xff]
                %884 = vst [vmem:[%s254 + $0x9d0] sm:$0xff] %v883
                %v885 = vld [vmem:[%s253 + $0x2760] sm:$0xff]
                %886 = vst [vmem:[%s254 + $0x9d8] sm:$0xff] %v885
                %v887 = vld [vmem:[%s253 + $0x2768] sm:$0xff]
                %888 = vst [vmem:[%s254 + $0x9e0] sm:$0xff] %v887
                %v889 = vld [vmem:[%s253 + $0x2770] sm:$0xff]
                %890 = vst [vmem:[%s254 + $0x9e8] sm:$0xff] %v889
                %v891 = vld [vmem:[%s253 + $0x2778] sm:$0xff]
                %892 = vst [vmem:[%s254 + $0x9f0] sm:$0xff] %v891
                %v893 = vld [vmem:[%s253 + $0x2780] sm:$0xff]
                %894 = vst [vmem:[%s254 + $0x9f8] sm:$0xff] %v893
                %v895 = vld [vmem:[%s253 + $0x2788] sm:$0xff]
                %896 = vst [vmem:[%s254 + $0xa00] sm:$0xff] %v895
                %v897 = vld [vmem:[%s253 + $0x2790] sm:$0xff]
                %898 = vst [vmem:[%s254 + $0xa08] sm:$0xff] %v897
                %v899 = vld [vmem:[%s253 + $0x2798] sm:$0xff]
                %900 = vst [vmem:[%s254 + $0xa10] sm:$0xff] %v899
                %v901 = vld [vmem:[%s253 + $0x27a0] sm:$0xff]
                %902 = vst [vmem:[%s254 + $0xa18] sm:$0xff] %v901
                %v903 = vld [vmem:[%s253 + $0x27a8] sm:$0xff]
                %904 = vst [vmem:[%s254 + $0xa20] sm:$0xff] %v903
                %v905 = vld [vmem:[%s253 + $0x27b0] sm:$0xff]
                %906 = vst [vmem:[%s254 + $0xa28] sm:$0xff] %v905
                %v907 = vld [vmem:[%s253 + $0x27b8] sm:$0xff]
                %908 = vst [vmem:[%s254 + $0xa30] sm:$0xff] %v907
                %v909 = vld [vmem:[%s253 + $0x27c0] sm:$0xff]
                %910 = vst [vmem:[%s254 + $0xa38] sm:$0xff] %v909
                %v911 = vld [vmem:[%s253 + $0x27c8] sm:$0xff]
                %912 = vst [vmem:[%s254 + $0xa40] sm:$0xff] %v911
                %v913 = vld [vmem:[%s253 + $0x27d0] sm:$0xff]
                %914 = vst [vmem:[%s254 + $0xa48] sm:$0xff] %v913
                %v915 = vld [vmem:[%s253 + $0x2940] sm:$0xff]
                %916 = vst [vmem:[%s254 + $0xa50] sm:$0xff] %v915
                %v917 = vld [vmem:[%s253 + $0x2948] sm:$0xff]
                %918 = vst [vmem:[%s254 + $0xa58] sm:$0xff] %v917
                %v919 = vld [vmem:[%s253 + $0x2950] sm:$0xff]
                %920 = vst [vmem:[%s254 + $0xa60] sm:$0xff] %v919
                %v921 = vld [vmem:[%s253 + $0x2958] sm:$0xff]
                %922 = vst [vmem:[%s254 + $0xa68] sm:$0xff] %v921
                %v923 = vld [vmem:[%s253 + $0x2960] sm:$0xff]
                %924 = vst [vmem:[%s254 + $0xa70] sm:$0xff] %v923
                %v925 = vld [vmem:[%s253 + $0x2968] sm:$0xff]
                %926 = vst [vmem:[%s254 + $0xa78] sm:$0xff] %v925
                %v927 = vld [vmem:[%s253 + $0x2970] sm:$0xff]
                %928 = vst [vmem:[%s254 + $0xa80] sm:$0xff] %v927
                %v929 = vld [vmem:[%s253 + $0x2978] sm:$0xff]
                %930 = vst [vmem:[%s254 + $0xa88] sm:$0xff] %v929
                %v931 = vld [vmem:[%s253 + $0x2980] sm:$0xff]
                %932 = vst [vmem:[%s254 + $0xa90] sm:$0xff] %v931
                %v933 = vld [vmem:[%s253 + $0x2988] sm:$0xff]
                %934 = vst [vmem:[%s254 + $0xa98] sm:$0xff] %v933
                %v935 = vld [vmem:[%s253 + $0x2990] sm:$0xff]
                %936 = vst [vmem:[%s254 + $0xaa0] sm:$0xff] %v935
                %v937 = vld [vmem:[%s253 + $0x2998] sm:$0xff]
                %938 = vst [vmem:[%s254 + $0xaa8] sm:$0xff] %v937
                %v939 = vld [vmem:[%s253 + $0x29a0] sm:$0xff]
                %940 = vst [vmem:[%s254 + $0xab0] sm:$0xff] %v939
                %v941 = vld [vmem:[%s253 + $0x29a8] sm:$0xff]
                %942 = vst [vmem:[%s254 + $0xab8] sm:$0xff] %v941
                %v943 = vld [vmem:[%s253 + $0x29b0] sm:$0xff]
                %944 = vst [vmem:[%s254 + $0xac0] sm:$0xff] %v943
                %v945 = vld [vmem:[%s253 + $0x2b20] sm:$0xff]
                %946 = vst [vmem:[%s254 + $0xac8] sm:$0xff] %v945
                %v947 = vld [vmem:[%s253 + $0x2b28] sm:$0xff]
                %948 = vst [vmem:[%s254 + $0xad0] sm:$0xff] %v947
                %v949 = vld [vmem:[%s253 + $0x2b30] sm:$0xff]
                %950 = vst [vmem:[%s254 + $0xad8] sm:$0xff] %v949
                %v951 = vld [vmem:[%s253 + $0x2b38] sm:$0xff]
                %952 = vst [vmem:[%s254 + $0xae0] sm:$0xff] %v951
                %v953 = vld [vmem:[%s253 + $0x2b40] sm:$0xff]
                %954 = vst [vmem:[%s254 + $0xae8] sm:$0xff] %v953
                %v955 = vld [vmem:[%s253 + $0x2b48] sm:$0xff]
                %956 = vst [vmem:[%s254 + $0xaf0] sm:$0xff] %v955
                %v957 = vld [vmem:[%s253 + $0x2b50] sm:$0xff]
                %958 = vst [vmem:[%s254 + $0xaf8] sm:$0xff] %v957
                %v959 = vld [vmem:[%s253 + $0x2b58] sm:$0xff]
                %960 = vst [vmem:[%s254 + $0xb00] sm:$0xff] %v959
                %v961 = vld [vmem:[%s253 + $0x2b60] sm:$0xff]
                %962 = vst [vmem:[%s254 + $0xb08] sm:$0xff] %v961
                %v963 = vld [vmem:[%s253 + $0x2b68] sm:$0xff]
                %964 = vst [vmem:[%s254 + $0xb10] sm:$0xff] %v963
                %v965 = vld [vmem:[%s253 + $0x2b70] sm:$0xff]
                %966 = vst [vmem:[%s254 + $0xb18] sm:$0xff] %v965
                %v967 = vld [vmem:[%s253 + $0x2b78] sm:$0xff]
                %968 = vst [vmem:[%s254 + $0xb20] sm:$0xff] %v967
                %v969 = vld [vmem:[%s253 + $0x2b80] sm:$0xff]
                %970 = vst [vmem:[%s254 + $0xb28] sm:$0xff] %v969
                %v971 = vld [vmem:[%s253 + $0x2b88] sm:$0xff]
                %972 = vst [vmem:[%s254 + $0xb30] sm:$0xff] %v971
                %v973 = vld [vmem:[%s253 + $0x2b90] sm:$0xff]
                %974 = vst [vmem:[%s254 + $0xb38] sm:$0xff] %v973
                %v975 = vld [vmem:[%s253 + $0x2d00] sm:$0xff]
                %976 = vst [vmem:[%s254 + $0xb40] sm:$0xff] %v975
                %v977 = vld [vmem:[%s253 + $0x2d08] sm:$0xff]
                %978 = vst [vmem:[%s254 + $0xb48] sm:$0xff] %v977
                %v979 = vld [vmem:[%s253 + $0x2d10] sm:$0xff]
                %980 = vst [vmem:[%s254 + $0xb50] sm:$0xff] %v979
                %v981 = vld [vmem:[%s253 + $0x2d18] sm:$0xff]
                %982 = vst [vmem:[%s254 + $0xb58] sm:$0xff] %v981
                %v983 = vld [vmem:[%s253 + $0x2d20] sm:$0xff]
                %984 = vst [vmem:[%s254 + $0xb60] sm:$0xff] %v983
                %v985 = vld [vmem:[%s253 + $0x2d28] sm:$0xff]
                %986 = vst [vmem:[%s254 + $0xb68] sm:$0xff] %v985
                %v987 = vld [vmem:[%s253 + $0x2d30] sm:$0xff]
                %988 = vst [vmem:[%s254 + $0xb70] sm:$0xff] %v987
                %v989 = vld [vmem:[%s253 + $0x2d38] sm:$0xff]
                %990 = vst [vmem:[%s254 + $0xb78] sm:$0xff] %v989
                %v991 = vld [vmem:[%s253 + $0x2d40] sm:$0xff]
                %992 = vst [vmem:[%s254 + $0xb80] sm:$0xff] %v991
                %v993 = vld [vmem:[%s253 + $0x2d48] sm:$0xff]
                %994 = vst [vmem:[%s254 + $0xb88] sm:$0xff] %v993
                %v995 = vld [vmem:[%s253 + $0x2d50] sm:$0xff]
                %996 = vst [vmem:[%s254 + $0xb90] sm:$0xff] %v995
                %v997 = vld [vmem:[%s253 + $0x2d58] sm:$0xff]
                %998 = vst [vmem:[%s254 + $0xb98] sm:$0xff] %v997
                %v999 = vld [vmem:[%s253 + $0x2d60] sm:$0xff]
                %1000 = vst [vmem:[%s254 + $0xba0] sm:$0xff] %v999
                %v1001 = vld [vmem:[%s253 + $0x2d68] sm:$0xff]
                %1002 = vst [vmem:[%s254 + $0xba8] sm:$0xff] %v1001
                %v1003 = vld [vmem:[%s253 + $0x2d70] sm:$0xff]
                %1004 = vst [vmem:[%s254 + $0xbb0] sm:$0xff] %v1003
                %v1005 = vld [vmem:[%s253 + $0x2ee0] sm:$0xff]
                %1006 = vst [vmem:[%s254 + $0xbb8] sm:$0xff] %v1005
                %v1007 = vld [vmem:[%s253 + $0x2ee8] sm:$0xff]
                %1008 = vst [vmem:[%s254 + $0xbc0] sm:$0xff] %v1007
                %v1009 = vld [vmem:[%s253 + $0x2ef0] sm:$0xff]
                %1010 = vst [vmem:[%s254 + $0xbc8] sm:$0xff] %v1009
                %v1011 = vld [vmem:[%s253 + $0x2ef8] sm:$0xff]
                %1012 = vst [vmem:[%s254 + $0xbd0] sm:$0xff] %v1011
                %v1013 = vld [vmem:[%s253 + $0x2f00] sm:$0xff]
                %1014 = vst [vmem:[%s254 + $0xbd8] sm:$0xff] %v1013
                %v1015 = vld [vmem:[%s253 + $0x2f08] sm:$0xff]
                %1016 = vst [vmem:[%s254 + $0xbe0] sm:$0xff] %v1015
                %v1017 = vld [vmem:[%s253 + $0x2f10] sm:$0xff]
                %1018 = vst [vmem:[%s254 + $0xbe8] sm:$0xff] %v1017
                %v1019 = vld [vmem:[%s253 + $0x2f18] sm:$0xff]
                %1020 = vst [vmem:[%s254 + $0xbf0] sm:$0xff] %v1019
                %v1021 = vld [vmem:[%s253 + $0x2f20] sm:$0xff]
                %1022 = vst [vmem:[%s254 + $0xbf8] sm:$0xff] %v1021
                %v1023 = vld [vmem:[%s253 + $0x2f28] sm:$0xff]
                %1024 = vst [vmem:[%s254 + $0xc00] sm:$0xff] %v1023
                %v1025 = vld [vmem:[%s253 + $0x2f30] sm:$0xff]
                %1026 = vst [vmem:[%s254 + $0xc08] sm:$0xff] %v1025
                %v1027 = vld [vmem:[%s253 + $0x2f38] sm:$0xff]
                %1028 = vst [vmem:[%s254 + $0xc10] sm:$0xff] %v1027
                %v1029 = vld [vmem:[%s253 + $0x2f40] sm:$0xff]
                %1030 = vst [vmem:[%s254 + $0xc18] sm:$0xff] %v1029
                %v1031 = vld [vmem:[%s253 + $0x2f48] sm:$0xff]
                %1032 = vst [vmem:[%s254 + $0xc20] sm:$0xff] %v1031
                %v1033 = vld [vmem:[%s253 + $0x2f50] sm:$0xff]
                %1034 = vst [vmem:[%s254 + $0xc28] sm:$0xff] %v1033
                %v1035 = vld [vmem:[%s253 + $0x30c0] sm:$0xff]
                %1036 = vst [vmem:[%s254 + $0xc30] sm:$0xff] %v1035
                %v1037 = vld [vmem:[%s253 + $0x30c8] sm:$0xff]
                %1038 = vst [vmem:[%s254 + $0xc38] sm:$0xff] %v1037
                %v1039 = vld [vmem:[%s253 + $0x30d0] sm:$0xff]
                %1040 = vst [vmem:[%s254 + $0xc40] sm:$0xff] %v1039
                %v1041 = vld [vmem:[%s253 + $0x30d8] sm:$0xff]
                %1042 = vst [vmem:[%s254 + $0xc48] sm:$0xff] %v1041
                %v1043 = vld [vmem:[%s253 + $0x30e0] sm:$0xff]
                %1044 = vst [vmem:[%s254 + $0xc50] sm:$0xff] %v1043
                %v1045 = vld [vmem:[%s253 + $0x30e8] sm:$0xff]
                %1046 = vst [vmem:[%s254 + $0xc58] sm:$0xff] %v1045
                %v1047 = vld [vmem:[%s253 + $0x30f0] sm:$0xff]
                %1048 = vst [vmem:[%s254 + $0xc60] sm:$0xff] %v1047
                %v1049 = vld [vmem:[%s253 + $0x30f8] sm:$0xff]
                %1050 = vst [vmem:[%s254 + $0xc68] sm:$0xff] %v1049
                %v1051 = vld [vmem:[%s253 + $0x3100] sm:$0xff]
                %1052 = vst [vmem:[%s254 + $0xc70] sm:$0xff] %v1051
                %v1053 = vld [vmem:[%s253 + $0x3108] sm:$0xff]
                %1054 = vst [vmem:[%s254 + $0xc78] sm:$0xff] %v1053
                %v1055 = vld [vmem:[%s253 + $0x3110] sm:$0xff]
                %1056 = vst [vmem:[%s254 + $0xc80] sm:$0xff] %v1055
                %v1057 = vld [vmem:[%s253 + $0x3118] sm:$0xff]
                %1058 = vst [vmem:[%s254 + $0xc88] sm:$0xff] %v1057
                %v1059 = vld [vmem:[%s253 + $0x3120] sm:$0xff]
                %1060 = vst [vmem:[%s254 + $0xc90] sm:$0xff] %v1059
                %v1061 = vld [vmem:[%s253 + $0x3128] sm:$0xff]
                %1062 = vst [vmem:[%s254 + $0xc98] sm:$0xff] %v1061
                %v1063 = vld [vmem:[%s253 + $0x3130] sm:$0xff]
                %1064 = vst [vmem:[%s254 + $0xca0] sm:$0xff] %v1063
                %v1065 = vld [vmem:[%s253 + $0x32a0] sm:$0xff]
                %1066 = vst [vmem:[%s254 + $0xca8] sm:$0xff] %v1065
                %v1067 = vld [vmem:[%s253 + $0x32a8] sm:$0xff]
                %1068 = vst [vmem:[%s254 + $0xcb0] sm:$0xff] %v1067
                %v1069 = vld [vmem:[%s253 + $0x32b0] sm:$0xff]
                %1070 = vst [vmem:[%s254 + $0xcb8] sm:$0xff] %v1069
                %v1071 = vld [vmem:[%s253 + $0x32b8] sm:$0xff]
                %1072 = vst [vmem:[%s254 + $0xcc0] sm:$0xff] %v1071
                %v1073 = vld [vmem:[%s253 + $0x32c0] sm:$0xff]
                %1074 = vst [vmem:[%s254 + $0xcc8] sm:$0xff] %v1073
                %v1075 = vld [vmem:[%s253 + $0x32c8] sm:$0xff]
                %1076 = vst [vmem:[%s254 + $0xcd0] sm:$0xff] %v1075
                %v1077 = vld [vmem:[%s253 + $0x32d0] sm:$0xff]
                %1078 = vst [vmem:[%s254 + $0xcd8] sm:$0xff] %v1077
                %v1079 = vld [vmem:[%s253 + $0x32d8] sm:$0xff]
                %1080 = vst [vmem:[%s254 + $0xce0] sm:$0xff] %v1079
                %v1081 = vld [vmem:[%s253 + $0x32e0] sm:$0xff]
                %1082 = vst [vmem:[%s254 + $0xce8] sm:$0xff] %v1081
                %v1083 = vld [vmem:[%s253 + $0x32e8] sm:$0xff]
                %1084 = vst [vmem:[%s254 + $0xcf0] sm:$0xff] %v1083
                %v1085 = vld [vmem:[%s253 + $0x32f0] sm:$0xff]
                %1086 = vst [vmem:[%s254 + $0xcf8] sm:$0xff] %v1085
                %v1087 = vld [vmem:[%s253 + $0x32f8] sm:$0xff]
                %1088 = vst [vmem:[%s254 + $0xd00] sm:$0xff] %v1087
                %v1089 = vld [vmem:[%s253 + $0x3300] sm:$0xff]
                %1090 = vst [vmem:[%s254 + $0xd08] sm:$0xff] %v1089
                %v1091 = vld [vmem:[%s253 + $0x3308] sm:$0xff]
                %1092 = vst [vmem:[%s254 + $0xd10] sm:$0xff] %v1091
                %v1093 = vld [vmem:[%s253 + $0x3310] sm:$0xff]
                %1094 = vst [vmem:[%s254 + $0xd18] sm:$0xff] %v1093
                %v1095 = vld [vmem:[%s253 + $0x3480] sm:$0xff]
                %1096 = vst [vmem:[%s254 + $0xd20] sm:$0xff] %v1095
                %v1097 = vld [vmem:[%s253 + $0x3488] sm:$0xff]
                %1098 = vst [vmem:[%s254 + $0xd28] sm:$0xff] %v1097
                %v1099 = vld [vmem:[%s253 + $0x3490] sm:$0xff]
                %1100 = vst [vmem:[%s254 + $0xd30] sm:$0xff] %v1099
                %v1101 = vld [vmem:[%s253 + $0x3498] sm:$0xff]
                %1102 = vst [vmem:[%s254 + $0xd38] sm:$0xff] %v1101
                %v1103 = vld [vmem:[%s253 + $0x34a0] sm:$0xff]
                %1104 = vst [vmem:[%s254 + $0xd40] sm:$0xff] %v1103
                %v1105 = vld [vmem:[%s253 + $0x34a8] sm:$0xff]
                %1106 = vst [vmem:[%s254 + $0xd48] sm:$0xff] %v1105
                %v1107 = vld [vmem:[%s253 + $0x34b0] sm:$0xff]
                %1108 = vst [vmem:[%s254 + $0xd50] sm:$0xff] %v1107
                %v1109 = vld [vmem:[%s253 + $0x34b8] sm:$0xff]
                %1110 = vst [vmem:[%s254 + $0xd58] sm:$0xff] %v1109
                %v1111 = vld [vmem:[%s253 + $0x34c0] sm:$0xff]
                %1112 = vst [vmem:[%s254 + $0xd60] sm:$0xff] %v1111
                %v1113 = vld [vmem:[%s253 + $0x34c8] sm:$0xff]
                %1114 = vst [vmem:[%s254 + $0xd68] sm:$0xff] %v1113
                %v1115 = vld [vmem:[%s253 + $0x34d0] sm:$0xff]
                %1116 = vst [vmem:[%s254 + $0xd70] sm:$0xff] %v1115
                %v1117 = vld [vmem:[%s253 + $0x34d8] sm:$0xff]
                %1118 = vst [vmem:[%s254 + $0xd78] sm:$0xff] %v1117
                %v1119 = vld [vmem:[%s253 + $0x34e0] sm:$0xff]
                %1120 = vst [vmem:[%s254 + $0xd80] sm:$0xff] %v1119
                %v1121 = vld [vmem:[%s253 + $0x34e8] sm:$0xff]
                %1122 = vst [vmem:[%s254 + $0xd88] sm:$0xff] %v1121
                %v1123 = vld [vmem:[%s253 + $0x34f0] sm:$0xff]
                %1124 = vst [vmem:[%s254 + $0xd90] sm:$0xff] %v1123
                %v1125 = vld [vmem:[%s253 + $0x3660] sm:$0xff]
                %1126 = vst [vmem:[%s254 + $0xd98] sm:$0xff] %v1125
                %v1127 = vld [vmem:[%s253 + $0x3668] sm:$0xff]
                %1128 = vst [vmem:[%s254 + $0xda0] sm:$0xff] %v1127
                %v1129 = vld [vmem:[%s253 + $0x3670] sm:$0xff]
                %1130 = vst [vmem:[%s254 + $0xda8] sm:$0xff] %v1129
                %v1131 = vld [vmem:[%s253 + $0x3678] sm:$0xff]
                %1132 = vst [vmem:[%s254 + $0xdb0] sm:$0xff] %v1131
                %v1133 = vld [vmem:[%s253 + $0x3680] sm:$0xff]
                %1134 = vst [vmem:[%s254 + $0xdb8] sm:$0xff] %v1133
                %v1135 = vld [vmem:[%s253 + $0x3688] sm:$0xff]
                %1136 = vst [vmem:[%s254 + $0xdc0] sm:$0xff] %v1135
                %v1137 = vld [vmem:[%s253 + $0x3690] sm:$0xff]
                %1138 = vst [vmem:[%s254 + $0xdc8] sm:$0xff] %v1137
                %v1139 = vld [vmem:[%s253 + $0x3698] sm:$0xff]
                %1140 = vst [vmem:[%s254 + $0xdd0] sm:$0xff] %v1139
                %v1141 = vld [vmem:[%s253 + $0x36a0] sm:$0xff]
                %1142 = vst [vmem:[%s254 + $0xdd8] sm:$0xff] %v1141
                %v1143 = vld [vmem:[%s253 + $0x36a8] sm:$0xff]
                %1144 = vst [vmem:[%s254 + $0xde0] sm:$0xff] %v1143
                %v1145 = vld [vmem:[%s253 + $0x36b0] sm:$0xff]
                %1146 = vst [vmem:[%s254 + $0xde8] sm:$0xff] %v1145
                %v1147 = vld [vmem:[%s253 + $0x36b8] sm:$0xff]
                %1148 = vst [vmem:[%s254 + $0xdf0] sm:$0xff] %v1147
                %v1149 = vld [vmem:[%s253 + $0x36c0] sm:$0xff]
                %1150 = vst [vmem:[%s254 + $0xdf8] sm:$0xff] %v1149
                %v1151 = vld [vmem:[%s253 + $0x36c8] sm:$0xff]
                %1152 = vst [vmem:[%s254 + $0xe00] sm:$0xff] %v1151
                %v1153 = vld [vmem:[%s253 + $0x36d0] sm:$0xff]
                %1154 = vst [vmem:[%s254 + $0xe08] sm:$0xff] %v1153
                %v1155 = vld [vmem:[%s253 + $0x3840] sm:$0xff]
                %1156 = vst [vmem:[%s254 + $0xe10] sm:$0xff] %v1155
                %v1157 = vld [vmem:[%s253 + $0x3848] sm:$0xff]
                %1158 = vst [vmem:[%s254 + $0xe18] sm:$0xff] %v1157
                %v1159 = vld [vmem:[%s253 + $0x3850] sm:$0xff]
                %1160 = vst [vmem:[%s254 + $0xe20] sm:$0xff] %v1159
                %v1161 = vld [vmem:[%s253 + $0x3858] sm:$0xff]
                %1162 = vst [vmem:[%s254 + $0xe28] sm:$0xff] %v1161
                %v1163 = vld [vmem:[%s253 + $0x3860] sm:$0xff]
                %1164 = vst [vmem:[%s254 + $0xe30] sm:$0xff] %v1163
                %v1165 = vld [vmem:[%s253 + $0x3868] sm:$0xff]
                %1166 = vst [vmem:[%s254 + $0xe38] sm:$0xff] %v1165
                %v1167 = vld [vmem:[%s253 + $0x3870] sm:$0xff]
                %1168 = vst [vmem:[%s254 + $0xe40] sm:$0xff] %v1167
                %v1169 = vld [vmem:[%s253 + $0x3878] sm:$0xff]
                %1170 = vst [vmem:[%s254 + $0xe48] sm:$0xff] %v1169
                %v1171 = vld [vmem:[%s253 + $0x3880] sm:$0xff]
                %1172 = vst [vmem:[%s254 + $0xe50] sm:$0xff] %v1171
                %v1173 = vld [vmem:[%s253 + $0x3888] sm:$0xff]
                %1174 = vst [vmem:[%s254 + $0xe58] sm:$0xff] %v1173
                %v1175 = vld [vmem:[%s253 + $0x3890] sm:$0xff]
                %1176 = vst [vmem:[%s254 + $0xe60] sm:$0xff] %v1175
                %v1177 = vld [vmem:[%s253 + $0x3898] sm:$0xff]
                %1178 = vst [vmem:[%s254 + $0xe68] sm:$0xff] %v1177
                %v1179 = vld [vmem:[%s253 + $0x38a0] sm:$0xff]
                %1180 = vst [vmem:[%s254 + $0xe70] sm:$0xff] %v1179
                %v1181 = vld [vmem:[%s253 + $0x38a8] sm:$0xff]
                %1182 = vst [vmem:[%s254 + $0xe78] sm:$0xff] %v1181
                %v1183 = vld [vmem:[%s253 + $0x38b0] sm:$0xff]
                %1184 = vst [vmem:[%s254 + $0xe80] sm:$0xff] %v1183
                %v1185 = vld [vmem:[%s253 + $0x3a20] sm:$0xff]
                %1186 = vst [vmem:[%s254 + $0xe88] sm:$0xff] %v1185
                %v1187 = vld [vmem:[%s253 + $0x3a28] sm:$0xff]
                %1188 = vst [vmem:[%s254 + $0xe90] sm:$0xff] %v1187
                %v1189 = vld [vmem:[%s253 + $0x3a30] sm:$0xff]
                %1190 = vst [vmem:[%s254 + $0xe98] sm:$0xff] %v1189
                %v1191 = vld [vmem:[%s253 + $0x3a38] sm:$0xff]
                %1192 = vst [vmem:[%s254 + $0xea0] sm:$0xff] %v1191
                %v1193 = vld [vmem:[%s253 + $0x3a40] sm:$0xff]
                %1194 = vst [vmem:[%s254 + $0xea8] sm:$0xff] %v1193
                %v1195 = vld [vmem:[%s253 + $0x3a48] sm:$0xff]
                %1196 = vst [vmem:[%s254 + $0xeb0] sm:$0xff] %v1195
                %v1197 = vld [vmem:[%s253 + $0x3a50] sm:$0xff]
                %1198 = vst [vmem:[%s254 + $0xeb8] sm:$0xff] %v1197
                %v1199 = vld [vmem:[%s253 + $0x3a58] sm:$0xff]
                %1200 = vst [vmem:[%s254 + $0xec0] sm:$0xff] %v1199
                %v1201 = vld [vmem:[%s253 + $0x3a60] sm:$0xff]
                %1202 = vst [vmem:[%s254 + $0xec8] sm:$0xff] %v1201
                %v1203 = vld [vmem:[%s253 + $0x3a68] sm:$0xff]
                %1204 = vst [vmem:[%s254 + $0xed0] sm:$0xff] %v1203
                %v1205 = vld [vmem:[%s253 + $0x3a70] sm:$0xff]
                %1206 = vst [vmem:[%s254 + $0xed8] sm:$0xff] %v1205
                %v1207 = vld [vmem:[%s253 + $0x3a78] sm:$0xff]
                %1208 = vst [vmem:[%s254 + $0xee0] sm:$0xff] %v1207
                %v1209 = vld [vmem:[%s253 + $0x3a80] sm:$0xff]
                %1210 = vst [vmem:[%s254 + $0xee8] sm:$0xff] %v1209
                %v1211 = vld [vmem:[%s253 + $0x3a88] sm:$0xff]
                %1212 = vst [vmem:[%s254 + $0xef0] sm:$0xff] %v1211
                %v1213 = vld [vmem:[%s253 + $0x3a90] sm:$0xff]
                %1214 = vst [vmem:[%s254 + $0xef8] sm:$0xff] %v1213
                %v1215 = vld [vmem:[%s253 + $0x3c00] sm:$0xff]
                %1216 = vst [vmem:[%s254 + $0xf00] sm:$0xff] %v1215
                %v1217 = vld [vmem:[%s253 + $0x3c08] sm:$0xff]
                %1218 = vst [vmem:[%s254 + $0xf08] sm:$0xff] %v1217
                %v1219 = vld [vmem:[%s253 + $0x3c10] sm:$0xff]
                %1220 = vst [vmem:[%s254 + $0xf10] sm:$0xff] %v1219
                %v1221 = vld [vmem:[%s253 + $0x3c18] sm:$0xff]
                %1222 = vst [vmem:[%s254 + $0xf18] sm:$0xff] %v1221
                %v1223 = vld [vmem:[%s253 + $0x3c20] sm:$0xff]
                %1224 = vst [vmem:[%s254 + $0xf20] sm:$0xff] %v1223
                %v1225 = vld [vmem:[%s253 + $0x3c28] sm:$0xff]
                %1226 = vst [vmem:[%s254 + $0xf28] sm:$0xff] %v1225
                %v1227 = vld [vmem:[%s253 + $0x3c30] sm:$0xff]
                %1228 = vst [vmem:[%s254 + $0xf30] sm:$0xff] %v1227
                %v1229 = vld [vmem:[%s253 + $0x3c38] sm:$0xff]
                %1230 = vst [vmem:[%s254 + $0xf38] sm:$0xff] %v1229
                %v1231 = vld [vmem:[%s253 + $0x3c40] sm:$0xff]
                %1232 = vst [vmem:[%s254 + $0xf40] sm:$0xff] %v1231
                %v1233 = vld [vmem:[%s253 + $0x3c48] sm:$0xff]
                %1234 = vst [vmem:[%s254 + $0xf48] sm:$0xff] %v1233
                %v1235 = vld [vmem:[%s253 + $0x3c50] sm:$0xff]
                %1236 = vst [vmem:[%s254 + $0xf50] sm:$0xff] %v1235
                %v1237 = vld [vmem:[%s253 + $0x3c58] sm:$0xff]
                %1238 = vst [vmem:[%s254 + $0xf58] sm:$0xff] %v1237
                %v1239 = vld [vmem:[%s253 + $0x3c60] sm:$0xff]
                %1240 = vst [vmem:[%s254 + $0xf60] sm:$0xff] %v1239
                %v1241 = vld [vmem:[%s253 + $0x3c68] sm:$0xff]
                %1242 = vst [vmem:[%s254 + $0xf68] sm:$0xff] %v1241
                %v1243 = vld [vmem:[%s253 + $0x3c70] sm:$0xff]
                %1244 = vst [vmem:[%s254 + $0xf70] sm:$0xff] %v1243
                %v1245 = vld [vmem:[%s253 + $0x3de0] sm:$0xff]
                %1246 = vst [vmem:[%s254 + $0xf78] sm:$0xff] %v1245
                %v1247 = vld [vmem:[%s253 + $0x3de8] sm:$0xff]
                %1248 = vst [vmem:[%s254 + $0xf80] sm:$0xff] %v1247
                %v1249 = vld [vmem:[%s253 + $0x3df0] sm:$0xff]
                %1250 = vst [vmem:[%s254 + $0xf88] sm:$0xff] %v1249
                %v1251 = vld [vmem:[%s253 + $0x3df8] sm:$0xff]
                %1252 = vst [vmem:[%s254 + $0xf90] sm:$0xff] %v1251
                %v1253 = vld [vmem:[%s253 + $0x3e00] sm:$0xff]
                %1254 = vst [vmem:[%s254 + $0xf98] sm:$0xff] %v1253
                %v1255 = vld [vmem:[%s253 + $0x3e08] sm:$0xff]
                %1256 = vst [vmem:[%s254 + $0xfa0] sm:$0xff] %v1255
                %v1257 = vld [vmem:[%s253 + $0x3e10] sm:$0xff]
                %1258 = vst [vmem:[%s254 + $0xfa8] sm:$0xff] %v1257
                %v1259 = vld [vmem:[%s253 + $0x3e18] sm:$0xff]
                %1260 = vst [vmem:[%s254 + $0xfb0] sm:$0xff] %v1259
                %v1261 = vld [vmem:[%s253 + $0x3e20] sm:$0xff]
                %1262 = vst [vmem:[%s254 + $0xfb8] sm:$0xff] %v1261
                %v1263 = vld [vmem:[%s253 + $0x3e28] sm:$0xff]
                %1264 = vst [vmem:[%s254 + $0xfc0] sm:$0xff] %v1263
                %v1265 = vld [vmem:[%s253 + $0x3e30] sm:$0xff]
                %1266 = vst [vmem:[%s254 + $0xfc8] sm:$0xff] %v1265
                %v1267 = vld [vmem:[%s253 + $0x3e38] sm:$0xff]
                %1268 = vst [vmem:[%s254 + $0xfd0] sm:$0xff] %v1267
                %v1269 = vld [vmem:[%s253 + $0x3e40] sm:$0xff]
                %1270 = vst [vmem:[%s254 + $0xfd8] sm:$0xff] %v1269
                %v1271 = vld [vmem:[%s253 + $0x3e48] sm:$0xff]
                %1272 = vst [vmem:[%s254 + $0xfe0] sm:$0xff] %v1271
                %v1273 = vld [vmem:[%s253 + $0x3e50] sm:$0xff]
                %1274 = vst [vmem:[%s254 + $0xfe8] sm:$0xff] %v1273
                %v1275 = vld [vmem:[%s253 + $0x3fc0] sm:$0xff]
                %1276 = vst [vmem:[%s254 + $0xff0] sm:$0xff] %v1275
                %v1277 = vld [vmem:[%s253 + $0x3fc8] sm:$0xff]
                %1278 = vst [vmem:[%s254 + $0xff8] sm:$0xff] %v1277
                %v1279 = vld [vmem:[%s253 + $0x3fd0] sm:$0xff]
                %1280 = vst [vmem:[%s254 + $0x1000] sm:$0xff] %v1279
                %v1281 = vld [vmem:[%s253 + $0x3fd8] sm:$0xff]
                %1282 = vst [vmem:[%s254 + $0x1008] sm:$0xff] %v1281
                %v1283 = vld [vmem:[%s253 + $0x3fe0] sm:$0xff]
                %1284 = vst [vmem:[%s254 + $0x1010] sm:$0xff] %v1283
                %v1285 = vld [vmem:[%s253 + $0x3fe8] sm:$0xff]
                %1286 = vst [vmem:[%s254 + $0x1018] sm:$0xff] %v1285
                %v1287 = vld [vmem:[%s253 + $0x3ff0] sm:$0xff]
                %1288 = vst [vmem:[%s254 + $0x1020] sm:$0xff] %v1287
                %v1289 = vld [vmem:[%s253 + $0x3ff8] sm:$0xff]
                %1290 = vst [vmem:[%s254 + $0x1028] sm:$0xff] %v1289
                %v1291 = vld [vmem:[%s253 + $0x4000] sm:$0xff]
                %1292 = vst [vmem:[%s254 + $0x1030] sm:$0xff] %v1291
                %v1293 = vld [vmem:[%s253 + $0x4008] sm:$0xff]
                %1294 = vst [vmem:[%s254 + $0x1038] sm:$0xff] %v1293
                %v1295 = vld [vmem:[%s253 + $0x4010] sm:$0xff]
                %1296 = vst [vmem:[%s254 + $0x1040] sm:$0xff] %v1295
                %v1297 = vld [vmem:[%s253 + $0x4018] sm:$0xff]
                %1298 = vst [vmem:[%s254 + $0x1048] sm:$0xff] %v1297
                %v1299 = vld [vmem:[%s253 + $0x4020] sm:$0xff]
                %1300 = vst [vmem:[%s254 + $0x1050] sm:$0xff] %v1299
                %v1301 = vld [vmem:[%s253 + $0x4028] sm:$0xff]
                %1302 = vst [vmem:[%s254 + $0x1058] sm:$0xff] %v1301
                %v1303 = vld [vmem:[%s253 + $0x4030] sm:$0xff]
                %1304 = vst [vmem:[%s254 + $0x1060] sm:$0xff] %v1303
                %v1305 = vld [vmem:[%s253 + $0x41a0] sm:$0xff]
                %1306 = vst [vmem:[%s254 + $0x1068] sm:$0xff] %v1305
                %v1307 = vld [vmem:[%s253 + $0x41a8] sm:$0xff]
                %1308 = vst [vmem:[%s254 + $0x1070] sm:$0xff] %v1307
                %v1309 = vld [vmem:[%s253 + $0x41b0] sm:$0xff]
                %1310 = vst [vmem:[%s254 + $0x1078] sm:$0xff] %v1309
                %v1311 = vld [vmem:[%s253 + $0x41b8] sm:$0xff]
                %1312 = vst [vmem:[%s254 + $0x1080] sm:$0xff] %v1311
                %v1313 = vld [vmem:[%s253 + $0x41c0] sm:$0xff]
                %1314 = vst [vmem:[%s254 + $0x1088] sm:$0xff] %v1313
                %v1315 = vld [vmem:[%s253 + $0x41c8] sm:$0xff]
                %1316 = vst [vmem:[%s254 + $0x1090] sm:$0xff] %v1315
                %v1317 = vld [vmem:[%s253 + $0x41d0] sm:$0xff]
                %1318 = vst [vmem:[%s254 + $0x1098] sm:$0xff] %v1317
                %v1319 = vld [vmem:[%s253 + $0x41d8] sm:$0xff]
                %1320 = vst [vmem:[%s254 + $0x10a0] sm:$0xff] %v1319
                %v1321 = vld [vmem:[%s253 + $0x41e0] sm:$0xff]
                %1322 = vst [vmem:[%s254 + $0x10a8] sm:$0xff] %v1321
                %v1323 = vld [vmem:[%s253 + $0x41e8] sm:$0xff]
                %1324 = vst [vmem:[%s254 + $0x10b0] sm:$0xff] %v1323
                %v1325 = vld [vmem:[%s253 + $0x41f0] sm:$0xff]
                %1326 = vst [vmem:[%s254 + $0x10b8] sm:$0xff] %v1325
                %v1327 = vld [vmem:[%s253 + $0x41f8] sm:$0xff]
                %1328 = vst [vmem:[%s254 + $0x10c0] sm:$0xff] %v1327
                %v1329 = vld [vmem:[%s253 + $0x4200] sm:$0xff]
                %1330 = vst [vmem:[%s254 + $0x10c8] sm:$0xff] %v1329
                %v1331 = vld [vmem:[%s253 + $0x4208] sm:$0xff]
                %1332 = vst [vmem:[%s254 + $0x10d0] sm:$0xff] %v1331
                %v1333 = vld [vmem:[%s253 + $0x4210] sm:$0xff]
                %1334 = vst [vmem:[%s254 + $0x10d8] sm:$0xff] %v1333
                %v1335 = vld [vmem:[%s253 + $0x4380] sm:$0xff]
                %1336 = vst [vmem:[%s254 + $0x10e0] sm:$0xff] %v1335
                %v1337 = vld [vmem:[%s253 + $0x4388] sm:$0xff]
                %1338 = vst [vmem:[%s254 + $0x10e8] sm:$0xff] %v1337
                %v1339 = vld [vmem:[%s253 + $0x4390] sm:$0xff]
                %1340 = vst [vmem:[%s254 + $0x10f0] sm:$0xff] %v1339
                %v1341 = vld [vmem:[%s253 + $0x4398] sm:$0xff]
                %1342 = vst [vmem:[%s254 + $0x10f8] sm:$0xff] %v1341
                %v1343 = vld [vmem:[%s253 + $0x43a0] sm:$0xff]
                %1344 = vst [vmem:[%s254 + $0x1100] sm:$0xff] %v1343
                %v1345 = vld [vmem:[%s253 + $0x43a8] sm:$0xff]
                %1346 = vst [vmem:[%s254 + $0x1108] sm:$0xff] %v1345
                %v1347 = vld [vmem:[%s253 + $0x43b0] sm:$0xff]
                %1348 = vst [vmem:[%s254 + $0x1110] sm:$0xff] %v1347
                %v1349 = vld [vmem:[%s253 + $0x43b8] sm:$0xff]
                %1350 = vst [vmem:[%s254 + $0x1118] sm:$0xff] %v1349
                %v1351 = vld [vmem:[%s253 + $0x43c0] sm:$0xff]
                %1352 = vst [vmem:[%s254 + $0x1120] sm:$0xff] %v1351
                %v1353 = vld [vmem:[%s253 + $0x43c8] sm:$0xff]
                %1354 = vst [vmem:[%s254 + $0x1128] sm:$0xff] %v1353
                %v1355 = vld [vmem:[%s253 + $0x43d0] sm:$0xff]
                %1356 = vst [vmem:[%s254 + $0x1130] sm:$0xff] %v1355
                %v1357 = vld [vmem:[%s253 + $0x43d8] sm:$0xff]
                %1358 = vst [vmem:[%s254 + $0x1138] sm:$0xff] %v1357
                %v1359 = vld [vmem:[%s253 + $0x43e0] sm:$0xff]
                %1360 = vst [vmem:[%s254 + $0x1140] sm:$0xff] %v1359
                %v1361 = vld [vmem:[%s253 + $0x43e8] sm:$0xff]
                %1362 = vst [vmem:[%s254 + $0x1148] sm:$0xff] %v1361
                %v1363 = vld [vmem:[%s253 + $0x43f0] sm:$0xff]
                %1364 = vst [vmem:[%s254 + $0x1150] sm:$0xff] %v1363
                %v1365 = vld [vmem:[%s253 + $0x4560] sm:$0xff]
                %1366 = vst [vmem:[%s254 + $0x1158] sm:$0xff] %v1365
                %v1367 = vld [vmem:[%s253 + $0x4568] sm:$0xff]
                %1368 = vst [vmem:[%s254 + $0x1160] sm:$0xff] %v1367
                %v1369 = vld [vmem:[%s253 + $0x4570] sm:$0xff]
                %1370 = vst [vmem:[%s254 + $0x1168] sm:$0xff] %v1369
                %v1371 = vld [vmem:[%s253 + $0x4578] sm:$0xff]
                %1372 = vst [vmem:[%s254 + $0x1170] sm:$0xff] %v1371
                %v1373 = vld [vmem:[%s253 + $0x4580] sm:$0xff]
                %1374 = vst [vmem:[%s254 + $0x1178] sm:$0xff] %v1373
                %v1375 = vld [vmem:[%s253 + $0x4588] sm:$0xff]
                %1376 = vst [vmem:[%s254 + $0x1180] sm:$0xff] %v1375
                %v1377 = vld [vmem:[%s253 + $0x4590] sm:$0xff]
                %1378 = vst [vmem:[%s254 + $0x1188] sm:$0xff] %v1377
                %v1379 = vld [vmem:[%s253 + $0x4598] sm:$0xff]
                %1380 = vst [vmem:[%s254 + $0x1190] sm:$0xff] %v1379
                %v1381 = vld [vmem:[%s253 + $0x45a0] sm:$0xff]
                %1382 = vst [vmem:[%s254 + $0x1198] sm:$0xff] %v1381
                %v1383 = vld [vmem:[%s253 + $0x45a8] sm:$0xff]
                %1384 = vst [vmem:[%s254 + $0x11a0] sm:$0xff] %v1383
                %v1385 = vld [vmem:[%s253 + $0x45b0] sm:$0xff]
                %1386 = vst [vmem:[%s254 + $0x11a8] sm:$0xff] %v1385
                %v1387 = vld [vmem:[%s253 + $0x45b8] sm:$0xff]
                %1388 = vst [vmem:[%s254 + $0x11b0] sm:$0xff] %v1387
                %v1389 = vld [vmem:[%s253 + $0x45c0] sm:$0xff]
                %1390 = vst [vmem:[%s254 + $0x11b8] sm:$0xff] %v1389
                %v1391 = vld [vmem:[%s253 + $0x45c8] sm:$0xff]
                %1392 = vst [vmem:[%s254 + $0x11c0] sm:$0xff] %v1391
                %v1393 = vld [vmem:[%s253 + $0x45d0] sm:$0xff]
                %1394 = vst [vmem:[%s254 + $0x11c8] sm:$0xff] %v1393
                %v1395 = vld [vmem:[%s253 + $0x4740] sm:$0xff]
                %1396 = vst [vmem:[%s254 + $0x11d0] sm:$0xff] %v1395
                %v1397 = vld [vmem:[%s253 + $0x4748] sm:$0xff]
                %1398 = vst [vmem:[%s254 + $0x11d8] sm:$0xff] %v1397
                %v1399 = vld [vmem:[%s253 + $0x4750] sm:$0xff]
                %1400 = vst [vmem:[%s254 + $0x11e0] sm:$0xff] %v1399
                %v1401 = vld [vmem:[%s253 + $0x4758] sm:$0xff]
                %1402 = vst [vmem:[%s254 + $0x11e8] sm:$0xff] %v1401
                %v1403 = vld [vmem:[%s253 + $0x4760] sm:$0xff]
                %1404 = vst [vmem:[%s254 + $0x11f0] sm:$0xff] %v1403
                %v1405 = vld [vmem:[%s253 + $0x4768] sm:$0xff]
                %1406 = vst [vmem:[%s254 + $0x11f8] sm:$0xff] %v1405
                %v1407 = vld [vmem:[%s253 + $0x4770] sm:$0xff]
                %1408 = vst [vmem:[%s254 + $0x1200] sm:$0xff] %v1407
                %v1409 = vld [vmem:[%s253 + $0x4778] sm:$0xff]
                %1410 = vst [vmem:[%s254 + $0x1208] sm:$0xff] %v1409
                %v1411 = vld [vmem:[%s253 + $0x4780] sm:$0xff]
                %1412 = vst [vmem:[%s254 + $0x1210] sm:$0xff] %v1411
                %v1413 = vld [vmem:[%s253 + $0x4788] sm:$0xff]
                %1414 = vst [vmem:[%s254 + $0x1218] sm:$0xff] %v1413
                %v1415 = vld [vmem:[%s253 + $0x4790] sm:$0xff]
                %1416 = vst [vmem:[%s254 + $0x1220] sm:$0xff] %v1415
                %v1417 = vld [vmem:[%s253 + $0x4798] sm:$0xff]
                %1418 = vst [vmem:[%s254 + $0x1228] sm:$0xff] %v1417
                %v1419 = vld [vmem:[%s253 + $0x47a0] sm:$0xff]
                %1420 = vst [vmem:[%s254 + $0x1230] sm:$0xff] %v1419
                %v1421 = vld [vmem:[%s253 + $0x47a8] sm:$0xff]
                %1422 = vst [vmem:[%s254 + $0x1238] sm:$0xff] %v1421
                %v1423 = vld [vmem:[%s253 + $0x47b0] sm:$0xff]
                %1424 = vst [vmem:[%s254 + $0x1240] sm:$0xff] %v1423
                %v1425 = vld [vmem:[%s253 + $0x4920] sm:$0xff]
                %1426 = vst [vmem:[%s254 + $0x1248] sm:$0xff] %v1425
                %v1427 = vld [vmem:[%s253 + $0x4928] sm:$0xff]
                %1428 = vst [vmem:[%s254 + $0x1250] sm:$0xff] %v1427
                %v1429 = vld [vmem:[%s253 + $0x4930] sm:$0xff]
                %1430 = vst [vmem:[%s254 + $0x1258] sm:$0xff] %v1429
                %v1431 = vld [vmem:[%s253 + $0x4938] sm:$0xff]
                %1432 = vst [vmem:[%s254 + $0x1260] sm:$0xff] %v1431
                %v1433 = vld [vmem:[%s253 + $0x4940] sm:$0xff]
                %1434 = vst [vmem:[%s254 + $0x1268] sm:$0xff] %v1433
                %v1435 = vld [vmem:[%s253 + $0x4948] sm:$0xff]
                %1436 = vst [vmem:[%s254 + $0x1270] sm:$0xff] %v1435
                %v1437 = vld [vmem:[%s253 + $0x4950] sm:$0xff]
                %1438 = vst [vmem:[%s254 + $0x1278] sm:$0xff] %v1437
                %v1439 = vld [vmem:[%s253 + $0x4958] sm:$0xff]
                %1440 = vst [vmem:[%s254 + $0x1280] sm:$0xff] %v1439
                %v1441 = vld [vmem:[%s253 + $0x4960] sm:$0xff]
                %1442 = vst [vmem:[%s254 + $0x1288] sm:$0xff] %v1441
                %v1443 = vld [vmem:[%s253 + $0x4968] sm:$0xff]
                %1444 = vst [vmem:[%s254 + $0x1290] sm:$0xff] %v1443
                %v1445 = vld [vmem:[%s253 + $0x4970] sm:$0xff]
                %1446 = vst [vmem:[%s254 + $0x1298] sm:$0xff] %v1445
                %v1447 = vld [vmem:[%s253 + $0x4978] sm:$0xff]
                %1448 = vst [vmem:[%s254 + $0x12a0] sm:$0xff] %v1447
                %v1449 = vld [vmem:[%s253 + $0x4980] sm:$0xff]
                %1450 = vst [vmem:[%s254 + $0x12a8] sm:$0xff] %v1449
                %v1451 = vld [vmem:[%s253 + $0x4988] sm:$0xff]
                %1452 = vst [vmem:[%s254 + $0x12b0] sm:$0xff] %v1451
                %v1453 = vld [vmem:[%s253 + $0x4990] sm:$0xff]
                %1454 = vst [vmem:[%s254 + $0x12b8] sm:$0xff] %v1453
                %v1455 = vld [vmem:[%s253 + $0x4b00] sm:$0xff]
                %1456 = vst [vmem:[%s254 + $0x12c0] sm:$0xff] %v1455
                %v1457 = vld [vmem:[%s253 + $0x4b08] sm:$0xff]
                %1458 = vst [vmem:[%s254 + $0x12c8] sm:$0xff] %v1457
                %v1459 = vld [vmem:[%s253 + $0x4b10] sm:$0xff]
                %1460 = vst [vmem:[%s254 + $0x12d0] sm:$0xff] %v1459
                %v1461 = vld [vmem:[%s253 + $0x4b18] sm:$0xff]
                %1462 = vst [vmem:[%s254 + $0x12d8] sm:$0xff] %v1461
                %v1463 = vld [vmem:[%s253 + $0x4b20] sm:$0xff]
                %1464 = vst [vmem:[%s254 + $0x12e0] sm:$0xff] %v1463
                %v1465 = vld [vmem:[%s253 + $0x4b28] sm:$0xff]
                %1466 = vst [vmem:[%s254 + $0x12e8] sm:$0xff] %v1465
                %v1467 = vld [vmem:[%s253 + $0x4b30] sm:$0xff]
                %1468 = vst [vmem:[%s254 + $0x12f0] sm:$0xff] %v1467
                %v1469 = vld [vmem:[%s253 + $0x4b38] sm:$0xff]
                %1470 = vst [vmem:[%s254 + $0x12f8] sm:$0xff] %v1469
                %v1471 = vld [vmem:[%s253 + $0x4b40] sm:$0xff]
                %1472 = vst [vmem:[%s254 + $0x1300] sm:$0xff] %v1471
                %v1473 = vld [vmem:[%s253 + $0x4b48] sm:$0xff]
                %1474 = vst [vmem:[%s254 + $0x1308] sm:$0xff] %v1473
                %v1475 = vld [vmem:[%s253 + $0x4b50] sm:$0xff]
                %1476 = vst [vmem:[%s254 + $0x1310] sm:$0xff] %v1475
                %v1477 = vld [vmem:[%s253 + $0x4b58] sm:$0xff]
                %1478 = vst [vmem:[%s254 + $0x1318] sm:$0xff] %v1477
                %v1479 = vld [vmem:[%s253 + $0x4b60] sm:$0xff]
                %1480 = vst [vmem:[%s254 + $0x1320] sm:$0xff] %v1479
                %v1481 = vld [vmem:[%s253 + $0x4b68] sm:$0xff]
                %1482 = vst [vmem:[%s254 + $0x1328] sm:$0xff] %v1481
                %v1483 = vld [vmem:[%s253 + $0x4b70] sm:$0xff]
                %1484 = vst [vmem:[%s254 + $0x1330] sm:$0xff] %v1483
                %v1485 = vld [vmem:[%s253 + $0x4ce0] sm:$0xff]
                %1486 = vst [vmem:[%s254 + $0x1338] sm:$0xff] %v1485
                %v1487 = vld [vmem:[%s253 + $0x4ce8] sm:$0xff]
                %1488 = vst [vmem:[%s254 + $0x1340] sm:$0xff] %v1487
                %v1489 = vld [vmem:[%s253 + $0x4cf0] sm:$0xff]
                %1490 = vst [vmem:[%s254 + $0x1348] sm:$0xff] %v1489
                %v1491 = vld [vmem:[%s253 + $0x4cf8] sm:$0xff]
                %1492 = vst [vmem:[%s254 + $0x1350] sm:$0xff] %v1491
                %v1493 = vld [vmem:[%s253 + $0x4d00] sm:$0xff]
                %1494 = vst [vmem:[%s254 + $0x1358] sm:$0xff] %v1493
                %v1495 = vld [vmem:[%s253 + $0x4d08] sm:$0xff]
                %1496 = vst [vmem:[%s254 + $0x1360] sm:$0xff] %v1495
                %v1497 = vld [vmem:[%s253 + $0x4d10] sm:$0xff]
                %1498 = vst [vmem:[%s254 + $0x1368] sm:$0xff] %v1497
                %v1499 = vld [vmem:[%s253 + $0x4d18] sm:$0xff]
                %1500 = vst [vmem:[%s254 + $0x1370] sm:$0xff] %v1499
                %v1501 = vld [vmem:[%s253 + $0x4d20] sm:$0xff]
                %1502 = vst [vmem:[%s254 + $0x1378] sm:$0xff] %v1501
                %v1503 = vld [vmem:[%s253 + $0x4d28] sm:$0xff]
                %1504 = vst [vmem:[%s254 + $0x1380] sm:$0xff] %v1503
                %v1505 = vld [vmem:[%s253 + $0x4d30] sm:$0xff]
                %1506 = vst [vmem:[%s254 + $0x1388] sm:$0xff] %v1505
                %v1507 = vld [vmem:[%s253 + $0x4d38] sm:$0xff]
                %1508 = vst [vmem:[%s254 + $0x1390] sm:$0xff] %v1507
                %v1509 = vld [vmem:[%s253 + $0x4d40] sm:$0xff]
                %1510 = vst [vmem:[%s254 + $0x1398] sm:$0xff] %v1509
                %v1511 = vld [vmem:[%s253 + $0x4d48] sm:$0xff]
                %1512 = vst [vmem:[%s254 + $0x13a0] sm:$0xff] %v1511
                %v1513 = vld [vmem:[%s253 + $0x4d50] sm:$0xff]
                %1514 = vst [vmem:[%s254 + $0x13a8] sm:$0xff] %v1513
                %v1515 = vld [vmem:[%s253 + $0x4ec0] sm:$0xff]
                %1516 = vst [vmem:[%s254 + $0x13b0] sm:$0xff] %v1515
                %v1517 = vld [vmem:[%s253 + $0x4ec8] sm:$0xff]
                %1518 = vst [vmem:[%s254 + $0x13b8] sm:$0xff] %v1517
                %v1519 = vld [vmem:[%s253 + $0x4ed0] sm:$0xff]
                %1520 = vst [vmem:[%s254 + $0x13c0] sm:$0xff] %v1519
                %v1521 = vld [vmem:[%s253 + $0x4ed8] sm:$0xff]
                %1522 = vst [vmem:[%s254 + $0x13c8] sm:$0xff] %v1521
                %v1523 = vld [vmem:[%s253 + $0x4ee0] sm:$0xff]
                %1524 = vst [vmem:[%s254 + $0x13d0] sm:$0xff] %v1523
                %v1525 = vld [vmem:[%s253 + $0x4ee8] sm:$0xff]
                %1526 = vst [vmem:[%s254 + $0x13d8] sm:$0xff] %v1525
                %v1527 = vld [vmem:[%s253 + $0x4ef0] sm:$0xff]
                %1528 = vst [vmem:[%s254 + $0x13e0] sm:$0xff] %v1527
                %v1529 = vld [vmem:[%s253 + $0x4ef8] sm:$0xff]
                %1530 = vst [vmem:[%s254 + $0x13e8] sm:$0xff] %v1529
                %v1531 = vld [vmem:[%s253 + $0x4f00] sm:$0xff]
                %1532 = vst [vmem:[%s254 + $0x13f0] sm:$0xff] %v1531
                %v1533 = vld [vmem:[%s253 + $0x4f08] sm:$0xff]
                %1534 = vst [vmem:[%s254 + $0x13f8] sm:$0xff] %v1533
                %v1535 = vld [vmem:[%s253 + $0x4f10] sm:$0xff]
                %1536 = vst [vmem:[%s254 + $0x1400] sm:$0xff] %v1535
                %v1537 = vld [vmem:[%s253 + $0x4f18] sm:$0xff]
                %1538 = vst [vmem:[%s254 + $0x1408] sm:$0xff] %v1537
                %v1539 = vld [vmem:[%s253 + $0x4f20] sm:$0xff]
                %1540 = vst [vmem:[%s254 + $0x1410] sm:$0xff] %v1539
                %v1541 = vld [vmem:[%s253 + $0x4f28] sm:$0xff]
                %1542 = vst [vmem:[%s254 + $0x1418] sm:$0xff] %v1541
                %v1543 = vld [vmem:[%s253 + $0x4f30] sm:$0xff]
                %1544 = vst [vmem:[%s254 + $0x1420] sm:$0xff] %v1543
                %v1545 = vld [vmem:[%s253 + $0x50a0] sm:$0xff]
                %1546 = vst [vmem:[%s254 + $0x1428] sm:$0xff] %v1545
                %v1547 = vld [vmem:[%s253 + $0x50a8] sm:$0xff]
                %1548 = vst [vmem:[%s254 + $0x1430] sm:$0xff] %v1547
                %v1549 = vld [vmem:[%s253 + $0x50b0] sm:$0xff]
                %1550 = vst [vmem:[%s254 + $0x1438] sm:$0xff] %v1549
                %v1551 = vld [vmem:[%s253 + $0x50b8] sm:$0xff]
                %1552 = vst [vmem:[%s254 + $0x1440] sm:$0xff] %v1551
                %v1553 = vld [vmem:[%s253 + $0x50c0] sm:$0xff]
                %1554 = vst [vmem:[%s254 + $0x1448] sm:$0xff] %v1553
                %v1555 = vld [vmem:[%s253 + $0x50c8] sm:$0xff]
                %1556 = vst [vmem:[%s254 + $0x1450] sm:$0xff] %v1555
                %v1557 = vld [vmem:[%s253 + $0x50d0] sm:$0xff]
                %1558 = vst [vmem:[%s254 + $0x1458] sm:$0xff] %v1557
                %v1559 = vld [vmem:[%s253 + $0x50d8] sm:$0xff]
                %1560 = vst [vmem:[%s254 + $0x1460] sm:$0xff] %v1559
                %v1561 = vld [vmem:[%s253 + $0x50e0] sm:$0xff]
                %1562 = vst [vmem:[%s254 + $0x1468] sm:$0xff] %v1561
                %v1563 = vld [vmem:[%s253 + $0x50e8] sm:$0xff]
                %1564 = vst [vmem:[%s254 + $0x1470] sm:$0xff] %v1563
                %v1565 = vld [vmem:[%s253 + $0x50f0] sm:$0xff]
                %1566 = vst [vmem:[%s254 + $0x1478] sm:$0xff] %v1565
                %v1567 = vld [vmem:[%s253 + $0x50f8] sm:$0xff]
                %1568 = vst [vmem:[%s254 + $0x1480] sm:$0xff] %v1567
                %v1569 = vld [vmem:[%s253 + $0x5100] sm:$0xff]
                %1570 = vst [vmem:[%s254 + $0x1488] sm:$0xff] %v1569
                %v1571 = vld [vmem:[%s253 + $0x5108] sm:$0xff]
                %1572 = vst [vmem:[%s254 + $0x1490] sm:$0xff] %v1571
                %v1573 = vld [vmem:[%s253 + $0x5110] sm:$0xff]
                %1574 = vst [vmem:[%s254 + $0x1498] sm:$0xff] %v1573
                %v1575 = vld [vmem:[%s253 + $0x5280] sm:$0xff]
                %1576 = vst [vmem:[%s254 + $0x14a0] sm:$0xff] %v1575
                %v1577 = vld [vmem:[%s253 + $0x5288] sm:$0xff]
                %1578 = vst [vmem:[%s254 + $0x14a8] sm:$0xff] %v1577
                %v1579 = vld [vmem:[%s253 + $0x5290] sm:$0xff]
                %1580 = vst [vmem:[%s254 + $0x14b0] sm:$0xff] %v1579
                %v1581 = vld [vmem:[%s253 + $0x5298] sm:$0xff]
                %1582 = vst [vmem:[%s254 + $0x14b8] sm:$0xff] %v1581
                %v1583 = vld [vmem:[%s253 + $0x52a0] sm:$0xff]
                %1584 = vst [vmem:[%s254 + $0x14c0] sm:$0xff] %v1583
                %v1585 = vld [vmem:[%s253 + $0x52a8] sm:$0xff]
                %1586 = vst [vmem:[%s254 + $0x14c8] sm:$0xff] %v1585
                %v1587 = vld [vmem:[%s253 + $0x52b0] sm:$0xff]
                %1588 = vst [vmem:[%s254 + $0x14d0] sm:$0xff] %v1587
                %v1589 = vld [vmem:[%s253 + $0x52b8] sm:$0xff]
                %1590 = vst [vmem:[%s254 + $0x14d8] sm:$0xff] %v1589
                %v1591 = vld [vmem:[%s253 + $0x52c0] sm:$0xff]
                %1592 = vst [vmem:[%s254 + $0x14e0] sm:$0xff] %v1591
                %v1593 = vld [vmem:[%s253 + $0x52c8] sm:$0xff]
                %1594 = vst [vmem:[%s254 + $0x14e8] sm:$0xff] %v1593
                %v1595 = vld [vmem:[%s253 + $0x52d0] sm:$0xff]
                %1596 = vst [vmem:[%s254 + $0x14f0] sm:$0xff] %v1595
                %v1597 = vld [vmem:[%s253 + $0x52d8] sm:$0xff]
                %1598 = vst [vmem:[%s254 + $0x14f8] sm:$0xff] %v1597
                %v1599 = vld [vmem:[%s253 + $0x52e0] sm:$0xff]
                %1600 = vst [vmem:[%s254 + $0x1500] sm:$0xff] %v1599
                %v1601 = vld [vmem:[%s253 + $0x52e8] sm:$0xff]
                %1602 = vst [vmem:[%s254 + $0x1508] sm:$0xff] %v1601
                %v1603 = vld [vmem:[%s253 + $0x52f0] sm:$0xff]
                %1604 = vst [vmem:[%s254 + $0x1510] sm:$0xff] %v1603
                %v1605 = vld [vmem:[%s253 + $0x5460] sm:$0xff]
                %1606 = vst [vmem:[%s254 + $0x1518] sm:$0xff] %v1605
                %v1607 = vld [vmem:[%s253 + $0x5468] sm:$0xff]
                %1608 = vst [vmem:[%s254 + $0x1520] sm:$0xff] %v1607
                %v1609 = vld [vmem:[%s253 + $0x5470] sm:$0xff]
                %1610 = vst [vmem:[%s254 + $0x1528] sm:$0xff] %v1609
                %v1611 = vld [vmem:[%s253 + $0x5478] sm:$0xff]
                %1612 = vst [vmem:[%s254 + $0x1530] sm:$0xff] %v1611
                %v1613 = vld [vmem:[%s253 + $0x5480] sm:$0xff]
                %1614 = vst [vmem:[%s254 + $0x1538] sm:$0xff] %v1613
                %v1615 = vld [vmem:[%s253 + $0x5488] sm:$0xff]
                %1616 = vst [vmem:[%s254 + $0x1540] sm:$0xff] %v1615
                %v1617 = vld [vmem:[%s253 + $0x5490] sm:$0xff]
                %1618 = vst [vmem:[%s254 + $0x1548] sm:$0xff] %v1617
                %v1619 = vld [vmem:[%s253 + $0x5498] sm:$0xff]
                %1620 = vst [vmem:[%s254 + $0x1550] sm:$0xff] %v1619
                %v1621 = vld [vmem:[%s253 + $0x54a0] sm:$0xff]
                %1622 = vst [vmem:[%s254 + $0x1558] sm:$0xff] %v1621
                %v1623 = vld [vmem:[%s253 + $0x54a8] sm:$0xff]
                %1624 = vst [vmem:[%s254 + $0x1560] sm:$0xff] %v1623
                %v1625 = vld [vmem:[%s253 + $0x54b0] sm:$0xff]
                %1626 = vst [vmem:[%s254 + $0x1568] sm:$0xff] %v1625
                %v1627 = vld [vmem:[%s253 + $0x54b8] sm:$0xff]
                %1628 = vst [vmem:[%s254 + $0x1570] sm:$0xff] %v1627
                %v1629 = vld [vmem:[%s253 + $0x54c0] sm:$0xff]
                %1630 = vst [vmem:[%s254 + $0x1578] sm:$0xff] %v1629
                %v1631 = vld [vmem:[%s253 + $0x54c8] sm:$0xff]
                %1632 = vst [vmem:[%s254 + $0x1580] sm:$0xff] %v1631
                %v1633 = vld [vmem:[%s253 + $0x54d0] sm:$0xff]
                %1634 = vst [vmem:[%s254 + $0x1588] sm:$0xff] %v1633
                %v1635 = vld [vmem:[%s253 + $0x5640] sm:$0xff]
                %1636 = vst [vmem:[%s254 + $0x1590] sm:$0xff] %v1635
                %v1637 = vld [vmem:[%s253 + $0x5648] sm:$0xff]
                %1638 = vst [vmem:[%s254 + $0x1598] sm:$0xff] %v1637
                %v1639 = vld [vmem:[%s253 + $0x5650] sm:$0xff]
                %1640 = vst [vmem:[%s254 + $0x15a0] sm:$0xff] %v1639
                %v1641 = vld [vmem:[%s253 + $0x5658] sm:$0xff]
                %1642 = vst [vmem:[%s254 + $0x15a8] sm:$0xff] %v1641
                %v1643 = vld [vmem:[%s253 + $0x5660] sm:$0xff]
                %1644 = vst [vmem:[%s254 + $0x15b0] sm:$0xff] %v1643
                %v1645 = vld [vmem:[%s253 + $0x5668] sm:$0xff]
                %1646 = vst [vmem:[%s254 + $0x15b8] sm:$0xff] %v1645
                %v1647 = vld [vmem:[%s253 + $0x5670] sm:$0xff]
                %1648 = vst [vmem:[%s254 + $0x15c0] sm:$0xff] %v1647
                %v1649 = vld [vmem:[%s253 + $0x5678] sm:$0xff]
                %1650 = vst [vmem:[%s254 + $0x15c8] sm:$0xff] %v1649
                %v1651 = vld [vmem:[%s253 + $0x5680] sm:$0xff]
                %1652 = vst [vmem:[%s254 + $0x15d0] sm:$0xff] %v1651
                %v1653 = vld [vmem:[%s253 + $0x5688] sm:$0xff]
                %1654 = vst [vmem:[%s254 + $0x15d8] sm:$0xff] %v1653
                %v1655 = vld [vmem:[%s253 + $0x5690] sm:$0xff]
                %1656 = vst [vmem:[%s254 + $0x15e0] sm:$0xff] %v1655
                %v1657 = vld [vmem:[%s253 + $0x5698] sm:$0xff]
                %1658 = vst [vmem:[%s254 + $0x15e8] sm:$0xff] %v1657
                %v1659 = vld [vmem:[%s253 + $0x56a0] sm:$0xff]
                %1660 = vst [vmem:[%s254 + $0x15f0] sm:$0xff] %v1659
                %v1661 = vld [vmem:[%s253 + $0x56a8] sm:$0xff]
                %1662 = vst [vmem:[%s254 + $0x15f8] sm:$0xff] %v1661
                %v1663 = vld [vmem:[%s253 + $0x56b0] sm:$0xff]
                %1664 = vst [vmem:[%s254 + $0x1600] sm:$0xff] %v1663
                %v1665 = vld [vmem:[%s253 + $0x5820] sm:$0xff]
                %1666 = vst [vmem:[%s254 + $0x1608] sm:$0xff] %v1665
                %v1667 = vld [vmem:[%s253 + $0x5828] sm:$0xff]
                %1668 = vst [vmem:[%s254 + $0x1610] sm:$0xff] %v1667
                %v1669 = vld [vmem:[%s253 + $0x5830] sm:$0xff]
                %1670 = vst [vmem:[%s254 + $0x1618] sm:$0xff] %v1669
                %v1671 = vld [vmem:[%s253 + $0x5838] sm:$0xff]
                %1672 = vst [vmem:[%s254 + $0x1620] sm:$0xff] %v1671
                %v1673 = vld [vmem:[%s253 + $0x5840] sm:$0xff]
                %1674 = vst [vmem:[%s254 + $0x1628] sm:$0xff] %v1673
                %v1675 = vld [vmem:[%s253 + $0x5848] sm:$0xff]
                %1676 = vst [vmem:[%s254 + $0x1630] sm:$0xff] %v1675
                %v1677 = vld [vmem:[%s253 + $0x5850] sm:$0xff]
                %1678 = vst [vmem:[%s254 + $0x1638] sm:$0xff] %v1677
                %v1679 = vld [vmem:[%s253 + $0x5858] sm:$0xff]
                %1680 = vst [vmem:[%s254 + $0x1640] sm:$0xff] %v1679
                %v1681 = vld [vmem:[%s253 + $0x5860] sm:$0xff]
                %1682 = vst [vmem:[%s254 + $0x1648] sm:$0xff] %v1681
                %v1683 = vld [vmem:[%s253 + $0x5868] sm:$0xff]
                %1684 = vst [vmem:[%s254 + $0x1650] sm:$0xff] %v1683
                %v1685 = vld [vmem:[%s253 + $0x5870] sm:$0xff]
                %1686 = vst [vmem:[%s254 + $0x1658] sm:$0xff] %v1685
                %v1687 = vld [vmem:[%s253 + $0x5878] sm:$0xff]
                %1688 = vst [vmem:[%s254 + $0x1660] sm:$0xff] %v1687
                %v1689 = vld [vmem:[%s253 + $0x5880] sm:$0xff]
                %1690 = vst [vmem:[%s254 + $0x1668] sm:$0xff] %v1689
                %v1691 = vld [vmem:[%s253 + $0x5888] sm:$0xff]
                %1692 = vst [vmem:[%s254 + $0x1670] sm:$0xff] %v1691
                %v1693 = vld [vmem:[%s253 + $0x5890] sm:$0xff]
                %1694 = vst [vmem:[%s254 + $0x1678] sm:$0xff] %v1693
                %v1695 = vld [vmem:[%s253 + $0x5a00] sm:$0xff]
                %1696 = vst [vmem:[%s254 + $0x1680] sm:$0xff] %v1695
                %v1697 = vld [vmem:[%s253 + $0x5a08] sm:$0xff]
                %1698 = vst [vmem:[%s254 + $0x1688] sm:$0xff] %v1697
                %v1699 = vld [vmem:[%s253 + $0x5a10] sm:$0xff]
                %1700 = vst [vmem:[%s254 + $0x1690] sm:$0xff] %v1699
                %v1701 = vld [vmem:[%s253 + $0x5a18] sm:$0xff]
                %1702 = vst [vmem:[%s254 + $0x1698] sm:$0xff] %v1701
                %v1703 = vld [vmem:[%s253 + $0x5a20] sm:$0xff]
                %1704 = vst [vmem:[%s254 + $0x16a0] sm:$0xff] %v1703
                %v1705 = vld [vmem:[%s253 + $0x5a28] sm:$0xff]
                %1706 = vst [vmem:[%s254 + $0x16a8] sm:$0xff] %v1705
                %v1707 = vld [vmem:[%s253 + $0x5a30] sm:$0xff]
                %1708 = vst [vmem:[%s254 + $0x16b0] sm:$0xff] %v1707
                %v1709 = vld [vmem:[%s253 + $0x5a38] sm:$0xff]
                %1710 = vst [vmem:[%s254 + $0x16b8] sm:$0xff] %v1709
                %v1711 = vld [vmem:[%s253 + $0x5a40] sm:$0xff]
                %1712 = vst [vmem:[%s254 + $0x16c0] sm:$0xff] %v1711
                %v1713 = vld [vmem:[%s253 + $0x5a48] sm:$0xff]
                %1714 = vst [vmem:[%s254 + $0x16c8] sm:$0xff] %v1713
                %v1715 = vld [vmem:[%s253 + $0x5a50] sm:$0xff]
                %1716 = vst [vmem:[%s254 + $0x16d0] sm:$0xff] %v1715
                %v1717 = vld [vmem:[%s253 + $0x5a58] sm:$0xff]
                %1718 = vst [vmem:[%s254 + $0x16d8] sm:$0xff] %v1717
                %v1719 = vld [vmem:[%s253 + $0x5a60] sm:$0xff]
                %1720 = vst [vmem:[%s254 + $0x16e0] sm:$0xff] %v1719
                %v1721 = vld [vmem:[%s253 + $0x5a68] sm:$0xff]
                %1722 = vst [vmem:[%s254 + $0x16e8] sm:$0xff] %v1721
                %v1723 = vld [vmem:[%s253 + $0x5a70] sm:$0xff]
                %1724 = vst [vmem:[%s254 + $0x16f0] sm:$0xff] %v1723
                %v1725 = vld [vmem:[%s253 + $0x5be0] sm:$0xff]
                %1726 = vst [vmem:[%s254 + $0x16f8] sm:$0xff] %v1725
                %v1727 = vld [vmem:[%s253 + $0x5be8] sm:$0xff]
                %1728 = vst [vmem:[%s254 + $0x1700] sm:$0xff] %v1727
                %v1729 = vld [vmem:[%s253 + $0x5bf0] sm:$0xff]
                %1730 = vst [vmem:[%s254 + $0x1708] sm:$0xff] %v1729
                %v1731 = vld [vmem:[%s253 + $0x5bf8] sm:$0xff]
                %1732 = vst [vmem:[%s254 + $0x1710] sm:$0xff] %v1731
                %v1733 = vld [vmem:[%s253 + $0x5c00] sm:$0xff]
                %1734 = vst [vmem:[%s254 + $0x1718] sm:$0xff] %v1733
                %v1735 = vld [vmem:[%s253 + $0x5c08] sm:$0xff]
                %1736 = vst [vmem:[%s254 + $0x1720] sm:$0xff] %v1735
                %v1737 = vld [vmem:[%s253 + $0x5c10] sm:$0xff]
                %1738 = vst [vmem:[%s254 + $0x1728] sm:$0xff] %v1737
                %v1739 = vld [vmem:[%s253 + $0x5c18] sm:$0xff]
                %1740 = vst [vmem:[%s254 + $0x1730] sm:$0xff] %v1739
                %v1741 = vld [vmem:[%s253 + $0x5c20] sm:$0xff]
                %1742 = vst [vmem:[%s254 + $0x1738] sm:$0xff] %v1741
                %v1743 = vld [vmem:[%s253 + $0x5c28] sm:$0xff]
                %1744 = vst [vmem:[%s254 + $0x1740] sm:$0xff] %v1743
                %v1745 = vld [vmem:[%s253 + $0x5c30] sm:$0xff]
                %1746 = vst [vmem:[%s254 + $0x1748] sm:$0xff] %v1745
                %v1747 = vld [vmem:[%s253 + $0x5c38] sm:$0xff]
                %1748 = vst [vmem:[%s254 + $0x1750] sm:$0xff] %v1747
                %v1749 = vld [vmem:[%s253 + $0x5c40] sm:$0xff]
                %1750 = vst [vmem:[%s254 + $0x1758] sm:$0xff] %v1749
                %v1751 = vld [vmem:[%s253 + $0x5c48] sm:$0xff]
                %1752 = vst [vmem:[%s254 + $0x1760] sm:$0xff] %v1751
                %v1753 = vld [vmem:[%s253 + $0x5c50] sm:$0xff]
                %1754 = vst [vmem:[%s254 + $0x1768] sm:$0xff] %v1753
                %v1755 = vld [vmem:[%s253 + $0x5dc0] sm:$0xff]
                %1756 = vst [vmem:[%s254 + $0x1770] sm:$0xff] %v1755
                %v1757 = vld [vmem:[%s253 + $0x5dc8] sm:$0xff]
                %1758 = vst [vmem:[%s254 + $0x1778] sm:$0xff] %v1757
                %v1759 = vld [vmem:[%s253 + $0x5dd0] sm:$0xff]
                %1760 = vst [vmem:[%s254 + $0x1780] sm:$0xff] %v1759
                %v1761 = vld [vmem:[%s253 + $0x5dd8] sm:$0xff]
                %1762 = vst [vmem:[%s254 + $0x1788] sm:$0xff] %v1761
                %v1763 = vld [vmem:[%s253 + $0x5de0] sm:$0xff]
                %1764 = vst [vmem:[%s254 + $0x1790] sm:$0xff] %v1763
                %v1765 = vld [vmem:[%s253 + $0x5de8] sm:$0xff]
                %1766 = vst [vmem:[%s254 + $0x1798] sm:$0xff] %v1765
                %v1767 = vld [vmem:[%s253 + $0x5df0] sm:$0xff]
                %1768 = vst [vmem:[%s254 + $0x17a0] sm:$0xff] %v1767
                %v1769 = vld [vmem:[%s253 + $0x5df8] sm:$0xff]
                %1770 = vst [vmem:[%s254 + $0x17a8] sm:$0xff] %v1769
                %v1771 = vld [vmem:[%s253 + $0x5e00] sm:$0xff]
                %1772 = vst [vmem:[%s254 + $0x17b0] sm:$0xff] %v1771
                %v1773 = vld [vmem:[%s253 + $0x5e08] sm:$0xff]
                %1774 = vst [vmem:[%s254 + $0x17b8] sm:$0xff] %v1773
                %v1775 = vld [vmem:[%s253 + $0x5e10] sm:$0xff]
                %1776 = vst [vmem:[%s254 + $0x17c0] sm:$0xff] %v1775
                %v1777 = vld [vmem:[%s253 + $0x5e18] sm:$0xff]
                %1778 = vst [vmem:[%s254 + $0x17c8] sm:$0xff] %v1777
                %v1779 = vld [vmem:[%s253 + $0x5e20] sm:$0xff]
                %1780 = vst [vmem:[%s254 + $0x17d0] sm:$0xff] %v1779
                %v1781 = vld [vmem:[%s253 + $0x5e28] sm:$0xff]
                %1782 = vst [vmem:[%s254 + $0x17d8] sm:$0xff] %v1781
                %v1783 = vld [vmem:[%s253 + $0x5e30] sm:$0xff]
                %1784 = vst [vmem:[%s254 + $0x17e0] sm:$0xff] %v1783
                %v1785 = vld [vmem:[%s253 + $0x5fa0] sm:$0xff]
                %1786 = vst [vmem:[%s254 + $0x17e8] sm:$0xff] %v1785
                %v1787 = vld [vmem:[%s253 + $0x5fa8] sm:$0xff]
                %1788 = vst [vmem:[%s254 + $0x17f0] sm:$0xff] %v1787
                %v1789 = vld [vmem:[%s253 + $0x5fb0] sm:$0xff]
                %1790 = vst [vmem:[%s254 + $0x17f8] sm:$0xff] %v1789
                %v1791 = vld [vmem:[%s253 + $0x5fb8] sm:$0xff]
                %1792 = vst [vmem:[%s254 + $0x1800] sm:$0xff] %v1791
                %v1793 = vld [vmem:[%s253 + $0x5fc0] sm:$0xff]
                %1794 = vst [vmem:[%s254 + $0x1808] sm:$0xff] %v1793
                %v1795 = vld [vmem:[%s253 + $0x5fc8] sm:$0xff]
                %1796 = vst [vmem:[%s254 + $0x1810] sm:$0xff] %v1795
                %v1797 = vld [vmem:[%s253 + $0x5fd0] sm:$0xff]
                %1798 = vst [vmem:[%s254 + $0x1818] sm:$0xff] %v1797
                %v1799 = vld [vmem:[%s253 + $0x5fd8] sm:$0xff]
                %1800 = vst [vmem:[%s254 + $0x1820] sm:$0xff] %v1799
                %v1801 = vld [vmem:[%s253 + $0x5fe0] sm:$0xff]
                %1802 = vst [vmem:[%s254 + $0x1828] sm:$0xff] %v1801
                %v1803 = vld [vmem:[%s253 + $0x5fe8] sm:$0xff]
                %1804 = vst [vmem:[%s254 + $0x1830] sm:$0xff] %v1803
                %v1805 = vld [vmem:[%s253 + $0x5ff0] sm:$0xff]
                %1806 = vst [vmem:[%s254 + $0x1838] sm:$0xff] %v1805
                %v1807 = vld [vmem:[%s253 + $0x5ff8] sm:$0xff]
                %1808 = vst [vmem:[%s254 + $0x1840] sm:$0xff] %v1807
                %v1809 = vld [vmem:[%s253 + $0x6000] sm:$0xff]
                %1810 = vst [vmem:[%s254 + $0x1848] sm:$0xff] %v1809
                %v1811 = vld [vmem:[%s253 + $0x6008] sm:$0xff]
                %1812 = vst [vmem:[%s254 + $0x1850] sm:$0xff] %v1811
                %v1813 = vld [vmem:[%s253 + $0x6010] sm:$0xff]
                %1814 = vst [vmem:[%s254 + $0x1858] sm:$0xff] %v1813
                %v1815 = vld [vmem:[%s253 + $0x6180] sm:$0xff]
                %1816 = vst [vmem:[%s254 + $0x1860] sm:$0xff] %v1815
                %v1817 = vld [vmem:[%s253 + $0x6188] sm:$0xff]
                %1818 = vst [vmem:[%s254 + $0x1868] sm:$0xff] %v1817
                %v1819 = vld [vmem:[%s253 + $0x6190] sm:$0xff]
                %1820 = vst [vmem:[%s254 + $0x1870] sm:$0xff] %v1819
                %v1821 = vld [vmem:[%s253 + $0x6198] sm:$0xff]
                %1822 = vst [vmem:[%s254 + $0x1878] sm:$0xff] %v1821
                %v1823 = vld [vmem:[%s253 + $0x61a0] sm:$0xff]
                %1824 = vst [vmem:[%s254 + $0x1880] sm:$0xff] %v1823
                %v1825 = vld [vmem:[%s253 + $0x61a8] sm:$0xff]
                %1826 = vst [vmem:[%s254 + $0x1888] sm:$0xff] %v1825
                %v1827 = vld [vmem:[%s253 + $0x61b0] sm:$0xff]
                %1828 = vst [vmem:[%s254 + $0x1890] sm:$0xff] %v1827
                %v1829 = vld [vmem:[%s253 + $0x61b8] sm:$0xff]
                %1830 = vst [vmem:[%s254 + $0x1898] sm:$0xff] %v1829
                %v1831 = vld [vmem:[%s253 + $0x61c0] sm:$0xff]
                %1832 = vst [vmem:[%s254 + $0x18a0] sm:$0xff] %v1831
                %v1833 = vld [vmem:[%s253 + $0x61c8] sm:$0xff]
                %1834 = vst [vmem:[%s254 + $0x18a8] sm:$0xff] %v1833
                %v1835 = vld [vmem:[%s253 + $0x61d0] sm:$0xff]
                %1836 = vst [vmem:[%s254 + $0x18b0] sm:$0xff] %v1835
                %v1837 = vld [vmem:[%s253 + $0x61d8] sm:$0xff]
                %1838 = vst [vmem:[%s254 + $0x18b8] sm:$0xff] %v1837
                %v1839 = vld [vmem:[%s253 + $0x61e0] sm:$0xff]
                %1840 = vst [vmem:[%s254 + $0x18c0] sm:$0xff] %v1839
                %v1841 = vld [vmem:[%s253 + $0x61e8] sm:$0xff]
                %1842 = vst [vmem:[%s254 + $0x18c8] sm:$0xff] %v1841
                %v1843 = vld [vmem:[%s253 + $0x61f0] sm:$0xff]
                %1844 = vst [vmem:[%s254 + $0x18d0] sm:$0xff] %v1843
                %v1845 = vld [vmem:[%s253 + $0x6360] sm:$0xff]
                %1846 = vst [vmem:[%s254 + $0x18d8] sm:$0xff] %v1845
                %v1847 = vld [vmem:[%s253 + $0x6368] sm:$0xff]
                %1848 = vst [vmem:[%s254 + $0x18e0] sm:$0xff] %v1847
                %v1849 = vld [vmem:[%s253 + $0x6370] sm:$0xff]
                %1850 = vst [vmem:[%s254 + $0x18e8] sm:$0xff] %v1849
                %v1851 = vld [vmem:[%s253 + $0x6378] sm:$0xff]
                %1852 = vst [vmem:[%s254 + $0x18f0] sm:$0xff] %v1851
                %v1853 = vld [vmem:[%s253 + $0x6380] sm:$0xff]
                %1854 = vst [vmem:[%s254 + $0x18f8] sm:$0xff] %v1853
                %v1855 = vld [vmem:[%s253 + $0x6388] sm:$0xff]
                %1856 = vst [vmem:[%s254 + $0x1900] sm:$0xff] %v1855
                %v1857 = vld [vmem:[%s253 + $0x6390] sm:$0xff]
                %1858 = vst [vmem:[%s254 + $0x1908] sm:$0xff] %v1857
                %v1859 = vld [vmem:[%s253 + $0x6398] sm:$0xff]
                %1860 = vst [vmem:[%s254 + $0x1910] sm:$0xff] %v1859
                %v1861 = vld [vmem:[%s253 + $0x63a0] sm:$0xff]
                %1862 = vst [vmem:[%s254 + $0x1918] sm:$0xff] %v1861
                %v1863 = vld [vmem:[%s253 + $0x63a8] sm:$0xff]
                %1864 = vst [vmem:[%s254 + $0x1920] sm:$0xff] %v1863
                %v1865 = vld [vmem:[%s253 + $0x63b0] sm:$0xff]
                %1866 = vst [vmem:[%s254 + $0x1928] sm:$0xff] %v1865
                %v1867 = vld [vmem:[%s253 + $0x63b8] sm:$0xff]
                %1868 = vst [vmem:[%s254 + $0x1930] sm:$0xff] %v1867
                %v1869 = vld [vmem:[%s253 + $0x63c0] sm:$0xff]
                %1870 = vst [vmem:[%s254 + $0x1938] sm:$0xff] %v1869
                %v1871 = vld [vmem:[%s253 + $0x63c8] sm:$0xff]
                %1872 = vst [vmem:[%s254 + $0x1940] sm:$0xff] %v1871
                %v1873 = vld [vmem:[%s253 + $0x63d0] sm:$0xff]
                %1874 = vst [vmem:[%s254 + $0x1948] sm:$0xff] %v1873
                %v1875 = vld [vmem:[%s253 + $0x6540] sm:$0xff]
                %1876 = vst [vmem:[%s254 + $0x1950] sm:$0xff] %v1875
                %v1877 = vld [vmem:[%s253 + $0x6548] sm:$0xff]
                %1878 = vst [vmem:[%s254 + $0x1958] sm:$0xff] %v1877
                %v1879 = vld [vmem:[%s253 + $0x6550] sm:$0xff]
                %1880 = vst [vmem:[%s254 + $0x1960] sm:$0xff] %v1879
                %v1881 = vld [vmem:[%s253 + $0x6558] sm:$0xff]
                %1882 = vst [vmem:[%s254 + $0x1968] sm:$0xff] %v1881
                %v1883 = vld [vmem:[%s253 + $0x6560] sm:$0xff]
                %1884 = vst [vmem:[%s254 + $0x1970] sm:$0xff] %v1883
                %v1885 = vld [vmem:[%s253 + $0x6568] sm:$0xff]
                %1886 = vst [vmem:[%s254 + $0x1978] sm:$0xff] %v1885
                %v1887 = vld [vmem:[%s253 + $0x6570] sm:$0xff]
                %1888 = vst [vmem:[%s254 + $0x1980] sm:$0xff] %v1887
                %v1889 = vld [vmem:[%s253 + $0x6578] sm:$0xff]
                %1890 = vst [vmem:[%s254 + $0x1988] sm:$0xff] %v1889
                %v1891 = vld [vmem:[%s253 + $0x6580] sm:$0xff]
                %1892 = vst [vmem:[%s254 + $0x1990] sm:$0xff] %v1891
                %v1893 = vld [vmem:[%s253 + $0x6588] sm:$0xff]
                %1894 = vst [vmem:[%s254 + $0x1998] sm:$0xff] %v1893
                %v1895 = vld [vmem:[%s253 + $0x6590] sm:$0xff]
                %1896 = vst [vmem:[%s254 + $0x19a0] sm:$0xff] %v1895
                %v1897 = vld [vmem:[%s253 + $0x6598] sm:$0xff]
                %1898 = vst [vmem:[%s254 + $0x19a8] sm:$0xff] %v1897
                %v1899 = vld [vmem:[%s253 + $0x65a0] sm:$0xff]
                %1900 = vst [vmem:[%s254 + $0x19b0] sm:$0xff] %v1899
                %v1901 = vld [vmem:[%s253 + $0x65a8] sm:$0xff]
                %1902 = vst [vmem:[%s254 + $0x19b8] sm:$0xff] %v1901
                %v1903 = vld [vmem:[%s253 + $0x65b0] sm:$0xff]
                %1904 = vst [vmem:[%s254 + $0x19c0] sm:$0xff] %v1903
                %v1905 = vld [vmem:[%s253 + $0x6720] sm:$0xff]
                %1906 = vst [vmem:[%s254 + $0x19c8] sm:$0xff] %v1905
                %v1907 = vld [vmem:[%s253 + $0x6728] sm:$0xff]
                %1908 = vst [vmem:[%s254 + $0x19d0] sm:$0xff] %v1907
                %v1909 = vld [vmem:[%s253 + $0x6730] sm:$0xff]
                %1910 = vst [vmem:[%s254 + $0x19d8] sm:$0xff] %v1909
                %v1911 = vld [vmem:[%s253 + $0x6738] sm:$0xff]
                %1912 = vst [vmem:[%s254 + $0x19e0] sm:$0xff] %v1911
                %v1913 = vld [vmem:[%s253 + $0x6740] sm:$0xff]
                %1914 = vst [vmem:[%s254 + $0x19e8] sm:$0xff] %v1913
                %v1915 = vld [vmem:[%s253 + $0x6748] sm:$0xff]
                %1916 = vst [vmem:[%s254 + $0x19f0] sm:$0xff] %v1915
                %v1917 = vld [vmem:[%s253 + $0x6750] sm:$0xff]
                %1918 = vst [vmem:[%s254 + $0x19f8] sm:$0xff] %v1917
                %v1919 = vld [vmem:[%s253 + $0x6758] sm:$0xff]
                %1920 = vst [vmem:[%s254 + $0x1a00] sm:$0xff] %v1919
                %v1921 = vld [vmem:[%s253 + $0x6760] sm:$0xff]
                %1922 = vst [vmem:[%s254 + $0x1a08] sm:$0xff] %v1921
                %v1923 = vld [vmem:[%s253 + $0x6768] sm:$0xff]
                %1924 = vst [vmem:[%s254 + $0x1a10] sm:$0xff] %v1923
                %v1925 = vld [vmem:[%s253 + $0x6770] sm:$0xff]
                %1926 = vst [vmem:[%s254 + $0x1a18] sm:$0xff] %v1925
                %v1927 = vld [vmem:[%s253 + $0x6778] sm:$0xff]
                %1928 = vst [vmem:[%s254 + $0x1a20] sm:$0xff] %v1927
                %v1929 = vld [vmem:[%s253 + $0x6780] sm:$0xff]
                %1930 = vst [vmem:[%s254 + $0x1a28] sm:$0xff] %v1929
                %v1931 = vld [vmem:[%s253 + $0x6788] sm:$0xff]
                %1932 = vst [vmem:[%s254 + $0x1a30] sm:$0xff] %v1931
                %v1933 = vld [vmem:[%s253 + $0x6790] sm:$0xff]
                %1934 = vst [vmem:[%s254 + $0x1a38] sm:$0xff] %v1933
                %v1935 = vld [vmem:[%s253 + $0x6900] sm:$0xff]
                %1936 = vst [vmem:[%s254 + $0x1a40] sm:$0xff] %v1935
                %v1937 = vld [vmem:[%s253 + $0x6908] sm:$0xff]
                %1938 = vst [vmem:[%s254 + $0x1a48] sm:$0xff] %v1937
                %v1939 = vld [vmem:[%s253 + $0x6910] sm:$0xff]
                %1940 = vst [vmem:[%s254 + $0x1a50] sm:$0xff] %v1939
                %v1941 = vld [vmem:[%s253 + $0x6918] sm:$0xff]
                %1942 = vst [vmem:[%s254 + $0x1a58] sm:$0xff] %v1941
                %v1943 = vld [vmem:[%s253 + $0x6920] sm:$0xff]
                %1944 = vst [vmem:[%s254 + $0x1a60] sm:$0xff] %v1943
                %v1945 = vld [vmem:[%s253 + $0x6928] sm:$0xff]
                %1946 = vst [vmem:[%s254 + $0x1a68] sm:$0xff] %v1945
                %v1947 = vld [vmem:[%s253 + $0x6930] sm:$0xff]
                %1948 = vst [vmem:[%s254 + $0x1a70] sm:$0xff] %v1947
                %v1949 = vld [vmem:[%s253 + $0x6938] sm:$0xff]
                %1950 = vst [vmem:[%s254 + $0x1a78] sm:$0xff] %v1949
                %v1951 = vld [vmem:[%s253 + $0x6940] sm:$0xff]
                %1952 = vst [vmem:[%s254 + $0x1a80] sm:$0xff] %v1951
                %v1953 = vld [vmem:[%s253 + $0x6948] sm:$0xff]
                %1954 = vst [vmem:[%s254 + $0x1a88] sm:$0xff] %v1953
                %v1955 = vld [vmem:[%s253 + $0x6950] sm:$0xff]
                %1956 = vst [vmem:[%s254 + $0x1a90] sm:$0xff] %v1955
                %v1957 = vld [vmem:[%s253 + $0x6958] sm:$0xff]
                %1958 = vst [vmem:[%s254 + $0x1a98] sm:$0xff] %v1957
                %v1959 = vld [vmem:[%s253 + $0x6960] sm:$0xff]
                %1960 = vst [vmem:[%s254 + $0x1aa0] sm:$0xff] %v1959
                %v1961 = vld [vmem:[%s253 + $0x6968] sm:$0xff]
                %1962 = vst [vmem:[%s254 + $0x1aa8] sm:$0xff] %v1961
                %v1963 = vld [vmem:[%s253 + $0x6970] sm:$0xff]
                %1964 = vst [vmem:[%s254 + $0x1ab0] sm:$0xff] %v1963
                %v1965 = vld [vmem:[%s253 + $0x6ae0] sm:$0xff]
                %1966 = vst [vmem:[%s254 + $0x1ab8] sm:$0xff] %v1965
                %v1967 = vld [vmem:[%s253 + $0x6ae8] sm:$0xff]
                %1968 = vst [vmem:[%s254 + $0x1ac0] sm:$0xff] %v1967
                %v1969 = vld [vmem:[%s253 + $0x6af0] sm:$0xff]
                %1970 = vst [vmem:[%s254 + $0x1ac8] sm:$0xff] %v1969
                %v1971 = vld [vmem:[%s253 + $0x6af8] sm:$0xff]
                %1972 = vst [vmem:[%s254 + $0x1ad0] sm:$0xff] %v1971
                %v1973 = vld [vmem:[%s253 + $0x6b00] sm:$0xff]
                %1974 = vst [vmem:[%s254 + $0x1ad8] sm:$0xff] %v1973
                %v1975 = vld [vmem:[%s253 + $0x6b08] sm:$0xff]
                %1976 = vst [vmem:[%s254 + $0x1ae0] sm:$0xff] %v1975
                %v1977 = vld [vmem:[%s253 + $0x6b10] sm:$0xff]
                %1978 = vst [vmem:[%s254 + $0x1ae8] sm:$0xff] %v1977
                %v1979 = vld [vmem:[%s253 + $0x6b18] sm:$0xff]
                %1980 = vst [vmem:[%s254 + $0x1af0] sm:$0xff] %v1979
                %v1981 = vld [vmem:[%s253 + $0x6b20] sm:$0xff]
                %1982 = vst [vmem:[%s254 + $0x1af8] sm:$0xff] %v1981
                %v1983 = vld [vmem:[%s253 + $0x6b28] sm:$0xff]
                %1984 = vst [vmem:[%s254 + $0x1b00] sm:$0xff] %v1983
                %v1985 = vld [vmem:[%s253 + $0x6b30] sm:$0xff]
                %1986 = vst [vmem:[%s254 + $0x1b08] sm:$0xff] %v1985
                %v1987 = vld [vmem:[%s253 + $0x6b38] sm:$0xff]
                %1988 = vst [vmem:[%s254 + $0x1b10] sm:$0xff] %v1987
                %v1989 = vld [vmem:[%s253 + $0x6b40] sm:$0xff]
                %1990 = vst [vmem:[%s254 + $0x1b18] sm:$0xff] %v1989
                %v1991 = vld [vmem:[%s253 + $0x6b48] sm:$0xff]
                %1992 = vst [vmem:[%s254 + $0x1b20] sm:$0xff] %v1991
                %v1993 = vld [vmem:[%s253 + $0x6b50] sm:$0xff]
                %1994 = vst [vmem:[%s254 + $0x1b28] sm:$0xff] %v1993
                %v1995 = vld [vmem:[%s253 + $0x6cc0] sm:$0xff]
                %1996 = vst [vmem:[%s254 + $0x1b30] sm:$0xff] %v1995
                %v1997 = vld [vmem:[%s253 + $0x6cc8] sm:$0xff]
                %1998 = vst [vmem:[%s254 + $0x1b38] sm:$0xff] %v1997
                %v1999 = vld [vmem:[%s253 + $0x6cd0] sm:$0xff]
                %2000 = vst [vmem:[%s254 + $0x1b40] sm:$0xff] %v1999
                %v2001 = vld [vmem:[%s253 + $0x6cd8] sm:$0xff]
                %2002 = vst [vmem:[%s254 + $0x1b48] sm:$0xff] %v2001
                %v2003 = vld [vmem:[%s253 + $0x6ce0] sm:$0xff]
                %2004 = vst [vmem:[%s254 + $0x1b50] sm:$0xff] %v2003
                %v2005 = vld [vmem:[%s253 + $0x6ce8] sm:$0xff]
                %2006 = vst [vmem:[%s254 + $0x1b58] sm:$0xff] %v2005
                %v2007 = vld [vmem:[%s253 + $0x6cf0] sm:$0xff]
                %2008 = vst [vmem:[%s254 + $0x1b60] sm:$0xff] %v2007
                %v2009 = vld [vmem:[%s253 + $0x6cf8] sm:$0xff]
                %2010 = vst [vmem:[%s254 + $0x1b68] sm:$0xff] %v2009
                %v2011 = vld [vmem:[%s253 + $0x6d00] sm:$0xff]
                %2012 = vst [vmem:[%s254 + $0x1b70] sm:$0xff] %v2011
                %v2013 = vld [vmem:[%s253 + $0x6d08] sm:$0xff]
                %2014 = vst [vmem:[%s254 + $0x1b78] sm:$0xff] %v2013
                %v2015 = vld [vmem:[%s253 + $0x6d10] sm:$0xff]
                %2016 = vst [vmem:[%s254 + $0x1b80] sm:$0xff] %v2015
                %v2017 = vld [vmem:[%s253 + $0x6d18] sm:$0xff]
                %2018 = vst [vmem:[%s254 + $0x1b88] sm:$0xff] %v2017
                %v2019 = vld [vmem:[%s253 + $0x6d20] sm:$0xff]
                %2020 = vst [vmem:[%s254 + $0x1b90] sm:$0xff] %v2019
                %v2021 = vld [vmem:[%s253 + $0x6d28] sm:$0xff]
                %2022 = vst [vmem:[%s254 + $0x1b98] sm:$0xff] %v2021
                %v2023 = vld [vmem:[%s253 + $0x6d30] sm:$0xff]
                %2024 = vst [vmem:[%s254 + $0x1ba0] sm:$0xff] %v2023
                %v2025 = vld [vmem:[%s253 + $0x6ea0] sm:$0xff]
                %2026 = vst [vmem:[%s254 + $0x1ba8] sm:$0xff] %v2025
                %v2027 = vld [vmem:[%s253 + $0x6ea8] sm:$0xff]
                %2028 = vst [vmem:[%s254 + $0x1bb0] sm:$0xff] %v2027
                %v2029 = vld [vmem:[%s253 + $0x6eb0] sm:$0xff]
                %2030 = vst [vmem:[%s254 + $0x1bb8] sm:$0xff] %v2029
                %v2031 = vld [vmem:[%s253 + $0x6eb8] sm:$0xff]
                %2032 = vst [vmem:[%s254 + $0x1bc0] sm:$0xff] %v2031
                %v2033 = vld [vmem:[%s253 + $0x6ec0] sm:$0xff]
                %2034 = vst [vmem:[%s254 + $0x1bc8] sm:$0xff] %v2033
                %v2035 = vld [vmem:[%s253 + $0x6ec8] sm:$0xff]
                %2036 = vst [vmem:[%s254 + $0x1bd0] sm:$0xff] %v2035
                %v2037 = vld [vmem:[%s253 + $0x6ed0] sm:$0xff]
                %2038 = vst [vmem:[%s254 + $0x1bd8] sm:$0xff] %v2037
                %v2039 = vld [vmem:[%s253 + $0x6ed8] sm:$0xff]
                %2040 = vst [vmem:[%s254 + $0x1be0] sm:$0xff] %v2039
                %v2041 = vld [vmem:[%s253 + $0x6ee0] sm:$0xff]
                %2042 = vst [vmem:[%s254 + $0x1be8] sm:$0xff] %v2041
                %v2043 = vld [vmem:[%s253 + $0x6ee8] sm:$0xff]
                %2044 = vst [vmem:[%s254 + $0x1bf0] sm:$0xff] %v2043
                %v2045 = vld [vmem:[%s253 + $0x6ef0] sm:$0xff]
                %2046 = vst [vmem:[%s254 + $0x1bf8] sm:$0xff] %v2045
                %v2047 = vld [vmem:[%s253 + $0x6ef8] sm:$0xff]
                %2048 = vst [vmem:[%s254 + $0x1c00] sm:$0xff] %v2047
                %v2049 = vld [vmem:[%s253 + $0x6f00] sm:$0xff]
                %2050 = vst [vmem:[%s254 + $0x1c08] sm:$0xff] %v2049
                %v2051 = vld [vmem:[%s253 + $0x6f08] sm:$0xff]
                %2052 = vst [vmem:[%s254 + $0x1c10] sm:$0xff] %v2051
                %v2053 = vld [vmem:[%s253 + $0x6f10] sm:$0xff]
                %2054 = vst [vmem:[%s254 + $0x1c18] sm:$0xff] %v2053
                %v2055 = vld [vmem:[%s253 + $0x7080] sm:$0xff]
                %2056 = vst [vmem:[%s254 + $0x1c20] sm:$0xff] %v2055
                %v2057 = vld [vmem:[%s253 + $0x7088] sm:$0xff]
                %2058 = vst [vmem:[%s254 + $0x1c28] sm:$0xff] %v2057
                %v2059 = vld [vmem:[%s253 + $0x7090] sm:$0xff]
                %2060 = vst [vmem:[%s254 + $0x1c30] sm:$0xff] %v2059
                %v2061 = vld [vmem:[%s253 + $0x7098] sm:$0xff]
                %2062 = vst [vmem:[%s254 + $0x1c38] sm:$0xff] %v2061
                %v2063 = vld [vmem:[%s253 + $0x70a0] sm:$0xff]
                %2064 = vst [vmem:[%s254 + $0x1c40] sm:$0xff] %v2063
                %v2065 = vld [vmem:[%s253 + $0x70a8] sm:$0xff]
                %2066 = vst [vmem:[%s254 + $0x1c48] sm:$0xff] %v2065
                %v2067 = vld [vmem:[%s253 + $0x70b0] sm:$0xff]
                %2068 = vst [vmem:[%s254 + $0x1c50] sm:$0xff] %v2067
                %v2069 = vld [vmem:[%s253 + $0x70b8] sm:$0xff]
                %2070 = vst [vmem:[%s254 + $0x1c58] sm:$0xff] %v2069
                %v2071 = vld [vmem:[%s253 + $0x70c0] sm:$0xff]
                %2072 = vst [vmem:[%s254 + $0x1c60] sm:$0xff] %v2071
                %v2073 = vld [vmem:[%s253 + $0x70c8] sm:$0xff]
                %2074 = vst [vmem:[%s254 + $0x1c68] sm:$0xff] %v2073
                %v2075 = vld [vmem:[%s253 + $0x70d0] sm:$0xff]
                %2076 = vst [vmem:[%s254 + $0x1c70] sm:$0xff] %v2075
                %v2077 = vld [vmem:[%s253 + $0x70d8] sm:$0xff]
                %2078 = vst [vmem:[%s254 + $0x1c78] sm:$0xff] %v2077
                %v2079 = vld [vmem:[%s253 + $0x70e0] sm:$0xff]
                %2080 = vst [vmem:[%s254 + $0x1c80] sm:$0xff] %v2079
                %v2081 = vld [vmem:[%s253 + $0x70e8] sm:$0xff]
                %2082 = vst [vmem:[%s254 + $0x1c88] sm:$0xff] %v2081
                %v2083 = vld [vmem:[%s253 + $0x70f0] sm:$0xff]
                %2084 = vst [vmem:[%s254 + $0x1c90] sm:$0xff] %v2083
                %v2085 = vld [vmem:[%s253 + $0x7260] sm:$0xff]
                %2086 = vst [vmem:[%s254 + $0x1c98] sm:$0xff] %v2085
                %v2087 = vld [vmem:[%s253 + $0x7268] sm:$0xff]
                %2088 = vst [vmem:[%s254 + $0x1ca0] sm:$0xff] %v2087
                %v2089 = vld [vmem:[%s253 + $0x7270] sm:$0xff]
                %2090 = vst [vmem:[%s254 + $0x1ca8] sm:$0xff] %v2089
                %v2091 = vld [vmem:[%s253 + $0x7278] sm:$0xff]
                %2092 = vst [vmem:[%s254 + $0x1cb0] sm:$0xff] %v2091
                %v2093 = vld [vmem:[%s253 + $0x7280] sm:$0xff]
                %2094 = vst [vmem:[%s254 + $0x1cb8] sm:$0xff] %v2093
                %v2095 = vld [vmem:[%s253 + $0x7288] sm:$0xff]
                %2096 = vst [vmem:[%s254 + $0x1cc0] sm:$0xff] %v2095
                %v2097 = vld [vmem:[%s253 + $0x7290] sm:$0xff]
                %2098 = vst [vmem:[%s254 + $0x1cc8] sm:$0xff] %v2097
                %v2099 = vld [vmem:[%s253 + $0x7298] sm:$0xff]
                %2100 = vst [vmem:[%s254 + $0x1cd0] sm:$0xff] %v2099
                %v2101 = vld [vmem:[%s253 + $0x72a0] sm:$0xff]
                %2102 = vst [vmem:[%s254 + $0x1cd8] sm:$0xff] %v2101
                %v2103 = vld [vmem:[%s253 + $0x72a8] sm:$0xff]
                %2104 = vst [vmem:[%s254 + $0x1ce0] sm:$0xff] %v2103
                %v2105 = vld [vmem:[%s253 + $0x72b0] sm:$0xff]
                %2106 = vst [vmem:[%s254 + $0x1ce8] sm:$0xff] %v2105
                %v2107 = vld [vmem:[%s253 + $0x72b8] sm:$0xff]
                %2108 = vst [vmem:[%s254 + $0x1cf0] sm:$0xff] %v2107
                %v2109 = vld [vmem:[%s253 + $0x72c0] sm:$0xff]
                %2110 = vst [vmem:[%s254 + $0x1cf8] sm:$0xff] %v2109
                %v2111 = vld [vmem:[%s253 + $0x72c8] sm:$0xff]
                %2112 = vst [vmem:[%s254 + $0x1d00] sm:$0xff] %v2111
                %v2113 = vld [vmem:[%s253 + $0x72d0] sm:$0xff]
                %2114 = vst [vmem:[%s254 + $0x1d08] sm:$0xff] %v2113
                %v2115 = vld [vmem:[%s253 + $0x7440] sm:$0xff]
                %2116 = vst [vmem:[%s254 + $0x1d10] sm:$0xff] %v2115
                %v2117 = vld [vmem:[%s253 + $0x7448] sm:$0xff]
                %2118 = vst [vmem:[%s254 + $0x1d18] sm:$0xff] %v2117
                %v2119 = vld [vmem:[%s253 + $0x7450] sm:$0xff]
                %2120 = vst [vmem:[%s254 + $0x1d20] sm:$0xff] %v2119
                %v2121 = vld [vmem:[%s253 + $0x7458] sm:$0xff]
                %2122 = vst [vmem:[%s254 + $0x1d28] sm:$0xff] %v2121
                %v2123 = vld [vmem:[%s253 + $0x7460] sm:$0xff]
                %2124 = vst [vmem:[%s254 + $0x1d30] sm:$0xff] %v2123
                %v2125 = vld [vmem:[%s253 + $0x7468] sm:$0xff]
                %2126 = vst [vmem:[%s254 + $0x1d38] sm:$0xff] %v2125
                %v2127 = vld [vmem:[%s253 + $0x7470] sm:$0xff]
                %2128 = vst [vmem:[%s254 + $0x1d40] sm:$0xff] %v2127
                %v2129 = vld [vmem:[%s253 + $0x7478] sm:$0xff]
                %2130 = vst [vmem:[%s254 + $0x1d48] sm:$0xff] %v2129
                %v2131 = vld [vmem:[%s253 + $0x7480] sm:$0xff]
                %2132 = vst [vmem:[%s254 + $0x1d50] sm:$0xff] %v2131
                %v2133 = vld [vmem:[%s253 + $0x7488] sm:$0xff]
                %2134 = vst [vmem:[%s254 + $0x1d58] sm:$0xff] %v2133
                %v2135 = vld [vmem:[%s253 + $0x7490] sm:$0xff]
                %2136 = vst [vmem:[%s254 + $0x1d60] sm:$0xff] %v2135
                %v2137 = vld [vmem:[%s253 + $0x7498] sm:$0xff]
                %2138 = vst [vmem:[%s254 + $0x1d68] sm:$0xff] %v2137
                %v2139 = vld [vmem:[%s253 + $0x74a0] sm:$0xff]
                %2140 = vst [vmem:[%s254 + $0x1d70] sm:$0xff] %v2139
                %v2141 = vld [vmem:[%s253 + $0x74a8] sm:$0xff]
                %2142 = vst [vmem:[%s254 + $0x1d78] sm:$0xff] %v2141
                %v2143 = vld [vmem:[%s253 + $0x74b0] sm:$0xff]
                %2144 = vst [vmem:[%s254 + $0x1d80] sm:$0xff] %v2143
                %v2145 = vld [vmem:[%s253 + $0x7620] sm:$0xff]
                %2146 = vst [vmem:[%s254 + $0x1d88] sm:$0xff] %v2145
                %v2147 = vld [vmem:[%s253 + $0x7628] sm:$0xff]
                %2148 = vst [vmem:[%s254 + $0x1d90] sm:$0xff] %v2147
                %v2149 = vld [vmem:[%s253 + $0x7630] sm:$0xff]
                %2150 = vst [vmem:[%s254 + $0x1d98] sm:$0xff] %v2149
                %v2151 = vld [vmem:[%s253 + $0x7638] sm:$0xff]
                %2152 = vst [vmem:[%s254 + $0x1da0] sm:$0xff] %v2151
                %v2153 = vld [vmem:[%s253 + $0x7640] sm:$0xff]
                %2154 = vst [vmem:[%s254 + $0x1da8] sm:$0xff] %v2153
                %v2155 = vld [vmem:[%s253 + $0x7648] sm:$0xff]
                %2156 = vst [vmem:[%s254 + $0x1db0] sm:$0xff] %v2155
                %v2157 = vld [vmem:[%s253 + $0x7650] sm:$0xff]
                %2158 = vst [vmem:[%s254 + $0x1db8] sm:$0xff] %v2157
                %v2159 = vld [vmem:[%s253 + $0x7658] sm:$0xff]
                %2160 = vst [vmem:[%s254 + $0x1dc0] sm:$0xff] %v2159
                %v2161 = vld [vmem:[%s253 + $0x7660] sm:$0xff]
                %2162 = vst [vmem:[%s254 + $0x1dc8] sm:$0xff] %v2161
                %v2163 = vld [vmem:[%s253 + $0x7668] sm:$0xff]
                %2164 = vst [vmem:[%s254 + $0x1dd0] sm:$0xff] %v2163
                %v2165 = vld [vmem:[%s253 + $0x7670] sm:$0xff]
                %2166 = vst [vmem:[%s254 + $0x1dd8] sm:$0xff] %v2165
                %v2167 = vld [vmem:[%s253 + $0x7678] sm:$0xff]
                %2168 = vst [vmem:[%s254 + $0x1de0] sm:$0xff] %v2167
                %v2169 = vld [vmem:[%s253 + $0x7680] sm:$0xff]
                %2170 = vst [vmem:[%s254 + $0x1de8] sm:$0xff] %v2169
                %v2171 = vld [vmem:[%s253 + $0x7688] sm:$0xff]
                %2172 = vst [vmem:[%s254 + $0x1df0] sm:$0xff] %v2171
                %v2173 = vld [vmem:[%s253 + $0x7690] sm:$0xff]
                %2174 = vst [vmem:[%s254 + $0x1df8] sm:$0xff] %v2173
              $region53: #{_lambda_.1} parent=47 // loop_footer
                %s252 = sadd.s32 1, %s248
              $region54: #{_lambda_.1} parent=47 // loop_footer_branch
                %247 = sbr.rel target = $region50
              $region55: #{_lambda_.1} parent=47 // loop_exit
                _
            $region48: #{_lambda_.1} parent=43 // pred_fallthru
              _
            // Predicated region
            $region56: #{_lambda_.1} parent=43 // pred_check
              _
            $region57: #{_lambda_.1} parent=43 // pred_check_branch
              %2176 = sbr.rel target = $region59
            $region58: #{_lambda_.1} parent=43 // pred_region
              _
            $region59: #{_lambda_.1} parent=43 // pred_fallthru
              _
          $region44: #{_lambda_.1} parent=39 // pred_fallthru
            _
          %2177 = vnop
        $region40: #{_lambda_.1} parent=35 // pred_fallthru
          _
        // Predicated region
        $region60: #{_lambda_.1} parent=35 // pred_check
          %p2178 = pneg %p167
        $region61: #{_lambda_.1} parent=35 // pred_check_branch
          %2180 = sbr.rel (%p2178) target = $region63
        $region62: #{_lambda_.1} parent=35 // pred_region
          %s2181 = smul.u32 30, %s16
          %p2182 = scmp.lt.s32.totalorder %s2181, 119
          %s2183 = scalar_select %p2182, %s2181, 119
          %s2184 = scalar_lea.vmem %s6, %s2183
          %s2185 = smul.u32 30, %s16
        $region63: #{_lambda_.1} parent=35 // pred_fallthru
          _
      $region36: #{_lambda_.1} parent=5 // pred_fallthru
        _
      %p2186 = scmp.le.s32.totalorder 1, %s16
      %p2187 = scmp.lt.s32.totalorder %s16, 5
      %p2188 = pnand %p2186, %p2187
      %p2189 = pneg %p2188
      // Predicated region
      $region64: #{_lambda_.1} parent=5 // pred_check
        _
      $region65: #{_lambda_.1} parent=5 // pred_check_branch
        %2191 = sbr.rel (%p2188) target = $region67
      $region66: #{_lambda_.1} parent=5 // pred_region
        %s2192 = ssub.s32 %s16, 1
        %s2193 = sand.u32 %s134, 1
        %s2194 = sand.u32 %s134, 1
        %s2195 = smul.addr %s2194, 7680
        %s2196 = scalar_lea.vmem [#allocation2], %s2195
        // Predicated region
        $region68: #{_lambda_.1} parent=66 // pred_check
          %p2197 = pneg %p147
        $region69: #{_lambda_.1} parent=66 // pred_check_branch
          %2199 = sbr.rel (%p2197) target = $region71
        $region70: #{_lambda_.1} parent=66 // pred_region
          _
        $region71: #{_lambda_.1} parent=66 // pred_fallthru
          _
        %p2200 = pneg %p37
        %p2201 = pneg %p34
        %p2202 = pneg %p58
        %p2203 = pneg %p55
        %p2204 = pneg %p79
        %p2205 = pneg %p76
        %p2206 = pneg %p100
        %p2207 = pneg %p97
        %p2208 = pneg %p121
        %p2209 = pneg %p118
        %s2210 = sand.u32 %s134, 1
        %s2211 = sand.u32 %s134, 1
        %s2212 = smul.addr %s2211, 7680
        %s2213 = scalar_lea.vmem [#allocation2], %s2212
        %p2214 = pneg %p147
        %p2215 = pneg %p144
        %s2216 = smul.u32 30, %s21
        %p2217 = scmp.lt.s32.totalorder %s2216, 119
        %s2218 = scalar_select %p2217, %s2216, 119
        %s2219 = scalar_lea.vmem %s6, %s2218
        %p2220 = pneg %p173
        %p2221 = pneg %p170
        %p2222 = pneg %p199
        %p2223 = pneg %p196
        %s2224 = sand.u32 %s186, 1
        %s2225 = scalar_lea.sflag [#allocation4], %s2224
        %s2226 = sand.u32 %s186, 1
        %s2227 = smul.addr %s2226, 240
        %s2228 = scalar_lea.vmem [#allocation3], %s2227
        %s2229 = smul.u32 30, %s21
        %s2230 = smul.u32 30, %s21
        %p2231 = scmp.lt.s32.totalorder %s2230, 119
        %s2232 = scalar_select %p2231, %s2230, 119
        %s2233 = scalar_lea.vmem %s6, %s2232
        %s2234 = smul.u32 30, %s21
        %s2235 = smul.u32 30, %s21
        %v2236 = vld [vmem:[%s0] sm:$0xff]
        %v2237 = vld [vmem:[%s1] sm:$0xff]
        %v2238 = vld [vmem:[%s1 + $0x8] sm:$0xff]
        %v2239 = vld [vmem:[%s1 + $0x10] sm:$0xff]
        %v2240 = vld [vmem:[%s1 + $0x18] sm:$0xff]
        %v2241 = vld [vmem:[%s1 + $0x20] sm:$0xff]
        %v2242 = vld [vmem:[%s1 + $0x28] sm:$0xff]
        %v2243 = vld [vmem:[%s1 + $0x30] sm:$0xff]
        %v2244 = vld [vmem:[%s1 + $0x38] sm:$0xff]
        %v2245 = vld [vmem:[%s1 + $0x40] sm:$0xff]
        %v2246 = vld [vmem:[%s1 + $0x48] sm:$0xff]
        %v2247 = vld [vmem:[%s1 + $0x50] sm:$0xff]
        %v2248 = vld [vmem:[%s1 + $0x58] sm:$0xff]
        %v2249 = vld [vmem:[%s1 + $0x60] sm:$0xff]
        %v2250 = vld [vmem:[%s1 + $0x68] sm:$0xff]
        %v2251 = vld [vmem:[%s1 + $0x70] sm:$0xff]
        %v2252 = vld [vmem:[%s1 + $0x78] sm:$0xff]
        %v2253 = vld [vmem:[%s1 + $0x80] sm:$0xff]
        %v2254 = vld [vmem:[%s1 + $0x88] sm:$0xff]
        %v2255 = vld [vmem:[%s1 + $0x90] sm:$0xff]
        %v2256 = vld [vmem:[%s1 + $0x98] sm:$0xff]
        %v2257 = vld [vmem:[%s1 + $0xa0] sm:$0xff]
        %v2258 = vld [vmem:[%s1 + $0xa8] sm:$0xff]
        %v2259 = vld [vmem:[%s1 + $0xb0] sm:$0xff]
        %v2260 = vld [vmem:[%s1 + $0xb8] sm:$0xff]
        %v2261 = vld [vmem:[%s1 + $0xc0] sm:$0xf]
        %v2262 = vld [vmem:[%s1 + $0xc8] sm:$0xf]
        %v2263 = vld [vmem:[%s2] sm:$0x3]
        %v2265 = vlaneseq
        %v2266 = vshrl.u32 %v2265, 7
        %v2267 = vsub.s32 0, %v2266
        %v2268 = vrot.slane %v2263, %v2267
        %v2269 = vlaneseq
        %v2270 = vshrl.u32 %v2269, 7
        %v2271 = vsub.s32 1, %v2270
        %v2272 = vrot.slane %v2263, %v2271
        %vm2275 = vcmask 818176
        %v2277 = vsel %vm2275, %v2236, 0
        %vm2279 = vcmask 1043456
        %v2281 = vsel %vm2279, %v2261, 0
        %v2284 = vsel %vm2279, %v2262, 0
        %2286 = vmatprep.subr.mxu0 %v2238
        %2287 = vmatpush1.msra.mxu0 %v2237
        %2288 = vmatprep.subr.mxu0 %v2240
        %2289 = vmatpush1.msra.mxu0 %v2239
        %2290 = vmatprep.subr.mxu0 %v2242
        %2291 = vmatpush1.msra.mxu0 %v2241
        %2292 = vmatprep.subr.mxu0 %v2244
        %2293 = vmatpush1.msra.mxu0 %v2243
        %2294 = vmatprep.subr.mxu0 %v2246
        %2295 = vmatpush1.msra.mxu0 %v2245
        %2296 = vmatprep.subr.mxu0 %v2248
        %2297 = vmatpush1.msra.mxu0 %v2247
        %2298 = vmatprep.subr.mxu0 %v2250
        %2299 = vmatpush1.msra.mxu0 %v2249
        %2300 = vmatprep.subr.mxu0 %v2252
        %2301 = vmatpush1.msra.mxu0 %v2251
        %2302 = vmatprep.subr.mxu0 %v2254
        %2303 = vmatpush1.msra.mxu0 %v2253
        %2304 = vmatprep.subr.mxu0 %v2256
        %2305 = vmatpush1.msra.mxu0 %v2255
        %2306 = vmatprep.subr.mxu0 %v2258
        %2307 = vmatpush1.msra.mxu0 %v2257
        %2308 = vmatprep.subr.mxu0 %v2260
        %2309 = vmatpush1.msra.mxu0 %v2259
        %2310 = vmatprep.subr.mxu0 %v2284
        %2311 = vmatpush1.msra.mxu0 %v2281
        %2312 = vmatprep.subr.mxu0 0.0
        %2313 = vmatpush1.msra.mxu0 0.0
        %2314 = vmatprep.subr.mxu0 0.0
        %2315 = vmatpush1.msra.mxu0 0.0
        %2316 = vmatprep.subr.mxu0 0.0
        %2317 = vmatpush1.msra.mxu0 0.0
        %2318 = vmatprep.subr.mxu0 0.0
        %2319 = vmatpush1.msra.mxu0 0.0
        %2320 = vmatprep.subr.mxu0 0.0
        %2321 = vmatpush1.msra.mxu0 0.0
        %2322 = vmatprep.subr.mxu0 0.0
        %2323 = vmatpush1.msra.mxu0 0.0
        %2324 = vmatprep.subr.mxu0 0.0
        %2325 = vmatpush1.msra.mxu0 0.0
        %2326 = vmatprep.subr.mxu0 0.0
        %2327 = vmatpush1.msra.mxu0 0.0
        %2328 = vmatprep.subr.mxu0 0.0
        %2329 = vmatpush1.msra.mxu0 0.0
        %2330 = vmatprep.subr.mxu0 0.0
        %2331 = vmatpush1.msra.mxu0 0.0
        %2332 = vmatprep.subr.mxu0 0.0
        %2333 = vmatpush1.msra.mxu0 0.0
        %2334 = vmatprep.subr.mxu0 0.0
        %2335 = vmatpush1.msra.mxu0 0.0
        %2336 = vmatprep.subr.mxu0 0.0
        %2337 = vmatpush1.msra.mxu0 0.0
        %2338 = vmatprep.subr.mxu0 0.0
        %2339 = vmatpush1.msra.mxu0 0.0
        %2340 = vmatprep.subr.mxu0 0.0
        %2341 = vmatpush1.msra.mxu0 0.0
        %2342 = vmatprep.subr.mxu0 0.0
        %2343 = vmatpush1.msra.mxu0 0.0
        %2344 = vmatprep.subr.mxu0 0.0
        %2345 = vmatpush1.msra.mxu0 0.0
        %2346 = vmatprep.subr.mxu0 0.0
        %2347 = vmatpush1.msra.mxu0 0.0
        %2348 = vmatprep.subr.mxu0 0.0
        %2349 = vmatpush1.msra.mxu0 0.0
        %2350 = vmatprep.mubr.f32.mxu0 0.0
        %2351 = vmatmul.mubr.f32.gmra.mrb[0].mxu0 %v2277
        %v2352 = vpop.f32.mrb[0].mxu0
        %v2353 = vadd.f32 %v2268, %v2352
        %v2354 = vpop.f32.mrb[0].mxu0
        %v2355 = vadd.f32 %v2272, %v2354
        %2356 = vdwg.mxu0
        %v2357 = vmax.f32 %v2353, 0.0
        %v2358 = vmax.f32 %v2355, 0.0
        %v2359 = vld [vmem:[%s3] sm:$0xff]
        %v2360 = vld [vmem:[%s3 + $0x8] sm:$0xff]
        %v2361 = vld [vmem:[%s3 + $0x10] sm:$0xff]
        %v2362 = vld [vmem:[%s3 + $0x18] sm:$0xff]
        %v2363 = vld [vmem:[%s3 + $0x20] sm:$0xff]
        %v2364 = vld [vmem:[%s3 + $0x28] sm:$0xff]
        %v2365 = vld [vmem:[%s3 + $0x30] sm:$0xff]
        %v2366 = vld [vmem:[%s3 + $0x38] sm:$0xff]
        %v2367 = vld [vmem:[%s3 + $0x40] sm:$0xff]
        %v2368 = vld [vmem:[%s3 + $0x48] sm:$0xff]
        %v2369 = vld [vmem:[%s3 + $0x50] sm:$0xff]
        %v2370 = vld [vmem:[%s3 + $0x58] sm:$0xff]
        %v2371 = vld [vmem:[%s3 + $0x60] sm:$0xff]
        %v2372 = vld [vmem:[%s3 + $0x68] sm:$0xff]
        %v2373 = vld [vmem:[%s3 + $0x70] sm:$0xff]
        %v2374 = vld [vmem:[%s3 + $0x78] sm:$0xff]
        %v2375 = vld [vmem:[%s3 + $0x80] sm:$0xff]
        %v2376 = vld [vmem:[%s3 + $0x88] sm:$0xff]
        %v2377 = vld [vmem:[%s3 + $0x90] sm:$0xff]
        %v2378 = vld [vmem:[%s3 + $0x98] sm:$0xff]
        %v2379 = vld [vmem:[%s3 + $0xa0] sm:$0xff]
        %v2380 = vld [vmem:[%s3 + $0xa8] sm:$0xff]
        %v2381 = vld [vmem:[%s3 + $0xb0] sm:$0xff]
        %v2382 = vld [vmem:[%s3 + $0xb8] sm:$0xff]
        %v2383 = vld [vmem:[%s3 + $0xc0] sm:$0xff]
        %v2384 = vld [vmem:[%s3 + $0xc8] sm:$0xff]
        %v2385 = vld [vmem:[%s3 + $0xd0] sm:$0xff]
        %v2386 = vld [vmem:[%s3 + $0xd8] sm:$0xff]
        %v2387 = vld [vmem:[%s3 + $0xe0] sm:$0xff]
        %v2388 = vld [vmem:[%s3 + $0xe8] sm:$0xff]
        %v2389 = vld [vmem:[%s3 + $0xf0] sm:$0xff]
        %v2390 = vld [vmem:[%s3 + $0xf8] sm:$0xff]
        %v2391 = vld [vmem:[%s3 + $0x100] sm:$0xff]
        %v2392 = vld [vmem:[%s3 + $0x108] sm:$0xff]
        %v2393 = vld [vmem:[%s3 + $0x110] sm:$0xff]
        %v2394 = vld [vmem:[%s3 + $0x118] sm:$0xff]
        %v2395 = vld [vmem:[%s3 + $0x120] sm:$0xff]
        %v2396 = vld [vmem:[%s3 + $0x128] sm:$0xff]
        %v2397 = vld [vmem:[%s3 + $0x130] sm:$0xff]
        %v2398 = vld [vmem:[%s3 + $0x138] sm:$0xff]
        %v2399 = vld [vmem:[%s3 + $0x140] sm:$0xff]
        %v2400 = vld [vmem:[%s3 + $0x148] sm:$0xff]
        %v2401 = vld [vmem:[%s3 + $0x150] sm:$0xff]
        %v2402 = vld [vmem:[%s3 + $0x158] sm:$0xff]
        %v2403 = vld [vmem:[%s3 + $0x160] sm:$0xff]
        %v2404 = vld [vmem:[%s3 + $0x168] sm:$0xff]
        %v2405 = vld [vmem:[%s3 + $0x170] sm:$0xff]
        %v2406 = vld [vmem:[%s3 + $0x178] sm:$0xff]
        %v2407 = vld [vmem:[%s3 + $0x180] sm:$0xff]
        %v2408 = vld [vmem:[%s3 + $0x188] sm:$0xff]
        %v2409 = vld [vmem:[%s3 + $0x190] sm:$0xff]
        %v2410 = vld [vmem:[%s3 + $0x198] sm:$0xff]
        %v2411 = vld [vmem:[%s3 + $0x1a0] sm:$0xff]
        %v2412 = vld [vmem:[%s3 + $0x1a8] sm:$0xff]
        %v2413 = vld [vmem:[%s3 + $0x1b0] sm:$0xff]
        %v2414 = vld [vmem:[%s3 + $0x1b8] sm:$0xff]
        %v2415 = vld [vmem:[%s3 + $0x1c0] sm:$0xff]
        %v2416 = vld [vmem:[%s3 + $0x1c8] sm:$0xff]
        %v2417 = vld [vmem:[%s3 + $0x1d0] sm:$0xff]
        %v2418 = vld [vmem:[%s3 + $0x1d8] sm:$0xff]
        %v2419 = vld [vmem:[%s3 + $0x1e0] sm:$0xff]
        %v2420 = vld [vmem:[%s3 + $0x1e8] sm:$0xff]
        %v2421 = vld [vmem:[%s3 + $0x1f0] sm:$0xff]
        %v2422 = vld [vmem:[%s3 + $0x1f8] sm:$0xff]
        %v2423 = vld [vmem:[%s3 + $0x200] sm:$0xff]
        %v2424 = vld [vmem:[%s3 + $0x208] sm:$0xff]
        %v2425 = vld [vmem:[%s3 + $0x210] sm:$0xff]
        %v2426 = vld [vmem:[%s3 + $0x218] sm:$0xff]
        %v2427 = vld [vmem:[%s3 + $0x220] sm:$0xff]
        %v2428 = vld [vmem:[%s3 + $0x228] sm:$0xff]
        %v2429 = vld [vmem:[%s3 + $0x230] sm:$0xff]
        %v2430 = vld [vmem:[%s3 + $0x238] sm:$0xff]
        %v2431 = vld [vmem:[%s3 + $0x240] sm:$0xff]
        %v2432 = vld [vmem:[%s3 + $0x248] sm:$0xff]
        %v2433 = vld [vmem:[%s3 + $0x250] sm:$0xff]
        %v2434 = vld [vmem:[%s3 + $0x258] sm:$0xff]
        %v2435 = vld [vmem:[%s3 + $0x260] sm:$0xff]
        %v2436 = vld [vmem:[%s3 + $0x268] sm:$0xff]
        %v2437 = vld [vmem:[%s3 + $0x270] sm:$0xff]
        %v2438 = vld [vmem:[%s3 + $0x278] sm:$0xff]
        %v2439 = vld [vmem:[%s3 + $0x280] sm:$0xff]
        %v2440 = vld [vmem:[%s3 + $0x288] sm:$0xff]
        %v2441 = vld [vmem:[%s3 + $0x290] sm:$0xff]
        %v2442 = vld [vmem:[%s3 + $0x298] sm:$0xff]
        %v2443 = vld [vmem:[%s3 + $0x2a0] sm:$0xff]
        %v2444 = vld [vmem:[%s3 + $0x2a8] sm:$0xff]
        %v2445 = vld [vmem:[%s3 + $0x2b0] sm:$0xff]
        %v2446 = vld [vmem:[%s3 + $0x2b8] sm:$0xff]
        %v2447 = vld [vmem:[%s3 + $0x2c0] sm:$0xff]
        %v2448 = vld [vmem:[%s3 + $0x2c8] sm:$0xff]
        %v2449 = vld [vmem:[%s3 + $0x2d0] sm:$0xff]
        %v2450 = vld [vmem:[%s3 + $0x2d8] sm:$0xff]
        %v2451 = vld [vmem:[%s3 + $0x2e0] sm:$0xff]
        %v2452 = vld [vmem:[%s3 + $0x2e8] sm:$0xff]
        %v2453 = vld [vmem:[%s3 + $0x2f0] sm:$0xff]
        %v2454 = vld [vmem:[%s3 + $0x2f8] sm:$0xff]
        %v2455 = vld [vmem:[%s3 + $0x300] sm:$0xff]
        %v2456 = vld [vmem:[%s3 + $0x308] sm:$0xff]
        %v2457 = vld [vmem:[%s3 + $0x310] sm:$0xff]
        %v2458 = vld [vmem:[%s3 + $0x318] sm:$0xff]
        %v2459 = vld [vmem:[%s3 + $0x320] sm:$0xff]
        %v2460 = vld [vmem:[%s3 + $0x328] sm:$0xff]
        %v2461 = vld [vmem:[%s3 + $0x330] sm:$0xff]
        %v2462 = vld [vmem:[%s3 + $0x338] sm:$0xff]
        %v2463 = vld [vmem:[%s3 + $0x340] sm:$0xff]
        %v2464 = vld [vmem:[%s3 + $0x348] sm:$0xff]
        %v2465 = vld [vmem:[%s3 + $0x350] sm:$0xff]
        %v2466 = vld [vmem:[%s3 + $0x358] sm:$0xff]
        %v2467 = vld [vmem:[%s3 + $0x360] sm:$0xff]
        %v2468 = vld [vmem:[%s3 + $0x368] sm:$0xff]
        %v2469 = vld [vmem:[%s3 + $0x370] sm:$0xff]
        %v2470 = vld [vmem:[%s3 + $0x378] sm:$0xff]
        %v2471 = vld [vmem:[%s3 + $0x380] sm:$0xff]
        %v2472 = vld [vmem:[%s3 + $0x388] sm:$0xff]
        %v2473 = vld [vmem:[%s3 + $0x390] sm:$0xff]
        %v2474 = vld [vmem:[%s3 + $0x398] sm:$0xff]
        %v2475 = vld [vmem:[%s3 + $0x3a0] sm:$0xff]
        %v2476 = vld [vmem:[%s3 + $0x3a8] sm:$0xff]
        %v2477 = vld [vmem:[%s3 + $0x3b0] sm:$0xff]
        %v2478 = vld [vmem:[%s3 + $0x3b8] sm:$0xff]
        %v2479 = vld [vmem:[%s3 + $0x3c0] sm:$0xff]
        %v2480 = vld [vmem:[%s3 + $0x3c8] sm:$0xff]
        %v2481 = vld [vmem:[%s3 + $0x3d0] sm:$0xff]
        %v2482 = vld [vmem:[%s3 + $0x3d8] sm:$0xff]
        %v2483 = vld [vmem:[%s3 + $0x3e0] sm:$0xff]
        %v2484 = vld [vmem:[%s3 + $0x3e8] sm:$0xff]
        %v2485 = vld [vmem:[%s3 + $0x3f0] sm:$0xff]
        %v2486 = vld [vmem:[%s3 + $0x3f8] sm:$0xff]
        %v2487 = vld [vmem:[%s4] sm:$0xf]
        %v2489 = vlaneseq
        %v2490 = vshrl.u32 %v2489, 7
        %v2491 = vsub.s32 0, %v2490
        %v2492 = vrot.slane %v2487, %v2491
        %v2493 = vlaneseq
        %v2494 = vshrl.u32 %v2493, 7
        %v2495 = vsub.s32 1, %v2494
        %v2496 = vrot.slane %v2487, %v2495
        %v2497 = vlaneseq
        %v2498 = vshrl.u32 %v2497, 7
        %v2499 = vsub.s32 2, %v2498
        %v2500 = vrot.slane %v2487, %v2499
        %v2501 = vlaneseq
        %v2502 = vshrl.u32 %v2501, 7
        %v2503 = vsub.s32 3, %v2502
        %v2504 = vrot.slane %v2487, %v2503
        %2509 = vmatprep.subr.mxu0 %v2360
        %2510 = vmatpush1.msra.mxu0 %v2359
        %2511 = vmatprep.subr.mxu0 %v2364
        %2512 = vmatpush1.msra.mxu0 %v2363
        %2513 = vmatprep.subr.mxu0 %v2368
        %2514 = vmatpush1.msra.mxu0 %v2367
        %2515 = vmatprep.subr.mxu0 %v2372
        %2516 = vmatpush1.msra.mxu0 %v2371
        %2517 = vmatprep.subr.mxu0 %v2376
        %2518 = vmatpush1.msra.mxu0 %v2375
        %2519 = vmatprep.subr.mxu0 %v2380
        %2520 = vmatpush1.msra.mxu0 %v2379
        %2521 = vmatprep.subr.mxu0 %v2384
        %2522 = vmatpush1.msra.mxu0 %v2383
        %2523 = vmatprep.subr.mxu0 %v2388
        %2524 = vmatpush1.msra.mxu0 %v2387
        %2525 = vmatprep.subr.mxu0 %v2392
        %2526 = vmatpush1.msra.mxu0 %v2391
        %2527 = vmatprep.subr.mxu0 %v2396
        %2528 = vmatpush1.msra.mxu0 %v2395
        %2529 = vmatprep.subr.mxu0 %v2400
        %2530 = vmatpush1.msra.mxu0 %v2399
        %2531 = vmatprep.subr.mxu0 %v2404
        %2532 = vmatpush1.msra.mxu0 %v2403
        %2533 = vmatprep.subr.mxu0 %v2408
        %2534 = vmatpush1.msra.mxu0 %v2407
        %2535 = vmatprep.subr.mxu0 %v2412
        %2536 = vmatpush1.msra.mxu0 %v2411
        %2537 = vmatprep.subr.mxu0 %v2416
        %2538 = vmatpush1.msra.mxu0 %v2415
        %2539 = vmatprep.subr.mxu0 %v2420
        %2540 = vmatpush1.msra.mxu0 %v2419
        %2541 = vmatprep.subr.mxu0 %v2424
        %2542 = vmatpush1.msra.mxu0 %v2423
        %2543 = vmatprep.subr.mxu0 %v2428
        %2544 = vmatpush1.msra.mxu0 %v2427
        %2545 = vmatprep.subr.mxu0 %v2432
        %2546 = vmatpush1.msra.mxu0 %v2431
        %2547 = vmatprep.subr.mxu0 %v2436
        %2548 = vmatpush1.msra.mxu0 %v2435
        %2549 = vmatprep.subr.mxu0 %v2440
        %2550 = vmatpush1.msra.mxu0 %v2439
        %2551 = vmatprep.subr.mxu0 %v2444
        %2552 = vmatpush1.msra.mxu0 %v2443
        %2553 = vmatprep.subr.mxu0 %v2448
        %2554 = vmatpush1.msra.mxu0 %v2447
        %2555 = vmatprep.subr.mxu0 %v2452
        %2556 = vmatpush1.msra.mxu0 %v2451
        %2557 = vmatprep.subr.mxu0 %v2456
        %2558 = vmatpush1.msra.mxu0 %v2455
        %2559 = vmatprep.subr.mxu0 %v2460
        %2560 = vmatpush1.msra.mxu0 %v2459
        %2561 = vmatprep.subr.mxu0 %v2464
        %2562 = vmatpush1.msra.mxu0 %v2463
        %2563 = vmatprep.subr.mxu0 %v2468
        %2564 = vmatpush1.msra.mxu0 %v2467
        %2565 = vmatprep.subr.mxu0 %v2472
        %2566 = vmatpush1.msra.mxu0 %v2471
        %2567 = vmatprep.subr.mxu0 %v2476
        %2568 = vmatpush1.msra.mxu0 %v2475
        %2569 = vmatprep.subr.mxu0 %v2480
        %2570 = vmatpush1.msra.mxu0 %v2479
        %2571 = vmatprep.subr.mxu0 %v2484
        %2572 = vmatpush1.msra.mxu0 %v2483
        %2573 = vmatprep.mubr.f32.mxu0 %v2358
        %2574 = vmatmul.mubr.f32.gmra.mrb[0].mxu0 %v2357
        %v2575 = vpop.f32.mrb[0].mxu0
        %v2576 = vadd.f32 %v2492, %v2575
        %v2577 = vpop.f32.mrb[0].mxu0
        %v2578 = vadd.f32 %v2496, %v2577
        %2579 = vdwg.mxu0
        %2580 = vmatprep.subr.mxu0 %v2362
        %2581 = vmatpush1.msra.mxu0 %v2361
        %2582 = vmatprep.subr.mxu0 %v2366
        %2583 = vmatpush1.msra.mxu0 %v2365
        %2584 = vmatprep.subr.mxu0 %v2370
        %2585 = vmatpush1.msra.mxu0 %v2369
        %2586 = vmatprep.subr.mxu0 %v2374
        %2587 = vmatpush1.msra.mxu0 %v2373
        %2588 = vmatprep.subr.mxu0 %v2378
        %2589 = vmatpush1.msra.mxu0 %v2377
        %2590 = vmatprep.subr.mxu0 %v2382
        %2591 = vmatpush1.msra.mxu0 %v2381
        %2592 = vmatprep.subr.mxu0 %v2386
        %2593 = vmatpush1.msra.mxu0 %v2385
        %2594 = vmatprep.subr.mxu0 %v2390
        %2595 = vmatpush1.msra.mxu0 %v2389
        %2596 = vmatprep.subr.mxu0 %v2394
        %2597 = vmatpush1.msra.mxu0 %v2393
        %2598 = vmatprep.subr.mxu0 %v2398
        %2599 = vmatpush1.msra.mxu0 %v2397
        %2600 = vmatprep.subr.mxu0 %v2402
        %2601 = vmatpush1.msra.mxu0 %v2401
        %2602 = vmatprep.subr.mxu0 %v2406
        %2603 = vmatpush1.msra.mxu0 %v2405
        %2604 = vmatprep.subr.mxu0 %v2410
        %2605 = vmatpush1.msra.mxu0 %v2409
        %2606 = vmatprep.subr.mxu0 %v2414
        %2607 = vmatpush1.msra.mxu0 %v2413
        %2608 = vmatprep.subr.mxu0 %v2418
        %2609 = vmatpush1.msra.mxu0 %v2417
        %2610 = vmatprep.subr.mxu0 %v2422
        %2611 = vmatpush1.msra.mxu0 %v2421
        %2612 = vmatprep.subr.mxu0 %v2426
        %2613 = vmatpush1.msra.mxu0 %v2425
        %2614 = vmatprep.subr.mxu0 %v2430
        %2615 = vmatpush1.msra.mxu0 %v2429
        %2616 = vmatprep.subr.mxu0 %v2434
        %2617 = vmatpush1.msra.mxu0 %v2433
        %2618 = vmatprep.subr.mxu0 %v2438
        %2619 = vmatpush1.msra.mxu0 %v2437
        %2620 = vmatprep.subr.mxu0 %v2442
        %2621 = vmatpush1.msra.mxu0 %v2441
        %2622 = vmatprep.subr.mxu0 %v2446
        %2623 = vmatpush1.msra.mxu0 %v2445
        %2624 = vmatprep.subr.mxu0 %v2450
        %2625 = vmatpush1.msra.mxu0 %v2449
        %2626 = vmatprep.subr.mxu0 %v2454
        %2627 = vmatpush1.msra.mxu0 %v2453
        %2628 = vmatprep.subr.mxu0 %v2458
        %2629 = vmatpush1.msra.mxu0 %v2457
        %2630 = vmatprep.subr.mxu0 %v2462
        %2631 = vmatpush1.msra.mxu0 %v2461
        %2632 = vmatprep.subr.mxu0 %v2466
        %2633 = vmatpush1.msra.mxu0 %v2465
        %2634 = vmatprep.subr.mxu0 %v2470
        %2635 = vmatpush1.msra.mxu0 %v2469
        %2636 = vmatprep.subr.mxu0 %v2474
        %2637 = vmatpush1.msra.mxu0 %v2473
        %2638 = vmatprep.subr.mxu0 %v2478
        %2639 = vmatpush1.msra.mxu0 %v2477
        %2640 = vmatprep.subr.mxu0 %v2482
        %2641 = vmatpush1.msra.mxu0 %v2481
        %2642 = vmatprep.subr.mxu0 %v2486
        %2643 = vmatpush1.msra.mxu0 %v2485
        %2644 = vmatprep.mubr.f32.mxu0 %v2358
        %2645 = vmatmul.mubr.f32.gmra.mrb[0].mxu0 %v2357
        %v2646 = vpop.f32.mrb[0].mxu0
        %v2647 = vadd.f32 %v2500, %v2646
        %v2648 = vpop.f32.mrb[0].mxu0
        %v2649 = vadd.f32 %v2504, %v2648
        %2650 = vdwg.mxu0
        %v2651 = vmax.f32 %v2576, 0.0
        %v2652 = vmax.f32 %v2578, 0.0
        %v2653 = vmax.f32 %v2647, 0.0
        %v2654 = vmax.f32 %v2649, 0.0
        %v2655 = vpack.c.bf16 %v2651, %v2651
        %v2656 = vpack.c.bf16 %v2652, %v2652
        %v2657 = vpack.c.bf16 %v2653, %v2653
        %v2658 = vpack.c.bf16 %v2654, %v2654
        %v2659 = vld [vmem:[%s2196] sm:$0xff]
        %v2660 = vld [vmem:[%s2196 + $0x8] sm:$0xff]
        %v2661 = vld [vmem:[%s2196 + $0x10] sm:$0xff]
        %v2662 = vld [vmem:[%s2196 + $0x18] sm:$0xff]
        %v2663 = vld [vmem:[%s2196 + $0x20] sm:$0xff]
        %v2664 = vld [vmem:[%s2196 + $0x28] sm:$0xff]
        %v2665 = vld [vmem:[%s2196 + $0x30] sm:$0xff]
        %v2666 = vld [vmem:[%s2196 + $0x38] sm:$0xff]
        %v2667 = vld [vmem:[%s2196 + $0x40] sm:$0xff]
        %v2668 = vld [vmem:[%s2196 + $0x48] sm:$0xff]
        %v2669 = vld [vmem:[%s2196 + $0x50] sm:$0xff]
        %v2670 = vld [vmem:[%s2196 + $0x58] sm:$0xff]
        %v2671 = vld [vmem:[%s2196 + $0x60] sm:$0xff]
        %v2672 = vld [vmem:[%s2196 + $0x68] sm:$0xff]
        %v2673 = vld [vmem:[%s2196 + $0x70] sm:$0xff]
        %v2674 = vld [vmem:[%s2196 + $0x78] sm:$0xff]
        %v2675 = vld [vmem:[%s2196 + $0x80] sm:$0xff]
        %v2676 = vld [vmem:[%s2196 + $0x88] sm:$0xff]
        %v2677 = vld [vmem:[%s2196 + $0x90] sm:$0xff]
        %v2678 = vld [vmem:[%s2196 + $0x98] sm:$0xff]
        %v2679 = vld [vmem:[%s2196 + $0xa0] sm:$0xff]
        %v2680 = vld [vmem:[%s2196 + $0xa8] sm:$0xff]
        %v2681 = vld [vmem:[%s2196 + $0xb0] sm:$0xff]
        %v2682 = vld [vmem:[%s2196 + $0xb8] sm:$0xff]
        %v2683 = vld [vmem:[%s2196 + $0xc0] sm:$0xff]
        %v2684 = vld [vmem:[%s2196 + $0xc8] sm:$0xff]
        %v2685 = vld [vmem:[%s2196 + $0xd0] sm:$0xff]
        %v2686 = vld [vmem:[%s2196 + $0xd8] sm:$0xff]
        %v2687 = vld [vmem:[%s2196 + $0xe0] sm:$0xff]
        %v2688 = vld [vmem:[%s2196 + $0xe8] sm:$0xff]
        %v2689 = vld [vmem:[%s2196 + $0xf0] sm:$0xff]
        %v2690 = vld [vmem:[%s2196 + $0xf8] sm:$0xff]
        %v2691 = vld [vmem:[%s2196 + $0x100] sm:$0xff]
        %v2692 = vld [vmem:[%s2196 + $0x108] sm:$0xff]
        %v2693 = vld [vmem:[%s2196 + $0x110] sm:$0xff]
        %v2694 = vld [vmem:[%s2196 + $0x118] sm:$0xff]
        %v2695 = vld [vmem:[%s2196 + $0x120] sm:$0xff]
        %v2696 = vld [vmem:[%s2196 + $0x128] sm:$0xff]
        %v2697 = vld [vmem:[%s2196 + $0x130] sm:$0xff]
        %v2698 = vld [vmem:[%s2196 + $0x138] sm:$0xff]
        %v2699 = vld [vmem:[%s2196 + $0x140] sm:$0xff]
        %v2700 = vld [vmem:[%s2196 + $0x148] sm:$0xff]
        %v2701 = vld [vmem:[%s2196 + $0x150] sm:$0xff]
        %v2702 = vld [vmem:[%s2196 + $0x158] sm:$0xff]
        %v2703 = vld [vmem:[%s2196 + $0x160] sm:$0xff]
        %v2704 = vld [vmem:[%s2196 + $0x168] sm:$0xff]
        %v2705 = vld [vmem:[%s2196 + $0x170] sm:$0xff]
        %v2706 = vld [vmem:[%s2196 + $0x178] sm:$0xff]
        %v2707 = vld [vmem:[%s2196 + $0x180] sm:$0xff]
        %v2708 = vld [vmem:[%s2196 + $0x188] sm:$0xff]
        %v2709 = vld [vmem:[%s2196 + $0x190] sm:$0xff]
        %v2710 = vld [vmem:[%s2196 + $0x198] sm:$0xff]
        %v2711 = vld [vmem:[%s2196 + $0x1a0] sm:$0xff]
        %v2712 = vld [vmem:[%s2196 + $0x1a8] sm:$0xff]
        %v2713 = vld [vmem:[%s2196 + $0x1b0] sm:$0xff]
        %v2714 = vld [vmem:[%s2196 + $0x1b8] sm:$0xff]
        %v2715 = vld [vmem:[%s2196 + $0x1c0] sm:$0xff]
        %v2716 = vld [vmem:[%s2196 + $0x1c8] sm:$0xff]
        %v2717 = vld [vmem:[%s2196 + $0x1d0] sm:$0xff]
        %v2718 = vld [vmem:[%s2196 + $0x1d8] sm:$0xff]
        %v2719 = vld [vmem:[%s2196 + $0x1e0] sm:$0xff]
        %v2720 = vld [vmem:[%s2196 + $0x1e8] sm:$0xff]
        %v2721 = vld [vmem:[%s2196 + $0x1f0] sm:$0xff]
        %v2722 = vld [vmem:[%s2196 + $0x1f8] sm:$0xff]
        %v2723 = vld [vmem:[%s2196 + $0x200] sm:$0xff]
        %v2724 = vld [vmem:[%s2196 + $0x208] sm:$0xff]
        %v2725 = vld [vmem:[%s2196 + $0x210] sm:$0xff]
        %v2726 = vld [vmem:[%s2196 + $0x218] sm:$0xff]
        %v2727 = vld [vmem:[%s2196 + $0x220] sm:$0xff]
        %v2728 = vld [vmem:[%s2196 + $0x228] sm:$0xff]
        %v2729 = vld [vmem:[%s2196 + $0x230] sm:$0xff]
        %v2730 = vld [vmem:[%s2196 + $0x238] sm:$0xff]
        %v2731 = vld [vmem:[%s2196 + $0x240] sm:$0xff]
        %v2732 = vld [vmem:[%s2196 + $0x248] sm:$0xff]
        %v2733 = vld [vmem:[%s2196 + $0x250] sm:$0xff]
        %v2734 = vld [vmem:[%s2196 + $0x258] sm:$0xff]
        %v2735 = vld [vmem:[%s2196 + $0x260] sm:$0xff]
        %v2736 = vld [vmem:[%s2196 + $0x268] sm:$0xff]
        %v2737 = vld [vmem:[%s2196 + $0x270] sm:$0xff]
        %v2738 = vld [vmem:[%s2196 + $0x278] sm:$0xff]
        %v2739 = vld [vmem:[%s2196 + $0x280] sm:$0xff]
        %v2740 = vld [vmem:[%s2196 + $0x288] sm:$0xff]
        %v2741 = vld [vmem:[%s2196 + $0x290] sm:$0xff]
        %v2742 = vld [vmem:[%s2196 + $0x298] sm:$0xff]
        %v2743 = vld [vmem:[%s2196 + $0x2a0] sm:$0xff]
        %v2744 = vld [vmem:[%s2196 + $0x2a8] sm:$0xff]
        %v2745 = vld [vmem:[%s2196 + $0x2b0] sm:$0xff]
        %v2746 = vld [vmem:[%s2196 + $0x2b8] sm:$0xff]
        %v2747 = vld [vmem:[%s2196 + $0x2c0] sm:$0xff]
        %v2748 = vld [vmem:[%s2196 + $0x2c8] sm:$0xff]
        %v2749 = vld [vmem:[%s2196 + $0x2d0] sm:$0xff]
        %v2750 = vld [vmem:[%s2196 + $0x2d8] sm:$0xff]
        %v2751 = vld [vmem:[%s2196 + $0x2e0] sm:$0xff]
        %v2752 = vld [vmem:[%s2196 + $0x2e8] sm:$0xff]
        %v2753 = vld [vmem:[%s2196 + $0x2f0] sm:$0xff]
        %v2754 = vld [vmem:[%s2196 + $0x2f8] sm:$0xff]
        %v2755 = vld [vmem:[%s2196 + $0x300] sm:$0xff]
        %v2756 = vld [vmem:[%s2196 + $0x308] sm:$0xff]
        %v2757 = vld [vmem:[%s2196 + $0x310] sm:$0xff]
        %v2758 = vld [vmem:[%s2196 + $0x318] sm:$0xff]
        %v2759 = vld [vmem:[%s2196 + $0x320] sm:$0xff]
        %v2760 = vld [vmem:[%s2196 + $0x328] sm:$0xff]
        %v2761 = vld [vmem:[%s2196 + $0x330] sm:$0xff]
        %v2762 = vld [vmem:[%s2196 + $0x338] sm:$0xff]
        %v2763 = vld [vmem:[%s2196 + $0x340] sm:$0xff]
        %v2764 = vld [vmem:[%s2196 + $0x348] sm:$0xff]
        %v2765 = vld [vmem:[%s2196 + $0x350] sm:$0xff]
        %v2766 = vld [vmem:[%s2196 + $0x358] sm:$0xff]
        %v2767 = vld [vmem:[%s2196 + $0x360] sm:$0xff]
        %v2768 = vld [vmem:[%s2196 + $0x368] sm:$0xff]
        %v2769 = vld [vmem:[%s2196 + $0x370] sm:$0xff]
        %v2770 = vld [vmem:[%s2196 + $0x378] sm:$0xff]
        %v2771 = vld [vmem:[%s2196 + $0x380] sm:$0xff]
        %v2772 = vld [vmem:[%s2196 + $0x388] sm:$0xff]
        %v2773 = vld [vmem:[%s2196 + $0x390] sm:$0xff]
        %v2774 = vld [vmem:[%s2196 + $0x398] sm:$0xff]
        %v2775 = vld [vmem:[%s2196 + $0x3a0] sm:$0xff]
        %v2776 = vld [vmem:[%s2196 + $0x3a8] sm:$0xff]
        %v2777 = vld [vmem:[%s2196 + $0x3b0] sm:$0xff]
        %v2778 = vld [vmem:[%s2196 + $0x3b8] sm:$0xff]
        %v2779 = vld [vmem:[%s2196 + $0x3c0] sm:$0xff]
        %v2780 = vld [vmem:[%s2196 + $0x3c8] sm:$0xff]
        %v2781 = vld [vmem:[%s2196 + $0x3d0] sm:$0xff]
        %v2782 = vld [vmem:[%s2196 + $0x3d8] sm:$0xff]
        %v2783 = vld [vmem:[%s2196 + $0x3e0] sm:$0xff]
        %v2784 = vld [vmem:[%s2196 + $0x3e8] sm:$0xff]
        %v2785 = vld [vmem:[%s2196 + $0x3f0] sm:$0xff]
        %v2786 = vld [vmem:[%s2196 + $0x3f8] sm:$0xff]
        %v2787 = vld [vmem:[%s2196 + $0x400] sm:$0xff]
        %v2788 = vld [vmem:[%s2196 + $0x408] sm:$0xff]
        %v2789 = vld [vmem:[%s2196 + $0x410] sm:$0xff]
        %v2790 = vld [vmem:[%s2196 + $0x418] sm:$0xff]
        %v2791 = vld [vmem:[%s2196 + $0x420] sm:$0xff]
        %v2792 = vld [vmem:[%s2196 + $0x428] sm:$0xff]
        %v2793 = vld [vmem:[%s2196 + $0x430] sm:$0xff]
        %v2794 = vld [vmem:[%s2196 + $0x438] sm:$0xff]
        %v2795 = vld [vmem:[%s2196 + $0x440] sm:$0xff]
        %v2796 = vld [vmem:[%s2196 + $0x448] sm:$0xff]
        %v2797 = vld [vmem:[%s2196 + $0x450] sm:$0xff]
        %v2798 = vld [vmem:[%s2196 + $0x458] sm:$0xff]
        %v2799 = vld [vmem:[%s2196 + $0x460] sm:$0xff]
        %v2800 = vld [vmem:[%s2196 + $0x468] sm:$0xff]
        %v2801 = vld [vmem:[%s2196 + $0x470] sm:$0xff]
        %v2802 = vld [vmem:[%s2196 + $0x478] sm:$0xff]
        %v2803 = vld [vmem:[%s2196 + $0x480] sm:$0xff]
        %v2804 = vld [vmem:[%s2196 + $0x488] sm:$0xff]
        %v2805 = vld [vmem:[%s2196 + $0x490] sm:$0xff]
        %v2806 = vld [vmem:[%s2196 + $0x498] sm:$0xff]
        %v2807 = vld [vmem:[%s2196 + $0x4a0] sm:$0xff]
        %v2808 = vld [vmem:[%s2196 + $0x4a8] sm:$0xff]
        %v2809 = vld [vmem:[%s2196 + $0x4b0] sm:$0xff]
        %v2810 = vld [vmem:[%s2196 + $0x4b8] sm:$0xff]
        %v2811 = vld [vmem:[%s2196 + $0x4c0] sm:$0xff]
        %v2812 = vld [vmem:[%s2196 + $0x4c8] sm:$0xff]
        %v2813 = vld [vmem:[%s2196 + $0x4d0] sm:$0xff]
        %v2814 = vld [vmem:[%s2196 + $0x4d8] sm:$0xff]
        %v2815 = vld [vmem:[%s2196 + $0x4e0] sm:$0xff]
        %v2816 = vld [vmem:[%s2196 + $0x4e8] sm:$0xff]
        %v2817 = vld [vmem:[%s2196 + $0x4f0] sm:$0xff]
        %v2818 = vld [vmem:[%s2196 + $0x4f8] sm:$0xff]
        %v2819 = vld [vmem:[%s2196 + $0x500] sm:$0xff]
        %v2820 = vld [vmem:[%s2196 + $0x508] sm:$0xff]
        %v2821 = vld [vmem:[%s2196 + $0x510] sm:$0xff]
        %v2822 = vld [vmem:[%s2196 + $0x518] sm:$0xff]
        %v2823 = vld [vmem:[%s2196 + $0x520] sm:$0xff]
        %v2824 = vld [vmem:[%s2196 + $0x528] sm:$0xff]
        %v2825 = vld [vmem:[%s2196 + $0x530] sm:$0xff]
        %v2826 = vld [vmem:[%s2196 + $0x538] sm:$0xff]
        %v2827 = vld [vmem:[%s2196 + $0x540] sm:$0xff]
        %v2828 = vld [vmem:[%s2196 + $0x548] sm:$0xff]
        %v2829 = vld [vmem:[%s2196 + $0x550] sm:$0xff]
        %v2830 = vld [vmem:[%s2196 + $0x558] sm:$0xff]
        %v2831 = vld [vmem:[%s2196 + $0x560] sm:$0xff]
        %v2832 = vld [vmem:[%s2196 + $0x568] sm:$0xff]
        %v2833 = vld [vmem:[%s2196 + $0x570] sm:$0xff]
        %v2834 = vld [vmem:[%s2196 + $0x578] sm:$0xff]
        %v2835 = vld [vmem:[%s2196 + $0x580] sm:$0xff]
        %v2836 = vld [vmem:[%s2196 + $0x588] sm:$0xff]
        %v2837 = vld [vmem:[%s2196 + $0x590] sm:$0xff]
        %v2838 = vld [vmem:[%s2196 + $0x598] sm:$0xff]
        %v2839 = vld [vmem:[%s2196 + $0x5a0] sm:$0xff]
        %v2840 = vld [vmem:[%s2196 + $0x5a8] sm:$0xff]
        %v2841 = vld [vmem:[%s2196 + $0x5b0] sm:$0xff]
        %v2842 = vld [vmem:[%s2196 + $0x5b8] sm:$0xff]
        %v2843 = vld [vmem:[%s2196 + $0x5c0] sm:$0xff]
        %v2844 = vld [vmem:[%s2196 + $0x5c8] sm:$0xff]
        %v2845 = vld [vmem:[%s2196 + $0x5d0] sm:$0xff]
        %v2846 = vld [vmem:[%s2196 + $0x5d8] sm:$0xff]
        %v2847 = vld [vmem:[%s2196 + $0x5e0] sm:$0xff]
        %v2848 = vld [vmem:[%s2196 + $0x5e8] sm:$0xff]
        %v2849 = vld [vmem:[%s2196 + $0x5f0] sm:$0xff]
        %v2850 = vld [vmem:[%s2196 + $0x5f8] sm:$0xff]
        %v2851 = vld [vmem:[%s2196 + $0x600] sm:$0xff]
        %v2852 = vld [vmem:[%s2196 + $0x608] sm:$0xff]
        %v2853 = vld [vmem:[%s2196 + $0x610] sm:$0xff]
        %v2854 = vld [vmem:[%s2196 + $0x618] sm:$0xff]
        %v2855 = vld [vmem:[%s2196 + $0x620] sm:$0xff]
        %v2856 = vld [vmem:[%s2196 + $0x628] sm:$0xff]
        %v2857 = vld [vmem:[%s2196 + $0x630] sm:$0xff]
        %v2858 = vld [vmem:[%s2196 + $0x638] sm:$0xff]
        %v2859 = vld [vmem:[%s2196 + $0x640] sm:$0xff]
        %v2860 = vld [vmem:[%s2196 + $0x648] sm:$0xff]
        %v2861 = vld [vmem:[%s2196 + $0x650] sm:$0xff]
        %v2862 = vld [vmem:[%s2196 + $0x658] sm:$0xff]
        %v2863 = vld [vmem:[%s2196 + $0x660] sm:$0xff]
        %v2864 = vld [vmem:[%s2196 + $0x668] sm:$0xff]
        %v2865 = vld [vmem:[%s2196 + $0x670] sm:$0xff]
        %v2866 = vld [vmem:[%s2196 + $0x678] sm:$0xff]
        %v2867 = vld [vmem:[%s2196 + $0x680] sm:$0xff]
        %v2868 = vld [vmem:[%s2196 + $0x688] sm:$0xff]
        %v2869 = vld [vmem:[%s2196 + $0x690] sm:$0xff]
        %v2870 = vld [vmem:[%s2196 + $0x698] sm:$0xff]
        %v2871 = vld [vmem:[%s2196 + $0x6a0] sm:$0xff]
        %v2872 = vld [vmem:[%s2196 + $0x6a8] sm:$0xff]
        %v2873 = vld [vmem:[%s2196 + $0x6b0] sm:$0xff]
        %v2874 = vld [vmem:[%s2196 + $0x6b8] sm:$0xff]
        %v2875 = vld [vmem:[%s2196 + $0x6c0] sm:$0xff]
        %v2876 = vld [vmem:[%s2196 + $0x6c8] sm:$0xff]
        %v2877 = vld [vmem:[%s2196 + $0x6d0] sm:$0xff]
        %v2878 = vld [vmem:[%s2196 + $0x6d8] sm:$0xff]
        %v2879 = vld [vmem:[%s2196 + $0x6e0] sm:$0xff]
        %v2880 = vld [vmem:[%s2196 + $0x6e8] sm:$0xff]
        %v2881 = vld [vmem:[%s2196 + $0x6f0] sm:$0xff]
        %v2882 = vld [vmem:[%s2196 + $0x6f8] sm:$0xff]
        %v2883 = vld [vmem:[%s2196 + $0x700] sm:$0xff]
        %v2884 = vld [vmem:[%s2196 + $0x708] sm:$0xff]
        %v2885 = vld [vmem:[%s2196 + $0x710] sm:$0xff]
        %v2886 = vld [vmem:[%s2196 + $0x718] sm:$0xff]
        %v2887 = vld [vmem:[%s2196 + $0x720] sm:$0xff]
        %v2888 = vld [vmem:[%s2196 + $0x728] sm:$0xff]
        %v2889 = vld [vmem:[%s2196 + $0x730] sm:$0xff]
        %v2890 = vld [vmem:[%s2196 + $0x738] sm:$0xff]
        %v2891 = vld [vmem:[%s2196 + $0x740] sm:$0xff]
        %v2892 = vld [vmem:[%s2196 + $0x748] sm:$0xff]
        %v2893 = vld [vmem:[%s2196 + $0x750] sm:$0xff]
        %v2894 = vld [vmem:[%s2196 + $0x758] sm:$0xff]
        %v2895 = vld [vmem:[%s2196 + $0x760] sm:$0xff]
        %v2896 = vld [vmem:[%s2196 + $0x768] sm:$0xff]
        %v2897 = vld [vmem:[%s2196 + $0x770] sm:$0xff]
        %v2898 = vld [vmem:[%s2196 + $0x778] sm:$0xff]
        %v2899 = vld [vmem:[%s2196 + $0x780] sm:$0xff]
        %v2900 = vld [vmem:[%s2196 + $0x788] sm:$0xff]
        %v2901 = vld [vmem:[%s2196 + $0x790] sm:$0xff]
        %v2902 = vld [vmem:[%s2196 + $0x798] sm:$0xff]
        %v2903 = vld [vmem:[%s2196 + $0x7a0] sm:$0xff]
        %v2904 = vld [vmem:[%s2196 + $0x7a8] sm:$0xff]
        %v2905 = vld [vmem:[%s2196 + $0x7b0] sm:$0xff]
        %v2906 = vld [vmem:[%s2196 + $0x7b8] sm:$0xff]
        %v2907 = vld [vmem:[%s2196 + $0x7c0] sm:$0xff]
        %v2908 = vld [vmem:[%s2196 + $0x7c8] sm:$0xff]
        %v2909 = vld [vmem:[%s2196 + $0x7d0] sm:$0xff]
        %v2910 = vld [vmem:[%s2196 + $0x7d8] sm:$0xff]
        %v2911 = vld [vmem:[%s2196 + $0x7e0] sm:$0xff]
        %v2912 = vld [vmem:[%s2196 + $0x7e8] sm:$0xff]
        %v2913 = vld [vmem:[%s2196 + $0x7f0] sm:$0xff]
        %v2914 = vld [vmem:[%s2196 + $0x7f8] sm:$0xff]
        %v2915 = vld [vmem:[%s2196 + $0x800] sm:$0xff]
        %v2916 = vld [vmem:[%s2196 + $0x808] sm:$0xff]
        %v2917 = vld [vmem:[%s2196 + $0x810] sm:$0xff]
        %v2918 = vld [vmem:[%s2196 + $0x818] sm:$0xff]
        %v2919 = vld [vmem:[%s2196 + $0x820] sm:$0xff]
        %v2920 = vld [vmem:[%s2196 + $0x828] sm:$0xff]
        %v2921 = vld [vmem:[%s2196 + $0x830] sm:$0xff]
        %v2922 = vld [vmem:[%s2196 + $0x838] sm:$0xff]
        %v2923 = vld [vmem:[%s2196 + $0x840] sm:$0xff]
        %v2924 = vld [vmem:[%s2196 + $0x848] sm:$0xff]
        %v2925 = vld [vmem:[%s2196 + $0x850] sm:$0xff]
        %v2926 = vld [vmem:[%s2196 + $0x858] sm:$0xff]
        %v2927 = vld [vmem:[%s2196 + $0x860] sm:$0xff]
        %v2928 = vld [vmem:[%s2196 + $0x868] sm:$0xff]
        %v2929 = vld [vmem:[%s2196 + $0x870] sm:$0xff]
        %v2930 = vld [vmem:[%s2196 + $0x878] sm:$0xff]
        %v2931 = vld [vmem:[%s2196 + $0x880] sm:$0xff]
        %v2932 = vld [vmem:[%s2196 + $0x888] sm:$0xff]
        %v2933 = vld [vmem:[%s2196 + $0x890] sm:$0xff]
        %v2934 = vld [vmem:[%s2196 + $0x898] sm:$0xff]
        %v2935 = vld [vmem:[%s2196 + $0x8a0] sm:$0xff]
        %v2936 = vld [vmem:[%s2196 + $0x8a8] sm:$0xff]
        %v2937 = vld [vmem:[%s2196 + $0x8b0] sm:$0xff]
        %v2938 = vld [vmem:[%s2196 + $0x8b8] sm:$0xff]
        %v2939 = vld [vmem:[%s2196 + $0x8c0] sm:$0xff]
        %v2940 = vld [vmem:[%s2196 + $0x8c8] sm:$0xff]
        %v2941 = vld [vmem:[%s2196 + $0x8d0] sm:$0xff]
        %v2942 = vld [vmem:[%s2196 + $0x8d8] sm:$0xff]
        %v2943 = vld [vmem:[%s2196 + $0x8e0] sm:$0xff]
        %v2944 = vld [vmem:[%s2196 + $0x8e8] sm:$0xff]
        %v2945 = vld [vmem:[%s2196 + $0x8f0] sm:$0xff]
        %v2946 = vld [vmem:[%s2196 + $0x8f8] sm:$0xff]
        %v2947 = vld [vmem:[%s2196 + $0x900] sm:$0xff]
        %v2948 = vld [vmem:[%s2196 + $0x908] sm:$0xff]
        %v2949 = vld [vmem:[%s2196 + $0x910] sm:$0xff]
        %v2950 = vld [vmem:[%s2196 + $0x918] sm:$0xff]
        %v2951 = vld [vmem:[%s2196 + $0x920] sm:$0xff]
        %v2952 = vld [vmem:[%s2196 + $0x928] sm:$0xff]
        %v2953 = vld [vmem:[%s2196 + $0x930] sm:$0xff]
        %v2954 = vld [vmem:[%s2196 + $0x938] sm:$0xff]
        %v2955 = vld [vmem:[%s2196 + $0x940] sm:$0xff]
        %v2956 = vld [vmem:[%s2196 + $0x948] sm:$0xff]
        %v2957 = vld [vmem:[%s2196 + $0x950] sm:$0xff]
        %v2958 = vld [vmem:[%s2196 + $0x958] sm:$0xff]
        %v2959 = vld [vmem:[%s2196 + $0x960] sm:$0xff]
        %v2960 = vld [vmem:[%s2196 + $0x968] sm:$0xff]
        %v2961 = vld [vmem:[%s2196 + $0x970] sm:$0xff]
        %v2962 = vld [vmem:[%s2196 + $0x978] sm:$0xff]
        %v2963 = vld [vmem:[%s2196 + $0x980] sm:$0xff]
        %v2964 = vld [vmem:[%s2196 + $0x988] sm:$0xff]
        %v2965 = vld [vmem:[%s2196 + $0x990] sm:$0xff]
        %v2966 = vld [vmem:[%s2196 + $0x998] sm:$0xff]
        %v2967 = vld [vmem:[%s2196 + $0x9a0] sm:$0xff]
        %v2968 = vld [vmem:[%s2196 + $0x9a8] sm:$0xff]
        %v2969 = vld [vmem:[%s2196 + $0x9b0] sm:$0xff]
        %v2970 = vld [vmem:[%s2196 + $0x9b8] sm:$0xff]
        %v2971 = vld [vmem:[%s2196 + $0x9c0] sm:$0xff]
        %v2972 = vld [vmem:[%s2196 + $0x9c8] sm:$0xff]
        %v2973 = vld [vmem:[%s2196 + $0x9d0] sm:$0xff]
        %v2974 = vld [vmem:[%s2196 + $0x9d8] sm:$0xff]
        %v2975 = vld [vmem:[%s2196 + $0x9e0] sm:$0xff]
        %v2976 = vld [vmem:[%s2196 + $0x9e8] sm:$0xff]
        %v2977 = vld [vmem:[%s2196 + $0x9f0] sm:$0xff]
        %v2978 = vld [vmem:[%s2196 + $0x9f8] sm:$0xff]
        %v2979 = vld [vmem:[%s2196 + $0xa00] sm:$0xff]
        %v2980 = vld [vmem:[%s2196 + $0xa08] sm:$0xff]
        %v2981 = vld [vmem:[%s2196 + $0xa10] sm:$0xff]
        %v2982 = vld [vmem:[%s2196 + $0xa18] sm:$0xff]
        %v2983 = vld [vmem:[%s2196 + $0xa20] sm:$0xff]
        %v2984 = vld [vmem:[%s2196 + $0xa28] sm:$0xff]
        %v2985 = vld [vmem:[%s2196 + $0xa30] sm:$0xff]
        %v2986 = vld [vmem:[%s2196 + $0xa38] sm:$0xff]
        %v2987 = vld [vmem:[%s2196 + $0xa40] sm:$0xff]
        %v2988 = vld [vmem:[%s2196 + $0xa48] sm:$0xff]
        %v2989 = vld [vmem:[%s2196 + $0xa50] sm:$0xff]
        %v2990 = vld [vmem:[%s2196 + $0xa58] sm:$0xff]
        %v2991 = vld [vmem:[%s2196 + $0xa60] sm:$0xff]
        %v2992 = vld [vmem:[%s2196 + $0xa68] sm:$0xff]
        %v2993 = vld [vmem:[%s2196 + $0xa70] sm:$0xff]
        %v2994 = vld [vmem:[%s2196 + $0xa78] sm:$0xff]
        %v2995 = vld [vmem:[%s2196 + $0xa80] sm:$0xff]
        %v2996 = vld [vmem:[%s2196 + $0xa88] sm:$0xff]
        %v2997 = vld [vmem:[%s2196 + $0xa90] sm:$0xff]
        %v2998 = vld [vmem:[%s2196 + $0xa98] sm:$0xff]
        %v2999 = vld [vmem:[%s2196 + $0xaa0] sm:$0xff]
        %v3000 = vld [vmem:[%s2196 + $0xaa8] sm:$0xff]
        %v3001 = vld [vmem:[%s2196 + $0xab0] sm:$0xff]
        %v3002 = vld [vmem:[%s2196 + $0xab8] sm:$0xff]
        %v3003 = vld [vmem:[%s2196 + $0xac0] sm:$0xff]
        %v3004 = vld [vmem:[%s2196 + $0xac8] sm:$0xff]
        %v3005 = vld [vmem:[%s2196 + $0xad0] sm:$0xff]
        %v3006 = vld [vmem:[%s2196 + $0xad8] sm:$0xff]
        %v3007 = vld [vmem:[%s2196 + $0xae0] sm:$0xff]
        %v3008 = vld [vmem:[%s2196 + $0xae8] sm:$0xff]
        %v3009 = vld [vmem:[%s2196 + $0xaf0] sm:$0xff]
        %v3010 = vld [vmem:[%s2196 + $0xaf8] sm:$0xff]
        %v3011 = vld [vmem:[%s2196 + $0xb00] sm:$0xff]
        %v3012 = vld [vmem:[%s2196 + $0xb08] sm:$0xff]
        %v3013 = vld [vmem:[%s2196 + $0xb10] sm:$0xff]
        %v3014 = vld [vmem:[%s2196 + $0xb18] sm:$0xff]
        %v3015 = vld [vmem:[%s2196 + $0xb20] sm:$0xff]
        %v3016 = vld [vmem:[%s2196 + $0xb28] sm:$0xff]
        %v3017 = vld [vmem:[%s2196 + $0xb30] sm:$0xff]
        %v3018 = vld [vmem:[%s2196 + $0xb38] sm:$0xff]
        %v3019 = vld [vmem:[%s2196 + $0xb40] sm:$0xff]
        %v3020 = vld [vmem:[%s2196 + $0xb48] sm:$0xff]
        %v3021 = vld [vmem:[%s2196 + $0xb50] sm:$0xff]
        %v3022 = vld [vmem:[%s2196 + $0xb58] sm:$0xff]
        %v3023 = vld [vmem:[%s2196 + $0xb60] sm:$0xff]
        %v3024 = vld [vmem:[%s2196 + $0xb68] sm:$0xff]
        %v3025 = vld [vmem:[%s2196 + $0xb70] sm:$0xff]
        %v3026 = vld [vmem:[%s2196 + $0xb78] sm:$0xff]
        %v3027 = vld [vmem:[%s2196 + $0xb80] sm:$0xff]
        %v3028 = vld [vmem:[%s2196 + $0xb88] sm:$0xff]
        %v3029 = vld [vmem:[%s2196 + $0xb90] sm:$0xff]
        %v3030 = vld [vmem:[%s2196 + $0xb98] sm:$0xff]
        %v3031 = vld [vmem:[%s2196 + $0xba0] sm:$0xff]
        %v3032 = vld [vmem:[%s2196 + $0xba8] sm:$0xff]
        %v3033 = vld [vmem:[%s2196 + $0xbb0] sm:$0xff]
        %v3034 = vld [vmem:[%s2196 + $0xbb8] sm:$0xff]
        %v3035 = vld [vmem:[%s2196 + $0xbc0] sm:$0xff]
        %v3036 = vld [vmem:[%s2196 + $0xbc8] sm:$0xff]
        %v3037 = vld [vmem:[%s2196 + $0xbd0] sm:$0xff]
        %v3038 = vld [vmem:[%s2196 + $0xbd8] sm:$0xff]
        %v3039 = vld [vmem:[%s2196 + $0xbe0] sm:$0xff]
        %v3040 = vld [vmem:[%s2196 + $0xbe8] sm:$0xff]
        %v3041 = vld [vmem:[%s2196 + $0xbf0] sm:$0xff]
        %v3042 = vld [vmem:[%s2196 + $0xbf8] sm:$0xff]
        %v3043 = vld [vmem:[%s2196 + $0xc00] sm:$0xff]
        %v3044 = vld [vmem:[%s2196 + $0xc08] sm:$0xff]
        %v3045 = vld [vmem:[%s2196 + $0xc10] sm:$0xff]
        %v3046 = vld [vmem:[%s2196 + $0xc18] sm:$0xff]
        %v3047 = vld [vmem:[%s2196 + $0xc20] sm:$0xff]
        %v3048 = vld [vmem:[%s2196 + $0xc28] sm:$0xff]
        %v3049 = vld [vmem:[%s2196 + $0xc30] sm:$0xff]
        %v3050 = vld [vmem:[%s2196 + $0xc38] sm:$0xff]
        %v3051 = vld [vmem:[%s2196 + $0xc40] sm:$0xff]
        %v3052 = vld [vmem:[%s2196 + $0xc48] sm:$0xff]
        %v3053 = vld [vmem:[%s2196 + $0xc50] sm:$0xff]
        %v3054 = vld [vmem:[%s2196 + $0xc58] sm:$0xff]
        %v3055 = vld [vmem:[%s2196 + $0xc60] sm:$0xff]
        %v3056 = vld [vmem:[%s2196 + $0xc68] sm:$0xff]
        %v3057 = vld [vmem:[%s2196 + $0xc70] sm:$0xff]
        %v3058 = vld [vmem:[%s2196 + $0xc78] sm:$0xff]
        %v3059 = vld [vmem:[%s2196 + $0xc80] sm:$0xff]
        %v3060 = vld [vmem:[%s2196 + $0xc88] sm:$0xff]
        %v3061 = vld [vmem:[%s2196 + $0xc90] sm:$0xff]
        %v3062 = vld [vmem:[%s2196 + $0xc98] sm:$0xff]
        %v3063 = vld [vmem:[%s2196 + $0xca0] sm:$0xff]
        %v3064 = vld [vmem:[%s2196 + $0xca8] sm:$0xff]
        %v3065 = vld [vmem:[%s2196 + $0xcb0] sm:$0xff]
        %v3066 = vld [vmem:[%s2196 + $0xcb8] sm:$0xff]
        %v3067 = vld [vmem:[%s2196 + $0xcc0] sm:$0xff]
        %v3068 = vld [vmem:[%s2196 + $0xcc8] sm:$0xff]
        %v3069 = vld [vmem:[%s2196 + $0xcd0] sm:$0xff]
        %v3070 = vld [vmem:[%s2196 + $0xcd8] sm:$0xff]
        %v3071 = vld [vmem:[%s2196 + $0xce0] sm:$0xff]
        %v3072 = vld [vmem:[%s2196 + $0xce8] sm:$0xff]
        %v3073 = vld [vmem:[%s2196 + $0xcf0] sm:$0xff]
        %v3074 = vld [vmem:[%s2196 + $0xcf8] sm:$0xff]
        %v3075 = vld [vmem:[%s2196 + $0xd00] sm:$0xff]
        %v3076 = vld [vmem:[%s2196 + $0xd08] sm:$0xff]
        %v3077 = vld [vmem:[%s2196 + $0xd10] sm:$0xff]
        %v3078 = vld [vmem:[%s2196 + $0xd18] sm:$0xff]
        %v3079 = vld [vmem:[%s2196 + $0xd20] sm:$0xff]
        %v3080 = vld [vmem:[%s2196 + $0xd28] sm:$0xff]
        %v3081 = vld [vmem:[%s2196 + $0xd30] sm:$0xff]
        %v3082 = vld [vmem:[%s2196 + $0xd38] sm:$0xff]
        %v3083 = vld [vmem:[%s2196 + $0xd40] sm:$0xff]
        %v3084 = vld [vmem:[%s2196 + $0xd48] sm:$0xff]
        %v3085 = vld [vmem:[%s2196 + $0xd50] sm:$0xff]
        %v3086 = vld [vmem:[%s2196 + $0xd58] sm:$0xff]
        %v3087 = vld [vmem:[%s2196 + $0xd60] sm:$0xff]
        %v3088 = vld [vmem:[%s2196 + $0xd68] sm:$0xff]
        %v3089 = vld [vmem:[%s2196 + $0xd70] sm:$0xff]
        %v3090 = vld [vmem:[%s2196 + $0xd78] sm:$0xff]
        %v3091 = vld [vmem:[%s2196 + $0xd80] sm:$0xff]
        %v3092 = vld [vmem:[%s2196 + $0xd88] sm:$0xff]
        %v3093 = vld [vmem:[%s2196 + $0xd90] sm:$0xff]
        %v3094 = vld [vmem:[%s2196 + $0xd98] sm:$0xff]
        %v3095 = vld [vmem:[%s2196 + $0xda0] sm:$0xff]
        %v3096 = vld [vmem:[%s2196 + $0xda8] sm:$0xff]
        %v3097 = vld [vmem:[%s2196 + $0xdb0] sm:$0xff]
        %v3098 = vld [vmem:[%s2196 + $0xdb8] sm:$0xff]
        %v3099 = vld [vmem:[%s2196 + $0xdc0] sm:$0xff]
        %v3100 = vld [vmem:[%s2196 + $0xdc8] sm:$0xff]
        %v3101 = vld [vmem:[%s2196 + $0xdd0] sm:$0xff]
        %v3102 = vld [vmem:[%s2196 + $0xdd8] sm:$0xff]
        %v3103 = vld [vmem:[%s2196 + $0xde0] sm:$0xff]
        %v3104 = vld [vmem:[%s2196 + $0xde8] sm:$0xff]
        %v3105 = vld [vmem:[%s2196 + $0xdf0] sm:$0xff]
        %v3106 = vld [vmem:[%s2196 + $0xdf8] sm:$0xff]
        %v3107 = vld [vmem:[%s2196 + $0xe00] sm:$0xff]
        %v3108 = vld [vmem:[%s2196 + $0xe08] sm:$0xff]
        %v3109 = vld [vmem:[%s2196 + $0xe10] sm:$0xff]
        %v3110 = vld [vmem:[%s2196 + $0xe18] sm:$0xff]
        %v3111 = vld [vmem:[%s2196 + $0xe20] sm:$0xff]
        %v3112 = vld [vmem:[%s2196 + $0xe28] sm:$0xff]
        %v3113 = vld [vmem:[%s2196 + $0xe30] sm:$0xff]
        %v3114 = vld [vmem:[%s2196 + $0xe38] sm:$0xff]
        %v3115 = vld [vmem:[%s2196 + $0xe40] sm:$0xff]
        %v3116 = vld [vmem:[%s2196 + $0xe48] sm:$0xff]
        %v3117 = vld [vmem:[%s2196 + $0xe50] sm:$0xff]
        %v3118 = vld [vmem:[%s2196 + $0xe58] sm:$0xff]
        %v3119 = vld [vmem:[%s2196 + $0xe60] sm:$0xff]
        %v3120 = vld [vmem:[%s2196 + $0xe68] sm:$0xff]
        %v3121 = vld [vmem:[%s2196 + $0xe70] sm:$0xff]
        %v3122 = vld [vmem:[%s2196 + $0xe78] sm:$0xff]
        %v3123 = vld [vmem:[%s2196 + $0xe80] sm:$0xff]
        %v3124 = vld [vmem:[%s2196 + $0xe88] sm:$0xff]
        %v3125 = vld [vmem:[%s2196 + $0xe90] sm:$0xff]
        %v3126 = vld [vmem:[%s2196 + $0xe98] sm:$0xff]
        %v3127 = vld [vmem:[%s2196 + $0xea0] sm:$0xff]
        %v3128 = vld [vmem:[%s2196 + $0xea8] sm:$0xff]
        %v3129 = vld [vmem:[%s2196 + $0xeb0] sm:$0xff]
        %v3130 = vld [vmem:[%s2196 + $0xeb8] sm:$0xff]
        %v3131 = vld [vmem:[%s2196 + $0xec0] sm:$0xff]
        %v3132 = vld [vmem:[%s2196 + $0xec8] sm:$0xff]
        %v3133 = vld [vmem:[%s2196 + $0xed0] sm:$0xff]
        %v3134 = vld [vmem:[%s2196 + $0xed8] sm:$0xff]
        %v3135 = vld [vmem:[%s2196 + $0xee0] sm:$0xff]
        %v3136 = vld [vmem:[%s2196 + $0xee8] sm:$0xff]
        %v3137 = vld [vmem:[%s2196 + $0xef0] sm:$0xff]
        %v3138 = vld [vmem:[%s2196 + $0xef8] sm:$0xff]
        %v3139 = vld [vmem:[%s2196 + $0xf00] sm:$0xff]
        %v3140 = vld [vmem:[%s2196 + $0xf08] sm:$0xff]
        %v3141 = vld [vmem:[%s2196 + $0xf10] sm:$0xff]
        %v3142 = vld [vmem:[%s2196 + $0xf18] sm:$0xff]
        %v3143 = vld [vmem:[%s2196 + $0xf20] sm:$0xff]
        %v3144 = vld [vmem:[%s2196 + $0xf28] sm:$0xff]
        %v3145 = vld [vmem:[%s2196 + $0xf30] sm:$0xff]
        %v3146 = vld [vmem:[%s2196 + $0xf38] sm:$0xff]
        %v3147 = vld [vmem:[%s2196 + $0xf40] sm:$0xff]
        %v3148 = vld [vmem:[%s2196 + $0xf48] sm:$0xff]
        %v3149 = vld [vmem:[%s2196 + $0xf50] sm:$0xff]
        %v3150 = vld [vmem:[%s2196 + $0xf58] sm:$0xff]
        %v3151 = vld [vmem:[%s2196 + $0xf60] sm:$0xff]
        %v3152 = vld [vmem:[%s2196 + $0xf68] sm:$0xff]
        %v3153 = vld [vmem:[%s2196 + $0xf70] sm:$0xff]
        %v3154 = vld [vmem:[%s2196 + $0xf78] sm:$0xff]
        %v3155 = vld [vmem:[%s2196 + $0xf80] sm:$0xff]
        %v3156 = vld [vmem:[%s2196 + $0xf88] sm:$0xff]
        %v3157 = vld [vmem:[%s2196 + $0xf90] sm:$0xff]
        %v3158 = vld [vmem:[%s2196 + $0xf98] sm:$0xff]
        %v3159 = vld [vmem:[%s2196 + $0xfa0] sm:$0xff]
        %v3160 = vld [vmem:[%s2196 + $0xfa8] sm:$0xff]
        %v3161 = vld [vmem:[%s2196 + $0xfb0] sm:$0xff]
        %v3162 = vld [vmem:[%s2196 + $0xfb8] sm:$0xff]
        %v3163 = vld [vmem:[%s2196 + $0xfc0] sm:$0xff]
        %v3164 = vld [vmem:[%s2196 + $0xfc8] sm:$0xff]
        %v3165 = vld [vmem:[%s2196 + $0xfd0] sm:$0xff]
        %v3166 = vld [vmem:[%s2196 + $0xfd8] sm:$0xff]
        %v3167 = vld [vmem:[%s2196 + $0xfe0] sm:$0xff]
        %v3168 = vld [vmem:[%s2196 + $0xfe8] sm:$0xff]
        %v3169 = vld [vmem:[%s2196 + $0xff0] sm:$0xff]
        %v3170 = vld [vmem:[%s2196 + $0xff8] sm:$0xff]
        %v3171 = vld [vmem:[%s2196 + $0x1000] sm:$0xff]
        %v3172 = vld [vmem:[%s2196 + $0x1008] sm:$0xff]
        %v3173 = vld [vmem:[%s2196 + $0x1010] sm:$0xff]
        %v3174 = vld [vmem:[%s2196 + $0x1018] sm:$0xff]
        %v3175 = vld [vmem:[%s2196 + $0x1020] sm:$0xff]
        %v3176 = vld [vmem:[%s2196 + $0x1028] sm:$0xff]
        %v3177 = vld [vmem:[%s2196 + $0x1030] sm:$0xff]
        %v3178 = vld [vmem:[%s2196 + $0x1038] sm:$0xff]
        %v3179 = vld [vmem:[%s2196 + $0x1040] sm:$0xff]
        %v3180 = vld [vmem:[%s2196 + $0x1048] sm:$0xff]
        %v3181 = vld [vmem:[%s2196 + $0x1050] sm:$0xff]
        %v3182 = vld [vmem:[%s2196 + $0x1058] sm:$0xff]
        %v3183 = vld [vmem:[%s2196 + $0x1060] sm:$0xff]
        %v3184 = vld [vmem:[%s2196 + $0x1068] sm:$0xff]
        %v3185 = vld [vmem:[%s2196 + $0x1070] sm:$0xff]
        %v3186 = vld [vmem:[%s2196 + $0x1078] sm:$0xff]
        %v3187 = vld [vmem:[%s2196 + $0x1080] sm:$0xff]
        %v3188 = vld [vmem:[%s2196 + $0x1088] sm:$0xff]
        %v3189 = vld [vmem:[%s2196 + $0x1090] sm:$0xff]
        %v3190 = vld [vmem:[%s2196 + $0x1098] sm:$0xff]
        %v3191 = vld [vmem:[%s2196 + $0x10a0] sm:$0xff]
        %v3192 = vld [vmem:[%s2196 + $0x10a8] sm:$0xff]
        %v3193 = vld [vmem:[%s2196 + $0x10b0] sm:$0xff]
        %v3194 = vld [vmem:[%s2196 + $0x10b8] sm:$0xff]
        %v3195 = vld [vmem:[%s2196 + $0x10c0] sm:$0xff]
        %v3196 = vld [vmem:[%s2196 + $0x10c8] sm:$0xff]
        %v3197 = vld [vmem:[%s2196 + $0x10d0] sm:$0xff]
        %v3198 = vld [vmem:[%s2196 + $0x10d8] sm:$0xff]
        %v3199 = vld [vmem:[%s2196 + $0x10e0] sm:$0xff]
        %v3200 = vld [vmem:[%s2196 + $0x10e8] sm:$0xff]
        %v3201 = vld [vmem:[%s2196 + $0x10f0] sm:$0xff]
        %v3202 = vld [vmem:[%s2196 + $0x10f8] sm:$0xff]
        %v3203 = vld [vmem:[%s2196 + $0x1100] sm:$0xff]
        %v3204 = vld [vmem:[%s2196 + $0x1108] sm:$0xff]
        %v3205 = vld [vmem:[%s2196 + $0x1110] sm:$0xff]
        %v3206 = vld [vmem:[%s2196 + $0x1118] sm:$0xff]
        %v3207 = vld [vmem:[%s2196 + $0x1120] sm:$0xff]
        %v3208 = vld [vmem:[%s2196 + $0x1128] sm:$0xff]
        %v3209 = vld [vmem:[%s2196 + $0x1130] sm:$0xff]
        %v3210 = vld [vmem:[%s2196 + $0x1138] sm:$0xff]
        %v3211 = vld [vmem:[%s2196 + $0x1140] sm:$0xff]
        %v3212 = vld [vmem:[%s2196 + $0x1148] sm:$0xff]
        %v3213 = vld [vmem:[%s2196 + $0x1150] sm:$0xff]
        %v3214 = vld [vmem:[%s2196 + $0x1158] sm:$0xff]
        %v3215 = vld [vmem:[%s2196 + $0x1160] sm:$0xff]
        %v3216 = vld [vmem:[%s2196 + $0x1168] sm:$0xff]
        %v3217 = vld [vmem:[%s2196 + $0x1170] sm:$0xff]
        %v3218 = vld [vmem:[%s2196 + $0x1178] sm:$0xff]
        %v3219 = vld [vmem:[%s2196 + $0x1180] sm:$0xff]
        %v3220 = vld [vmem:[%s2196 + $0x1188] sm:$0xff]
        %v3221 = vld [vmem:[%s2196 + $0x1190] sm:$0xff]
        %v3222 = vld [vmem:[%s2196 + $0x1198] sm:$0xff]
        %v3223 = vld [vmem:[%s2196 + $0x11a0] sm:$0xff]
        %v3224 = vld [vmem:[%s2196 + $0x11a8] sm:$0xff]
        %v3225 = vld [vmem:[%s2196 + $0x11b0] sm:$0xff]
        %v3226 = vld [vmem:[%s2196 + $0x11b8] sm:$0xff]
        %v3227 = vld [vmem:[%s2196 + $0x11c0] sm:$0xff]
        %v3228 = vld [vmem:[%s2196 + $0x11c8] sm:$0xff]
        %v3229 = vld [vmem:[%s2196 + $0x11d0] sm:$0xff]
        %v3230 = vld [vmem:[%s2196 + $0x11d8] sm:$0xff]
        %v3231 = vld [vmem:[%s2196 + $0x11e0] sm:$0xff]
        %v3232 = vld [vmem:[%s2196 + $0x11e8] sm:$0xff]
        %v3233 = vld [vmem:[%s2196 + $0x11f0] sm:$0xff]
        %v3234 = vld [vmem:[%s2196 + $0x11f8] sm:$0xff]
        %v3235 = vld [vmem:[%s2196 + $0x1200] sm:$0xff]
        %v3236 = vld [vmem:[%s2196 + $0x1208] sm:$0xff]
        %v3237 = vld [vmem:[%s2196 + $0x1210] sm:$0xff]
        %v3238 = vld [vmem:[%s2196 + $0x1218] sm:$0xff]
        %v3239 = vld [vmem:[%s2196 + $0x1220] sm:$0xff]
        %v3240 = vld [vmem:[%s2196 + $0x1228] sm:$0xff]
        %v3241 = vld [vmem:[%s2196 + $0x1230] sm:$0xff]
        %v3242 = vld [vmem:[%s2196 + $0x1238] sm:$0xff]
        %v3243 = vld [vmem:[%s2196 + $0x1240] sm:$0xff]
        %v3244 = vld [vmem:[%s2196 + $0x1248] sm:$0xff]
        %v3245 = vld [vmem:[%s2196 + $0x1250] sm:$0xff]
        %v3246 = vld [vmem:[%s2196 + $0x1258] sm:$0xff]
        %v3247 = vld [vmem:[%s2196 + $0x1260] sm:$0xff]
        %v3248 = vld [vmem:[%s2196 + $0x1268] sm:$0xff]
        %v3249 = vld [vmem:[%s2196 + $0x1270] sm:$0xff]
        %v3250 = vld [vmem:[%s2196 + $0x1278] sm:$0xff]
        %v3251 = vld [vmem:[%s2196 + $0x1280] sm:$0xff]
        %v3252 = vld [vmem:[%s2196 + $0x1288] sm:$0xff]
        %v3253 = vld [vmem:[%s2196 + $0x1290] sm:$0xff]
        %v3254 = vld [vmem:[%s2196 + $0x1298] sm:$0xff]
        %v3255 = vld [vmem:[%s2196 + $0x12a0] sm:$0xff]
        %v3256 = vld [vmem:[%s2196 + $0x12a8] sm:$0xff]
        %v3257 = vld [vmem:[%s2196 + $0x12b0] sm:$0xff]
        %v3258 = vld [vmem:[%s2196 + $0x12b8] sm:$0xff]
        %v3259 = vld [vmem:[%s2196 + $0x12c0] sm:$0xff]
        %v3260 = vld [vmem:[%s2196 + $0x12c8] sm:$0xff]
        %v3261 = vld [vmem:[%s2196 + $0x12d0] sm:$0xff]
        %v3262 = vld [vmem:[%s2196 + $0x12d8] sm:$0xff]
        %v3263 = vld [vmem:[%s2196 + $0x12e0] sm:$0xff]
        %v3264 = vld [vmem:[%s2196 + $0x12e8] sm:$0xff]
        %v3265 = vld [vmem:[%s2196 + $0x12f0] sm:$0xff]
        %v3266 = vld [vmem:[%s2196 + $0x12f8] sm:$0xff]
        %v3267 = vld [vmem:[%s2196 + $0x1300] sm:$0xff]
        %v3268 = vld [vmem:[%s2196 + $0x1308] sm:$0xff]
        %v3269 = vld [vmem:[%s2196 + $0x1310] sm:$0xff]
        %v3270 = vld [vmem:[%s2196 + $0x1318] sm:$0xff]
        %v3271 = vld [vmem:[%s2196 + $0x1320] sm:$0xff]
        %v3272 = vld [vmem:[%s2196 + $0x1328] sm:$0xff]
        %v3273 = vld [vmem:[%s2196 + $0x1330] sm:$0xff]
        %v3274 = vld [vmem:[%s2196 + $0x1338] sm:$0xff]
        %v3275 = vld [vmem:[%s2196 + $0x1340] sm:$0xff]
        %v3276 = vld [vmem:[%s2196 + $0x1348] sm:$0xff]
        %v3277 = vld [vmem:[%s2196 + $0x1350] sm:$0xff]
        %v3278 = vld [vmem:[%s2196 + $0x1358] sm:$0xff]
        %v3279 = vld [vmem:[%s2196 + $0x1360] sm:$0xff]
        %v3280 = vld [vmem:[%s2196 + $0x1368] sm:$0xff]
        %v3281 = vld [vmem:[%s2196 + $0x1370] sm:$0xff]
        %v3282 = vld [vmem:[%s2196 + $0x1378] sm:$0xff]
        %v3283 = vld [vmem:[%s2196 + $0x1380] sm:$0xff]
        %v3284 = vld [vmem:[%s2196 + $0x1388] sm:$0xff]
        %v3285 = vld [vmem:[%s2196 + $0x1390] sm:$0xff]
        %v3286 = vld [vmem:[%s2196 + $0x1398] sm:$0xff]
        %v3287 = vld [vmem:[%s2196 + $0x13a0] sm:$0xff]
        %v3288 = vld [vmem:[%s2196 + $0x13a8] sm:$0xff]
        %v3289 = vld [vmem:[%s2196 + $0x13b0] sm:$0xff]
        %v3290 = vld [vmem:[%s2196 + $0x13b8] sm:$0xff]
        %v3291 = vld [vmem:[%s2196 + $0x13c0] sm:$0xff]
        %v3292 = vld [vmem:[%s2196 + $0x13c8] sm:$0xff]
        %v3293 = vld [vmem:[%s2196 + $0x13d0] sm:$0xff]
        %v3294 = vld [vmem:[%s2196 + $0x13d8] sm:$0xff]
        %v3295 = vld [vmem:[%s2196 + $0x13e0] sm:$0xff]
        %v3296 = vld [vmem:[%s2196 + $0x13e8] sm:$0xff]
        %v3297 = vld [vmem:[%s2196 + $0x13f0] sm:$0xff]
        %v3298 = vld [vmem:[%s2196 + $0x13f8] sm:$0xff]
        %v3299 = vld [vmem:[%s2196 + $0x1400] sm:$0xff]
        %v3300 = vld [vmem:[%s2196 + $0x1408] sm:$0xff]
        %v3301 = vld [vmem:[%s2196 + $0x1410] sm:$0xff]
        %v3302 = vld [vmem:[%s2196 + $0x1418] sm:$0xff]
        %v3303 = vld [vmem:[%s2196 + $0x1420] sm:$0xff]
        %v3304 = vld [vmem:[%s2196 + $0x1428] sm:$0xff]
        %v3305 = vld [vmem:[%s2196 + $0x1430] sm:$0xff]
        %v3306 = vld [vmem:[%s2196 + $0x1438] sm:$0xff]
        %v3307 = vld [vmem:[%s2196 + $0x1440] sm:$0xff]
        %v3308 = vld [vmem:[%s2196 + $0x1448] sm:$0xff]
        %v3309 = vld [vmem:[%s2196 + $0x1450] sm:$0xff]
        %v3310 = vld [vmem:[%s2196 + $0x1458] sm:$0xff]
        %v3311 = vld [vmem:[%s2196 + $0x1460] sm:$0xff]
        %v3312 = vld [vmem:[%s2196 + $0x1468] sm:$0xff]
        %v3313 = vld [vmem:[%s2196 + $0x1470] sm:$0xff]
        %v3314 = vld [vmem:[%s2196 + $0x1478] sm:$0xff]
        %v3315 = vld [vmem:[%s2196 + $0x1480] sm:$0xff]
        %v3316 = vld [vmem:[%s2196 + $0x1488] sm:$0xff]
        %v3317 = vld [vmem:[%s2196 + $0x1490] sm:$0xff]
        %v3318 = vld [vmem:[%s2196 + $0x1498] sm:$0xff]
        %v3319 = vld [vmem:[%s2196 + $0x14a0] sm:$0xff]
        %v3320 = vld [vmem:[%s2196 + $0x14a8] sm:$0xff]
        %v3321 = vld [vmem:[%s2196 + $0x14b0] sm:$0xff]
        %v3322 = vld [vmem:[%s2196 + $0x14b8] sm:$0xff]
        %v3323 = vld [vmem:[%s2196 + $0x14c0] sm:$0xff]
        %v3324 = vld [vmem:[%s2196 + $0x14c8] sm:$0xff]
        %v3325 = vld [vmem:[%s2196 + $0x14d0] sm:$0xff]
        %v3326 = vld [vmem:[%s2196 + $0x14d8] sm:$0xff]
        %v3327 = vld [vmem:[%s2196 + $0x14e0] sm:$0xff]
        %v3328 = vld [vmem:[%s2196 + $0x14e8] sm:$0xff]
        %v3329 = vld [vmem:[%s2196 + $0x14f0] sm:$0xff]
        %v3330 = vld [vmem:[%s2196 + $0x14f8] sm:$0xff]
        %v3331 = vld [vmem:[%s2196 + $0x1500] sm:$0xff]
        %v3332 = vld [vmem:[%s2196 + $0x1508] sm:$0xff]
        %v3333 = vld [vmem:[%s2196 + $0x1510] sm:$0xff]
        %v3334 = vld [vmem:[%s2196 + $0x1518] sm:$0xff]
        %v3335 = vld [vmem:[%s2196 + $0x1520] sm:$0xff]
        %v3336 = vld [vmem:[%s2196 + $0x1528] sm:$0xff]
        %v3337 = vld [vmem:[%s2196 + $0x1530] sm:$0xff]
        %v3338 = vld [vmem:[%s2196 + $0x1538] sm:$0xff]
        %v3339 = vld [vmem:[%s2196 + $0x1540] sm:$0xff]
        %v3340 = vld [vmem:[%s2196 + $0x1548] sm:$0xff]
        %v3341 = vld [vmem:[%s2196 + $0x1550] sm:$0xff]
        %v3342 = vld [vmem:[%s2196 + $0x1558] sm:$0xff]
        %v3343 = vld [vmem:[%s2196 + $0x1560] sm:$0xff]
        %v3344 = vld [vmem:[%s2196 + $0x1568] sm:$0xff]
        %v3345 = vld [vmem:[%s2196 + $0x1570] sm:$0xff]
        %v3346 = vld [vmem:[%s2196 + $0x1578] sm:$0xff]
        %v3347 = vld [vmem:[%s2196 + $0x1580] sm:$0xff]
        %v3348 = vld [vmem:[%s2196 + $0x1588] sm:$0xff]
        %v3349 = vld [vmem:[%s2196 + $0x1590] sm:$0xff]
        %v3350 = vld [vmem:[%s2196 + $0x1598] sm:$0xff]
        %v3351 = vld [vmem:[%s2196 + $0x15a0] sm:$0xff]
        %v3352 = vld [vmem:[%s2196 + $0x15a8] sm:$0xff]
        %v3353 = vld [vmem:[%s2196 + $0x15b0] sm:$0xff]
        %v3354 = vld [vmem:[%s2196 + $0x15b8] sm:$0xff]
        %v3355 = vld [vmem:[%s2196 + $0x15c0] sm:$0xff]
        %v3356 = vld [vmem:[%s2196 + $0x15c8] sm:$0xff]
        %v3357 = vld [vmem:[%s2196 + $0x15d0] sm:$0xff]
        %v3358 = vld [vmem:[%s2196 + $0x15d8] sm:$0xff]
        %v3359 = vld [vmem:[%s2196 + $0x15e0] sm:$0xff]
        %v3360 = vld [vmem:[%s2196 + $0x15e8] sm:$0xff]
        %v3361 = vld [vmem:[%s2196 + $0x15f0] sm:$0xff]
        %v3362 = vld [vmem:[%s2196 + $0x15f8] sm:$0xff]
        %v3363 = vld [vmem:[%s2196 + $0x1600] sm:$0xff]
        %v3364 = vld [vmem:[%s2196 + $0x1608] sm:$0xff]
        %v3365 = vld [vmem:[%s2196 + $0x1610] sm:$0xff]
        %v3366 = vld [vmem:[%s2196 + $0x1618] sm:$0xff]
        %v3367 = vld [vmem:[%s2196 + $0x1620] sm:$0xff]
        %v3368 = vld [vmem:[%s2196 + $0x1628] sm:$0xff]
        %v3369 = vld [vmem:[%s2196 + $0x1630] sm:$0xff]
        %v3370 = vld [vmem:[%s2196 + $0x1638] sm:$0xff]
        %v3371 = vld [vmem:[%s2196 + $0x1640] sm:$0xff]
        %v3372 = vld [vmem:[%s2196 + $0x1648] sm:$0xff]
        %v3373 = vld [vmem:[%s2196 + $0x1650] sm:$0xff]
        %v3374 = vld [vmem:[%s2196 + $0x1658] sm:$0xff]
        %v3375 = vld [vmem:[%s2196 + $0x1660] sm:$0xff]
        %v3376 = vld [vmem:[%s2196 + $0x1668] sm:$0xff]
        %v3377 = vld [vmem:[%s2196 + $0x1670] sm:$0xff]
        %v3378 = vld [vmem:[%s2196 + $0x1678] sm:$0xff]
        %v3379 = vld [vmem:[%s2196 + $0x1680] sm:$0xff]
        %v3380 = vld [vmem:[%s2196 + $0x1688] sm:$0xff]
        %v3381 = vld [vmem:[%s2196 + $0x1690] sm:$0xff]
        %v3382 = vld [vmem:[%s2196 + $0x1698] sm:$0xff]
        %v3383 = vld [vmem:[%s2196 + $0x16a0] sm:$0xff]
        %v3384 = vld [vmem:[%s2196 + $0x16a8] sm:$0xff]
        %v3385 = vld [vmem:[%s2196 + $0x16b0] sm:$0xff]
        %v3386 = vld [vmem:[%s2196 + $0x16b8] sm:$0xff]
        %v3387 = vld [vmem:[%s2196 + $0x16c0] sm:$0xff]
        %v3388 = vld [vmem:[%s2196 + $0x16c8] sm:$0xff]
        %v3389 = vld [vmem:[%s2196 + $0x16d0] sm:$0xff]
        %v3390 = vld [vmem:[%s2196 + $0x16d8] sm:$0xff]
        %v3391 = vld [vmem:[%s2196 + $0x16e0] sm:$0xff]
        %v3392 = vld [vmem:[%s2196 + $0x16e8] sm:$0xff]
        %v3393 = vld [vmem:[%s2196 + $0x16f0] sm:$0xff]
        %v3394 = vld [vmem:[%s2196 + $0x16f8] sm:$0xff]
        %v3395 = vld [vmem:[%s2196 + $0x1700] sm:$0xff]
        %v3396 = vld [vmem:[%s2196 + $0x1708] sm:$0xff]
        %v3397 = vld [vmem:[%s2196 + $0x1710] sm:$0xff]
        %v3398 = vld [vmem:[%s2196 + $0x1718] sm:$0xff]
        %v3399 = vld [vmem:[%s2196 + $0x1720] sm:$0xff]
        %v3400 = vld [vmem:[%s2196 + $0x1728] sm:$0xff]
        %v3401 = vld [vmem:[%s2196 + $0x1730] sm:$0xff]
        %v3402 = vld [vmem:[%s2196 + $0x1738] sm:$0xff]
        %v3403 = vld [vmem:[%s2196 + $0x1740] sm:$0xff]
        %v3404 = vld [vmem:[%s2196 + $0x1748] sm:$0xff]
        %v3405 = vld [vmem:[%s2196 + $0x1750] sm:$0xff]
        %v3406 = vld [vmem:[%s2196 + $0x1758] sm:$0xff]
        %v3407 = vld [vmem:[%s2196 + $0x1760] sm:$0xff]
        %v3408 = vld [vmem:[%s2196 + $0x1768] sm:$0xff]
        %v3409 = vld [vmem:[%s2196 + $0x1770] sm:$0xff]
        %v3410 = vld [vmem:[%s2196 + $0x1778] sm:$0xff]
        %v3411 = vld [vmem:[%s2196 + $0x1780] sm:$0xff]
        %v3412 = vld [vmem:[%s2196 + $0x1788] sm:$0xff]
        %v3413 = vld [vmem:[%s2196 + $0x1790] sm:$0xff]
        %v3414 = vld [vmem:[%s2196 + $0x1798] sm:$0xff]
        %v3415 = vld [vmem:[%s2196 + $0x17a0] sm:$0xff]
        %v3416 = vld [vmem:[%s2196 + $0x17a8] sm:$0xff]
        %v3417 = vld [vmem:[%s2196 + $0x17b0] sm:$0xff]
        %v3418 = vld [vmem:[%s2196 + $0x17b8] sm:$0xff]
        %v3419 = vld [vmem:[%s2196 + $0x17c0] sm:$0xff]
        %v3420 = vld [vmem:[%s2196 + $0x17c8] sm:$0xff]
        %v3421 = vld [vmem:[%s2196 + $0x17d0] sm:$0xff]
        %v3422 = vld [vmem:[%s2196 + $0x17d8] sm:$0xff]
        %v3423 = vld [vmem:[%s2196 + $0x17e0] sm:$0xff]
        %v3424 = vld [vmem:[%s2196 + $0x17e8] sm:$0xff]
        %v3425 = vld [vmem:[%s2196 + $0x17f0] sm:$0xff]
        %v3426 = vld [vmem:[%s2196 + $0x17f8] sm:$0xff]
        %v3427 = vld [vmem:[%s2196 + $0x1800] sm:$0xff]
        %v3428 = vld [vmem:[%s2196 + $0x1808] sm:$0xff]
        %v3429 = vld [vmem:[%s2196 + $0x1810] sm:$0xff]
        %v3430 = vld [vmem:[%s2196 + $0x1818] sm:$0xff]
        %v3431 = vld [vmem:[%s2196 + $0x1820] sm:$0xff]
        %v3432 = vld [vmem:[%s2196 + $0x1828] sm:$0xff]
        %v3433 = vld [vmem:[%s2196 + $0x1830] sm:$0xff]
        %v3434 = vld [vmem:[%s2196 + $0x1838] sm:$0xff]
        %v3435 = vld [vmem:[%s2196 + $0x1840] sm:$0xff]
        %v3436 = vld [vmem:[%s2196 + $0x1848] sm:$0xff]
        %v3437 = vld [vmem:[%s2196 + $0x1850] sm:$0xff]
        %v3438 = vld [vmem:[%s2196 + $0x1858] sm:$0xff]
        %v3439 = vld [vmem:[%s2196 + $0x1860] sm:$0xff]
        %v3440 = vld [vmem:[%s2196 + $0x1868] sm:$0xff]
        %v3441 = vld [vmem:[%s2196 + $0x1870] sm:$0xff]
        %v3442 = vld [vmem:[%s2196 + $0x1878] sm:$0xff]
        %v3443 = vld [vmem:[%s2196 + $0x1880] sm:$0xff]
        %v3444 = vld [vmem:[%s2196 + $0x1888] sm:$0xff]
        %v3445 = vld [vmem:[%s2196 + $0x1890] sm:$0xff]
        %v3446 = vld [vmem:[%s2196 + $0x1898] sm:$0xff]
        %v3447 = vld [vmem:[%s2196 + $0x18a0] sm:$0xff]
        %v3448 = vld [vmem:[%s2196 + $0x18a8] sm:$0xff]
        %v3449 = vld [vmem:[%s2196 + $0x18b0] sm:$0xff]
        %v3450 = vld [vmem:[%s2196 + $0x18b8] sm:$0xff]
        %v3451 = vld [vmem:[%s2196 + $0x18c0] sm:$0xff]
        %v3452 = vld [vmem:[%s2196 + $0x18c8] sm:$0xff]
        %v3453 = vld [vmem:[%s2196 + $0x18d0] sm:$0xff]
        %v3454 = vld [vmem:[%s2196 + $0x18d8] sm:$0xff]
        %v3455 = vld [vmem:[%s2196 + $0x18e0] sm:$0xff]
        %v3456 = vld [vmem:[%s2196 + $0x18e8] sm:$0xff]
        %v3457 = vld [vmem:[%s2196 + $0x18f0] sm:$0xff]
        %v3458 = vld [vmem:[%s2196 + $0x18f8] sm:$0xff]
        %v3459 = vld [vmem:[%s2196 + $0x1900] sm:$0xff]
        %v3460 = vld [vmem:[%s2196 + $0x1908] sm:$0xff]
        %v3461 = vld [vmem:[%s2196 + $0x1910] sm:$0xff]
        %v3462 = vld [vmem:[%s2196 + $0x1918] sm:$0xff]
        %v3463 = vld [vmem:[%s2196 + $0x1920] sm:$0xff]
        %v3464 = vld [vmem:[%s2196 + $0x1928] sm:$0xff]
        %v3465 = vld [vmem:[%s2196 + $0x1930] sm:$0xff]
        %v3466 = vld [vmem:[%s2196 + $0x1938] sm:$0xff]
        %v3467 = vld [vmem:[%s2196 + $0x1940] sm:$0xff]
        %v3468 = vld [vmem:[%s2196 + $0x1948] sm:$0xff]
        %v3469 = vld [vmem:[%s2196 + $0x1950] sm:$0xff]
        %v3470 = vld [vmem:[%s2196 + $0x1958] sm:$0xff]
        %v3471 = vld [vmem:[%s2196 + $0x1960] sm:$0xff]
        %v3472 = vld [vmem:[%s2196 + $0x1968] sm:$0xff]
        %v3473 = vld [vmem:[%s2196 + $0x1970] sm:$0xff]
        %v3474 = vld [vmem:[%s2196 + $0x1978] sm:$0xff]
        %v3475 = vld [vmem:[%s2196 + $0x1980] sm:$0xff]
        %v3476 = vld [vmem:[%s2196 + $0x1988] sm:$0xff]
        %v3477 = vld [vmem:[%s2196 + $0x1990] sm:$0xff]
        %v3478 = vld [vmem:[%s2196 + $0x1998] sm:$0xff]
        %v3479 = vld [vmem:[%s2196 + $0x19a0] sm:$0xff]
        %v3480 = vld [vmem:[%s2196 + $0x19a8] sm:$0xff]
        %v3481 = vld [vmem:[%s2196 + $0x19b0] sm:$0xff]
        %v3482 = vld [vmem:[%s2196 + $0x19b8] sm:$0xff]
        %v3483 = vld [vmem:[%s2196 + $0x19c0] sm:$0xff]
        %v3484 = vld [vmem:[%s2196 + $0x19c8] sm:$0xff]
        %v3485 = vld [vmem:[%s2196 + $0x19d0] sm:$0xff]
        %v3486 = vld [vmem:[%s2196 + $0x19d8] sm:$0xff]
        %v3487 = vld [vmem:[%s2196 + $0x19e0] sm:$0xff]
        %v3488 = vld [vmem:[%s2196 + $0x19e8] sm:$0xff]
        %v3489 = vld [vmem:[%s2196 + $0x19f0] sm:$0xff]
        %v3490 = vld [vmem:[%s2196 + $0x19f8] sm:$0xff]
        %v3491 = vld [vmem:[%s2196 + $0x1a00] sm:$0xff]
        %v3492 = vld [vmem:[%s2196 + $0x1a08] sm:$0xff]
        %v3493 = vld [vmem:[%s2196 + $0x1a10] sm:$0xff]
        %v3494 = vld [vmem:[%s2196 + $0x1a18] sm:$0xff]
        %v3495 = vld [vmem:[%s2196 + $0x1a20] sm:$0xff]
        %v3496 = vld [vmem:[%s2196 + $0x1a28] sm:$0xff]
        %v3497 = vld [vmem:[%s2196 + $0x1a30] sm:$0xff]
        %v3498 = vld [vmem:[%s2196 + $0x1a38] sm:$0xff]
        %v3499 = vld [vmem:[%s2196 + $0x1a40] sm:$0xff]
        %v3500 = vld [vmem:[%s2196 + $0x1a48] sm:$0xff]
        %v3501 = vld [vmem:[%s2196 + $0x1a50] sm:$0xff]
        %v3502 = vld [vmem:[%s2196 + $0x1a58] sm:$0xff]
        %v3503 = vld [vmem:[%s2196 + $0x1a60] sm:$0xff]
        %v3504 = vld [vmem:[%s2196 + $0x1a68] sm:$0xff]
        %v3505 = vld [vmem:[%s2196 + $0x1a70] sm:$0xff]
        %v3506 = vld [vmem:[%s2196 + $0x1a78] sm:$0xff]
        %v3507 = vld [vmem:[%s2196 + $0x1a80] sm:$0xff]
        %v3508 = vld [vmem:[%s2196 + $0x1a88] sm:$0xff]
        %v3509 = vld [vmem:[%s2196 + $0x1a90] sm:$0xff]
        %v3510 = vld [vmem:[%s2196 + $0x1a98] sm:$0xff]
        %v3511 = vld [vmem:[%s2196 + $0x1aa0] sm:$0xff]
        %v3512 = vld [vmem:[%s2196 + $0x1aa8] sm:$0xff]
        %v3513 = vld [vmem:[%s2196 + $0x1ab0] sm:$0xff]
        %v3514 = vld [vmem:[%s2196 + $0x1ab8] sm:$0xff]
        %v3515 = vld [vmem:[%s2196 + $0x1ac0] sm:$0xff]
        %v3516 = vld [vmem:[%s2196 + $0x1ac8] sm:$0xff]
        %v3517 = vld [vmem:[%s2196 + $0x1ad0] sm:$0xff]
        %v3518 = vld [vmem:[%s2196 + $0x1ad8] sm:$0xff]
        %v3519 = vld [vmem:[%s2196 + $0x1ae0] sm:$0xff]
        %v3520 = vld [vmem:[%s2196 + $0x1ae8] sm:$0xff]
        %v3521 = vld [vmem:[%s2196 + $0x1af0] sm:$0xff]
        %v3522 = vld [vmem:[%s2196 + $0x1af8] sm:$0xff]
        %v3523 = vld [vmem:[%s2196 + $0x1b00] sm:$0xff]
        %v3524 = vld [vmem:[%s2196 + $0x1b08] sm:$0xff]
        %v3525 = vld [vmem:[%s2196 + $0x1b10] sm:$0xff]
        %v3526 = vld [vmem:[%s2196 + $0x1b18] sm:$0xff]
        %v3527 = vld [vmem:[%s2196 + $0x1b20] sm:$0xff]
        %v3528 = vld [vmem:[%s2196 + $0x1b28] sm:$0xff]
        %v3529 = vld [vmem:[%s2196 + $0x1b30] sm:$0xff]
        %v3530 = vld [vmem:[%s2196 + $0x1b38] sm:$0xff]
        %v3531 = vld [vmem:[%s2196 + $0x1b40] sm:$0xff]
        %v3532 = vld [vmem:[%s2196 + $0x1b48] sm:$0xff]
        %v3533 = vld [vmem:[%s2196 + $0x1b50] sm:$0xff]
        %v3534 = vld [vmem:[%s2196 + $0x1b58] sm:$0xff]
        %v3535 = vld [vmem:[%s2196 + $0x1b60] sm:$0xff]
        %v3536 = vld [vmem:[%s2196 + $0x1b68] sm:$0xff]
        %v3537 = vld [vmem:[%s2196 + $0x1b70] sm:$0xff]
        %v3538 = vld [vmem:[%s2196 + $0x1b78] sm:$0xff]
        %v3539 = vld [vmem:[%s2196 + $0x1b80] sm:$0xff]
        %v3540 = vld [vmem:[%s2196 + $0x1b88] sm:$0xff]
        %v3541 = vld [vmem:[%s2196 + $0x1b90] sm:$0xff]
        %v3542 = vld [vmem:[%s2196 + $0x1b98] sm:$0xff]
        %v3543 = vld [vmem:[%s2196 + $0x1ba0] sm:$0xff]
        %v3544 = vld [vmem:[%s2196 + $0x1ba8] sm:$0xff]
        %v3545 = vld [vmem:[%s2196 + $0x1bb0] sm:$0xff]
        %v3546 = vld [vmem:[%s2196 + $0x1bb8] sm:$0xff]
        %v3547 = vld [vmem:[%s2196 + $0x1bc0] sm:$0xff]
        %v3548 = vld [vmem:[%s2196 + $0x1bc8] sm:$0xff]
        %v3549 = vld [vmem:[%s2196 + $0x1bd0] sm:$0xff]
        %v3550 = vld [vmem:[%s2196 + $0x1bd8] sm:$0xff]
        %v3551 = vld [vmem:[%s2196 + $0x1be0] sm:$0xff]
        %v3552 = vld [vmem:[%s2196 + $0x1be8] sm:$0xff]
        %v3553 = vld [vmem:[%s2196 + $0x1bf0] sm:$0xff]
        %v3554 = vld [vmem:[%s2196 + $0x1bf8] sm:$0xff]
        %v3555 = vld [vmem:[%s2196 + $0x1c00] sm:$0xff]
        %v3556 = vld [vmem:[%s2196 + $0x1c08] sm:$0xff]
        %v3557 = vld [vmem:[%s2196 + $0x1c10] sm:$0xff]
        %v3558 = vld [vmem:[%s2196 + $0x1c18] sm:$0xff]
        %v3559 = vld [vmem:[%s2196 + $0x1c20] sm:$0xff]
        %v3560 = vld [vmem:[%s2196 + $0x1c28] sm:$0xff]
        %v3561 = vld [vmem:[%s2196 + $0x1c30] sm:$0xff]
        %v3562 = vld [vmem:[%s2196 + $0x1c38] sm:$0xff]
        %v3563 = vld [vmem:[%s2196 + $0x1c40] sm:$0xff]
        %v3564 = vld [vmem:[%s2196 + $0x1c48] sm:$0xff]
        %v3565 = vld [vmem:[%s2196 + $0x1c50] sm:$0xff]
        %v3566 = vld [vmem:[%s2196 + $0x1c58] sm:$0xff]
        %v3567 = vld [vmem:[%s2196 + $0x1c60] sm:$0xff]
        %v3568 = vld [vmem:[%s2196 + $0x1c68] sm:$0xff]
        %v3569 = vld [vmem:[%s2196 + $0x1c70] sm:$0xff]
        %v3570 = vld [vmem:[%s2196 + $0x1c78] sm:$0xff]
        %v3571 = vld [vmem:[%s2196 + $0x1c80] sm:$0xff]
        %v3572 = vld [vmem:[%s2196 + $0x1c88] sm:$0xff]
        %v3573 = vld [vmem:[%s2196 + $0x1c90] sm:$0xff]
        %v3574 = vld [vmem:[%s2196 + $0x1c98] sm:$0xff]
        %v3575 = vld [vmem:[%s2196 + $0x1ca0] sm:$0xff]
        %v3576 = vld [vmem:[%s2196 + $0x1ca8] sm:$0xff]
        %v3577 = vld [vmem:[%s2196 + $0x1cb0] sm:$0xff]
        %v3578 = vld [vmem:[%s2196 + $0x1cb8] sm:$0xff]
        %v3579 = vld [vmem:[%s2196 + $0x1cc0] sm:$0xff]
        %v3580 = vld [vmem:[%s2196 + $0x1cc8] sm:$0xff]
        %v3581 = vld [vmem:[%s2196 + $0x1cd0] sm:$0xff]
        %v3582 = vld [vmem:[%s2196 + $0x1cd8] sm:$0xff]
        %v3583 = vld [vmem:[%s2196 + $0x1ce0] sm:$0xff]
        %v3584 = vld [vmem:[%s2196 + $0x1ce8] sm:$0xff]
        %v3585 = vld [vmem:[%s2196 + $0x1cf0] sm:$0xff]
        %v3586 = vld [vmem:[%s2196 + $0x1cf8] sm:$0xff]
        %v3587 = vld [vmem:[%s2196 + $0x1d00] sm:$0xff]
        %v3588 = vld [vmem:[%s2196 + $0x1d08] sm:$0xff]
        %v3589 = vld [vmem:[%s2196 + $0x1d10] sm:$0xff]
        %v3590 = vld [vmem:[%s2196 + $0x1d18] sm:$0xff]
        %v3591 = vld [vmem:[%s2196 + $0x1d20] sm:$0xff]
        %v3592 = vld [vmem:[%s2196 + $0x1d28] sm:$0xff]
        %v3593 = vld [vmem:[%s2196 + $0x1d30] sm:$0xff]
        %v3594 = vld [vmem:[%s2196 + $0x1d38] sm:$0xff]
        %v3595 = vld [vmem:[%s2196 + $0x1d40] sm:$0xff]
        %v3596 = vld [vmem:[%s2196 + $0x1d48] sm:$0xff]
        %v3597 = vld [vmem:[%s2196 + $0x1d50] sm:$0xff]
        %v3598 = vld [vmem:[%s2196 + $0x1d58] sm:$0xff]
        %v3599 = vld [vmem:[%s2196 + $0x1d60] sm:$0xff]
        %v3600 = vld [vmem:[%s2196 + $0x1d68] sm:$0xff]
        %v3601 = vld [vmem:[%s2196 + $0x1d70] sm:$0xff]
        %v3602 = vld [vmem:[%s2196 + $0x1d78] sm:$0xff]
        %v3603 = vld [vmem:[%s2196 + $0x1d80] sm:$0xff]
        %v3604 = vld [vmem:[%s2196 + $0x1d88] sm:$0xff]
        %v3605 = vld [vmem:[%s2196 + $0x1d90] sm:$0xff]
        %v3606 = vld [vmem:[%s2196 + $0x1d98] sm:$0xff]
        %v3607 = vld [vmem:[%s2196 + $0x1da0] sm:$0xff]
        %v3608 = vld [vmem:[%s2196 + $0x1da8] sm:$0xff]
        %v3609 = vld [vmem:[%s2196 + $0x1db0] sm:$0xff]
        %v3610 = vld [vmem:[%s2196 + $0x1db8] sm:$0xff]
        %v3611 = vld [vmem:[%s2196 + $0x1dc0] sm:$0xff]
        %v3612 = vld [vmem:[%s2196 + $0x1dc8] sm:$0xff]
        %v3613 = vld [vmem:[%s2196 + $0x1dd0] sm:$0xff]
        %v3614 = vld [vmem:[%s2196 + $0x1dd8] sm:$0xff]
        %v3615 = vld [vmem:[%s2196 + $0x1de0] sm:$0xff]
        %v3616 = vld [vmem:[%s2196 + $0x1de8] sm:$0xff]
        %v3617 = vld [vmem:[%s2196 + $0x1df0] sm:$0xff]
        %v3618 = vld [vmem:[%s2196 + $0x1df8] sm:$0xff]
        %v3619 = vld [vmem:[%s2233] sm:$0xff]
        %v3620 = vld [vmem:[%s2233 + $0x8] sm:$0xff]
        %v3621 = vld [vmem:[%s2233 + $0x10] sm:$0xff]
        %v3622 = vld [vmem:[%s2233 + $0x18] sm:$0x3f]
        %v3627 = vlaneseq
        %v3628 = vshrl.u32 %v3627, 7
        %v3629 = vsub.s32 0, %v3628
        %v3630 = vrot.slane %v3619, %v3629
        %v3631 = vlaneseq
        %v3632 = vshrl.u32 %v3631, 7
        %v3633 = vsub.s32 1, %v3632
        %v3634 = vrot.slane %v3619, %v3633
        %v3635 = vlaneseq
        %v3636 = vshrl.u32 %v3635, 7
        %v3637 = vsub.s32 2, %v3636
        %v3638 = vrot.slane %v3619, %v3637
        %v3639 = vlaneseq
        %v3640 = vshrl.u32 %v3639, 7
        %v3641 = vsub.s32 3, %v3640
        %v3642 = vrot.slane %v3619, %v3641
        %v3643 = vlaneseq
        %v3644 = vshrl.u32 %v3643, 7
        %v3645 = vsub.s32 4, %v3644
        %v3646 = vrot.slane %v3619, %v3645
        %v3647 = vlaneseq
        %v3648 = vshrl.u32 %v3647, 7
        %v3649 = vsub.s32 5, %v3648
        %v3650 = vrot.slane %v3619, %v3649
        %v3651 = vlaneseq
        %v3652 = vshrl.u32 %v3651, 7
        %v3653 = vsub.s32 6, %v3652
        %v3654 = vrot.slane %v3619, %v3653
        %v3655 = vlaneseq
        %v3656 = vshrl.u32 %v3655, 7
        %v3657 = vsub.s32 7, %v3656
        %v3658 = vrot.slane %v3619, %v3657
        %v3659 = vlaneseq
        %v3660 = vshrl.u32 %v3659, 7
        %v3661 = vsub.s32 0, %v3660
        %v3662 = vrot.slane %v3620, %v3661
        %v3663 = vlaneseq
        %v3664 = vshrl.u32 %v3663, 7
        %v3665 = vsub.s32 1, %v3664
        %v3666 = vrot.slane %v3620, %v3665
        %v3667 = vlaneseq
        %v3668 = vshrl.u32 %v3667, 7
        %v3669 = vsub.s32 2, %v3668
        %v3670 = vrot.slane %v3620, %v3669
        %v3671 = vlaneseq
        %v3672 = vshrl.u32 %v3671, 7
        %v3673 = vsub.s32 3, %v3672
        %v3674 = vrot.slane %v3620, %v3673
        %v3675 = vlaneseq
        %v3676 = vshrl.u32 %v3675, 7
        %v3677 = vsub.s32 4, %v3676
        %v3678 = vrot.slane %v3620, %v3677
        %v3679 = vlaneseq
        %v3680 = vshrl.u32 %v3679, 7
        %v3681 = vsub.s32 5, %v3680
        %v3682 = vrot.slane %v3620, %v3681
        %v3683 = vlaneseq
        %v3684 = vshrl.u32 %v3683, 7
        %v3685 = vsub.s32 6, %v3684
        %v3686 = vrot.slane %v3620, %v3685
        %v3687 = vlaneseq
        %v3688 = vshrl.u32 %v3687, 7
        %v3689 = vsub.s32 7, %v3688
        %v3690 = vrot.slane %v3620, %v3689
        %v3691 = vlaneseq
        %v3692 = vshrl.u32 %v3691, 7
        %v3693 = vsub.s32 0, %v3692
        %v3694 = vrot.slane %v3621, %v3693
        %v3695 = vlaneseq
        %v3696 = vshrl.u32 %v3695, 7
        %v3697 = vsub.s32 1, %v3696
        %v3698 = vrot.slane %v3621, %v3697
        %v3699 = vlaneseq
        %v3700 = vshrl.u32 %v3699, 7
        %v3701 = vsub.s32 2, %v3700
        %v3702 = vrot.slane %v3621, %v3701
        %v3703 = vlaneseq
        %v3704 = vshrl.u32 %v3703, 7
        %v3705 = vsub.s32 3, %v3704
        %v3706 = vrot.slane %v3621, %v3705
        %v3707 = vlaneseq
        %v3708 = vshrl.u32 %v3707, 7
        %v3709 = vsub.s32 4, %v3708
        %v3710 = vrot.slane %v3621, %v3709
        %v3711 = vlaneseq
        %v3712 = vshrl.u32 %v3711, 7
        %v3713 = vsub.s32 5, %v3712
        %v3714 = vrot.slane %v3621, %v3713
        %v3715 = vlaneseq
        %v3716 = vshrl.u32 %v3715, 7
        %v3717 = vsub.s32 6, %v3716
        %v3718 = vrot.slane %v3621, %v3717
        %v3719 = vlaneseq
        %v3720 = vshrl.u32 %v3719, 7
        %v3721 = vsub.s32 7, %v3720
        %v3722 = vrot.slane %v3621, %v3721
        %v3723 = vlaneseq
        %v3724 = vshrl.u32 %v3723, 7
        %v3725 = vsub.s32 0, %v3724
        %v3726 = vrot.slane %v3622, %v3725
        %v3727 = vlaneseq
        %v3728 = vshrl.u32 %v3727, 7
        %v3729 = vsub.s32 1, %v3728
        %v3730 = vrot.slane %v3622, %v3729
        %v3731 = vlaneseq
        %v3732 = vshrl.u32 %v3731, 7
        %v3733 = vsub.s32 2, %v3732
        %v3734 = vrot.slane %v3622, %v3733
        %v3735 = vlaneseq
        %v3736 = vshrl.u32 %v3735, 7
        %v3737 = vsub.s32 3, %v3736
        %v3738 = vrot.slane %v3622, %v3737
        %v3739 = vlaneseq
        %v3740 = vshrl.u32 %v3739, 7
        %v3741 = vsub.s32 4, %v3740
        %v3742 = vrot.slane %v3622, %v3741
        %v3743 = vlaneseq
        %v3744 = vshrl.u32 %v3743, 7
        %v3745 = vsub.s32 5, %v3744
        %v3746 = vrot.slane %v3622, %v3745
        %v4737 = vunpack.c.l.b16 %v2659
        %v4738 = vunpack.c.h.b16 %v2659
        %v4739 = vunpack.c.l.b16 %v2660
        %v4740 = vunpack.c.h.b16 %v2660
        %v4741 = vunpack.c.l.b16 %v2661
        %v4742 = vunpack.c.h.b16 %v2661
        %v4743 = vunpack.c.l.b16 %v2662
        %v4744 = vunpack.c.h.b16 %v2662
        %v4745 = vunpack.c.l.b16 %v2663
        %v4746 = vunpack.c.h.b16 %v2663
        %v4747 = vunpack.c.l.b16 %v2664
        %v4748 = vunpack.c.h.b16 %v2664
        %v4749 = vunpack.c.l.b16 %v2665
        %v4750 = vunpack.c.h.b16 %v2665
        %v4751 = vunpack.c.l.b16 %v2666
        %v4752 = vunpack.c.h.b16 %v2666
        %v4753 = vunpack.c.l.b16 %v2667
        %v4754 = vunpack.c.h.b16 %v2667
        %v4755 = vunpack.c.l.b16 %v2668
        %v4756 = vunpack.c.h.b16 %v2668
        %v4757 = vunpack.c.l.b16 %v2669
        %v4758 = vunpack.c.h.b16 %v2669
        %v4759 = vunpack.c.l.b16 %v2670
        %v4760 = vunpack.c.h.b16 %v2670
        %v4761 = vunpack.c.l.b16 %v2671
        %v4762 = vunpack.c.h.b16 %v2671
        %v4763 = vunpack.c.l.b16 %v2672
        %v4764 = vunpack.c.h.b16 %v2672
        %v4765 = vunpack.c.l.b16 %v2673
        %v4766 = vunpack.c.h.b16 %v2673
        %v4767 = vunpack.c.l.b16 %v2674
        %v4768 = vunpack.c.h.b16 %v2674
        %v4769 = vunpack.c.l.b16 %v2675
        %v4770 = vunpack.c.h.b16 %v2675
        %v4771 = vunpack.c.l.b16 %v2676
        %v4772 = vunpack.c.h.b16 %v2676
        %v4773 = vunpack.c.l.b16 %v2677
        %v4774 = vunpack.c.h.b16 %v2677
        %v4775 = vunpack.c.l.b16 %v2678
        %v4776 = vunpack.c.h.b16 %v2678
        %v4777 = vunpack.c.l.b16 %v2679
        %v4778 = vunpack.c.h.b16 %v2679
        %v4779 = vunpack.c.l.b16 %v2680
        %v4780 = vunpack.c.h.b16 %v2680
        %v4781 = vunpack.c.l.b16 %v2681
        %v4782 = vunpack.c.h.b16 %v2681
        %v4783 = vunpack.c.l.b16 %v2682
        %v4784 = vunpack.c.h.b16 %v2682
        %v4785 = vunpack.c.l.b16 %v2683
        %v4786 = vunpack.c.h.b16 %v2683
        %v4787 = vunpack.c.l.b16 %v2684
        %v4788 = vunpack.c.h.b16 %v2684
        %v4789 = vunpack.c.l.b16 %v2685
        %v4790 = vunpack.c.h.b16 %v2685
        %v4791 = vunpack.c.l.b16 %v2686
        %v4792 = vunpack.c.h.b16 %v2686
        %v4793 = vunpack.c.l.b16 %v2687
        %v4794 = vunpack.c.h.b16 %v2687
        %v4795 = vunpack.c.l.b16 %v2688
        %v4796 = vunpack.c.h.b16 %v2688
        %v4797 = vunpack.c.l.b16 %v2689
        %v4798 = vunpack.c.h.b16 %v2689
        %v4799 = vunpack.c.l.b16 %v2690
        %v4800 = vunpack.c.h.b16 %v2690
        %v4801 = vunpack.c.l.b16 %v2691
        %v4802 = vunpack.c.h.b16 %v2691
        %v4803 = vunpack.c.l.b16 %v2692
        %v4804 = vunpack.c.h.b16 %v2692
        %v4805 = vunpack.c.l.b16 %v2693
        %v4806 = vunpack.c.h.b16 %v2693
        %v4807 = vunpack.c.l.b16 %v2694
        %v4808 = vunpack.c.h.b16 %v2694
        %v4809 = vunpack.c.l.b16 %v2695
        %v4810 = vunpack.c.h.b16 %v2695
        %v4811 = vunpack.c.l.b16 %v2696
        %v4812 = vunpack.c.h.b16 %v2696
        %v4813 = vunpack.c.l.b16 %v2697
        %v4814 = vunpack.c.h.b16 %v2697
        %v4815 = vunpack.c.l.b16 %v2698
        %v4816 = vunpack.c.h.b16 %v2698
        %v4817 = vunpack.c.l.b16 %v2699
        %v4818 = vunpack.c.h.b16 %v2699
        %v4819 = vunpack.c.l.b16 %v2700
        %v4820 = vunpack.c.h.b16 %v2700
        %v4821 = vunpack.c.l.b16 %v2701
        %v4822 = vunpack.c.h.b16 %v2701
        %v4823 = vunpack.c.l.b16 %v2702
        %v4824 = vunpack.c.h.b16 %v2702
        %v4825 = vunpack.c.l.b16 %v2703
        %v4826 = vunpack.c.h.b16 %v2703
        %v4827 = vunpack.c.l.b16 %v2704
        %v4828 = vunpack.c.h.b16 %v2704
        %v4829 = vunpack.c.l.b16 %v2705
        %v4830 = vunpack.c.h.b16 %v2705
        %v4831 = vunpack.c.l.b16 %v2706
        %v4832 = vunpack.c.h.b16 %v2706
        %v4833 = vunpack.c.l.b16 %v2707
        %v4834 = vunpack.c.h.b16 %v2707
        %v4835 = vunpack.c.l.b16 %v2708
        %v4836 = vunpack.c.h.b16 %v2708
        %v4837 = vunpack.c.l.b16 %v2709
        %v4838 = vunpack.c.h.b16 %v2709
        %v4839 = vunpack.c.l.b16 %v2710
        %v4840 = vunpack.c.h.b16 %v2710
        %v4841 = vunpack.c.l.b16 %v2711
        %v4842 = vunpack.c.h.b16 %v2711
        %v4843 = vunpack.c.l.b16 %v2712
        %v4844 = vunpack.c.h.b16 %v2712
        %v4845 = vunpack.c.l.b16 %v2713
        %v4846 = vunpack.c.h.b16 %v2713
        %v4847 = vunpack.c.l.b16 %v2714
        %v4848 = vunpack.c.h.b16 %v2714
        %v4849 = vunpack.c.l.b16 %v2715
        %v4850 = vunpack.c.h.b16 %v2715
        %v4851 = vunpack.c.l.b16 %v2716
        %v4852 = vunpack.c.h.b16 %v2716
        %v4853 = vunpack.c.l.b16 %v2717
        %v4854 = vunpack.c.h.b16 %v2717
        %v4855 = vunpack.c.l.b16 %v2718
        %v4856 = vunpack.c.h.b16 %v2718
        %v4857 = vunpack.c.l.b16 %v2719
        %v4858 = vunpack.c.h.b16 %v2719
        %v4859 = vunpack.c.l.b16 %v2720
        %v4860 = vunpack.c.h.b16 %v2720
        %v4861 = vunpack.c.l.b16 %v2721
        %v4862 = vunpack.c.h.b16 %v2721
        %v4863 = vunpack.c.l.b16 %v2722
        %v4864 = vunpack.c.h.b16 %v2722
        %v4865 = vunpack.c.l.b16 %v2723
        %v4866 = vunpack.c.h.b16 %v2723
        %v4867 = vunpack.c.l.b16 %v2724
        %v4868 = vunpack.c.h.b16 %v2724
        %v4869 = vunpack.c.l.b16 %v2725
        %v4870 = vunpack.c.h.b16 %v2725
        %v4871 = vunpack.c.l.b16 %v2726
        %v4872 = vunpack.c.h.b16 %v2726
        %v4873 = vunpack.c.l.b16 %v2727
        %v4874 = vunpack.c.h.b16 %v2727
        %v4875 = vunpack.c.l.b16 %v2728
        %v4876 = vunpack.c.h.b16 %v2728
        %v4877 = vunpack.c.l.b16 %v2729
        %v4878 = vunpack.c.h.b16 %v2729
        %v4879 = vunpack.c.l.b16 %v2730
        %v4880 = vunpack.c.h.b16 %v2730
        %v4881 = vunpack.c.l.b16 %v2731
        %v4882 = vunpack.c.h.b16 %v2731
        %v4883 = vunpack.c.l.b16 %v2732
        %v4884 = vunpack.c.h.b16 %v2732
        %v4885 = vunpack.c.l.b16 %v2733
        %v4886 = vunpack.c.h.b16 %v2733
        %v4887 = vunpack.c.l.b16 %v2734
        %v4888 = vunpack.c.h.b16 %v2734
        %v4889 = vunpack.c.l.b16 %v2735
        %v4890 = vunpack.c.h.b16 %v2735
        %v4891 = vunpack.c.l.b16 %v2736
        %v4892 = vunpack.c.h.b16 %v2736
        %v4893 = vunpack.c.l.b16 %v2737
        %v4894 = vunpack.c.h.b16 %v2737
        %v4895 = vunpack.c.l.b16 %v2738
        %v4896 = vunpack.c.h.b16 %v2738
        %v4897 = vunpack.c.l.b16 %v2739
        %v4898 = vunpack.c.h.b16 %v2739
        %v4899 = vunpack.c.l.b16 %v2740
        %v4900 = vunpack.c.h.b16 %v2740
        %v4901 = vunpack.c.l.b16 %v2741
        %v4902 = vunpack.c.h.b16 %v2741
        %v4903 = vunpack.c.l.b16 %v2742
        %v4904 = vunpack.c.h.b16 %v2742
        %v4905 = vunpack.c.l.b16 %v2743
        %v4906 = vunpack.c.h.b16 %v2743
        %v4907 = vunpack.c.l.b16 %v2744
        %v4908 = vunpack.c.h.b16 %v2744
        %v4909 = vunpack.c.l.b16 %v2745
        %v4910 = vunpack.c.h.b16 %v2745
        %v4911 = vunpack.c.l.b16 %v2746
        %v4912 = vunpack.c.h.b16 %v2746
        %v4913 = vunpack.c.l.b16 %v2747
        %v4914 = vunpack.c.h.b16 %v2747
        %v4915 = vunpack.c.l.b16 %v2748
        %v4916 = vunpack.c.h.b16 %v2748
        %v4917 = vunpack.c.l.b16 %v2749
        %v4918 = vunpack.c.h.b16 %v2749
        %v4919 = vunpack.c.l.b16 %v2750
        %v4920 = vunpack.c.h.b16 %v2750
        %v4921 = vunpack.c.l.b16 %v2751
        %v4922 = vunpack.c.h.b16 %v2751
        %v4923 = vunpack.c.l.b16 %v2752
        %v4924 = vunpack.c.h.b16 %v2752
        %v4925 = vunpack.c.l.b16 %v2753
        %v4926 = vunpack.c.h.b16 %v2753
        %v4927 = vunpack.c.l.b16 %v2754
        %v4928 = vunpack.c.h.b16 %v2754
        %v4929 = vunpack.c.l.b16 %v2755
        %v4930 = vunpack.c.h.b16 %v2755
        %v4931 = vunpack.c.l.b16 %v2756
        %v4932 = vunpack.c.h.b16 %v2756
        %v4933 = vunpack.c.l.b16 %v2757
        %v4934 = vunpack.c.h.b16 %v2757
        %v4935 = vunpack.c.l.b16 %v2758
        %v4936 = vunpack.c.h.b16 %v2758
        %v4937 = vunpack.c.l.b16 %v2759
        %v4938 = vunpack.c.h.b16 %v2759
        %v4939 = vunpack.c.l.b16 %v2760
        %v4940 = vunpack.c.h.b16 %v2760
        %v4941 = vunpack.c.l.b16 %v2761
        %v4942 = vunpack.c.h.b16 %v2761
        %v4943 = vunpack.c.l.b16 %v2762
        %v4944 = vunpack.c.h.b16 %v2762
        %v4945 = vunpack.c.l.b16 %v2763
        %v4946 = vunpack.c.h.b16 %v2763
        %v4947 = vunpack.c.l.b16 %v2764
        %v4948 = vunpack.c.h.b16 %v2764
        %v4949 = vunpack.c.l.b16 %v2765
        %v4950 = vunpack.c.h.b16 %v2765
        %v4951 = vunpack.c.l.b16 %v2766
        %v4952 = vunpack.c.h.b16 %v2766
        %v4953 = vunpack.c.l.b16 %v2767
        %v4954 = vunpack.c.h.b16 %v2767
        %v4955 = vunpack.c.l.b16 %v2768
        %v4956 = vunpack.c.h.b16 %v2768
        %v4957 = vunpack.c.l.b16 %v2769
        %v4958 = vunpack.c.h.b16 %v2769
        %v4959 = vunpack.c.l.b16 %v2770
        %v4960 = vunpack.c.h.b16 %v2770
        %v4961 = vunpack.c.l.b16 %v2771
        %v4962 = vunpack.c.h.b16 %v2771
        %v4963 = vunpack.c.l.b16 %v2772
        %v4964 = vunpack.c.h.b16 %v2772
        %v4965 = vunpack.c.l.b16 %v2773
        %v4966 = vunpack.c.h.b16 %v2773
        %v4967 = vunpack.c.l.b16 %v2774
        %v4968 = vunpack.c.h.b16 %v2774
        %v4969 = vunpack.c.l.b16 %v2775
        %v4970 = vunpack.c.h.b16 %v2775
        %v4971 = vunpack.c.l.b16 %v2776
        %v4972 = vunpack.c.h.b16 %v2776
        %v4973 = vunpack.c.l.b16 %v2777
        %v4974 = vunpack.c.h.b16 %v2777
        %v4975 = vunpack.c.l.b16 %v2778
        %v4976 = vunpack.c.h.b16 %v2778
        %v4977 = vunpack.c.l.b16 %v2779
        %v4978 = vunpack.c.h.b16 %v2779
        %v4979 = vunpack.c.l.b16 %v2780
        %v4980 = vunpack.c.h.b16 %v2780
        %v4981 = vunpack.c.l.b16 %v2781
        %v4982 = vunpack.c.h.b16 %v2781
        %v4983 = vunpack.c.l.b16 %v2782
        %v4984 = vunpack.c.h.b16 %v2782
        %v4985 = vunpack.c.l.b16 %v2783
        %v4986 = vunpack.c.h.b16 %v2783
        %v4987 = vunpack.c.l.b16 %v2784
        %v4988 = vunpack.c.h.b16 %v2784
        %v4989 = vunpack.c.l.b16 %v2785
        %v4990 = vunpack.c.h.b16 %v2785
        %v4991 = vunpack.c.l.b16 %v2786
        %v4992 = vunpack.c.h.b16 %v2786
        %v4993 = vunpack.c.l.b16 %v2787
        %v4994 = vunpack.c.h.b16 %v2787
        %v4995 = vunpack.c.l.b16 %v2788
        %v4996 = vunpack.c.h.b16 %v2788
        %v4997 = vunpack.c.l.b16 %v2789
        %v4998 = vunpack.c.h.b16 %v2789
        %v4999 = vunpack.c.l.b16 %v2790
        %v5000 = vunpack.c.h.b16 %v2790
        %v5001 = vunpack.c.l.b16 %v2791
        %v5002 = vunpack.c.h.b16 %v2791
        %v5003 = vunpack.c.l.b16 %v2792
        %v5004 = vunpack.c.h.b16 %v2792
        %v5005 = vunpack.c.l.b16 %v2793
        %v5006 = vunpack.c.h.b16 %v2793
        %v5007 = vunpack.c.l.b16 %v2794
        %v5008 = vunpack.c.h.b16 %v2794
        %v5009 = vunpack.c.l.b16 %v2795
        %v5010 = vunpack.c.h.b16 %v2795
        %v5011 = vunpack.c.l.b16 %v2796
        %v5012 = vunpack.c.h.b16 %v2796
        %v5013 = vunpack.c.l.b16 %v2797
        %v5014 = vunpack.c.h.b16 %v2797
        %v5015 = vunpack.c.l.b16 %v2798
        %v5016 = vunpack.c.h.b16 %v2798
        %v5017 = vunpack.c.l.b16 %v2799
        %v5018 = vunpack.c.h.b16 %v2799
        %v5019 = vunpack.c.l.b16 %v2800
        %v5020 = vunpack.c.h.b16 %v2800
        %v5021 = vunpack.c.l.b16 %v2801
        %v5022 = vunpack.c.h.b16 %v2801
        %v5023 = vunpack.c.l.b16 %v2802
        %v5024 = vunpack.c.h.b16 %v2802
        %v5025 = vunpack.c.l.b16 %v2803
        %v5026 = vunpack.c.h.b16 %v2803
        %v5027 = vunpack.c.l.b16 %v2804
        %v5028 = vunpack.c.h.b16 %v2804
        %v5029 = vunpack.c.l.b16 %v2805
        %v5030 = vunpack.c.h.b16 %v2805
        %v5031 = vunpack.c.l.b16 %v2806
        %v5032 = vunpack.c.h.b16 %v2806
        %v5033 = vunpack.c.l.b16 %v2807
        %v5034 = vunpack.c.h.b16 %v2807
        %v5035 = vunpack.c.l.b16 %v2808
        %v5036 = vunpack.c.h.b16 %v2808
        %v5037 = vunpack.c.l.b16 %v2809
        %v5038 = vunpack.c.h.b16 %v2809
        %v5039 = vunpack.c.l.b16 %v2810
        %v5040 = vunpack.c.h.b16 %v2810
        %v5041 = vunpack.c.l.b16 %v2811
        %v5042 = vunpack.c.h.b16 %v2811
        %v5043 = vunpack.c.l.b16 %v2812
        %v5044 = vunpack.c.h.b16 %v2812
        %v5045 = vunpack.c.l.b16 %v2813
        %v5046 = vunpack.c.h.b16 %v2813
        %v5047 = vunpack.c.l.b16 %v2814
        %v5048 = vunpack.c.h.b16 %v2814
        %v5049 = vunpack.c.l.b16 %v2815
        %v5050 = vunpack.c.h.b16 %v2815
        %v5051 = vunpack.c.l.b16 %v2816
        %v5052 = vunpack.c.h.b16 %v2816
        %v5053 = vunpack.c.l.b16 %v2817
        %v5054 = vunpack.c.h.b16 %v2817
        %v5055 = vunpack.c.l.b16 %v2818
        %v5056 = vunpack.c.h.b16 %v2818
        %v5057 = vunpack.c.l.b16 %v2819
        %v5058 = vunpack.c.h.b16 %v2819
        %v5059 = vunpack.c.l.b16 %v2820
        %v5060 = vunpack.c.h.b16 %v2820
        %v5061 = vunpack.c.l.b16 %v2821
        %v5062 = vunpack.c.h.b16 %v2821
        %v5063 = vunpack.c.l.b16 %v2822
        %v5064 = vunpack.c.h.b16 %v2822
        %v5065 = vunpack.c.l.b16 %v2823
        %v5066 = vunpack.c.h.b16 %v2823
        %v5067 = vunpack.c.l.b16 %v2824
        %v5068 = vunpack.c.h.b16 %v2824
        %v5069 = vunpack.c.l.b16 %v2825
        %v5070 = vunpack.c.h.b16 %v2825
        %v5071 = vunpack.c.l.b16 %v2826
        %v5072 = vunpack.c.h.b16 %v2826
        %v5073 = vunpack.c.l.b16 %v2827
        %v5074 = vunpack.c.h.b16 %v2827
        %v5075 = vunpack.c.l.b16 %v2828
        %v5076 = vunpack.c.h.b16 %v2828
        %v5077 = vunpack.c.l.b16 %v2829
        %v5078 = vunpack.c.h.b16 %v2829
        %v5079 = vunpack.c.l.b16 %v2830
        %v5080 = vunpack.c.h.b16 %v2830
        %v5081 = vunpack.c.l.b16 %v2831
        %v5082 = vunpack.c.h.b16 %v2831
        %v5083 = vunpack.c.l.b16 %v2832
        %v5084 = vunpack.c.h.b16 %v2832
        %v5085 = vunpack.c.l.b16 %v2833
        %v5086 = vunpack.c.h.b16 %v2833
        %v5087 = vunpack.c.l.b16 %v2834
        %v5088 = vunpack.c.h.b16 %v2834
        %v5089 = vunpack.c.l.b16 %v2835
        %v5090 = vunpack.c.h.b16 %v2835
        %v5091 = vunpack.c.l.b16 %v2836
        %v5092 = vunpack.c.h.b16 %v2836
        %v5093 = vunpack.c.l.b16 %v2837
        %v5094 = vunpack.c.h.b16 %v2837
        %v5095 = vunpack.c.l.b16 %v2838
        %v5096 = vunpack.c.h.b16 %v2838
        %v5097 = vunpack.c.l.b16 %v2839
        %v5098 = vunpack.c.h.b16 %v2839
        %v5099 = vunpack.c.l.b16 %v2840
        %v5100 = vunpack.c.h.b16 %v2840
        %v5101 = vunpack.c.l.b16 %v2841
        %v5102 = vunpack.c.h.b16 %v2841
        %v5103 = vunpack.c.l.b16 %v2842
        %v5104 = vunpack.c.h.b16 %v2842
        %v5105 = vunpack.c.l.b16 %v2843
        %v5106 = vunpack.c.h.b16 %v2843
        %v5107 = vunpack.c.l.b16 %v2844
        %v5108 = vunpack.c.h.b16 %v2844
        %v5109 = vunpack.c.l.b16 %v2845
        %v5110 = vunpack.c.h.b16 %v2845
        %v5111 = vunpack.c.l.b16 %v2846
        %v5112 = vunpack.c.h.b16 %v2846
        %v5113 = vunpack.c.l.b16 %v2847
        %v5114 = vunpack.c.h.b16 %v2847
        %v5115 = vunpack.c.l.b16 %v2848
        %v5116 = vunpack.c.h.b16 %v2848
        %v5117 = vunpack.c.l.b16 %v2849
        %v5118 = vunpack.c.h.b16 %v2849
        %v5119 = vunpack.c.l.b16 %v2850
        %v5120 = vunpack.c.h.b16 %v2850
        %v5121 = vunpack.c.l.b16 %v2851
        %v5122 = vunpack.c.h.b16 %v2851
        %v5123 = vunpack.c.l.b16 %v2852
        %v5124 = vunpack.c.h.b16 %v2852
        %v5125 = vunpack.c.l.b16 %v2853
        %v5126 = vunpack.c.h.b16 %v2853
        %v5127 = vunpack.c.l.b16 %v2854
        %v5128 = vunpack.c.h.b16 %v2854
        %v5129 = vunpack.c.l.b16 %v2855
        %v5130 = vunpack.c.h.b16 %v2855
        %v5131 = vunpack.c.l.b16 %v2856
        %v5132 = vunpack.c.h.b16 %v2856
        %v5133 = vunpack.c.l.b16 %v2857
        %v5134 = vunpack.c.h.b16 %v2857
        %v5135 = vunpack.c.l.b16 %v2858
        %v5136 = vunpack.c.h.b16 %v2858
        %v5137 = vunpack.c.l.b16 %v2859
        %v5138 = vunpack.c.h.b16 %v2859
        %v5139 = vunpack.c.l.b16 %v2860
        %v5140 = vunpack.c.h.b16 %v2860
        %v5141 = vunpack.c.l.b16 %v2861
        %v5142 = vunpack.c.h.b16 %v2861
        %v5143 = vunpack.c.l.b16 %v2862
        %v5144 = vunpack.c.h.b16 %v2862
        %v5145 = vunpack.c.l.b16 %v2863
        %v5146 = vunpack.c.h.b16 %v2863
        %v5147 = vunpack.c.l.b16 %v2864
        %v5148 = vunpack.c.h.b16 %v2864
        %v5149 = vunpack.c.l.b16 %v2865
        %v5150 = vunpack.c.h.b16 %v2865
        %v5151 = vunpack.c.l.b16 %v2866
        %v5152 = vunpack.c.h.b16 %v2866
        %v5153 = vunpack.c.l.b16 %v2867
        %v5154 = vunpack.c.h.b16 %v2867
        %v5155 = vunpack.c.l.b16 %v2868
        %v5156 = vunpack.c.h.b16 %v2868
        %v5157 = vunpack.c.l.b16 %v2869
        %v5158 = vunpack.c.h.b16 %v2869
        %v5159 = vunpack.c.l.b16 %v2870
        %v5160 = vunpack.c.h.b16 %v2870
        %v5161 = vunpack.c.l.b16 %v2871
        %v5162 = vunpack.c.h.b16 %v2871
        %v5163 = vunpack.c.l.b16 %v2872
        %v5164 = vunpack.c.h.b16 %v2872
        %v5165 = vunpack.c.l.b16 %v2873
        %v5166 = vunpack.c.h.b16 %v2873
        %v5167 = vunpack.c.l.b16 %v2874
        %v5168 = vunpack.c.h.b16 %v2874
        %v5169 = vunpack.c.l.b16 %v2875
        %v5170 = vunpack.c.h.b16 %v2875
        %v5171 = vunpack.c.l.b16 %v2876
        %v5172 = vunpack.c.h.b16 %v2876
        %v5173 = vunpack.c.l.b16 %v2877
        %v5174 = vunpack.c.h.b16 %v2877
        %v5175 = vunpack.c.l.b16 %v2878
        %v5176 = vunpack.c.h.b16 %v2878
        %v5177 = vunpack.c.l.b16 %v2879
        %v5178 = vunpack.c.h.b16 %v2879
        %v5179 = vunpack.c.l.b16 %v2880
        %v5180 = vunpack.c.h.b16 %v2880
        %v5181 = vunpack.c.l.b16 %v2881
        %v5182 = vunpack.c.h.b16 %v2881
        %v5183 = vunpack.c.l.b16 %v2882
        %v5184 = vunpack.c.h.b16 %v2882
        %v5185 = vunpack.c.l.b16 %v2883
        %v5186 = vunpack.c.h.b16 %v2883
        %v5187 = vunpack.c.l.b16 %v2884
        %v5188 = vunpack.c.h.b16 %v2884
        %v5189 = vunpack.c.l.b16 %v2885
        %v5190 = vunpack.c.h.b16 %v2885
        %v5191 = vunpack.c.l.b16 %v2886
        %v5192 = vunpack.c.h.b16 %v2886
        %v5193 = vunpack.c.l.b16 %v2887
        %v5194 = vunpack.c.h.b16 %v2887
        %v5195 = vunpack.c.l.b16 %v2888
        %v5196 = vunpack.c.h.b16 %v2888
        %v5197 = vunpack.c.l.b16 %v2889
        %v5198 = vunpack.c.h.b16 %v2889
        %v5199 = vunpack.c.l.b16 %v2890
        %v5200 = vunpack.c.h.b16 %v2890
        %v5201 = vunpack.c.l.b16 %v2891
        %v5202 = vunpack.c.h.b16 %v2891
        %v5203 = vunpack.c.l.b16 %v2892
        %v5204 = vunpack.c.h.b16 %v2892
        %v5205 = vunpack.c.l.b16 %v2893
        %v5206 = vunpack.c.h.b16 %v2893
        %v5207 = vunpack.c.l.b16 %v2894
        %v5208 = vunpack.c.h.b16 %v2894
        %v5209 = vunpack.c.l.b16 %v2895
        %v5210 = vunpack.c.h.b16 %v2895
        %v5211 = vunpack.c.l.b16 %v2896
        %v5212 = vunpack.c.h.b16 %v2896
        %v5213 = vunpack.c.l.b16 %v2897
        %v5214 = vunpack.c.h.b16 %v2897
        %v5215 = vunpack.c.l.b16 %v2898
        %v5216 = vunpack.c.h.b16 %v2898
        %v5217 = vunpack.c.l.b16 %v2899
        %v5218 = vunpack.c.h.b16 %v2899
        %v5219 = vunpack.c.l.b16 %v2900
        %v5220 = vunpack.c.h.b16 %v2900
        %v5221 = vunpack.c.l.b16 %v2901
        %v5222 = vunpack.c.h.b16 %v2901
        %v5223 = vunpack.c.l.b16 %v2902
        %v5224 = vunpack.c.h.b16 %v2902
        %v5225 = vunpack.c.l.b16 %v2903
        %v5226 = vunpack.c.h.b16 %v2903
        %v5227 = vunpack.c.l.b16 %v2904
        %v5228 = vunpack.c.h.b16 %v2904
        %v5229 = vunpack.c.l.b16 %v2905
        %v5230 = vunpack.c.h.b16 %v2905
        %v5231 = vunpack.c.l.b16 %v2906
        %v5232 = vunpack.c.h.b16 %v2906
        %v5233 = vunpack.c.l.b16 %v2907
        %v5234 = vunpack.c.h.b16 %v2907
        %v5235 = vunpack.c.l.b16 %v2908
        %v5236 = vunpack.c.h.b16 %v2908
        %v5237 = vunpack.c.l.b16 %v2909
        %v5238 = vunpack.c.h.b16 %v2909
        %v5239 = vunpack.c.l.b16 %v2910
        %v5240 = vunpack.c.h.b16 %v2910
        %v5241 = vunpack.c.l.b16 %v2911
        %v5242 = vunpack.c.h.b16 %v2911
        %v5243 = vunpack.c.l.b16 %v2912
        %v5244 = vunpack.c.h.b16 %v2912
        %v5245 = vunpack.c.l.b16 %v2913
        %v5246 = vunpack.c.h.b16 %v2913
        %v5247 = vunpack.c.l.b16 %v2914
        %v5248 = vunpack.c.h.b16 %v2914
        %v5249 = vunpack.c.l.b16 %v2915
        %v5250 = vunpack.c.h.b16 %v2915
        %v5251 = vunpack.c.l.b16 %v2916
        %v5252 = vunpack.c.h.b16 %v2916
        %v5253 = vunpack.c.l.b16 %v2917
        %v5254 = vunpack.c.h.b16 %v2917
        %v5255 = vunpack.c.l.b16 %v2918
        %v5256 = vunpack.c.h.b16 %v2918
        %v5257 = vunpack.c.l.b16 %v2919
        %v5258 = vunpack.c.h.b16 %v2919
        %v5259 = vunpack.c.l.b16 %v2920
        %v5260 = vunpack.c.h.b16 %v2920
        %v5261 = vunpack.c.l.b16 %v2921
        %v5262 = vunpack.c.h.b16 %v2921
        %v5263 = vunpack.c.l.b16 %v2922
        %v5264 = vunpack.c.h.b16 %v2922
        %v5265 = vunpack.c.l.b16 %v2923
        %v5266 = vunpack.c.h.b16 %v2923
        %v5267 = vunpack.c.l.b16 %v2924
        %v5268 = vunpack.c.h.b16 %v2924
        %v5269 = vunpack.c.l.b16 %v2925
        %v5270 = vunpack.c.h.b16 %v2925
        %v5271 = vunpack.c.l.b16 %v2926
        %v5272 = vunpack.c.h.b16 %v2926
        %v5273 = vunpack.c.l.b16 %v2927
        %v5274 = vunpack.c.h.b16 %v2927
        %v5275 = vunpack.c.l.b16 %v2928
        %v5276 = vunpack.c.h.b16 %v2928
        %v5277 = vunpack.c.l.b16 %v2929
        %v5278 = vunpack.c.h.b16 %v2929
        %v5279 = vunpack.c.l.b16 %v2930
        %v5280 = vunpack.c.h.b16 %v2930
        %v5281 = vunpack.c.l.b16 %v2931
        %v5282 = vunpack.c.h.b16 %v2931
        %v5283 = vunpack.c.l.b16 %v2932
        %v5284 = vunpack.c.h.b16 %v2932
        %v5285 = vunpack.c.l.b16 %v2933
        %v5286 = vunpack.c.h.b16 %v2933
        %v5287 = vunpack.c.l.b16 %v2934
        %v5288 = vunpack.c.h.b16 %v2934
        %v5289 = vunpack.c.l.b16 %v2935
        %v5290 = vunpack.c.h.b16 %v2935
        %v5291 = vunpack.c.l.b16 %v2936
        %v5292 = vunpack.c.h.b16 %v2936
        %v5293 = vunpack.c.l.b16 %v2937
        %v5294 = vunpack.c.h.b16 %v2937
        %v5295 = vunpack.c.l.b16 %v2938
        %v5296 = vunpack.c.h.b16 %v2938
        %v5297 = vunpack.c.l.b16 %v2939
        %v5298 = vunpack.c.h.b16 %v2939
        %v5299 = vunpack.c.l.b16 %v2940
        %v5300 = vunpack.c.h.b16 %v2940
        %v5301 = vunpack.c.l.b16 %v2941
        %v5302 = vunpack.c.h.b16 %v2941
        %v5303 = vunpack.c.l.b16 %v2942
        %v5304 = vunpack.c.h.b16 %v2942
        %v5305 = vunpack.c.l.b16 %v2943
        %v5306 = vunpack.c.h.b16 %v2943
        %v5307 = vunpack.c.l.b16 %v2944
        %v5308 = vunpack.c.h.b16 %v2944
        %v5309 = vunpack.c.l.b16 %v2945
        %v5310 = vunpack.c.h.b16 %v2945
        %v5311 = vunpack.c.l.b16 %v2946
        %v5312 = vunpack.c.h.b16 %v2946
        %v5313 = vunpack.c.l.b16 %v2947
        %v5314 = vunpack.c.h.b16 %v2947
        %v5315 = vunpack.c.l.b16 %v2948
        %v5316 = vunpack.c.h.b16 %v2948
        %v5317 = vunpack.c.l.b16 %v2949
        %v5318 = vunpack.c.h.b16 %v2949
        %v5319 = vunpack.c.l.b16 %v2950
        %v5320 = vunpack.c.h.b16 %v2950
        %v5321 = vunpack.c.l.b16 %v2951
        %v5322 = vunpack.c.h.b16 %v2951
        %v5323 = vunpack.c.l.b16 %v2952
        %v5324 = vunpack.c.h.b16 %v2952
        %v5325 = vunpack.c.l.b16 %v2953
        %v5326 = vunpack.c.h.b16 %v2953
        %v5327 = vunpack.c.l.b16 %v2954
        %v5328 = vunpack.c.h.b16 %v2954
        %v5329 = vunpack.c.l.b16 %v2955
        %v5330 = vunpack.c.h.b16 %v2955
        %v5331 = vunpack.c.l.b16 %v2956
        %v5332 = vunpack.c.h.b16 %v2956
        %v5333 = vunpack.c.l.b16 %v2957
        %v5334 = vunpack.c.h.b16 %v2957
        %v5335 = vunpack.c.l.b16 %v2958
        %v5336 = vunpack.c.h.b16 %v2958
        %v5337 = vunpack.c.l.b16 %v2959
        %v5338 = vunpack.c.h.b16 %v2959
        %v5339 = vunpack.c.l.b16 %v2960
        %v5340 = vunpack.c.h.b16 %v2960
        %v5341 = vunpack.c.l.b16 %v2961
        %v5342 = vunpack.c.h.b16 %v2961
        %v5343 = vunpack.c.l.b16 %v2962
        %v5344 = vunpack.c.h.b16 %v2962
        %v5345 = vunpack.c.l.b16 %v2963
        %v5346 = vunpack.c.h.b16 %v2963
        %v5347 = vunpack.c.l.b16 %v2964
        %v5348 = vunpack.c.h.b16 %v2964
        %v5349 = vunpack.c.l.b16 %v2965
        %v5350 = vunpack.c.h.b16 %v2965
        %v5351 = vunpack.c.l.b16 %v2966
        %v5352 = vunpack.c.h.b16 %v2966
        %v5353 = vunpack.c.l.b16 %v2967
        %v5354 = vunpack.c.h.b16 %v2967
        %v5355 = vunpack.c.l.b16 %v2968
        %v5356 = vunpack.c.h.b16 %v2968
        %v5357 = vunpack.c.l.b16 %v2969
        %v5358 = vunpack.c.h.b16 %v2969
        %v5359 = vunpack.c.l.b16 %v2970
        %v5360 = vunpack.c.h.b16 %v2970
        %v5361 = vunpack.c.l.b16 %v2971
        %v5362 = vunpack.c.h.b16 %v2971
        %v5363 = vunpack.c.l.b16 %v2972
        %v5364 = vunpack.c.h.b16 %v2972
        %v5365 = vunpack.c.l.b16 %v2973
        %v5366 = vunpack.c.h.b16 %v2973
        %v5367 = vunpack.c.l.b16 %v2974
        %v5368 = vunpack.c.h.b16 %v2974
        %v5369 = vunpack.c.l.b16 %v2975
        %v5370 = vunpack.c.h.b16 %v2975
        %v5371 = vunpack.c.l.b16 %v2976
        %v5372 = vunpack.c.h.b16 %v2976
        %v5373 = vunpack.c.l.b16 %v2977
        %v5374 = vunpack.c.h.b16 %v2977
        %v5375 = vunpack.c.l.b16 %v2978
        %v5376 = vunpack.c.h.b16 %v2978
        %v5377 = vunpack.c.l.b16 %v2979
        %v5378 = vunpack.c.h.b16 %v2979
        %v5379 = vunpack.c.l.b16 %v2980
        %v5380 = vunpack.c.h.b16 %v2980
        %v5381 = vunpack.c.l.b16 %v2981
        %v5382 = vunpack.c.h.b16 %v2981
        %v5383 = vunpack.c.l.b16 %v2982
        %v5384 = vunpack.c.h.b16 %v2982
        %v5385 = vunpack.c.l.b16 %v2983
        %v5386 = vunpack.c.h.b16 %v2983
        %v5387 = vunpack.c.l.b16 %v2984
        %v5388 = vunpack.c.h.b16 %v2984
        %v5389 = vunpack.c.l.b16 %v2985
        %v5390 = vunpack.c.h.b16 %v2985
        %v5391 = vunpack.c.l.b16 %v2986
        %v5392 = vunpack.c.h.b16 %v2986
        %v5393 = vunpack.c.l.b16 %v2987
        %v5394 = vunpack.c.h.b16 %v2987
        %v5395 = vunpack.c.l.b16 %v2988
        %v5396 = vunpack.c.h.b16 %v2988
        %v5397 = vunpack.c.l.b16 %v2989
        %v5398 = vunpack.c.h.b16 %v2989
        %v5399 = vunpack.c.l.b16 %v2990
        %v5400 = vunpack.c.h.b16 %v2990
        %v5401 = vunpack.c.l.b16 %v2991
        %v5402 = vunpack.c.h.b16 %v2991
        %v5403 = vunpack.c.l.b16 %v2992
        %v5404 = vunpack.c.h.b16 %v2992
        %v5405 = vunpack.c.l.b16 %v2993
        %v5406 = vunpack.c.h.b16 %v2993
        %v5407 = vunpack.c.l.b16 %v2994
        %v5408 = vunpack.c.h.b16 %v2994
        %v5409 = vunpack.c.l.b16 %v2995
        %v5410 = vunpack.c.h.b16 %v2995
        %v5411 = vunpack.c.l.b16 %v2996
        %v5412 = vunpack.c.h.b16 %v2996
        %v5413 = vunpack.c.l.b16 %v2997
        %v5414 = vunpack.c.h.b16 %v2997
        %v5415 = vunpack.c.l.b16 %v2998
        %v5416 = vunpack.c.h.b16 %v2998
        %v5417 = vunpack.c.l.b16 %v2999
        %v5418 = vunpack.c.h.b16 %v2999
        %v5419 = vunpack.c.l.b16 %v3000
        %v5420 = vunpack.c.h.b16 %v3000
        %v5421 = vunpack.c.l.b16 %v3001
        %v5422 = vunpack.c.h.b16 %v3001
        %v5423 = vunpack.c.l.b16 %v3002
        %v5424 = vunpack.c.h.b16 %v3002
        %v5425 = vunpack.c.l.b16 %v3003
        %v5426 = vunpack.c.h.b16 %v3003
        %v5427 = vunpack.c.l.b16 %v3004
        %v5428 = vunpack.c.h.b16 %v3004
        %v5429 = vunpack.c.l.b16 %v3005
        %v5430 = vunpack.c.h.b16 %v3005
        %v5431 = vunpack.c.l.b16 %v3006
        %v5432 = vunpack.c.h.b16 %v3006
        %v5433 = vunpack.c.l.b16 %v3007
        %v5434 = vunpack.c.h.b16 %v3007
        %v5435 = vunpack.c.l.b16 %v3008
        %v5436 = vunpack.c.h.b16 %v3008
        %v5437 = vunpack.c.l.b16 %v3009
        %v5438 = vunpack.c.h.b16 %v3009
        %v5439 = vunpack.c.l.b16 %v3010
        %v5440 = vunpack.c.h.b16 %v3010
        %v5441 = vunpack.c.l.b16 %v3011
        %v5442 = vunpack.c.h.b16 %v3011
        %v5443 = vunpack.c.l.b16 %v3012
        %v5444 = vunpack.c.h.b16 %v3012
        %v5445 = vunpack.c.l.b16 %v3013
        %v5446 = vunpack.c.h.b16 %v3013
        %v5447 = vunpack.c.l.b16 %v3014
        %v5448 = vunpack.c.h.b16 %v3014
        %v5449 = vunpack.c.l.b16 %v3015
        %v5450 = vunpack.c.h.b16 %v3015
        %v5451 = vunpack.c.l.b16 %v3016
        %v5452 = vunpack.c.h.b16 %v3016
        %v5453 = vunpack.c.l.b16 %v3017
        %v5454 = vunpack.c.h.b16 %v3017
        %v5455 = vunpack.c.l.b16 %v3018
        %v5456 = vunpack.c.h.b16 %v3018
        %v5457 = vunpack.c.l.b16 %v3019
        %v5458 = vunpack.c.h.b16 %v3019
        %v5459 = vunpack.c.l.b16 %v3020
        %v5460 = vunpack.c.h.b16 %v3020
        %v5461 = vunpack.c.l.b16 %v3021
        %v5462 = vunpack.c.h.b16 %v3021
        %v5463 = vunpack.c.l.b16 %v3022
        %v5464 = vunpack.c.h.b16 %v3022
        %v5465 = vunpack.c.l.b16 %v3023
        %v5466 = vunpack.c.h.b16 %v3023
        %v5467 = vunpack.c.l.b16 %v3024
        %v5468 = vunpack.c.h.b16 %v3024
        %v5469 = vunpack.c.l.b16 %v3025
        %v5470 = vunpack.c.h.b16 %v3025
        %v5471 = vunpack.c.l.b16 %v3026
        %v5472 = vunpack.c.h.b16 %v3026
        %v5473 = vunpack.c.l.b16 %v3027
        %v5474 = vunpack.c.h.b16 %v3027
        %v5475 = vunpack.c.l.b16 %v3028
        %v5476 = vunpack.c.h.b16 %v3028
        %v5477 = vunpack.c.l.b16 %v3029
        %v5478 = vunpack.c.h.b16 %v3029
        %v5479 = vunpack.c.l.b16 %v3030
        %v5480 = vunpack.c.h.b16 %v3030
        %v5481 = vunpack.c.l.b16 %v3031
        %v5482 = vunpack.c.h.b16 %v3031
        %v5483 = vunpack.c.l.b16 %v3032
        %v5484 = vunpack.c.h.b16 %v3032
        %v5485 = vunpack.c.l.b16 %v3033
        %v5486 = vunpack.c.h.b16 %v3033
        %v5487 = vunpack.c.l.b16 %v3034
        %v5488 = vunpack.c.h.b16 %v3034
        %v5489 = vunpack.c.l.b16 %v3035
        %v5490 = vunpack.c.h.b16 %v3035
        %v5491 = vunpack.c.l.b16 %v3036
        %v5492 = vunpack.c.h.b16 %v3036
        %v5493 = vunpack.c.l.b16 %v3037
        %v5494 = vunpack.c.h.b16 %v3037
        %v5495 = vunpack.c.l.b16 %v3038
        %v5496 = vunpack.c.h.b16 %v3038
        %v5497 = vunpack.c.l.b16 %v3039
        %v5498 = vunpack.c.h.b16 %v3039
        %v5499 = vunpack.c.l.b16 %v3040
        %v5500 = vunpack.c.h.b16 %v3040
        %v5501 = vunpack.c.l.b16 %v3041
        %v5502 = vunpack.c.h.b16 %v3041
        %v5503 = vunpack.c.l.b16 %v3042
        %v5504 = vunpack.c.h.b16 %v3042
        %v5505 = vunpack.c.l.b16 %v3043
        %v5506 = vunpack.c.h.b16 %v3043
        %v5507 = vunpack.c.l.b16 %v3044
        %v5508 = vunpack.c.h.b16 %v3044
        %v5509 = vunpack.c.l.b16 %v3045
        %v5510 = vunpack.c.h.b16 %v3045
        %v5511 = vunpack.c.l.b16 %v3046
        %v5512 = vunpack.c.h.b16 %v3046
        %v5513 = vunpack.c.l.b16 %v3047
        %v5514 = vunpack.c.h.b16 %v3047
        %v5515 = vunpack.c.l.b16 %v3048
        %v5516 = vunpack.c.h.b16 %v3048
        %v5517 = vunpack.c.l.b16 %v3049
        %v5518 = vunpack.c.h.b16 %v3049
        %v5519 = vunpack.c.l.b16 %v3050
        %v5520 = vunpack.c.h.b16 %v3050
        %v5521 = vunpack.c.l.b16 %v3051
        %v5522 = vunpack.c.h.b16 %v3051
        %v5523 = vunpack.c.l.b16 %v3052
        %v5524 = vunpack.c.h.b16 %v3052
        %v5525 = vunpack.c.l.b16 %v3053
        %v5526 = vunpack.c.h.b16 %v3053
        %v5527 = vunpack.c.l.b16 %v3054
        %v5528 = vunpack.c.h.b16 %v3054
        %v5529 = vunpack.c.l.b16 %v3055
        %v5530 = vunpack.c.h.b16 %v3055
        %v5531 = vunpack.c.l.b16 %v3056
        %v5532 = vunpack.c.h.b16 %v3056
        %v5533 = vunpack.c.l.b16 %v3057
        %v5534 = vunpack.c.h.b16 %v3057
        %v5535 = vunpack.c.l.b16 %v3058
        %v5536 = vunpack.c.h.b16 %v3058
        %v5537 = vunpack.c.l.b16 %v3059
        %v5538 = vunpack.c.h.b16 %v3059
        %v5539 = vunpack.c.l.b16 %v3060
        %v5540 = vunpack.c.h.b16 %v3060
        %v5541 = vunpack.c.l.b16 %v3061
        %v5542 = vunpack.c.h.b16 %v3061
        %v5543 = vunpack.c.l.b16 %v3062
        %v5544 = vunpack.c.h.b16 %v3062
        %v5545 = vunpack.c.l.b16 %v3063
        %v5546 = vunpack.c.h.b16 %v3063
        %v5547 = vunpack.c.l.b16 %v3064
        %v5548 = vunpack.c.h.b16 %v3064
        %v5549 = vunpack.c.l.b16 %v3065
        %v5550 = vunpack.c.h.b16 %v3065
        %v5551 = vunpack.c.l.b16 %v3066
        %v5552 = vunpack.c.h.b16 %v3066
        %v5553 = vunpack.c.l.b16 %v3067
        %v5554 = vunpack.c.h.b16 %v3067
        %v5555 = vunpack.c.l.b16 %v3068
        %v5556 = vunpack.c.h.b16 %v3068
        %v5557 = vunpack.c.l.b16 %v3069
        %v5558 = vunpack.c.h.b16 %v3069
        %v5559 = vunpack.c.l.b16 %v3070
        %v5560 = vunpack.c.h.b16 %v3070
        %v5561 = vunpack.c.l.b16 %v3071
        %v5562 = vunpack.c.h.b16 %v3071
        %v5563 = vunpack.c.l.b16 %v3072
        %v5564 = vunpack.c.h.b16 %v3072
        %v5565 = vunpack.c.l.b16 %v3073
        %v5566 = vunpack.c.h.b16 %v3073
        %v5567 = vunpack.c.l.b16 %v3074
        %v5568 = vunpack.c.h.b16 %v3074
        %v5569 = vunpack.c.l.b16 %v3075
        %v5570 = vunpack.c.h.b16 %v3075
        %v5571 = vunpack.c.l.b16 %v3076
        %v5572 = vunpack.c.h.b16 %v3076
        %v5573 = vunpack.c.l.b16 %v3077
        %v5574 = vunpack.c.h.b16 %v3077
        %v5575 = vunpack.c.l.b16 %v3078
        %v5576 = vunpack.c.h.b16 %v3078
        %v5577 = vunpack.c.l.b16 %v3079
        %v5578 = vunpack.c.h.b16 %v3079
        %v5579 = vunpack.c.l.b16 %v3080
        %v5580 = vunpack.c.h.b16 %v3080
        %v5581 = vunpack.c.l.b16 %v3081
        %v5582 = vunpack.c.h.b16 %v3081
        %v5583 = vunpack.c.l.b16 %v3082
        %v5584 = vunpack.c.h.b16 %v3082
        %v5585 = vunpack.c.l.b16 %v3083
        %v5586 = vunpack.c.h.b16 %v3083
        %v5587 = vunpack.c.l.b16 %v3084
        %v5588 = vunpack.c.h.b16 %v3084
        %v5589 = vunpack.c.l.b16 %v3085
        %v5590 = vunpack.c.h.b16 %v3085
        %v5591 = vunpack.c.l.b16 %v3086
        %v5592 = vunpack.c.h.b16 %v3086
        %v5593 = vunpack.c.l.b16 %v3087
        %v5594 = vunpack.c.h.b16 %v3087
        %v5595 = vunpack.c.l.b16 %v3088
        %v5596 = vunpack.c.h.b16 %v3088
        %v5597 = vunpack.c.l.b16 %v3089
        %v5598 = vunpack.c.h.b16 %v3089
        %v5599 = vunpack.c.l.b16 %v3090
        %v5600 = vunpack.c.h.b16 %v3090
        %v5601 = vunpack.c.l.b16 %v3091
        %v5602 = vunpack.c.h.b16 %v3091
        %v5603 = vunpack.c.l.b16 %v3092
        %v5604 = vunpack.c.h.b16 %v3092
        %v5605 = vunpack.c.l.b16 %v3093
        %v5606 = vunpack.c.h.b16 %v3093
        %v5607 = vunpack.c.l.b16 %v3094
        %v5608 = vunpack.c.h.b16 %v3094
        %v5609 = vunpack.c.l.b16 %v3095
        %v5610 = vunpack.c.h.b16 %v3095
        %v5611 = vunpack.c.l.b16 %v3096
        %v5612 = vunpack.c.h.b16 %v3096
        %v5613 = vunpack.c.l.b16 %v3097
        %v5614 = vunpack.c.h.b16 %v3097
        %v5615 = vunpack.c.l.b16 %v3098
        %v5616 = vunpack.c.h.b16 %v3098
        %v5617 = vunpack.c.l.b16 %v3099
        %v5618 = vunpack.c.h.b16 %v3099
        %v5619 = vunpack.c.l.b16 %v3100
        %v5620 = vunpack.c.h.b16 %v3100
        %v5621 = vunpack.c.l.b16 %v3101
        %v5622 = vunpack.c.h.b16 %v3101
        %v5623 = vunpack.c.l.b16 %v3102
        %v5624 = vunpack.c.h.b16 %v3102
        %v5625 = vunpack.c.l.b16 %v3103
        %v5626 = vunpack.c.h.b16 %v3103
        %v5627 = vunpack.c.l.b16 %v3104
        %v5628 = vunpack.c.h.b16 %v3104
        %v5629 = vunpack.c.l.b16 %v3105
        %v5630 = vunpack.c.h.b16 %v3105
        %v5631 = vunpack.c.l.b16 %v3106
        %v5632 = vunpack.c.h.b16 %v3106
        %v5633 = vunpack.c.l.b16 %v3107
        %v5634 = vunpack.c.h.b16 %v3107
        %v5635 = vunpack.c.l.b16 %v3108
        %v5636 = vunpack.c.h.b16 %v3108
        %v5637 = vunpack.c.l.b16 %v3109
        %v5638 = vunpack.c.h.b16 %v3109
        %v5639 = vunpack.c.l.b16 %v3110
        %v5640 = vunpack.c.h.b16 %v3110
        %v5641 = vunpack.c.l.b16 %v3111
        %v5642 = vunpack.c.h.b16 %v3111
        %v5643 = vunpack.c.l.b16 %v3112
        %v5644 = vunpack.c.h.b16 %v3112
        %v5645 = vunpack.c.l.b16 %v3113
        %v5646 = vunpack.c.h.b16 %v3113
        %v5647 = vunpack.c.l.b16 %v3114
        %v5648 = vunpack.c.h.b16 %v3114
        %v5649 = vunpack.c.l.b16 %v3115
        %v5650 = vunpack.c.h.b16 %v3115
        %v5651 = vunpack.c.l.b16 %v3116
        %v5652 = vunpack.c.h.b16 %v3116
        %v5653 = vunpack.c.l.b16 %v3117
        %v5654 = vunpack.c.h.b16 %v3117
        %v5655 = vunpack.c.l.b16 %v3118
        %v5656 = vunpack.c.h.b16 %v3118
        %v5657 = vunpack.c.l.b16 %v3119
        %v5658 = vunpack.c.h.b16 %v3119
        %v5659 = vunpack.c.l.b16 %v3120
        %v5660 = vunpack.c.h.b16 %v3120
        %v5661 = vunpack.c.l.b16 %v3121
        %v5662 = vunpack.c.h.b16 %v3121
        %v5663 = vunpack.c.l.b16 %v3122
        %v5664 = vunpack.c.h.b16 %v3122
        %v5665 = vunpack.c.l.b16 %v3123
        %v5666 = vunpack.c.h.b16 %v3123
        %v5667 = vunpack.c.l.b16 %v3124
        %v5668 = vunpack.c.h.b16 %v3124
        %v5669 = vunpack.c.l.b16 %v3125
        %v5670 = vunpack.c.h.b16 %v3125
        %v5671 = vunpack.c.l.b16 %v3126
        %v5672 = vunpack.c.h.b16 %v3126
        %v5673 = vunpack.c.l.b16 %v3127
        %v5674 = vunpack.c.h.b16 %v3127
        %v5675 = vunpack.c.l.b16 %v3128
        %v5676 = vunpack.c.h.b16 %v3128
        %v5677 = vunpack.c.l.b16 %v3129
        %v5678 = vunpack.c.h.b16 %v3129
        %v5679 = vunpack.c.l.b16 %v3130
        %v5680 = vunpack.c.h.b16 %v3130
        %v5681 = vunpack.c.l.b16 %v3131
        %v5682 = vunpack.c.h.b16 %v3131
        %v5683 = vunpack.c.l.b16 %v3132
        %v5684 = vunpack.c.h.b16 %v3132
        %v5685 = vunpack.c.l.b16 %v3133
        %v5686 = vunpack.c.h.b16 %v3133
        %v5687 = vunpack.c.l.b16 %v3134
        %v5688 = vunpack.c.h.b16 %v3134
        %v5689 = vunpack.c.l.b16 %v3135
        %v5690 = vunpack.c.h.b16 %v3135
        %v5691 = vunpack.c.l.b16 %v3136
        %v5692 = vunpack.c.h.b16 %v3136
        %v5693 = vunpack.c.l.b16 %v3137
        %v5694 = vunpack.c.h.b16 %v3137
        %v5695 = vunpack.c.l.b16 %v3138
        %v5696 = vunpack.c.h.b16 %v3138
        %v5697 = vunpack.c.l.b16 %v3139
        %v5698 = vunpack.c.h.b16 %v3139
        %v5699 = vunpack.c.l.b16 %v3140
        %v5700 = vunpack.c.h.b16 %v3140
        %v5701 = vunpack.c.l.b16 %v3141
        %v5702 = vunpack.c.h.b16 %v3141
        %v5703 = vunpack.c.l.b16 %v3142
        %v5704 = vunpack.c.h.b16 %v3142
        %v5705 = vunpack.c.l.b16 %v3143
        %v5706 = vunpack.c.h.b16 %v3143
        %v5707 = vunpack.c.l.b16 %v3144
        %v5708 = vunpack.c.h.b16 %v3144
        %v5709 = vunpack.c.l.b16 %v3145
        %v5710 = vunpack.c.h.b16 %v3145
        %v5711 = vunpack.c.l.b16 %v3146
        %v5712 = vunpack.c.h.b16 %v3146
        %v5713 = vunpack.c.l.b16 %v3147
        %v5714 = vunpack.c.h.b16 %v3147
        %v5715 = vunpack.c.l.b16 %v3148
        %v5716 = vunpack.c.h.b16 %v3148
        %v5717 = vunpack.c.l.b16 %v3149
        %v5718 = vunpack.c.h.b16 %v3149
        %v5719 = vunpack.c.l.b16 %v3150
        %v5720 = vunpack.c.h.b16 %v3150
        %v5721 = vunpack.c.l.b16 %v3151
        %v5722 = vunpack.c.h.b16 %v3151
        %v5723 = vunpack.c.l.b16 %v3152
        %v5724 = vunpack.c.h.b16 %v3152
        %v5725 = vunpack.c.l.b16 %v3153
        %v5726 = vunpack.c.h.b16 %v3153
        %v5727 = vunpack.c.l.b16 %v3154
        %v5728 = vunpack.c.h.b16 %v3154
        %v5729 = vunpack.c.l.b16 %v3155
        %v5730 = vunpack.c.h.b16 %v3155
        %v5731 = vunpack.c.l.b16 %v3156
        %v5732 = vunpack.c.h.b16 %v3156
        %v5733 = vunpack.c.l.b16 %v3157
        %v5734 = vunpack.c.h.b16 %v3157
        %v5735 = vunpack.c.l.b16 %v3158
        %v5736 = vunpack.c.h.b16 %v3158
        %v5737 = vunpack.c.l.b16 %v3159
        %v5738 = vunpack.c.h.b16 %v3159
        %v5739 = vunpack.c.l.b16 %v3160
        %v5740 = vunpack.c.h.b16 %v3160
        %v5741 = vunpack.c.l.b16 %v3161
        %v5742 = vunpack.c.h.b16 %v3161
        %v5743 = vunpack.c.l.b16 %v3162
        %v5744 = vunpack.c.h.b16 %v3162
        %v5745 = vunpack.c.l.b16 %v3163
        %v5746 = vunpack.c.h.b16 %v3163
        %v5747 = vunpack.c.l.b16 %v3164
        %v5748 = vunpack.c.h.b16 %v3164
        %v5749 = vunpack.c.l.b16 %v3165
        %v5750 = vunpack.c.h.b16 %v3165
        %v5751 = vunpack.c.l.b16 %v3166
        %v5752 = vunpack.c.h.b16 %v3166
        %v5753 = vunpack.c.l.b16 %v3167
        %v5754 = vunpack.c.h.b16 %v3167
        %v5755 = vunpack.c.l.b16 %v3168
        %v5756 = vunpack.c.h.b16 %v3168
        %v5757 = vunpack.c.l.b16 %v3169
        %v5758 = vunpack.c.h.b16 %v3169
        %v5759 = vunpack.c.l.b16 %v3170
        %v5760 = vunpack.c.h.b16 %v3170
        %v5761 = vunpack.c.l.b16 %v3171
        %v5762 = vunpack.c.h.b16 %v3171
        %v5763 = vunpack.c.l.b16 %v3172
        %v5764 = vunpack.c.h.b16 %v3172
        %v5765 = vunpack.c.l.b16 %v3173
        %v5766 = vunpack.c.h.b16 %v3173
        %v5767 = vunpack.c.l.b16 %v3174
        %v5768 = vunpack.c.h.b16 %v3174
        %v5769 = vunpack.c.l.b16 %v3175
        %v5770 = vunpack.c.h.b16 %v3175
        %v5771 = vunpack.c.l.b16 %v3176
        %v5772 = vunpack.c.h.b16 %v3176
        %v5773 = vunpack.c.l.b16 %v3177
        %v5774 = vunpack.c.h.b16 %v3177
        %v5775 = vunpack.c.l.b16 %v3178
        %v5776 = vunpack.c.h.b16 %v3178
        %v5777 = vunpack.c.l.b16 %v3179
        %v5778 = vunpack.c.h.b16 %v3179
        %v5779 = vunpack.c.l.b16 %v3180
        %v5780 = vunpack.c.h.b16 %v3180
        %v5781 = vunpack.c.l.b16 %v3181
        %v5782 = vunpack.c.h.b16 %v3181
        %v5783 = vunpack.c.l.b16 %v3182
        %v5784 = vunpack.c.h.b16 %v3182
        %v5785 = vunpack.c.l.b16 %v3183
        %v5786 = vunpack.c.h.b16 %v3183
        %v5787 = vunpack.c.l.b16 %v3184
        %v5788 = vunpack.c.h.b16 %v3184
        %v5789 = vunpack.c.l.b16 %v3185
        %v5790 = vunpack.c.h.b16 %v3185
        %v5791 = vunpack.c.l.b16 %v3186
        %v5792 = vunpack.c.h.b16 %v3186
        %v5793 = vunpack.c.l.b16 %v3187
        %v5794 = vunpack.c.h.b16 %v3187
        %v5795 = vunpack.c.l.b16 %v3188
        %v5796 = vunpack.c.h.b16 %v3188
        %v5797 = vunpack.c.l.b16 %v3189
        %v5798 = vunpack.c.h.b16 %v3189
        %v5799 = vunpack.c.l.b16 %v3190
        %v5800 = vunpack.c.h.b16 %v3190
        %v5801 = vunpack.c.l.b16 %v3191
        %v5802 = vunpack.c.h.b16 %v3191
        %v5803 = vunpack.c.l.b16 %v3192
        %v5804 = vunpack.c.h.b16 %v3192
        %v5805 = vunpack.c.l.b16 %v3193
        %v5806 = vunpack.c.h.b16 %v3193
        %v5807 = vunpack.c.l.b16 %v3194
        %v5808 = vunpack.c.h.b16 %v3194
        %v5809 = vunpack.c.l.b16 %v3195
        %v5810 = vunpack.c.h.b16 %v3195
        %v5811 = vunpack.c.l.b16 %v3196
        %v5812 = vunpack.c.h.b16 %v3196
        %v5813 = vunpack.c.l.b16 %v3197
        %v5814 = vunpack.c.h.b16 %v3197
        %v5815 = vunpack.c.l.b16 %v3198
        %v5816 = vunpack.c.h.b16 %v3198
        %v5817 = vunpack.c.l.b16 %v3199
        %v5818 = vunpack.c.h.b16 %v3199
        %v5819 = vunpack.c.l.b16 %v3200
        %v5820 = vunpack.c.h.b16 %v3200
        %v5821 = vunpack.c.l.b16 %v3201
        %v5822 = vunpack.c.h.b16 %v3201
        %v5823 = vunpack.c.l.b16 %v3202
        %v5824 = vunpack.c.h.b16 %v3202
        %v5825 = vunpack.c.l.b16 %v3203
        %v5826 = vunpack.c.h.b16 %v3203
        %v5827 = vunpack.c.l.b16 %v3204
        %v5828 = vunpack.c.h.b16 %v3204
        %v5829 = vunpack.c.l.b16 %v3205
        %v5830 = vunpack.c.h.b16 %v3205
        %v5831 = vunpack.c.l.b16 %v3206
        %v5832 = vunpack.c.h.b16 %v3206
        %v5833 = vunpack.c.l.b16 %v3207
        %v5834 = vunpack.c.h.b16 %v3207
        %v5835 = vunpack.c.l.b16 %v3208
        %v5836 = vunpack.c.h.b16 %v3208
        %v5837 = vunpack.c.l.b16 %v3209
        %v5838 = vunpack.c.h.b16 %v3209
        %v5839 = vunpack.c.l.b16 %v3210
        %v5840 = vunpack.c.h.b16 %v3210
        %v5841 = vunpack.c.l.b16 %v3211
        %v5842 = vunpack.c.h.b16 %v3211
        %v5843 = vunpack.c.l.b16 %v3212
        %v5844 = vunpack.c.h.b16 %v3212
        %v5845 = vunpack.c.l.b16 %v3213
        %v5846 = vunpack.c.h.b16 %v3213
        %v5847 = vunpack.c.l.b16 %v3214
        %v5848 = vunpack.c.h.b16 %v3214
        %v5849 = vunpack.c.l.b16 %v3215
        %v5850 = vunpack.c.h.b16 %v3215
        %v5851 = vunpack.c.l.b16 %v3216
        %v5852 = vunpack.c.h.b16 %v3216
        %v5853 = vunpack.c.l.b16 %v3217
        %v5854 = vunpack.c.h.b16 %v3217
        %v5855 = vunpack.c.l.b16 %v3218
        %v5856 = vunpack.c.h.b16 %v3218
        %v5857 = vunpack.c.l.b16 %v3219
        %v5858 = vunpack.c.h.b16 %v3219
        %v5859 = vunpack.c.l.b16 %v3220
        %v5860 = vunpack.c.h.b16 %v3220
        %v5861 = vunpack.c.l.b16 %v3221
        %v5862 = vunpack.c.h.b16 %v3221
        %v5863 = vunpack.c.l.b16 %v3222
        %v5864 = vunpack.c.h.b16 %v3222
        %v5865 = vunpack.c.l.b16 %v3223
        %v5866 = vunpack.c.h.b16 %v3223
        %v5867 = vunpack.c.l.b16 %v3224
        %v5868 = vunpack.c.h.b16 %v3224
        %v5869 = vunpack.c.l.b16 %v3225
        %v5870 = vunpack.c.h.b16 %v3225
        %v5871 = vunpack.c.l.b16 %v3226
        %v5872 = vunpack.c.h.b16 %v3226
        %v5873 = vunpack.c.l.b16 %v3227
        %v5874 = vunpack.c.h.b16 %v3227
        %v5875 = vunpack.c.l.b16 %v3228
        %v5876 = vunpack.c.h.b16 %v3228
        %v5877 = vunpack.c.l.b16 %v3229
        %v5878 = vunpack.c.h.b16 %v3229
        %v5879 = vunpack.c.l.b16 %v3230
        %v5880 = vunpack.c.h.b16 %v3230
        %v5881 = vunpack.c.l.b16 %v3231
        %v5882 = vunpack.c.h.b16 %v3231
        %v5883 = vunpack.c.l.b16 %v3232
        %v5884 = vunpack.c.h.b16 %v3232
        %v5885 = vunpack.c.l.b16 %v3233
        %v5886 = vunpack.c.h.b16 %v3233
        %v5887 = vunpack.c.l.b16 %v3234
        %v5888 = vunpack.c.h.b16 %v3234
        %v5889 = vunpack.c.l.b16 %v3235
        %v5890 = vunpack.c.h.b16 %v3235
        %v5891 = vunpack.c.l.b16 %v3236
        %v5892 = vunpack.c.h.b16 %v3236
        %v5893 = vunpack.c.l.b16 %v3237
        %v5894 = vunpack.c.h.b16 %v3237
        %v5895 = vunpack.c.l.b16 %v3238
        %v5896 = vunpack.c.h.b16 %v3238
        %v5897 = vunpack.c.l.b16 %v3239
        %v5898 = vunpack.c.h.b16 %v3239
        %v5899 = vunpack.c.l.b16 %v3240
        %v5900 = vunpack.c.h.b16 %v3240
        %v5901 = vunpack.c.l.b16 %v3241
        %v5902 = vunpack.c.h.b16 %v3241
        %v5903 = vunpack.c.l.b16 %v3242
        %v5904 = vunpack.c.h.b16 %v3242
        %v5905 = vunpack.c.l.b16 %v3243
        %v5906 = vunpack.c.h.b16 %v3243
        %v5907 = vunpack.c.l.b16 %v3244
        %v5908 = vunpack.c.h.b16 %v3244
        %v5909 = vunpack.c.l.b16 %v3245
        %v5910 = vunpack.c.h.b16 %v3245
        %v5911 = vunpack.c.l.b16 %v3246
        %v5912 = vunpack.c.h.b16 %v3246
        %v5913 = vunpack.c.l.b16 %v3247
        %v5914 = vunpack.c.h.b16 %v3247
        %v5915 = vunpack.c.l.b16 %v3248
        %v5916 = vunpack.c.h.b16 %v3248
        %v5917 = vunpack.c.l.b16 %v3249
        %v5918 = vunpack.c.h.b16 %v3249
        %v5919 = vunpack.c.l.b16 %v3250
        %v5920 = vunpack.c.h.b16 %v3250
        %v5921 = vunpack.c.l.b16 %v3251
        %v5922 = vunpack.c.h.b16 %v3251
        %v5923 = vunpack.c.l.b16 %v3252
        %v5924 = vunpack.c.h.b16 %v3252
        %v5925 = vunpack.c.l.b16 %v3253
        %v5926 = vunpack.c.h.b16 %v3253
        %v5927 = vunpack.c.l.b16 %v3254
        %v5928 = vunpack.c.h.b16 %v3254
        %v5929 = vunpack.c.l.b16 %v3255
        %v5930 = vunpack.c.h.b16 %v3255
        %v5931 = vunpack.c.l.b16 %v3256
        %v5932 = vunpack.c.h.b16 %v3256
        %v5933 = vunpack.c.l.b16 %v3257
        %v5934 = vunpack.c.h.b16 %v3257
        %v5935 = vunpack.c.l.b16 %v3258
        %v5936 = vunpack.c.h.b16 %v3258
        %v5937 = vunpack.c.l.b16 %v3259
        %v5938 = vunpack.c.h.b16 %v3259
        %v5939 = vunpack.c.l.b16 %v3260
        %v5940 = vunpack.c.h.b16 %v3260
        %v5941 = vunpack.c.l.b16 %v3261
        %v5942 = vunpack.c.h.b16 %v3261
        %v5943 = vunpack.c.l.b16 %v3262
        %v5944 = vunpack.c.h.b16 %v3262
        %v5945 = vunpack.c.l.b16 %v3263
        %v5946 = vunpack.c.h.b16 %v3263
        %v5947 = vunpack.c.l.b16 %v3264
        %v5948 = vunpack.c.h.b16 %v3264
        %v5949 = vunpack.c.l.b16 %v3265
        %v5950 = vunpack.c.h.b16 %v3265
        %v5951 = vunpack.c.l.b16 %v3266
        %v5952 = vunpack.c.h.b16 %v3266
        %v5953 = vunpack.c.l.b16 %v3267
        %v5954 = vunpack.c.h.b16 %v3267
        %v5955 = vunpack.c.l.b16 %v3268
        %v5956 = vunpack.c.h.b16 %v3268
        %v5957 = vunpack.c.l.b16 %v3269
        %v5958 = vunpack.c.h.b16 %v3269
        %v5959 = vunpack.c.l.b16 %v3270
        %v5960 = vunpack.c.h.b16 %v3270
        %v5961 = vunpack.c.l.b16 %v3271
        %v5962 = vunpack.c.h.b16 %v3271
        %v5963 = vunpack.c.l.b16 %v3272
        %v5964 = vunpack.c.h.b16 %v3272
        %v5965 = vunpack.c.l.b16 %v3273
        %v5966 = vunpack.c.h.b16 %v3273
        %v5967 = vunpack.c.l.b16 %v3274
        %v5968 = vunpack.c.h.b16 %v3274
        %v5969 = vunpack.c.l.b16 %v3275
        %v5970 = vunpack.c.h.b16 %v3275
        %v5971 = vunpack.c.l.b16 %v3276
        %v5972 = vunpack.c.h.b16 %v3276
        %v5973 = vunpack.c.l.b16 %v3277
        %v5974 = vunpack.c.h.b16 %v3277
        %v5975 = vunpack.c.l.b16 %v3278
        %v5976 = vunpack.c.h.b16 %v3278
        %v5977 = vunpack.c.l.b16 %v3279
        %v5978 = vunpack.c.h.b16 %v3279
        %v5979 = vunpack.c.l.b16 %v3280
        %v5980 = vunpack.c.h.b16 %v3280
        %v5981 = vunpack.c.l.b16 %v3281
        %v5982 = vunpack.c.h.b16 %v3281
        %v5983 = vunpack.c.l.b16 %v3282
        %v5984 = vunpack.c.h.b16 %v3282
        %v5985 = vunpack.c.l.b16 %v3283
        %v5986 = vunpack.c.h.b16 %v3283
        %v5987 = vunpack.c.l.b16 %v3284
        %v5988 = vunpack.c.h.b16 %v3284
        %v5989 = vunpack.c.l.b16 %v3285
        %v5990 = vunpack.c.h.b16 %v3285
        %v5991 = vunpack.c.l.b16 %v3286
        %v5992 = vunpack.c.h.b16 %v3286
        %v5993 = vunpack.c.l.b16 %v3287
        %v5994 = vunpack.c.h.b16 %v3287
        %v5995 = vunpack.c.l.b16 %v3288
        %v5996 = vunpack.c.h.b16 %v3288
        %v5997 = vunpack.c.l.b16 %v3289
        %v5998 = vunpack.c.h.b16 %v3289
        %v5999 = vunpack.c.l.b16 %v3290
        %v6000 = vunpack.c.h.b16 %v3290
        %v6001 = vunpack.c.l.b16 %v3291
        %v6002 = vunpack.c.h.b16 %v3291
        %v6003 = vunpack.c.l.b16 %v3292
        %v6004 = vunpack.c.h.b16 %v3292
        %v6005 = vunpack.c.l.b16 %v3293
        %v6006 = vunpack.c.h.b16 %v3293
        %v6007 = vunpack.c.l.b16 %v3294
        %v6008 = vunpack.c.h.b16 %v3294
        %v6009 = vunpack.c.l.b16 %v3295
        %v6010 = vunpack.c.h.b16 %v3295
        %v6011 = vunpack.c.l.b16 %v3296
        %v6012 = vunpack.c.h.b16 %v3296
        %v6013 = vunpack.c.l.b16 %v3297
        %v6014 = vunpack.c.h.b16 %v3297
        %v6015 = vunpack.c.l.b16 %v3298
        %v6016 = vunpack.c.h.b16 %v3298
        %v6017 = vunpack.c.l.b16 %v3299
        %v6018 = vunpack.c.h.b16 %v3299
        %v6019 = vunpack.c.l.b16 %v3300
        %v6020 = vunpack.c.h.b16 %v3300
        %v6021 = vunpack.c.l.b16 %v3301
        %v6022 = vunpack.c.h.b16 %v3301
        %v6023 = vunpack.c.l.b16 %v3302
        %v6024 = vunpack.c.h.b16 %v3302
        %v6025 = vunpack.c.l.b16 %v3303
        %v6026 = vunpack.c.h.b16 %v3303
        %v6027 = vunpack.c.l.b16 %v3304
        %v6028 = vunpack.c.h.b16 %v3304
        %v6029 = vunpack.c.l.b16 %v3305
        %v6030 = vunpack.c.h.b16 %v3305
        %v6031 = vunpack.c.l.b16 %v3306
        %v6032 = vunpack.c.h.b16 %v3306
        %v6033 = vunpack.c.l.b16 %v3307
        %v6034 = vunpack.c.h.b16 %v3307
        %v6035 = vunpack.c.l.b16 %v3308
        %v6036 = vunpack.c.h.b16 %v3308
        %v6037 = vunpack.c.l.b16 %v3309
        %v6038 = vunpack.c.h.b16 %v3309
        %v6039 = vunpack.c.l.b16 %v3310
        %v6040 = vunpack.c.h.b16 %v3310
        %v6041 = vunpack.c.l.b16 %v3311
        %v6042 = vunpack.c.h.b16 %v3311
        %v6043 = vunpack.c.l.b16 %v3312
        %v6044 = vunpack.c.h.b16 %v3312
        %v6045 = vunpack.c.l.b16 %v3313
        %v6046 = vunpack.c.h.b16 %v3313
        %v6047 = vunpack.c.l.b16 %v3314
        %v6048 = vunpack.c.h.b16 %v3314
        %v6049 = vunpack.c.l.b16 %v3315
        %v6050 = vunpack.c.h.b16 %v3315
        %v6051 = vunpack.c.l.b16 %v3316
        %v6052 = vunpack.c.h.b16 %v3316
        %v6053 = vunpack.c.l.b16 %v3317
        %v6054 = vunpack.c.h.b16 %v3317
        %v6055 = vunpack.c.l.b16 %v3318
        %v6056 = vunpack.c.h.b16 %v3318
        %v6057 = vunpack.c.l.b16 %v3319
        %v6058 = vunpack.c.h.b16 %v3319
        %v6059 = vunpack.c.l.b16 %v3320
        %v6060 = vunpack.c.h.b16 %v3320
        %v6061 = vunpack.c.l.b16 %v3321
        %v6062 = vunpack.c.h.b16 %v3321
        %v6063 = vunpack.c.l.b16 %v3322
        %v6064 = vunpack.c.h.b16 %v3322
        %v6065 = vunpack.c.l.b16 %v3323
        %v6066 = vunpack.c.h.b16 %v3323
        %v6067 = vunpack.c.l.b16 %v3324
        %v6068 = vunpack.c.h.b16 %v3324
        %v6069 = vunpack.c.l.b16 %v3325
        %v6070 = vunpack.c.h.b16 %v3325
        %v6071 = vunpack.c.l.b16 %v3326
        %v6072 = vunpack.c.h.b16 %v3326
        %v6073 = vunpack.c.l.b16 %v3327
        %v6074 = vunpack.c.h.b16 %v3327
        %v6075 = vunpack.c.l.b16 %v3328
        %v6076 = vunpack.c.h.b16 %v3328
        %v6077 = vunpack.c.l.b16 %v3329
        %v6078 = vunpack.c.h.b16 %v3329
        %v6079 = vunpack.c.l.b16 %v3330
        %v6080 = vunpack.c.h.b16 %v3330
        %v6081 = vunpack.c.l.b16 %v3331
        %v6082 = vunpack.c.h.b16 %v3331
        %v6083 = vunpack.c.l.b16 %v3332
        %v6084 = vunpack.c.h.b16 %v3332
        %v6085 = vunpack.c.l.b16 %v3333
        %v6086 = vunpack.c.h.b16 %v3333
        %v6087 = vunpack.c.l.b16 %v3334
        %v6088 = vunpack.c.h.b16 %v3334
        %v6089 = vunpack.c.l.b16 %v3335
        %v6090 = vunpack.c.h.b16 %v3335
        %v6091 = vunpack.c.l.b16 %v3336
        %v6092 = vunpack.c.h.b16 %v3336
        %v6093 = vunpack.c.l.b16 %v3337
        %v6094 = vunpack.c.h.b16 %v3337
        %v6095 = vunpack.c.l.b16 %v3338
        %v6096 = vunpack.c.h.b16 %v3338
        %v6097 = vunpack.c.l.b16 %v3339
        %v6098 = vunpack.c.h.b16 %v3339
        %v6099 = vunpack.c.l.b16 %v3340
        %v6100 = vunpack.c.h.b16 %v3340
        %v6101 = vunpack.c.l.b16 %v3341
        %v6102 = vunpack.c.h.b16 %v3341
        %v6103 = vunpack.c.l.b16 %v3342
        %v6104 = vunpack.c.h.b16 %v3342
        %v6105 = vunpack.c.l.b16 %v3343
        %v6106 = vunpack.c.h.b16 %v3343
        %v6107 = vunpack.c.l.b16 %v3344
        %v6108 = vunpack.c.h.b16 %v3344
        %v6109 = vunpack.c.l.b16 %v3345
        %v6110 = vunpack.c.h.b16 %v3345
        %v6111 = vunpack.c.l.b16 %v3346
        %v6112 = vunpack.c.h.b16 %v3346
        %v6113 = vunpack.c.l.b16 %v3347
        %v6114 = vunpack.c.h.b16 %v3347
        %v6115 = vunpack.c.l.b16 %v3348
        %v6116 = vunpack.c.h.b16 %v3348
        %v6117 = vunpack.c.l.b16 %v3349
        %v6118 = vunpack.c.h.b16 %v3349
        %v6119 = vunpack.c.l.b16 %v3350
        %v6120 = vunpack.c.h.b16 %v3350
        %v6121 = vunpack.c.l.b16 %v3351
        %v6122 = vunpack.c.h.b16 %v3351
        %v6123 = vunpack.c.l.b16 %v3352
        %v6124 = vunpack.c.h.b16 %v3352
        %v6125 = vunpack.c.l.b16 %v3353
        %v6126 = vunpack.c.h.b16 %v3353
        %v6127 = vunpack.c.l.b16 %v3354
        %v6128 = vunpack.c.h.b16 %v3354
        %v6129 = vunpack.c.l.b16 %v3355
        %v6130 = vunpack.c.h.b16 %v3355
        %v6131 = vunpack.c.l.b16 %v3356
        %v6132 = vunpack.c.h.b16 %v3356
        %v6133 = vunpack.c.l.b16 %v3357
        %v6134 = vunpack.c.h.b16 %v3357
        %v6135 = vunpack.c.l.b16 %v3358
        %v6136 = vunpack.c.h.b16 %v3358
        %v6137 = vunpack.c.l.b16 %v3359
        %v6138 = vunpack.c.h.b16 %v3359
        %v6139 = vunpack.c.l.b16 %v3360
        %v6140 = vunpack.c.h.b16 %v3360
        %v6141 = vunpack.c.l.b16 %v3361
        %v6142 = vunpack.c.h.b16 %v3361
        %v6143 = vunpack.c.l.b16 %v3362
        %v6144 = vunpack.c.h.b16 %v3362
        %v6145 = vunpack.c.l.b16 %v3363
        %v6146 = vunpack.c.h.b16 %v3363
        %v6147 = vunpack.c.l.b16 %v3364
        %v6148 = vunpack.c.h.b16 %v3364
        %v6149 = vunpack.c.l.b16 %v3365
        %v6150 = vunpack.c.h.b16 %v3365
        %v6151 = vunpack.c.l.b16 %v3366
        %v6152 = vunpack.c.h.b16 %v3366
        %v6153 = vunpack.c.l.b16 %v3367
        %v6154 = vunpack.c.h.b16 %v3367
        %v6155 = vunpack.c.l.b16 %v3368
        %v6156 = vunpack.c.h.b16 %v3368
        %v6157 = vunpack.c.l.b16 %v3369
        %v6158 = vunpack.c.h.b16 %v3369
        %v6159 = vunpack.c.l.b16 %v3370
        %v6160 = vunpack.c.h.b16 %v3370
        %v6161 = vunpack.c.l.b16 %v3371
        %v6162 = vunpack.c.h.b16 %v3371
        %v6163 = vunpack.c.l.b16 %v3372
        %v6164 = vunpack.c.h.b16 %v3372
        %v6165 = vunpack.c.l.b16 %v3373
        %v6166 = vunpack.c.h.b16 %v3373
        %v6167 = vunpack.c.l.b16 %v3374
        %v6168 = vunpack.c.h.b16 %v3374
        %v6169 = vunpack.c.l.b16 %v3375
        %v6170 = vunpack.c.h.b16 %v3375
        %v6171 = vunpack.c.l.b16 %v3376
        %v6172 = vunpack.c.h.b16 %v3376
        %v6173 = vunpack.c.l.b16 %v3377
        %v6174 = vunpack.c.h.b16 %v3377
        %v6175 = vunpack.c.l.b16 %v3378
        %v6176 = vunpack.c.h.b16 %v3378
        %v6177 = vunpack.c.l.b16 %v3379
        %v6178 = vunpack.c.h.b16 %v3379
        %v6179 = vunpack.c.l.b16 %v3380
        %v6180 = vunpack.c.h.b16 %v3380
        %v6181 = vunpack.c.l.b16 %v3381
        %v6182 = vunpack.c.h.b16 %v3381
        %v6183 = vunpack.c.l.b16 %v3382
        %v6184 = vunpack.c.h.b16 %v3382
        %v6185 = vunpack.c.l.b16 %v3383
        %v6186 = vunpack.c.h.b16 %v3383
        %v6187 = vunpack.c.l.b16 %v3384
        %v6188 = vunpack.c.h.b16 %v3384
        %v6189 = vunpack.c.l.b16 %v3385
        %v6190 = vunpack.c.h.b16 %v3385
        %v6191 = vunpack.c.l.b16 %v3386
        %v6192 = vunpack.c.h.b16 %v3386
        %v6193 = vunpack.c.l.b16 %v3387
        %v6194 = vunpack.c.h.b16 %v3387
        %v6195 = vunpack.c.l.b16 %v3388
        %v6196 = vunpack.c.h.b16 %v3388
        %v6197 = vunpack.c.l.b16 %v3389
        %v6198 = vunpack.c.h.b16 %v3389
        %v6199 = vunpack.c.l.b16 %v3390
        %v6200 = vunpack.c.h.b16 %v3390
        %v6201 = vunpack.c.l.b16 %v3391
        %v6202 = vunpack.c.h.b16 %v3391
        %v6203 = vunpack.c.l.b16 %v3392
        %v6204 = vunpack.c.h.b16 %v3392
        %v6205 = vunpack.c.l.b16 %v3393
        %v6206 = vunpack.c.h.b16 %v3393
        %v6207 = vunpack.c.l.b16 %v3394
        %v6208 = vunpack.c.h.b16 %v3394
        %v6209 = vunpack.c.l.b16 %v3395
        %v6210 = vunpack.c.h.b16 %v3395
        %v6211 = vunpack.c.l.b16 %v3396
        %v6212 = vunpack.c.h.b16 %v3396
        %v6213 = vunpack.c.l.b16 %v3397
        %v6214 = vunpack.c.h.b16 %v3397
        %v6215 = vunpack.c.l.b16 %v3398
        %v6216 = vunpack.c.h.b16 %v3398
        %v6217 = vunpack.c.l.b16 %v3399
        %v6218 = vunpack.c.h.b16 %v3399
        %v6219 = vunpack.c.l.b16 %v3400
        %v6220 = vunpack.c.h.b16 %v3400
        %v6221 = vunpack.c.l.b16 %v3401
        %v6222 = vunpack.c.h.b16 %v3401
        %v6223 = vunpack.c.l.b16 %v3402
        %v6224 = vunpack.c.h.b16 %v3402
        %v6225 = vunpack.c.l.b16 %v3403
        %v6226 = vunpack.c.h.b16 %v3403
        %v6227 = vunpack.c.l.b16 %v3404
        %v6228 = vunpack.c.h.b16 %v3404
        %v6229 = vunpack.c.l.b16 %v3405
        %v6230 = vunpack.c.h.b16 %v3405
        %v6231 = vunpack.c.l.b16 %v3406
        %v6232 = vunpack.c.h.b16 %v3406
        %v6233 = vunpack.c.l.b16 %v3407
        %v6234 = vunpack.c.h.b16 %v3407
        %v6235 = vunpack.c.l.b16 %v3408
        %v6236 = vunpack.c.h.b16 %v3408
        %v6237 = vunpack.c.l.b16 %v3409
        %v6238 = vunpack.c.h.b16 %v3409
        %v6239 = vunpack.c.l.b16 %v3410
        %v6240 = vunpack.c.h.b16 %v3410
        %v6241 = vunpack.c.l.b16 %v3411
        %v6242 = vunpack.c.h.b16 %v3411
        %v6243 = vunpack.c.l.b16 %v3412
        %v6244 = vunpack.c.h.b16 %v3412
        %v6245 = vunpack.c.l.b16 %v3413
        %v6246 = vunpack.c.h.b16 %v3413
        %v6247 = vunpack.c.l.b16 %v3414
        %v6248 = vunpack.c.h.b16 %v3414
        %v6249 = vunpack.c.l.b16 %v3415
        %v6250 = vunpack.c.h.b16 %v3415
        %v6251 = vunpack.c.l.b16 %v3416
        %v6252 = vunpack.c.h.b16 %v3416
        %v6253 = vunpack.c.l.b16 %v3417
        %v6254 = vunpack.c.h.b16 %v3417
        %v6255 = vunpack.c.l.b16 %v3418
        %v6256 = vunpack.c.h.b16 %v3418
        %v6257 = vunpack.c.l.b16 %v3419
        %v6258 = vunpack.c.h.b16 %v3419
        %v6259 = vunpack.c.l.b16 %v3420
        %v6260 = vunpack.c.h.b16 %v3420
        %v6261 = vunpack.c.l.b16 %v3421
        %v6262 = vunpack.c.h.b16 %v3421
        %v6263 = vunpack.c.l.b16 %v3422
        %v6264 = vunpack.c.h.b16 %v3422
        %v6265 = vunpack.c.l.b16 %v3423
        %v6266 = vunpack.c.h.b16 %v3423
        %v6267 = vunpack.c.l.b16 %v3424
        %v6268 = vunpack.c.h.b16 %v3424
        %v6269 = vunpack.c.l.b16 %v3425
        %v6270 = vunpack.c.h.b16 %v3425
        %v6271 = vunpack.c.l.b16 %v3426
        %v6272 = vunpack.c.h.b16 %v3426
        %v6273 = vunpack.c.l.b16 %v3427
        %v6274 = vunpack.c.h.b16 %v3427
        %v6275 = vunpack.c.l.b16 %v3428
        %v6276 = vunpack.c.h.b16 %v3428
        %v6277 = vunpack.c.l.b16 %v3429
        %v6278 = vunpack.c.h.b16 %v3429
        %v6279 = vunpack.c.l.b16 %v3430
        %v6280 = vunpack.c.h.b16 %v3430
        %v6281 = vunpack.c.l.b16 %v3431
        %v6282 = vunpack.c.h.b16 %v3431
        %v6283 = vunpack.c.l.b16 %v3432
        %v6284 = vunpack.c.h.b16 %v3432
        %v6285 = vunpack.c.l.b16 %v3433
        %v6286 = vunpack.c.h.b16 %v3433
        %v6287 = vunpack.c.l.b16 %v3434
        %v6288 = vunpack.c.h.b16 %v3434
        %v6289 = vunpack.c.l.b16 %v3435
        %v6290 = vunpack.c.h.b16 %v3435
        %v6291 = vunpack.c.l.b16 %v3436
        %v6292 = vunpack.c.h.b16 %v3436
        %v6293 = vunpack.c.l.b16 %v3437
        %v6294 = vunpack.c.h.b16 %v3437
        %v6295 = vunpack.c.l.b16 %v3438
        %v6296 = vunpack.c.h.b16 %v3438
        %v6297 = vunpack.c.l.b16 %v3439
        %v6298 = vunpack.c.h.b16 %v3439
        %v6299 = vunpack.c.l.b16 %v3440
        %v6300 = vunpack.c.h.b16 %v3440
        %v6301 = vunpack.c.l.b16 %v3441
        %v6302 = vunpack.c.h.b16 %v3441
        %v6303 = vunpack.c.l.b16 %v3442
        %v6304 = vunpack.c.h.b16 %v3442
        %v6305 = vunpack.c.l.b16 %v3443
        %v6306 = vunpack.c.h.b16 %v3443
        %v6307 = vunpack.c.l.b16 %v3444
        %v6308 = vunpack.c.h.b16 %v3444
        %v6309 = vunpack.c.l.b16 %v3445
        %v6310 = vunpack.c.h.b16 %v3445
        %v6311 = vunpack.c.l.b16 %v3446
        %v6312 = vunpack.c.h.b16 %v3446
        %v6313 = vunpack.c.l.b16 %v3447
        %v6314 = vunpack.c.h.b16 %v3447
        %v6315 = vunpack.c.l.b16 %v3448
        %v6316 = vunpack.c.h.b16 %v3448
        %v6317 = vunpack.c.l.b16 %v3449
        %v6318 = vunpack.c.h.b16 %v3449
        %v6319 = vunpack.c.l.b16 %v3450
        %v6320 = vunpack.c.h.b16 %v3450
        %v6321 = vunpack.c.l.b16 %v3451
        %v6322 = vunpack.c.h.b16 %v3451
        %v6323 = vunpack.c.l.b16 %v3452
        %v6324 = vunpack.c.h.b16 %v3452
        %v6325 = vunpack.c.l.b16 %v3453
        %v6326 = vunpack.c.h.b16 %v3453
        %v6327 = vunpack.c.l.b16 %v3454
        %v6328 = vunpack.c.h.b16 %v3454
        %v6329 = vunpack.c.l.b16 %v3455
        %v6330 = vunpack.c.h.b16 %v3455
        %v6331 = vunpack.c.l.b16 %v3456
        %v6332 = vunpack.c.h.b16 %v3456
        %v6333 = vunpack.c.l.b16 %v3457
        %v6334 = vunpack.c.h.b16 %v3457
        %v6335 = vunpack.c.l.b16 %v3458
        %v6336 = vunpack.c.h.b16 %v3458
        %v6337 = vunpack.c.l.b16 %v3459
        %v6338 = vunpack.c.h.b16 %v3459
        %v6339 = vunpack.c.l.b16 %v3460
        %v6340 = vunpack.c.h.b16 %v3460
        %v6341 = vunpack.c.l.b16 %v3461
        %v6342 = vunpack.c.h.b16 %v3461
        %v6343 = vunpack.c.l.b16 %v3462
        %v6344 = vunpack.c.h.b16 %v3462
        %v6345 = vunpack.c.l.b16 %v3463
        %v6346 = vunpack.c.h.b16 %v3463
        %v6347 = vunpack.c.l.b16 %v3464
        %v6348 = vunpack.c.h.b16 %v3464
        %v6349 = vunpack.c.l.b16 %v3465
        %v6350 = vunpack.c.h.b16 %v3465
        %v6351 = vunpack.c.l.b16 %v3466
        %v6352 = vunpack.c.h.b16 %v3466
        %v6353 = vunpack.c.l.b16 %v3467
        %v6354 = vunpack.c.h.b16 %v3467
        %v6355 = vunpack.c.l.b16 %v3468
        %v6356 = vunpack.c.h.b16 %v3468
        %v6357 = vunpack.c.l.b16 %v3469
        %v6358 = vunpack.c.h.b16 %v3469
        %v6359 = vunpack.c.l.b16 %v3470
        %v6360 = vunpack.c.h.b16 %v3470
        %v6361 = vunpack.c.l.b16 %v3471
        %v6362 = vunpack.c.h.b16 %v3471
        %v6363 = vunpack.c.l.b16 %v3472
        %v6364 = vunpack.c.h.b16 %v3472
        %v6365 = vunpack.c.l.b16 %v3473
        %v6366 = vunpack.c.h.b16 %v3473
        %v6367 = vunpack.c.l.b16 %v3474
        %v6368 = vunpack.c.h.b16 %v3474
        %v6369 = vunpack.c.l.b16 %v3475
        %v6370 = vunpack.c.h.b16 %v3475
        %v6371 = vunpack.c.l.b16 %v3476
        %v6372 = vunpack.c.h.b16 %v3476
        %v6373 = vunpack.c.l.b16 %v3477
        %v6374 = vunpack.c.h.b16 %v3477
        %v6375 = vunpack.c.l.b16 %v3478
        %v6376 = vunpack.c.h.b16 %v3478
        %v6377 = vunpack.c.l.b16 %v3479
        %v6378 = vunpack.c.h.b16 %v3479
        %v6379 = vunpack.c.l.b16 %v3480
        %v6380 = vunpack.c.h.b16 %v3480
        %v6381 = vunpack.c.l.b16 %v3481
        %v6382 = vunpack.c.h.b16 %v3481
        %v6383 = vunpack.c.l.b16 %v3482
        %v6384 = vunpack.c.h.b16 %v3482
        %v6385 = vunpack.c.l.b16 %v3483
        %v6386 = vunpack.c.h.b16 %v3483
        %v6387 = vunpack.c.l.b16 %v3484
        %v6388 = vunpack.c.h.b16 %v3484
        %v6389 = vunpack.c.l.b16 %v3485
        %v6390 = vunpack.c.h.b16 %v3485
        %v6391 = vunpack.c.l.b16 %v3486
        %v6392 = vunpack.c.h.b16 %v3486
        %v6393 = vunpack.c.l.b16 %v3487
        %v6394 = vunpack.c.h.b16 %v3487
        %v6395 = vunpack.c.l.b16 %v3488
        %v6396 = vunpack.c.h.b16 %v3488
        %v6397 = vunpack.c.l.b16 %v3489
        %v6398 = vunpack.c.h.b16 %v3489
        %v6399 = vunpack.c.l.b16 %v3490
        %v6400 = vunpack.c.h.b16 %v3490
        %v6401 = vunpack.c.l.b16 %v3491
        %v6402 = vunpack.c.h.b16 %v3491
        %v6403 = vunpack.c.l.b16 %v3492
        %v6404 = vunpack.c.h.b16 %v3492
        %v6405 = vunpack.c.l.b16 %v3493
        %v6406 = vunpack.c.h.b16 %v3493
        %v6407 = vunpack.c.l.b16 %v3494
        %v6408 = vunpack.c.h.b16 %v3494
        %v6409 = vunpack.c.l.b16 %v3495
        %v6410 = vunpack.c.h.b16 %v3495
        %v6411 = vunpack.c.l.b16 %v3496
        %v6412 = vunpack.c.h.b16 %v3496
        %v6413 = vunpack.c.l.b16 %v3497
        %v6414 = vunpack.c.h.b16 %v3497
        %v6415 = vunpack.c.l.b16 %v3498
        %v6416 = vunpack.c.h.b16 %v3498
        %v6417 = vunpack.c.l.b16 %v3499
        %v6418 = vunpack.c.h.b16 %v3499
        %v6419 = vunpack.c.l.b16 %v3500
        %v6420 = vunpack.c.h.b16 %v3500
        %v6421 = vunpack.c.l.b16 %v3501
        %v6422 = vunpack.c.h.b16 %v3501
        %v6423 = vunpack.c.l.b16 %v3502
        %v6424 = vunpack.c.h.b16 %v3502
        %v6425 = vunpack.c.l.b16 %v3503
        %v6426 = vunpack.c.h.b16 %v3503
        %v6427 = vunpack.c.l.b16 %v3504
        %v6428 = vunpack.c.h.b16 %v3504
        %v6429 = vunpack.c.l.b16 %v3505
        %v6430 = vunpack.c.h.b16 %v3505
        %v6431 = vunpack.c.l.b16 %v3506
        %v6432 = vunpack.c.h.b16 %v3506
        %v6433 = vunpack.c.l.b16 %v3507
        %v6434 = vunpack.c.h.b16 %v3507
        %v6435 = vunpack.c.l.b16 %v3508
        %v6436 = vunpack.c.h.b16 %v3508
        %v6437 = vunpack.c.l.b16 %v3509
        %v6438 = vunpack.c.h.b16 %v3509
        %v6439 = vunpack.c.l.b16 %v3510
        %v6440 = vunpack.c.h.b16 %v3510
        %v6441 = vunpack.c.l.b16 %v3511
        %v6442 = vunpack.c.h.b16 %v3511
        %v6443 = vunpack.c.l.b16 %v3512
        %v6444 = vunpack.c.h.b16 %v3512
        %v6445 = vunpack.c.l.b16 %v3513
        %v6446 = vunpack.c.h.b16 %v3513
        %v6447 = vunpack.c.l.b16 %v3514
        %v6448 = vunpack.c.h.b16 %v3514
        %v6449 = vunpack.c.l.b16 %v3515
        %v6450 = vunpack.c.h.b16 %v3515
        %v6451 = vunpack.c.l.b16 %v3516
        %v6452 = vunpack.c.h.b16 %v3516
        %v6453 = vunpack.c.l.b16 %v3517
        %v6454 = vunpack.c.h.b16 %v3517
        %v6455 = vunpack.c.l.b16 %v3518
        %v6456 = vunpack.c.h.b16 %v3518
        %v6457 = vunpack.c.l.b16 %v3519
        %v6458 = vunpack.c.h.b16 %v3519
        %v6459 = vunpack.c.l.b16 %v3520
        %v6460 = vunpack.c.h.b16 %v3520
        %v6461 = vunpack.c.l.b16 %v3521
        %v6462 = vunpack.c.h.b16 %v3521
        %v6463 = vunpack.c.l.b16 %v3522
        %v6464 = vunpack.c.h.b16 %v3522
        %v6465 = vunpack.c.l.b16 %v3523
        %v6466 = vunpack.c.h.b16 %v3523
        %v6467 = vunpack.c.l.b16 %v3524
        %v6468 = vunpack.c.h.b16 %v3524
        %v6469 = vunpack.c.l.b16 %v3525
        %v6470 = vunpack.c.h.b16 %v3525
        %v6471 = vunpack.c.l.b16 %v3526
        %v6472 = vunpack.c.h.b16 %v3526
        %v6473 = vunpack.c.l.b16 %v3527
        %v6474 = vunpack.c.h.b16 %v3527
        %v6475 = vunpack.c.l.b16 %v3528
        %v6476 = vunpack.c.h.b16 %v3528
        %v6477 = vunpack.c.l.b16 %v3529
        %v6478 = vunpack.c.h.b16 %v3529
        %v6479 = vunpack.c.l.b16 %v3530
        %v6480 = vunpack.c.h.b16 %v3530
        %v6481 = vunpack.c.l.b16 %v3531
        %v6482 = vunpack.c.h.b16 %v3531
        %v6483 = vunpack.c.l.b16 %v3532
        %v6484 = vunpack.c.h.b16 %v3532
        %v6485 = vunpack.c.l.b16 %v3533
        %v6486 = vunpack.c.h.b16 %v3533
        %v6487 = vunpack.c.l.b16 %v3534
        %v6488 = vunpack.c.h.b16 %v3534
        %v6489 = vunpack.c.l.b16 %v3535
        %v6490 = vunpack.c.h.b16 %v3535
        %v6491 = vunpack.c.l.b16 %v3536
        %v6492 = vunpack.c.h.b16 %v3536
        %v6493 = vunpack.c.l.b16 %v3537
        %v6494 = vunpack.c.h.b16 %v3537
        %v6495 = vunpack.c.l.b16 %v3538
        %v6496 = vunpack.c.h.b16 %v3538
        %v6497 = vunpack.c.l.b16 %v3539
        %v6498 = vunpack.c.h.b16 %v3539
        %v6499 = vunpack.c.l.b16 %v3540
        %v6500 = vunpack.c.h.b16 %v3540
        %v6501 = vunpack.c.l.b16 %v3541
        %v6502 = vunpack.c.h.b16 %v3541
        %v6503 = vunpack.c.l.b16 %v3542
        %v6504 = vunpack.c.h.b16 %v3542
        %v6505 = vunpack.c.l.b16 %v3543
        %v6506 = vunpack.c.h.b16 %v3543
        %v6507 = vunpack.c.l.b16 %v3544
        %v6508 = vunpack.c.h.b16 %v3544
        %v6509 = vunpack.c.l.b16 %v3545
        %v6510 = vunpack.c.h.b16 %v3545
        %v6511 = vunpack.c.l.b16 %v3546
        %v6512 = vunpack.c.h.b16 %v3546
        %v6513 = vunpack.c.l.b16 %v3547
        %v6514 = vunpack.c.h.b16 %v3547
        %v6515 = vunpack.c.l.b16 %v3548
        %v6516 = vunpack.c.h.b16 %v3548
        %v6517 = vunpack.c.l.b16 %v3549
        %v6518 = vunpack.c.h.b16 %v3549
        %v6519 = vunpack.c.l.b16 %v3550
        %v6520 = vunpack.c.h.b16 %v3550
        %v6521 = vunpack.c.l.b16 %v3551
        %v6522 = vunpack.c.h.b16 %v3551
        %v6523 = vunpack.c.l.b16 %v3552
        %v6524 = vunpack.c.h.b16 %v3552
        %v6525 = vunpack.c.l.b16 %v3553
        %v6526 = vunpack.c.h.b16 %v3553
        %v6527 = vunpack.c.l.b16 %v3554
        %v6528 = vunpack.c.h.b16 %v3554
        %v6529 = vunpack.c.l.b16 %v3555
        %v6530 = vunpack.c.h.b16 %v3555
        %v6531 = vunpack.c.l.b16 %v3556
        %v6532 = vunpack.c.h.b16 %v3556
        %v6533 = vunpack.c.l.b16 %v3557
        %v6534 = vunpack.c.h.b16 %v3557
        %v6535 = vunpack.c.l.b16 %v3558
        %v6536 = vunpack.c.h.b16 %v3558
        %v6537 = vunpack.c.l.b16 %v3559
        %v6538 = vunpack.c.h.b16 %v3559
        %v6539 = vunpack.c.l.b16 %v3560
        %v6540 = vunpack.c.h.b16 %v3560
        %v6541 = vunpack.c.l.b16 %v3561
        %v6542 = vunpack.c.h.b16 %v3561
        %v6543 = vunpack.c.l.b16 %v3562
        %v6544 = vunpack.c.h.b16 %v3562
        %v6545 = vunpack.c.l.b16 %v3563
        %v6546 = vunpack.c.h.b16 %v3563
        %v6547 = vunpack.c.l.b16 %v3564
        %v6548 = vunpack.c.h.b16 %v3564
        %v6549 = vunpack.c.l.b16 %v3565
        %v6550 = vunpack.c.h.b16 %v3565
        %v6551 = vunpack.c.l.b16 %v3566
        %v6552 = vunpack.c.h.b16 %v3566
        %v6553 = vunpack.c.l.b16 %v3567
        %v6554 = vunpack.c.h.b16 %v3567
        %v6555 = vunpack.c.l.b16 %v3568
        %v6556 = vunpack.c.h.b16 %v3568
        %v6557 = vunpack.c.l.b16 %v3569
        %v6558 = vunpack.c.h.b16 %v3569
        %v6559 = vunpack.c.l.b16 %v3570
        %v6560 = vunpack.c.h.b16 %v3570
        %v6561 = vunpack.c.l.b16 %v3571
        %v6562 = vunpack.c.h.b16 %v3571
        %v6563 = vunpack.c.l.b16 %v3572
        %v6564 = vunpack.c.h.b16 %v3572
        %v6565 = vunpack.c.l.b16 %v3573
        %v6566 = vunpack.c.h.b16 %v3573
        %v6567 = vunpack.c.l.b16 %v3574
        %v6568 = vunpack.c.h.b16 %v3574
        %v6569 = vunpack.c.l.b16 %v3575
        %v6570 = vunpack.c.h.b16 %v3575
        %v6571 = vunpack.c.l.b16 %v3576
        %v6572 = vunpack.c.h.b16 %v3576
        %v6573 = vunpack.c.l.b16 %v3577
        %v6574 = vunpack.c.h.b16 %v3577
        %v6575 = vunpack.c.l.b16 %v3578
        %v6576 = vunpack.c.h.b16 %v3578
        %v6577 = vunpack.c.l.b16 %v3579
        %v6578 = vunpack.c.h.b16 %v3579
        %v6579 = vunpack.c.l.b16 %v3580
        %v6580 = vunpack.c.h.b16 %v3580
        %v6581 = vunpack.c.l.b16 %v3581
        %v6582 = vunpack.c.h.b16 %v3581
        %v6583 = vunpack.c.l.b16 %v3582
        %v6584 = vunpack.c.h.b16 %v3582
        %v6585 = vunpack.c.l.b16 %v3583
        %v6586 = vunpack.c.h.b16 %v3583
        %v6587 = vunpack.c.l.b16 %v3584
        %v6588 = vunpack.c.h.b16 %v3584
        %v6589 = vunpack.c.l.b16 %v3585
        %v6590 = vunpack.c.h.b16 %v3585
        %v6591 = vunpack.c.l.b16 %v3586
        %v6592 = vunpack.c.h.b16 %v3586
        %v6593 = vunpack.c.l.b16 %v3587
        %v6594 = vunpack.c.h.b16 %v3587
        %v6595 = vunpack.c.l.b16 %v3588
        %v6596 = vunpack.c.h.b16 %v3588
        %v6597 = vunpack.c.l.b16 %v3589
        %v6598 = vunpack.c.h.b16 %v3589
        %v6599 = vunpack.c.l.b16 %v3590
        %v6600 = vunpack.c.h.b16 %v3590
        %v6601 = vunpack.c.l.b16 %v3591
        %v6602 = vunpack.c.h.b16 %v3591
        %v6603 = vunpack.c.l.b16 %v3592
        %v6604 = vunpack.c.h.b16 %v3592
        %v6605 = vunpack.c.l.b16 %v3593
        %v6606 = vunpack.c.h.b16 %v3593
        %v6607 = vunpack.c.l.b16 %v3594
        %v6608 = vunpack.c.h.b16 %v3594
        %v6609 = vunpack.c.l.b16 %v3595
        %v6610 = vunpack.c.h.b16 %v3595
        %v6611 = vunpack.c.l.b16 %v3596
        %v6612 = vunpack.c.h.b16 %v3596
        %v6613 = vunpack.c.l.b16 %v3597
        %v6614 = vunpack.c.h.b16 %v3597
        %v6615 = vunpack.c.l.b16 %v3598
        %v6616 = vunpack.c.h.b16 %v3598
        %v6617 = vunpack.c.l.b16 %v3599
        %v6618 = vunpack.c.h.b16 %v3599
        %v6619 = vunpack.c.l.b16 %v3600
        %v6620 = vunpack.c.h.b16 %v3600
        %v6621 = vunpack.c.l.b16 %v3601
        %v6622 = vunpack.c.h.b16 %v3601
        %v6623 = vunpack.c.l.b16 %v3602
        %v6624 = vunpack.c.h.b16 %v3602
        %v6625 = vunpack.c.l.b16 %v3603
        %v6626 = vunpack.c.h.b16 %v3603
        %v6627 = vunpack.c.l.b16 %v3604
        %v6628 = vunpack.c.h.b16 %v3604
        %v6629 = vunpack.c.l.b16 %v3605
        %v6630 = vunpack.c.h.b16 %v3605
        %v6631 = vunpack.c.l.b16 %v3606
        %v6632 = vunpack.c.h.b16 %v3606
        %v6633 = vunpack.c.l.b16 %v3607
        %v6634 = vunpack.c.h.b16 %v3607
        %v6635 = vunpack.c.l.b16 %v3608
        %v6636 = vunpack.c.h.b16 %v3608
        %v6637 = vunpack.c.l.b16 %v3609
        %v6638 = vunpack.c.h.b16 %v3609
        %v6639 = vunpack.c.l.b16 %v3610
        %v6640 = vunpack.c.h.b16 %v3610
        %v6641 = vunpack.c.l.b16 %v3611
        %v6642 = vunpack.c.h.b16 %v3611
        %v6643 = vunpack.c.l.b16 %v3612
        %v6644 = vunpack.c.h.b16 %v3612
        %v6645 = vunpack.c.l.b16 %v3613
        %v6646 = vunpack.c.h.b16 %v3613
        %v6647 = vunpack.c.l.b16 %v3614
        %v6648 = vunpack.c.h.b16 %v3614
        %v6649 = vunpack.c.l.b16 %v3615
        %v6650 = vunpack.c.h.b16 %v3615
        %v6651 = vunpack.c.l.b16 %v3616
        %v6652 = vunpack.c.h.b16 %v3616
        %v6653 = vunpack.c.l.b16 %v3617
        %v6654 = vunpack.c.h.b16 %v3617
        %v6655 = vunpack.c.l.b16 %v3618
        %v6656 = vunpack.c.h.b16 %v3618
        %v6657 = vpack.c.b16 %v4767, %v4737
        %v6658 = vpack.c.b16 %v4768, %v4738
        %v6659 = vpack.c.b16 %v4769, %v4739
        %v6660 = vpack.c.b16 %v4770, %v4740
        %v6661 = vpack.c.b16 %v4771, %v4741
        %v6662 = vpack.c.b16 %v4772, %v4742
        %v6663 = vpack.c.b16 %v4773, %v4743
        %v6664 = vpack.c.b16 %v4774, %v4744
        %v6665 = vpack.c.b16 %v4775, %v4745
        %v6666 = vpack.c.b16 %v4776, %v4746
        %v6667 = vpack.c.b16 %v4777, %v4747
        %v6668 = vpack.c.b16 %v4778, %v4748
        %v6669 = vpack.c.b16 %v4779, %v4749
        %v6670 = vpack.c.b16 %v4780, %v4750
        %v6671 = vpack.c.b16 %v4781, %v4751
        %v6672 = vpack.c.b16 %v4782, %v4752
        %v6673 = vpack.c.b16 %v4783, %v4753
        %v6674 = vpack.c.b16 %v4784, %v4754
        %v6675 = vpack.c.b16 %v4785, %v4755
        %v6676 = vpack.c.b16 %v4786, %v4756
        %v6677 = vpack.c.b16 %v4787, %v4757
        %v6678 = vpack.c.b16 %v4788, %v4758
        %v6679 = vpack.c.b16 %v4789, %v4759
        %v6680 = vpack.c.b16 %v4790, %v4760
        %v6681 = vpack.c.b16 %v4791, %v4761
        %v6682 = vpack.c.b16 %v4792, %v4762
        %v6683 = vpack.c.b16 %v4793, %v4763
        %v6684 = vpack.c.b16 %v4794, %v4764
        %v6685 = vpack.c.b16 %v4795, %v4765
        %v6686 = vpack.c.b16 %v4796, %v4766
        %v6687 = vpack.c.b16 %v4827, %v4797
        %v6688 = vpack.c.b16 %v4828, %v4798
        %v6689 = vpack.c.b16 %v4829, %v4799
        %v6690 = vpack.c.b16 %v4830, %v4800
        %v6691 = vpack.c.b16 %v4831, %v4801
        %v6692 = vpack.c.b16 %v4832, %v4802
        %v6693 = vpack.c.b16 %v4833, %v4803
        %v6694 = vpack.c.b16 %v4834, %v4804
        %v6695 = vpack.c.b16 %v4835, %v4805
        %v6696 = vpack.c.b16 %v4836, %v4806
        %v6697 = vpack.c.b16 %v4837, %v4807
        %v6698 = vpack.c.b16 %v4838, %v4808
        %v6699 = vpack.c.b16 %v4839, %v4809
        %v6700 = vpack.c.b16 %v4840, %v4810
        %v6701 = vpack.c.b16 %v4841, %v4811
        %v6702 = vpack.c.b16 %v4842, %v4812
        %v6703 = vpack.c.b16 %v4843, %v4813
        %v6704 = vpack.c.b16 %v4844, %v4814
        %v6705 = vpack.c.b16 %v4845, %v4815
        %v6706 = vpack.c.b16 %v4846, %v4816
        %v6707 = vpack.c.b16 %v4847, %v4817
        %v6708 = vpack.c.b16 %v4848, %v4818
        %v6709 = vpack.c.b16 %v4849, %v4819
        %v6710 = vpack.c.b16 %v4850, %v4820
        %v6711 = vpack.c.b16 %v4851, %v4821
        %v6712 = vpack.c.b16 %v4852, %v4822
        %v6713 = vpack.c.b16 %v4853, %v4823
        %v6714 = vpack.c.b16 %v4854, %v4824
        %v6715 = vpack.c.b16 %v4855, %v4825
        %v6716 = vpack.c.b16 %v4856, %v4826
        %v6717 = vpack.c.b16 %v4887, %v4857
        %v6718 = vpack.c.b16 %v4888, %v4858
        %v6719 = vpack.c.b16 %v4889, %v4859
        %v6720 = vpack.c.b16 %v4890, %v4860
        %v6721 = vpack.c.b16 %v4891, %v4861
        %v6722 = vpack.c.b16 %v4892, %v4862
        %v6723 = vpack.c.b16 %v4893, %v4863
        %v6724 = vpack.c.b16 %v4894, %v4864
        %v6725 = vpack.c.b16 %v4895, %v4865
        %v6726 = vpack.c.b16 %v4896, %v4866
        %v6727 = vpack.c.b16 %v4897, %v4867
        %v6728 = vpack.c.b16 %v4898, %v4868
        %v6729 = vpack.c.b16 %v4899, %v4869
        %v6730 = vpack.c.b16 %v4900, %v4870
        %v6731 = vpack.c.b16 %v4901, %v4871
        %v6732 = vpack.c.b16 %v4902, %v4872
        %v6733 = vpack.c.b16 %v4903, %v4873
        %v6734 = vpack.c.b16 %v4904, %v4874
        %v6735 = vpack.c.b16 %v4905, %v4875
        %v6736 = vpack.c.b16 %v4906, %v4876
        %v6737 = vpack.c.b16 %v4907, %v4877
        %v6738 = vpack.c.b16 %v4908, %v4878
        %v6739 = vpack.c.b16 %v4909, %v4879
        %v6740 = vpack.c.b16 %v4910, %v4880
        %v6741 = vpack.c.b16 %v4911, %v4881
        %v6742 = vpack.c.b16 %v4912, %v4882
        %v6743 = vpack.c.b16 %v4913, %v4883
        %v6744 = vpack.c.b16 %v4914, %v4884
        %v6745 = vpack.c.b16 %v4915, %v4885
        %v6746 = vpack.c.b16 %v4916, %v4886
        %v6747 = vpack.c.b16 %v4947, %v4917
        %v6748 = vpack.c.b16 %v4948, %v4918
        %v6749 = vpack.c.b16 %v4949, %v4919
        %v6750 = vpack.c.b16 %v4950, %v4920
        %v6751 = vpack.c.b16 %v4951, %v4921
        %v6752 = vpack.c.b16 %v4952, %v4922
        %v6753 = vpack.c.b16 %v4953, %v4923
        %v6754 = vpack.c.b16 %v4954, %v4924
        %v6755 = vpack.c.b16 %v4955, %v4925
        %v6756 = vpack.c.b16 %v4956, %v4926
        %v6757 = vpack.c.b16 %v4957, %v4927
        %v6758 = vpack.c.b16 %v4958, %v4928
        %v6759 = vpack.c.b16 %v4959, %v4929
        %v6760 = vpack.c.b16 %v4960, %v4930
        %v6761 = vpack.c.b16 %v4961, %v4931
        %v6762 = vpack.c.b16 %v4962, %v4932
        %v6763 = vpack.c.b16 %v4963, %v4933
        %v6764 = vpack.c.b16 %v4964, %v4934
        %v6765 = vpack.c.b16 %v4965, %v4935
        %v6766 = vpack.c.b16 %v4966, %v4936
        %v6767 = vpack.c.b16 %v4967, %v4937
        %v6768 = vpack.c.b16 %v4968, %v4938
        %v6769 = vpack.c.b16 %v4969, %v4939
        %v6770 = vpack.c.b16 %v4970, %v4940
        %v6771 = vpack.c.b16 %v4971, %v4941
        %v6772 = vpack.c.b16 %v4972, %v4942
        %v6773 = vpack.c.b16 %v4973, %v4943
        %v6774 = vpack.c.b16 %v4974, %v4944
        %v6775 = vpack.c.b16 %v4975, %v4945
        %v6776 = vpack.c.b16 %v4976, %v4946
        %v6777 = vpack.c.b16 %v5007, %v4977
        %v6778 = vpack.c.b16 %v5008, %v4978
        %v6779 = vpack.c.b16 %v5009, %v4979
        %v6780 = vpack.c.b16 %v5010, %v4980
        %v6781 = vpack.c.b16 %v5011, %v4981
        %v6782 = vpack.c.b16 %v5012, %v4982
        %v6783 = vpack.c.b16 %v5013, %v4983
        %v6784 = vpack.c.b16 %v5014, %v4984
        %v6785 = vpack.c.b16 %v5015, %v4985
        %v6786 = vpack.c.b16 %v5016, %v4986
        %v6787 = vpack.c.b16 %v5017, %v4987
        %v6788 = vpack.c.b16 %v5018, %v4988
        %v6789 = vpack.c.b16 %v5019, %v4989
        %v6790 = vpack.c.b16 %v5020, %v4990
        %v6791 = vpack.c.b16 %v5021, %v4991
        %v6792 = vpack.c.b16 %v5022, %v4992
        %v6793 = vpack.c.b16 %v5023, %v4993
        %v6794 = vpack.c.b16 %v5024, %v4994
        %v6795 = vpack.c.b16 %v5025, %v4995
        %v6796 = vpack.c.b16 %v5026, %v4996
        %v6797 = vpack.c.b16 %v5027, %v4997
        %v6798 = vpack.c.b16 %v5028, %v4998
        %v6799 = vpack.c.b16 %v5029, %v4999
        %v6800 = vpack.c.b16 %v5030, %v5000
        %v6801 = vpack.c.b16 %v5031, %v5001
        %v6802 = vpack.c.b16 %v5032, %v5002
        %v6803 = vpack.c.b16 %v5033, %v5003
        %v6804 = vpack.c.b16 %v5034, %v5004
        %v6805 = vpack.c.b16 %v5035, %v5005
        %v6806 = vpack.c.b16 %v5036, %v5006
        %v6807 = vpack.c.b16 %v5067, %v5037
        %v6808 = vpack.c.b16 %v5068, %v5038
        %v6809 = vpack.c.b16 %v5069, %v5039
        %v6810 = vpack.c.b16 %v5070, %v5040
        %v6811 = vpack.c.b16 %v5071, %v5041
        %v6812 = vpack.c.b16 %v5072, %v5042
        %v6813 = vpack.c.b16 %v5073, %v5043
        %v6814 = vpack.c.b16 %v5074, %v5044
        %v6815 = vpack.c.b16 %v5075, %v5045
        %v6816 = vpack.c.b16 %v5076, %v5046
        %v6817 = vpack.c.b16 %v5077, %v5047
        %v6818 = vpack.c.b16 %v5078, %v5048
        %v6819 = vpack.c.b16 %v5079, %v5049
        %v6820 = vpack.c.b16 %v5080, %v5050
        %v6821 = vpack.c.b16 %v5081, %v5051
        %v6822 = vpack.c.b16 %v5082, %v5052
        %v6823 = vpack.c.b16 %v5083, %v5053
        %v6824 = vpack.c.b16 %v5084, %v5054
        %v6825 = vpack.c.b16 %v5085, %v5055
        %v6826 = vpack.c.b16 %v5086, %v5056
        %v6827 = vpack.c.b16 %v5087, %v5057
        %v6828 = vpack.c.b16 %v5088, %v5058
        %v6829 = vpack.c.b16 %v5089, %v5059
        %v6830 = vpack.c.b16 %v5090, %v5060
        %v6831 = vpack.c.b16 %v5091, %v5061
        %v6832 = vpack.c.b16 %v5092, %v5062
        %v6833 = vpack.c.b16 %v5093, %v5063
        %v6834 = vpack.c.b16 %v5094, %v5064
        %v6835 = vpack.c.b16 %v5095, %v5065
        %v6836 = vpack.c.b16 %v5096, %v5066
        %v6837 = vpack.c.b16 %v5127, %v5097
        %v6838 = vpack.c.b16 %v5128, %v5098
        %v6839 = vpack.c.b16 %v5129, %v5099
        %v6840 = vpack.c.b16 %v5130, %v5100
        %v6841 = vpack.c.b16 %v5131, %v5101
        %v6842 = vpack.c.b16 %v5132, %v5102
        %v6843 = vpack.c.b16 %v5133, %v5103
        %v6844 = vpack.c.b16 %v5134, %v5104
        %v6845 = vpack.c.b16 %v5135, %v5105
        %v6846 = vpack.c.b16 %v5136, %v5106
        %v6847 = vpack.c.b16 %v5137, %v5107
        %v6848 = vpack.c.b16 %v5138, %v5108
        %v6849 = vpack.c.b16 %v5139, %v5109
        %v6850 = vpack.c.b16 %v5140, %v5110
        %v6851 = vpack.c.b16 %v5141, %v5111
        %v6852 = vpack.c.b16 %v5142, %v5112
        %v6853 = vpack.c.b16 %v5143, %v5113
        %v6854 = vpack.c.b16 %v5144, %v5114
        %v6855 = vpack.c.b16 %v5145, %v5115
        %v6856 = vpack.c.b16 %v5146, %v5116
        %v6857 = vpack.c.b16 %v5147, %v5117
        %v6858 = vpack.c.b16 %v5148, %v5118
        %v6859 = vpack.c.b16 %v5149, %v5119
        %v6860 = vpack.c.b16 %v5150, %v5120
        %v6861 = vpack.c.b16 %v5151, %v5121
        %v6862 = vpack.c.b16 %v5152, %v5122
        %v6863 = vpack.c.b16 %v5153, %v5123
        %v6864 = vpack.c.b16 %v5154, %v5124
        %v6865 = vpack.c.b16 %v5155, %v5125
        %v6866 = vpack.c.b16 %v5156, %v5126
        %v6867 = vpack.c.b16 %v5187, %v5157
        %v6868 = vpack.c.b16 %v5188, %v5158
        %v6869 = vpack.c.b16 %v5189, %v5159
        %v6870 = vpack.c.b16 %v5190, %v5160
        %v6871 = vpack.c.b16 %v5191, %v5161
        %v6872 = vpack.c.b16 %v5192, %v5162
        %v6873 = vpack.c.b16 %v5193, %v5163
        %v6874 = vpack.c.b16 %v5194, %v5164
        %v6875 = vpack.c.b16 %v5195, %v5165
        %v6876 = vpack.c.b16 %v5196, %v5166
        %v6877 = vpack.c.b16 %v5197, %v5167
        %v6878 = vpack.c.b16 %v5198, %v5168
        %v6879 = vpack.c.b16 %v5199, %v5169
        %v6880 = vpack.c.b16 %v5200, %v5170
        %v6881 = vpack.c.b16 %v5201, %v5171
        %v6882 = vpack.c.b16 %v5202, %v5172
        %v6883 = vpack.c.b16 %v5203, %v5173
        %v6884 = vpack.c.b16 %v5204, %v5174
        %v6885 = vpack.c.b16 %v5205, %v5175
        %v6886 = vpack.c.b16 %v5206, %v5176
        %v6887 = vpack.c.b16 %v5207, %v5177
        %v6888 = vpack.c.b16 %v5208, %v5178
        %v6889 = vpack.c.b16 %v5209, %v5179
        %v6890 = vpack.c.b16 %v5210, %v5180
        %v6891 = vpack.c.b16 %v5211, %v5181
        %v6892 = vpack.c.b16 %v5212, %v5182
        %v6893 = vpack.c.b16 %v5213, %v5183
        %v6894 = vpack.c.b16 %v5214, %v5184
        %v6895 = vpack.c.b16 %v5215, %v5185
        %v6896 = vpack.c.b16 %v5216, %v5186
        %v6897 = vpack.c.b16 %v5247, %v5217
        %v6898 = vpack.c.b16 %v5248, %v5218
        %v6899 = vpack.c.b16 %v5249, %v5219
        %v6900 = vpack.c.b16 %v5250, %v5220
        %v6901 = vpack.c.b16 %v5251, %v5221
        %v6902 = vpack.c.b16 %v5252, %v5222
        %v6903 = vpack.c.b16 %v5253, %v5223
        %v6904 = vpack.c.b16 %v5254, %v5224
        %v6905 = vpack.c.b16 %v5255, %v5225
        %v6906 = vpack.c.b16 %v5256, %v5226
        %v6907 = vpack.c.b16 %v5257, %v5227
        %v6908 = vpack.c.b16 %v5258, %v5228
        %v6909 = vpack.c.b16 %v5259, %v5229
        %v6910 = vpack.c.b16 %v5260, %v5230
        %v6911 = vpack.c.b16 %v5261, %v5231
        %v6912 = vpack.c.b16 %v5262, %v5232
        %v6913 = vpack.c.b16 %v5263, %v5233
        %v6914 = vpack.c.b16 %v5264, %v5234
        %v6915 = vpack.c.b16 %v5265, %v5235
        %v6916 = vpack.c.b16 %v5266, %v5236
        %v6917 = vpack.c.b16 %v5267, %v5237
        %v6918 = vpack.c.b16 %v5268, %v5238
        %v6919 = vpack.c.b16 %v5269, %v5239
        %v6920 = vpack.c.b16 %v5270, %v5240
        %v6921 = vpack.c.b16 %v5271, %v5241
        %v6922 = vpack.c.b16 %v5272, %v5242
        %v6923 = vpack.c.b16 %v5273, %v5243
        %v6924 = vpack.c.b16 %v5274, %v5244
        %v6925 = vpack.c.b16 %v5275, %v5245
        %v6926 = vpack.c.b16 %v5276, %v5246
        %v6927 = vpack.c.b16 %v5307, %v5277
        %v6928 = vpack.c.b16 %v5308, %v5278
        %v6929 = vpack.c.b16 %v5309, %v5279
        %v6930 = vpack.c.b16 %v5310, %v5280
        %v6931 = vpack.c.b16 %v5311, %v5281
        %v6932 = vpack.c.b16 %v5312, %v5282
        %v6933 = vpack.c.b16 %v5313, %v5283
        %v6934 = vpack.c.b16 %v5314, %v5284
        %v6935 = vpack.c.b16 %v5315, %v5285
        %v6936 = vpack.c.b16 %v5316, %v5286
        %v6937 = vpack.c.b16 %v5317, %v5287
        %v6938 = vpack.c.b16 %v5318, %v5288
        %v6939 = vpack.c.b16 %v5319, %v5289
        %v6940 = vpack.c.b16 %v5320, %v5290
        %v6941 = vpack.c.b16 %v5321, %v5291
        %v6942 = vpack.c.b16 %v5322, %v5292
        %v6943 = vpack.c.b16 %v5323, %v5293
        %v6944 = vpack.c.b16 %v5324, %v5294
        %v6945 = vpack.c.b16 %v5325, %v5295
        %v6946 = vpack.c.b16 %v5326, %v5296
        %v6947 = vpack.c.b16 %v5327, %v5297
        %v6948 = vpack.c.b16 %v5328, %v5298
        %v6949 = vpack.c.b16 %v5329, %v5299
        %v6950 = vpack.c.b16 %v5330, %v5300
        %v6951 = vpack.c.b16 %v5331, %v5301
        %v6952 = vpack.c.b16 %v5332, %v5302
        %v6953 = vpack.c.b16 %v5333, %v5303
        %v6954 = vpack.c.b16 %v5334, %v5304
        %v6955 = vpack.c.b16 %v5335, %v5305
        %v6956 = vpack.c.b16 %v5336, %v5306
        %v6957 = vpack.c.b16 %v5367, %v5337
        %v6958 = vpack.c.b16 %v5368, %v5338
        %v6959 = vpack.c.b16 %v5369, %v5339
        %v6960 = vpack.c.b16 %v5370, %v5340
        %v6961 = vpack.c.b16 %v5371, %v5341
        %v6962 = vpack.c.b16 %v5372, %v5342
        %v6963 = vpack.c.b16 %v5373, %v5343
        %v6964 = vpack.c.b16 %v5374, %v5344
        %v6965 = vpack.c.b16 %v5375, %v5345
        %v6966 = vpack.c.b16 %v5376, %v5346
        %v6967 = vpack.c.b16 %v5377, %v5347
        %v6968 = vpack.c.b16 %v5378, %v5348
        %v6969 = vpack.c.b16 %v5379, %v5349
        %v6970 = vpack.c.b16 %v5380, %v5350
        %v6971 = vpack.c.b16 %v5381, %v5351
        %v6972 = vpack.c.b16 %v5382, %v5352
        %v6973 = vpack.c.b16 %v5383, %v5353
        %v6974 = vpack.c.b16 %v5384, %v5354
        %v6975 = vpack.c.b16 %v5385, %v5355
        %v6976 = vpack.c.b16 %v5386, %v5356
        %v6977 = vpack.c.b16 %v5387, %v5357
        %v6978 = vpack.c.b16 %v5388, %v5358
        %v6979 = vpack.c.b16 %v5389, %v5359
        %v6980 = vpack.c.b16 %v5390, %v5360
        %v6981 = vpack.c.b16 %v5391, %v5361
        %v6982 = vpack.c.b16 %v5392, %v5362
        %v6983 = vpack.c.b16 %v5393, %v5363
        %v6984 = vpack.c.b16 %v5394, %v5364
        %v6985 = vpack.c.b16 %v5395, %v5365
        %v6986 = vpack.c.b16 %v5396, %v5366
        %v6987 = vpack.c.b16 %v5427, %v5397
        %v6988 = vpack.c.b16 %v5428, %v5398
        %v6989 = vpack.c.b16 %v5429, %v5399
        %v6990 = vpack.c.b16 %v5430, %v5400
        %v6991 = vpack.c.b16 %v5431, %v5401
        %v6992 = vpack.c.b16 %v5432, %v5402
        %v6993 = vpack.c.b16 %v5433, %v5403
        %v6994 = vpack.c.b16 %v5434, %v5404
        %v6995 = vpack.c.b16 %v5435, %v5405
        %v6996 = vpack.c.b16 %v5436, %v5406
        %v6997 = vpack.c.b16 %v5437, %v5407
        %v6998 = vpack.c.b16 %v5438, %v5408
        %v6999 = vpack.c.b16 %v5439, %v5409
        %v7000 = vpack.c.b16 %v5440, %v5410
        %v7001 = vpack.c.b16 %v5441, %v5411
        %v7002 = vpack.c.b16 %v5442, %v5412
        %v7003 = vpack.c.b16 %v5443, %v5413
        %v7004 = vpack.c.b16 %v5444, %v5414
        %v7005 = vpack.c.b16 %v5445, %v5415
        %v7006 = vpack.c.b16 %v5446, %v5416
        %v7007 = vpack.c.b16 %v5447, %v5417
        %v7008 = vpack.c.b16 %v5448, %v5418
        %v7009 = vpack.c.b16 %v5449, %v5419
        %v7010 = vpack.c.b16 %v5450, %v5420
        %v7011 = vpack.c.b16 %v5451, %v5421
        %v7012 = vpack.c.b16 %v5452, %v5422
        %v7013 = vpack.c.b16 %v5453, %v5423
        %v7014 = vpack.c.b16 %v5454, %v5424
        %v7015 = vpack.c.b16 %v5455, %v5425
        %v7016 = vpack.c.b16 %v5456, %v5426
        %v7017 = vpack.c.b16 %v5487, %v5457
        %v7018 = vpack.c.b16 %v5488, %v5458
        %v7019 = vpack.c.b16 %v5489, %v5459
        %v7020 = vpack.c.b16 %v5490, %v5460
        %v7021 = vpack.c.b16 %v5491, %v5461
        %v7022 = vpack.c.b16 %v5492, %v5462
        %v7023 = vpack.c.b16 %v5493, %v5463
        %v7024 = vpack.c.b16 %v5494, %v5464
        %v7025 = vpack.c.b16 %v5495, %v5465
        %v7026 = vpack.c.b16 %v5496, %v5466
        %v7027 = vpack.c.b16 %v5497, %v5467
        %v7028 = vpack.c.b16 %v5498, %v5468
        %v7029 = vpack.c.b16 %v5499, %v5469
        %v7030 = vpack.c.b16 %v5500, %v5470
        %v7031 = vpack.c.b16 %v5501, %v5471
        %v7032 = vpack.c.b16 %v5502, %v5472
        %v7033 = vpack.c.b16 %v5503, %v5473
        %v7034 = vpack.c.b16 %v5504, %v5474
        %v7035 = vpack.c.b16 %v5505, %v5475
        %v7036 = vpack.c.b16 %v5506, %v5476
        %v7037 = vpack.c.b16 %v5507, %v5477
        %v7038 = vpack.c.b16 %v5508, %v5478
        %v7039 = vpack.c.b16 %v5509, %v5479
        %v7040 = vpack.c.b16 %v5510, %v5480
        %v7041 = vpack.c.b16 %v5511, %v5481
        %v7042 = vpack.c.b16 %v5512, %v5482
        %v7043 = vpack.c.b16 %v5513, %v5483
        %v7044 = vpack.c.b16 %v5514, %v5484
        %v7045 = vpack.c.b16 %v5515, %v5485
        %v7046 = vpack.c.b16 %v5516, %v5486
        %v7047 = vpack.c.b16 %v5547, %v5517
        %v7048 = vpack.c.b16 %v5548, %v5518
        %v7049 = vpack.c.b16 %v5549, %v5519
        %v7050 = vpack.c.b16 %v5550, %v5520
        %v7051 = vpack.c.b16 %v5551, %v5521
        %v7052 = vpack.c.b16 %v5552, %v5522
        %v7053 = vpack.c.b16 %v5553, %v5523
        %v7054 = vpack.c.b16 %v5554, %v5524
        %v7055 = vpack.c.b16 %v5555, %v5525
        %v7056 = vpack.c.b16 %v5556, %v5526
        %v7057 = vpack.c.b16 %v5557, %v5527
        %v7058 = vpack.c.b16 %v5558, %v5528
        %v7059 = vpack.c.b16 %v5559, %v5529
        %v7060 = vpack.c.b16 %v5560, %v5530
        %v7061 = vpack.c.b16 %v5561, %v5531
        %v7062 = vpack.c.b16 %v5562, %v5532
        %v7063 = vpack.c.b16 %v5563, %v5533
        %v7064 = vpack.c.b16 %v5564, %v5534
        %v7065 = vpack.c.b16 %v5565, %v5535
        %v7066 = vpack.c.b16 %v5566, %v5536
        %v7067 = vpack.c.b16 %v5567, %v5537
        %v7068 = vpack.c.b16 %v5568, %v5538
        %v7069 = vpack.c.b16 %v5569, %v5539
        %v7070 = vpack.c.b16 %v5570, %v5540
        %v7071 = vpack.c.b16 %v5571, %v5541
        %v7072 = vpack.c.b16 %v5572, %v5542
        %v7073 = vpack.c.b16 %v5573, %v5543
        %v7074 = vpack.c.b16 %v5574, %v5544
        %v7075 = vpack.c.b16 %v5575, %v5545
        %v7076 = vpack.c.b16 %v5576, %v5546
        %v7077 = vpack.c.b16 %v5607, %v5577
        %v7078 = vpack.c.b16 %v5608, %v5578
        %v7079 = vpack.c.b16 %v5609, %v5579
        %v7080 = vpack.c.b16 %v5610, %v5580
        %v7081 = vpack.c.b16 %v5611, %v5581
        %v7082 = vpack.c.b16 %v5612, %v5582
        %v7083 = vpack.c.b16 %v5613, %v5583
        %v7084 = vpack.c.b16 %v5614, %v5584
        %v7085 = vpack.c.b16 %v5615, %v5585
        %v7086 = vpack.c.b16 %v5616, %v5586
        %v7087 = vpack.c.b16 %v5617, %v5587
        %v7088 = vpack.c.b16 %v5618, %v5588
        %v7089 = vpack.c.b16 %v5619, %v5589
        %v7090 = vpack.c.b16 %v5620, %v5590
        %v7091 = vpack.c.b16 %v5621, %v5591
        %v7092 = vpack.c.b16 %v5622, %v5592
        %v7093 = vpack.c.b16 %v5623, %v5593
        %v7094 = vpack.c.b16 %v5624, %v5594
        %v7095 = vpack.c.b16 %v5625, %v5595
        %v7096 = vpack.c.b16 %v5626, %v5596
        %v7097 = vpack.c.b16 %v5627, %v5597
        %v7098 = vpack.c.b16 %v5628, %v5598
        %v7099 = vpack.c.b16 %v5629, %v5599
        %v7100 = vpack.c.b16 %v5630, %v5600
        %v7101 = vpack.c.b16 %v5631, %v5601
        %v7102 = vpack.c.b16 %v5632, %v5602
        %v7103 = vpack.c.b16 %v5633, %v5603
        %v7104 = vpack.c.b16 %v5634, %v5604
        %v7105 = vpack.c.b16 %v5635, %v5605
        %v7106 = vpack.c.b16 %v5636, %v5606
        %v7107 = vpack.c.b16 %v5667, %v5637
        %v7108 = vpack.c.b16 %v5668, %v5638
        %v7109 = vpack.c.b16 %v5669, %v5639
        %v7110 = vpack.c.b16 %v5670, %v5640
        %v7111 = vpack.c.b16 %v5671, %v5641
        %v7112 = vpack.c.b16 %v5672, %v5642
        %v7113 = vpack.c.b16 %v5673, %v5643
        %v7114 = vpack.c.b16 %v5674, %v5644
        %v7115 = vpack.c.b16 %v5675, %v5645
        %v7116 = vpack.c.b16 %v5676, %v5646
        %v7117 = vpack.c.b16 %v5677, %v5647
        %v7118 = vpack.c.b16 %v5678, %v5648
        %v7119 = vpack.c.b16 %v5679, %v5649
        %v7120 = vpack.c.b16 %v5680, %v5650
        %v7121 = vpack.c.b16 %v5681, %v5651
        %v7122 = vpack.c.b16 %v5682, %v5652
        %v7123 = vpack.c.b16 %v5683, %v5653
        %v7124 = vpack.c.b16 %v5684, %v5654
        %v7125 = vpack.c.b16 %v5685, %v5655
        %v7126 = vpack.c.b16 %v5686, %v5656
        %v7127 = vpack.c.b16 %v5687, %v5657
        %v7128 = vpack.c.b16 %v5688, %v5658
        %v7129 = vpack.c.b16 %v5689, %v5659
        %v7130 = vpack.c.b16 %v5690, %v5660
        %v7131 = vpack.c.b16 %v5691, %v5661
        %v7132 = vpack.c.b16 %v5692, %v5662
        %v7133 = vpack.c.b16 %v5693, %v5663
        %v7134 = vpack.c.b16 %v5694, %v5664
        %v7135 = vpack.c.b16 %v5695, %v5665
        %v7136 = vpack.c.b16 %v5696, %v5666
        %v7137 = vpack.c.b16 %v5727, %v5697
        %v7138 = vpack.c.b16 %v5728, %v5698
        %v7139 = vpack.c.b16 %v5729, %v5699
        %v7140 = vpack.c.b16 %v5730, %v5700
        %v7141 = vpack.c.b16 %v5731, %v5701
        %v7142 = vpack.c.b16 %v5732, %v5702
        %v7143 = vpack.c.b16 %v5733, %v5703
        %v7144 = vpack.c.b16 %v5734, %v5704
        %v7145 = vpack.c.b16 %v5735, %v5705
        %v7146 = vpack.c.b16 %v5736, %v5706
        %v7147 = vpack.c.b16 %v5737, %v5707
        %v7148 = vpack.c.b16 %v5738, %v5708
        %v7149 = vpack.c.b16 %v5739, %v5709
        %v7150 = vpack.c.b16 %v5740, %v5710
        %v7151 = vpack.c.b16 %v5741, %v5711
        %v7152 = vpack.c.b16 %v5742, %v5712
        %v7153 = vpack.c.b16 %v5743, %v5713
        %v7154 = vpack.c.b16 %v5744, %v5714
        %v7155 = vpack.c.b16 %v5745, %v5715
        %v7156 = vpack.c.b16 %v5746, %v5716
        %v7157 = vpack.c.b16 %v5747, %v5717
        %v7158 = vpack.c.b16 %v5748, %v5718
        %v7159 = vpack.c.b16 %v5749, %v5719
        %v7160 = vpack.c.b16 %v5750, %v5720
        %v7161 = vpack.c.b16 %v5751, %v5721
        %v7162 = vpack.c.b16 %v5752, %v5722
        %v7163 = vpack.c.b16 %v5753, %v5723
        %v7164 = vpack.c.b16 %v5754, %v5724
        %v7165 = vpack.c.b16 %v5755, %v5725
        %v7166 = vpack.c.b16 %v5756, %v5726
        %v7167 = vpack.c.b16 %v5787, %v5757
        %v7168 = vpack.c.b16 %v5788, %v5758
        %v7169 = vpack.c.b16 %v5789, %v5759
        %v7170 = vpack.c.b16 %v5790, %v5760
        %v7171 = vpack.c.b16 %v5791, %v5761
        %v7172 = vpack.c.b16 %v5792, %v5762
        %v7173 = vpack.c.b16 %v5793, %v5763
        %v7174 = vpack.c.b16 %v5794, %v5764
        %v7175 = vpack.c.b16 %v5795, %v5765
        %v7176 = vpack.c.b16 %v5796, %v5766
        %v7177 = vpack.c.b16 %v5797, %v5767
        %v7178 = vpack.c.b16 %v5798, %v5768
        %v7179 = vpack.c.b16 %v5799, %v5769
        %v7180 = vpack.c.b16 %v5800, %v5770
        %v7181 = vpack.c.b16 %v5801, %v5771
        %v7182 = vpack.c.b16 %v5802, %v5772
        %v7183 = vpack.c.b16 %v5803, %v5773
        %v7184 = vpack.c.b16 %v5804, %v5774
        %v7185 = vpack.c.b16 %v5805, %v5775
        %v7186 = vpack.c.b16 %v5806, %v5776
        %v7187 = vpack.c.b16 %v5807, %v5777
        %v7188 = vpack.c.b16 %v5808, %v5778
        %v7189 = vpack.c.b16 %v5809, %v5779
        %v7190 = vpack.c.b16 %v5810, %v5780
        %v7191 = vpack.c.b16 %v5811, %v5781
        %v7192 = vpack.c.b16 %v5812, %v5782
        %v7193 = vpack.c.b16 %v5813, %v5783
        %v7194 = vpack.c.b16 %v5814, %v5784
        %v7195 = vpack.c.b16 %v5815, %v5785
        %v7196 = vpack.c.b16 %v5816, %v5786
        %v7197 = vpack.c.b16 %v5847, %v5817
        %v7198 = vpack.c.b16 %v5848, %v5818
        %v7199 = vpack.c.b16 %v5849, %v5819
        %v7200 = vpack.c.b16 %v5850, %v5820
        %v7201 = vpack.c.b16 %v5851, %v5821
        %v7202 = vpack.c.b16 %v5852, %v5822
        %v7203 = vpack.c.b16 %v5853, %v5823
        %v7204 = vpack.c.b16 %v5854, %v5824
        %v7205 = vpack.c.b16 %v5855, %v5825
        %v7206 = vpack.c.b16 %v5856, %v5826
        %v7207 = vpack.c.b16 %v5857, %v5827
        %v7208 = vpack.c.b16 %v5858, %v5828
        %v7209 = vpack.c.b16 %v5859, %v5829
        %v7210 = vpack.c.b16 %v5860, %v5830
        %v7211 = vpack.c.b16 %v5861, %v5831
        %v7212 = vpack.c.b16 %v5862, %v5832
        %v7213 = vpack.c.b16 %v5863, %v5833
        %v7214 = vpack.c.b16 %v5864, %v5834
        %v7215 = vpack.c.b16 %v5865, %v5835
        %v7216 = vpack.c.b16 %v5866, %v5836
        %v7217 = vpack.c.b16 %v5867, %v5837
        %v7218 = vpack.c.b16 %v5868, %v5838
        %v7219 = vpack.c.b16 %v5869, %v5839
        %v7220 = vpack.c.b16 %v5870, %v5840
        %v7221 = vpack.c.b16 %v5871, %v5841
        %v7222 = vpack.c.b16 %v5872, %v5842
        %v7223 = vpack.c.b16 %v5873, %v5843
        %v7224 = vpack.c.b16 %v5874, %v5844
        %v7225 = vpack.c.b16 %v5875, %v5845
        %v7226 = vpack.c.b16 %v5876, %v5846
        %v7227 = vpack.c.b16 %v5907, %v5877
        %v7228 = vpack.c.b16 %v5908, %v5878
        %v7229 = vpack.c.b16 %v5909, %v5879
        %v7230 = vpack.c.b16 %v5910, %v5880
        %v7231 = vpack.c.b16 %v5911, %v5881
        %v7232 = vpack.c.b16 %v5912, %v5882
        %v7233 = vpack.c.b16 %v5913, %v5883
        %v7234 = vpack.c.b16 %v5914, %v5884
        %v7235 = vpack.c.b16 %v5915, %v5885
        %v7236 = vpack.c.b16 %v5916, %v5886
        %v7237 = vpack.c.b16 %v5917, %v5887
        %v7238 = vpack.c.b16 %v5918, %v5888
        %v7239 = vpack.c.b16 %v5919, %v5889
        %v7240 = vpack.c.b16 %v5920, %v5890
        %v7241 = vpack.c.b16 %v5921, %v5891
        %v7242 = vpack.c.b16 %v5922, %v5892
        %v7243 = vpack.c.b16 %v5923, %v5893
        %v7244 = vpack.c.b16 %v5924, %v5894
        %v7245 = vpack.c.b16 %v5925, %v5895
        %v7246 = vpack.c.b16 %v5926, %v5896
        %v7247 = vpack.c.b16 %v5927, %v5897
        %v7248 = vpack.c.b16 %v5928, %v5898
        %v7249 = vpack.c.b16 %v5929, %v5899
        %v7250 = vpack.c.b16 %v5930, %v5900
        %v7251 = vpack.c.b16 %v5931, %v5901
        %v7252 = vpack.c.b16 %v5932, %v5902
        %v7253 = vpack.c.b16 %v5933, %v5903
        %v7254 = vpack.c.b16 %v5934, %v5904
        %v7255 = vpack.c.b16 %v5935, %v5905
        %v7256 = vpack.c.b16 %v5936, %v5906
        %v7257 = vpack.c.b16 %v5967, %v5937
        %v7258 = vpack.c.b16 %v5968, %v5938
        %v7259 = vpack.c.b16 %v5969, %v5939
        %v7260 = vpack.c.b16 %v5970, %v5940
        %v7261 = vpack.c.b16 %v5971, %v5941
        %v7262 = vpack.c.b16 %v5972, %v5942
        %v7263 = vpack.c.b16 %v5973, %v5943
        %v7264 = vpack.c.b16 %v5974, %v5944
        %v7265 = vpack.c.b16 %v5975, %v5945
        %v7266 = vpack.c.b16 %v5976, %v5946
        %v7267 = vpack.c.b16 %v5977, %v5947
        %v7268 = vpack.c.b16 %v5978, %v5948
        %v7269 = vpack.c.b16 %v5979, %v5949
        %v7270 = vpack.c.b16 %v5980, %v5950
        %v7271 = vpack.c.b16 %v5981, %v5951
        %v7272 = vpack.c.b16 %v5982, %v5952
        %v7273 = vpack.c.b16 %v5983, %v5953
        %v7274 = vpack.c.b16 %v5984, %v5954
        %v7275 = vpack.c.b16 %v5985, %v5955
        %v7276 = vpack.c.b16 %v5986, %v5956
        %v7277 = vpack.c.b16 %v5987, %v5957
        %v7278 = vpack.c.b16 %v5988, %v5958
        %v7279 = vpack.c.b16 %v5989, %v5959
        %v7280 = vpack.c.b16 %v5990, %v5960
        %v7281 = vpack.c.b16 %v5991, %v5961
        %v7282 = vpack.c.b16 %v5992, %v5962
        %v7283 = vpack.c.b16 %v5993, %v5963
        %v7284 = vpack.c.b16 %v5994, %v5964
        %v7285 = vpack.c.b16 %v5995, %v5965
        %v7286 = vpack.c.b16 %v5996, %v5966
        %v7287 = vpack.c.b16 %v6027, %v5997
        %v7288 = vpack.c.b16 %v6028, %v5998
        %v7289 = vpack.c.b16 %v6029, %v5999
        %v7290 = vpack.c.b16 %v6030, %v6000
        %v7291 = vpack.c.b16 %v6031, %v6001
        %v7292 = vpack.c.b16 %v6032, %v6002
        %v7293 = vpack.c.b16 %v6033, %v6003
        %v7294 = vpack.c.b16 %v6034, %v6004
        %v7295 = vpack.c.b16 %v6035, %v6005
        %v7296 = vpack.c.b16 %v6036, %v6006
        %v7297 = vpack.c.b16 %v6037, %v6007
        %v7298 = vpack.c.b16 %v6038, %v6008
        %v7299 = vpack.c.b16 %v6039, %v6009
        %v7300 = vpack.c.b16 %v6040, %v6010
        %v7301 = vpack.c.b16 %v6041, %v6011
        %v7302 = vpack.c.b16 %v6042, %v6012
        %v7303 = vpack.c.b16 %v6043, %v6013
        %v7304 = vpack.c.b16 %v6044, %v6014
        %v7305 = vpack.c.b16 %v6045, %v6015
        %v7306 = vpack.c.b16 %v6046, %v6016
        %v7307 = vpack.c.b16 %v6047, %v6017
        %v7308 = vpack.c.b16 %v6048, %v6018
        %v7309 = vpack.c.b16 %v6049, %v6019
        %v7310 = vpack.c.b16 %v6050, %v6020
        %v7311 = vpack.c.b16 %v6051, %v6021
        %v7312 = vpack.c.b16 %v6052, %v6022
        %v7313 = vpack.c.b16 %v6053, %v6023
        %v7314 = vpack.c.b16 %v6054, %v6024
        %v7315 = vpack.c.b16 %v6055, %v6025
        %v7316 = vpack.c.b16 %v6056, %v6026
        %v7317 = vpack.c.b16 %v6087, %v6057
        %v7318 = vpack.c.b16 %v6088, %v6058
        %v7319 = vpack.c.b16 %v6089, %v6059
        %v7320 = vpack.c.b16 %v6090, %v6060
        %v7321 = vpack.c.b16 %v6091, %v6061
        %v7322 = vpack.c.b16 %v6092, %v6062
        %v7323 = vpack.c.b16 %v6093, %v6063
        %v7324 = vpack.c.b16 %v6094, %v6064
        %v7325 = vpack.c.b16 %v6095, %v6065
        %v7326 = vpack.c.b16 %v6096, %v6066
        %v7327 = vpack.c.b16 %v6097, %v6067
        %v7328 = vpack.c.b16 %v6098, %v6068
        %v7329 = vpack.c.b16 %v6099, %v6069
        %v7330 = vpack.c.b16 %v6100, %v6070
        %v7331 = vpack.c.b16 %v6101, %v6071
        %v7332 = vpack.c.b16 %v6102, %v6072
        %v7333 = vpack.c.b16 %v6103, %v6073
        %v7334 = vpack.c.b16 %v6104, %v6074
        %v7335 = vpack.c.b16 %v6105, %v6075
        %v7336 = vpack.c.b16 %v6106, %v6076
        %v7337 = vpack.c.b16 %v6107, %v6077
        %v7338 = vpack.c.b16 %v6108, %v6078
        %v7339 = vpack.c.b16 %v6109, %v6079
        %v7340 = vpack.c.b16 %v6110, %v6080
        %v7341 = vpack.c.b16 %v6111, %v6081
        %v7342 = vpack.c.b16 %v6112, %v6082
        %v7343 = vpack.c.b16 %v6113, %v6083
        %v7344 = vpack.c.b16 %v6114, %v6084
        %v7345 = vpack.c.b16 %v6115, %v6085
        %v7346 = vpack.c.b16 %v6116, %v6086
        %v7347 = vpack.c.b16 %v6147, %v6117
        %v7348 = vpack.c.b16 %v6148, %v6118
        %v7349 = vpack.c.b16 %v6149, %v6119
        %v7350 = vpack.c.b16 %v6150, %v6120
        %v7351 = vpack.c.b16 %v6151, %v6121
        %v7352 = vpack.c.b16 %v6152, %v6122
        %v7353 = vpack.c.b16 %v6153, %v6123
        %v7354 = vpack.c.b16 %v6154, %v6124
        %v7355 = vpack.c.b16 %v6155, %v6125
        %v7356 = vpack.c.b16 %v6156, %v6126
        %v7357 = vpack.c.b16 %v6157, %v6127
        %v7358 = vpack.c.b16 %v6158, %v6128
        %v7359 = vpack.c.b16 %v6159, %v6129
        %v7360 = vpack.c.b16 %v6160, %v6130
        %v7361 = vpack.c.b16 %v6161, %v6131
        %v7362 = vpack.c.b16 %v6162, %v6132
        %v7363 = vpack.c.b16 %v6163, %v6133
        %v7364 = vpack.c.b16 %v6164, %v6134
        %v7365 = vpack.c.b16 %v6165, %v6135
        %v7366 = vpack.c.b16 %v6166, %v6136
        %v7367 = vpack.c.b16 %v6167, %v6137
        %v7368 = vpack.c.b16 %v6168, %v6138
        %v7369 = vpack.c.b16 %v6169, %v6139
        %v7370 = vpack.c.b16 %v6170, %v6140
        %v7371 = vpack.c.b16 %v6171, %v6141
        %v7372 = vpack.c.b16 %v6172, %v6142
        %v7373 = vpack.c.b16 %v6173, %v6143
        %v7374 = vpack.c.b16 %v6174, %v6144
        %v7375 = vpack.c.b16 %v6175, %v6145
        %v7376 = vpack.c.b16 %v6176, %v6146
        %v7377 = vpack.c.b16 %v6207, %v6177
        %v7378 = vpack.c.b16 %v6208, %v6178
        %v7379 = vpack.c.b16 %v6209, %v6179
        %v7380 = vpack.c.b16 %v6210, %v6180
        %v7381 = vpack.c.b16 %v6211, %v6181
        %v7382 = vpack.c.b16 %v6212, %v6182
        %v7383 = vpack.c.b16 %v6213, %v6183
        %v7384 = vpack.c.b16 %v6214, %v6184
        %v7385 = vpack.c.b16 %v6215, %v6185
        %v7386 = vpack.c.b16 %v6216, %v6186
        %v7387 = vpack.c.b16 %v6217, %v6187
        %v7388 = vpack.c.b16 %v6218, %v6188
        %v7389 = vpack.c.b16 %v6219, %v6189
        %v7390 = vpack.c.b16 %v6220, %v6190
        %v7391 = vpack.c.b16 %v6221, %v6191
        %v7392 = vpack.c.b16 %v6222, %v6192
        %v7393 = vpack.c.b16 %v6223, %v6193
        %v7394 = vpack.c.b16 %v6224, %v6194
        %v7395 = vpack.c.b16 %v6225, %v6195
        %v7396 = vpack.c.b16 %v6226, %v6196
        %v7397 = vpack.c.b16 %v6227, %v6197
        %v7398 = vpack.c.b16 %v6228, %v6198
        %v7399 = vpack.c.b16 %v6229, %v6199
        %v7400 = vpack.c.b16 %v6230, %v6200
        %v7401 = vpack.c.b16 %v6231, %v6201
        %v7402 = vpack.c.b16 %v6232, %v6202
        %v7403 = vpack.c.b16 %v6233, %v6203
        %v7404 = vpack.c.b16 %v6234, %v6204
        %v7405 = vpack.c.b16 %v6235, %v6205
        %v7406 = vpack.c.b16 %v6236, %v6206
        %v7407 = vpack.c.b16 %v6267, %v6237
        %v7408 = vpack.c.b16 %v6268, %v6238
        %v7409 = vpack.c.b16 %v6269, %v6239
        %v7410 = vpack.c.b16 %v6270, %v6240
        %v7411 = vpack.c.b16 %v6271, %v6241
        %v7412 = vpack.c.b16 %v6272, %v6242
        %v7413 = vpack.c.b16 %v6273, %v6243
        %v7414 = vpack.c.b16 %v6274, %v6244
        %v7415 = vpack.c.b16 %v6275, %v6245
        %v7416 = vpack.c.b16 %v6276, %v6246
        %v7417 = vpack.c.b16 %v6277, %v6247
        %v7418 = vpack.c.b16 %v6278, %v6248
        %v7419 = vpack.c.b16 %v6279, %v6249
        %v7420 = vpack.c.b16 %v6280, %v6250
        %v7421 = vpack.c.b16 %v6281, %v6251
        %v7422 = vpack.c.b16 %v6282, %v6252
        %v7423 = vpack.c.b16 %v6283, %v6253
        %v7424 = vpack.c.b16 %v6284, %v6254
        %v7425 = vpack.c.b16 %v6285, %v6255
        %v7426 = vpack.c.b16 %v6286, %v6256
        %v7427 = vpack.c.b16 %v6287, %v6257
        %v7428 = vpack.c.b16 %v6288, %v6258
        %v7429 = vpack.c.b16 %v6289, %v6259
        %v7430 = vpack.c.b16 %v6290, %v6260
        %v7431 = vpack.c.b16 %v6291, %v6261
        %v7432 = vpack.c.b16 %v6292, %v6262
        %v7433 = vpack.c.b16 %v6293, %v6263
        %v7434 = vpack.c.b16 %v6294, %v6264
        %v7435 = vpack.c.b16 %v6295, %v6265
        %v7436 = vpack.c.b16 %v6296, %v6266
        %v7437 = vpack.c.b16 %v6327, %v6297
        %v7438 = vpack.c.b16 %v6328, %v6298
        %v7439 = vpack.c.b16 %v6329, %v6299
        %v7440 = vpack.c.b16 %v6330, %v6300
        %v7441 = vpack.c.b16 %v6331, %v6301
        %v7442 = vpack.c.b16 %v6332, %v6302
        %v7443 = vpack.c.b16 %v6333, %v6303
        %v7444 = vpack.c.b16 %v6334, %v6304
        %v7445 = vpack.c.b16 %v6335, %v6305
        %v7446 = vpack.c.b16 %v6336, %v6306
        %v7447 = vpack.c.b16 %v6337, %v6307
        %v7448 = vpack.c.b16 %v6338, %v6308
        %v7449 = vpack.c.b16 %v6339, %v6309
        %v7450 = vpack.c.b16 %v6340, %v6310
        %v7451 = vpack.c.b16 %v6341, %v6311
        %v7452 = vpack.c.b16 %v6342, %v6312
        %v7453 = vpack.c.b16 %v6343, %v6313
        %v7454 = vpack.c.b16 %v6344, %v6314
        %v7455 = vpack.c.b16 %v6345, %v6315
        %v7456 = vpack.c.b16 %v6346, %v6316
        %v7457 = vpack.c.b16 %v6347, %v6317
        %v7458 = vpack.c.b16 %v6348, %v6318
        %v7459 = vpack.c.b16 %v6349, %v6319
        %v7460 = vpack.c.b16 %v6350, %v6320
        %v7461 = vpack.c.b16 %v6351, %v6321
        %v7462 = vpack.c.b16 %v6352, %v6322
        %v7463 = vpack.c.b16 %v6353, %v6323
        %v7464 = vpack.c.b16 %v6354, %v6324
        %v7465 = vpack.c.b16 %v6355, %v6325
        %v7466 = vpack.c.b16 %v6356, %v6326
        %v7467 = vpack.c.b16 %v6387, %v6357
        %v7468 = vpack.c.b16 %v6388, %v6358
        %v7469 = vpack.c.b16 %v6389, %v6359
        %v7470 = vpack.c.b16 %v6390, %v6360
        %v7471 = vpack.c.b16 %v6391, %v6361
        %v7472 = vpack.c.b16 %v6392, %v6362
        %v7473 = vpack.c.b16 %v6393, %v6363
        %v7474 = vpack.c.b16 %v6394, %v6364
        %v7475 = vpack.c.b16 %v6395, %v6365
        %v7476 = vpack.c.b16 %v6396, %v6366
        %v7477 = vpack.c.b16 %v6397, %v6367
        %v7478 = vpack.c.b16 %v6398, %v6368
        %v7479 = vpack.c.b16 %v6399, %v6369
        %v7480 = vpack.c.b16 %v6400, %v6370
        %v7481 = vpack.c.b16 %v6401, %v6371
        %v7482 = vpack.c.b16 %v6402, %v6372
        %v7483 = vpack.c.b16 %v6403, %v6373
        %v7484 = vpack.c.b16 %v6404, %v6374
        %v7485 = vpack.c.b16 %v6405, %v6375
        %v7486 = vpack.c.b16 %v6406, %v6376
        %v7487 = vpack.c.b16 %v6407, %v6377
        %v7488 = vpack.c.b16 %v6408, %v6378
        %v7489 = vpack.c.b16 %v6409, %v6379
        %v7490 = vpack.c.b16 %v6410, %v6380
        %v7491 = vpack.c.b16 %v6411, %v6381
        %v7492 = vpack.c.b16 %v6412, %v6382
        %v7493 = vpack.c.b16 %v6413, %v6383
        %v7494 = vpack.c.b16 %v6414, %v6384
        %v7495 = vpack.c.b16 %v6415, %v6385
        %v7496 = vpack.c.b16 %v6416, %v6386
        %v7497 = vpack.c.b16 %v6447, %v6417
        %v7498 = vpack.c.b16 %v6448, %v6418
        %v7499 = vpack.c.b16 %v6449, %v6419
        %v7500 = vpack.c.b16 %v6450, %v6420
        %v7501 = vpack.c.b16 %v6451, %v6421
        %v7502 = vpack.c.b16 %v6452, %v6422
        %v7503 = vpack.c.b16 %v6453, %v6423
        %v7504 = vpack.c.b16 %v6454, %v6424
        %v7505 = vpack.c.b16 %v6455, %v6425
        %v7506 = vpack.c.b16 %v6456, %v6426
        %v7507 = vpack.c.b16 %v6457, %v6427
        %v7508 = vpack.c.b16 %v6458, %v6428
        %v7509 = vpack.c.b16 %v6459, %v6429
        %v7510 = vpack.c.b16 %v6460, %v6430
        %v7511 = vpack.c.b16 %v6461, %v6431
        %v7512 = vpack.c.b16 %v6462, %v6432
        %v7513 = vpack.c.b16 %v6463, %v6433
        %v7514 = vpack.c.b16 %v6464, %v6434
        %v7515 = vpack.c.b16 %v6465, %v6435
        %v7516 = vpack.c.b16 %v6466, %v6436
        %v7517 = vpack.c.b16 %v6467, %v6437
        %v7518 = vpack.c.b16 %v6468, %v6438
        %v7519 = vpack.c.b16 %v6469, %v6439
        %v7520 = vpack.c.b16 %v6470, %v6440
        %v7521 = vpack.c.b16 %v6471, %v6441
        %v7522 = vpack.c.b16 %v6472, %v6442
        %v7523 = vpack.c.b16 %v6473, %v6443
        %v7524 = vpack.c.b16 %v6474, %v6444
        %v7525 = vpack.c.b16 %v6475, %v6445
        %v7526 = vpack.c.b16 %v6476, %v6446
        %v7527 = vpack.c.b16 %v6507, %v6477
        %v7528 = vpack.c.b16 %v6508, %v6478
        %v7529 = vpack.c.b16 %v6509, %v6479
        %v7530 = vpack.c.b16 %v6510, %v6480
        %v7531 = vpack.c.b16 %v6511, %v6481
        %v7532 = vpack.c.b16 %v6512, %v6482
        %v7533 = vpack.c.b16 %v6513, %v6483
        %v7534 = vpack.c.b16 %v6514, %v6484
        %v7535 = vpack.c.b16 %v6515, %v6485
        %v7536 = vpack.c.b16 %v6516, %v6486
        %v7537 = vpack.c.b16 %v6517, %v6487
        %v7538 = vpack.c.b16 %v6518, %v6488
        %v7539 = vpack.c.b16 %v6519, %v6489
        %v7540 = vpack.c.b16 %v6520, %v6490
        %v7541 = vpack.c.b16 %v6521, %v6491
        %v7542 = vpack.c.b16 %v6522, %v6492
        %v7543 = vpack.c.b16 %v6523, %v6493
        %v7544 = vpack.c.b16 %v6524, %v6494
        %v7545 = vpack.c.b16 %v6525, %v6495
        %v7546 = vpack.c.b16 %v6526, %v6496
        %v7547 = vpack.c.b16 %v6527, %v6497
        %v7548 = vpack.c.b16 %v6528, %v6498
        %v7549 = vpack.c.b16 %v6529, %v6499
        %v7550 = vpack.c.b16 %v6530, %v6500
        %v7551 = vpack.c.b16 %v6531, %v6501
        %v7552 = vpack.c.b16 %v6532, %v6502
        %v7553 = vpack.c.b16 %v6533, %v6503
        %v7554 = vpack.c.b16 %v6534, %v6504
        %v7555 = vpack.c.b16 %v6535, %v6505
        %v7556 = vpack.c.b16 %v6536, %v6506
        %v7557 = vpack.c.b16 %v6567, %v6537
        %v7558 = vpack.c.b16 %v6568, %v6538
        %v7559 = vpack.c.b16 %v6569, %v6539
        %v7560 = vpack.c.b16 %v6570, %v6540
        %v7561 = vpack.c.b16 %v6571, %v6541
        %v7562 = vpack.c.b16 %v6572, %v6542
        %v7563 = vpack.c.b16 %v6573, %v6543
        %v7564 = vpack.c.b16 %v6574, %v6544
        %v7565 = vpack.c.b16 %v6575, %v6545
        %v7566 = vpack.c.b16 %v6576, %v6546
        %v7567 = vpack.c.b16 %v6577, %v6547
        %v7568 = vpack.c.b16 %v6578, %v6548
        %v7569 = vpack.c.b16 %v6579, %v6549
        %v7570 = vpack.c.b16 %v6580, %v6550
        %v7571 = vpack.c.b16 %v6581, %v6551
        %v7572 = vpack.c.b16 %v6582, %v6552
        %v7573 = vpack.c.b16 %v6583, %v6553
        %v7574 = vpack.c.b16 %v6584, %v6554
        %v7575 = vpack.c.b16 %v6585, %v6555
        %v7576 = vpack.c.b16 %v6586, %v6556
        %v7577 = vpack.c.b16 %v6587, %v6557
        %v7578 = vpack.c.b16 %v6588, %v6558
        %v7579 = vpack.c.b16 %v6589, %v6559
        %v7580 = vpack.c.b16 %v6590, %v6560
        %v7581 = vpack.c.b16 %v6591, %v6561
        %v7582 = vpack.c.b16 %v6592, %v6562
        %v7583 = vpack.c.b16 %v6593, %v6563
        %v7584 = vpack.c.b16 %v6594, %v6564
        %v7585 = vpack.c.b16 %v6595, %v6565
        %v7586 = vpack.c.b16 %v6596, %v6566
        %v7587 = vpack.c.b16 %v6627, %v6597
        %v7588 = vpack.c.b16 %v6628, %v6598
        %v7589 = vpack.c.b16 %v6629, %v6599
        %v7590 = vpack.c.b16 %v6630, %v6600
        %v7591 = vpack.c.b16 %v6631, %v6601
        %v7592 = vpack.c.b16 %v6632, %v6602
        %v7593 = vpack.c.b16 %v6633, %v6603
        %v7594 = vpack.c.b16 %v6634, %v6604
        %v7595 = vpack.c.b16 %v6635, %v6605
        %v7596 = vpack.c.b16 %v6636, %v6606
        %v7597 = vpack.c.b16 %v6637, %v6607
        %v7598 = vpack.c.b16 %v6638, %v6608
        %v7599 = vpack.c.b16 %v6639, %v6609
        %v7600 = vpack.c.b16 %v6640, %v6610
        %v7601 = vpack.c.b16 %v6641, %v6611
        %v7602 = vpack.c.b16 %v6642, %v6612
        %v7603 = vpack.c.b16 %v6643, %v6613
        %v7604 = vpack.c.b16 %v6644, %v6614
        %v7605 = vpack.c.b16 %v6645, %v6615
        %v7606 = vpack.c.b16 %v6646, %v6616
        %v7607 = vpack.c.b16 %v6647, %v6617
        %v7608 = vpack.c.b16 %v6648, %v6618
        %v7609 = vpack.c.b16 %v6649, %v6619
        %v7610 = vpack.c.b16 %v6650, %v6620
        %v7611 = vpack.c.b16 %v6651, %v6621
        %v7612 = vpack.c.b16 %v6652, %v6622
        %v7613 = vpack.c.b16 %v6653, %v6623
        %v7614 = vpack.c.b16 %v6654, %v6624
        %v7615 = vpack.c.b16 %v6655, %v6625
        %v7616 = vpack.c.b16 %v6656, %v6626
        %8577 = vmatprep.subr.bf16.mxu0 %v6658
        %8578 = vmatpush1.bf16.msra.mxu0 %v6657
        %8579 = vmatprep.subr.bf16.mxu0 %v6688
        %8580 = vmatpush1.bf16.msra.mxu0 %v6687
        %8581 = vmatprep.subr.bf16.mxu0 %v6718
        %8582 = vmatpush1.bf16.msra.mxu0 %v6717
        %8583 = vmatprep.subr.bf16.mxu0 %v6748
        %8584 = vmatpush1.bf16.msra.mxu0 %v6747
        %8585 = vmatprep.subr.bf16.mxu0 %v6778
        %8586 = vmatpush1.bf16.msra.mxu0 %v6777
        %8587 = vmatprep.subr.bf16.mxu0 %v6808
        %8588 = vmatpush1.bf16.msra.mxu0 %v6807
        %8589 = vmatprep.subr.bf16.mxu0 %v6838
        %8590 = vmatpush1.bf16.msra.mxu0 %v6837
        %8591 = vmatprep.subr.bf16.mxu0 %v6868
        %8592 = vmatpush1.bf16.msra.mxu0 %v6867
        %8593 = vmatprep.subr.bf16.mxu0 %v6898
        %8594 = vmatpush1.bf16.msra.mxu0 %v6897
        %8595 = vmatprep.subr.bf16.mxu0 %v6928
        %8596 = vmatpush1.bf16.msra.mxu0 %v6927
        %8597 = vmatprep.subr.bf16.mxu0 %v6958
        %8598 = vmatpush1.bf16.msra.mxu0 %v6957
        %8599 = vmatprep.subr.bf16.mxu0 %v6988
        %8600 = vmatpush1.bf16.msra.mxu0 %v6987
        %8601 = vmatprep.subr.bf16.mxu0 %v7018
        %8602 = vmatpush1.bf16.msra.mxu0 %v7017
        %8603 = vmatprep.subr.bf16.mxu0 %v7048
        %8604 = vmatpush1.bf16.msra.mxu0 %v7047
        %8605 = vmatprep.subr.bf16.mxu0 %v7078
        %8606 = vmatpush1.bf16.msra.mxu0 %v7077
        %8607 = vmatprep.subr.bf16.mxu0 %v7108
        %8608 = vmatpush1.bf16.msra.mxu0 %v7107
        %8609 = vmatprep.mubr.bf16.mxu0 %v2656
        %8610 = vmatmul.mubr.bf16.gmra.mrb[0].mxu0 %v2655
        %v8611 = vpop.f32.mrb[0].mxu0
        %v8612 = vadd.f32 %v3630, %v8611
        %v8613 = vpop.f32.mrb[0].mxu0
        %v8614 = vadd.f32 %v3634, %v8613
        %v8615 = vpop.f32.mrb[0].mxu0
        %v8616 = vpop.f32.mrb[0].mxu0
        %8617 = vdwg.mxu0
        %8618 = vmatprep.subr.bf16.mxu0 %v7138
        %8619 = vmatpush1.bf16.msra.mxu0 %v7137
        %8620 = vmatprep.subr.bf16.mxu0 %v7168
        %8621 = vmatpush1.bf16.msra.mxu0 %v7167
        %8622 = vmatprep.subr.bf16.mxu0 %v7198
        %8623 = vmatpush1.bf16.msra.mxu0 %v7197
        %8624 = vmatprep.subr.bf16.mxu0 %v7228
        %8625 = vmatpush1.bf16.msra.mxu0 %v7227
        %8626 = vmatprep.subr.bf16.mxu0 %v7258
        %8627 = vmatpush1.bf16.msra.mxu0 %v7257
        %8628 = vmatprep.subr.bf16.mxu0 %v7288
        %8629 = vmatpush1.bf16.msra.mxu0 %v7287
        %8630 = vmatprep.subr.bf16.mxu0 %v7318
        %8631 = vmatpush1.bf16.msra.mxu0 %v7317
        %8632 = vmatprep.subr.bf16.mxu0 %v7348
        %8633 = vmatpush1.bf16.msra.mxu0 %v7347
        %8634 = vmatprep.subr.bf16.mxu0 %v7378
        %8635 = vmatpush1.bf16.msra.mxu0 %v7377
        %8636 = vmatprep.subr.bf16.mxu0 %v7408
        %8637 = vmatpush1.bf16.msra.mxu0 %v7407
        %8638 = vmatprep.subr.bf16.mxu0 %v7438
        %8639 = vmatpush1.bf16.msra.mxu0 %v7437
        %8640 = vmatprep.subr.bf16.mxu0 %v7468
        %8641 = vmatpush1.bf16.msra.mxu0 %v7467
        %8642 = vmatprep.subr.bf16.mxu0 %v7498
        %8643 = vmatpush1.bf16.msra.mxu0 %v7497
        %8644 = vmatprep.subr.bf16.mxu0 %v7528
        %8645 = vmatpush1.bf16.msra.mxu0 %v7527
        %8646 = vmatprep.subr.bf16.mxu0 %v7558
        %8647 = vmatpush1.bf16.msra.mxu0 %v7557
        %8648 = vmatprep.subr.bf16.mxu0 %v7588
        %8649 = vmatpush1.bf16.msra.mxu0 %v7587
        %8650 = vmatprep.mubr.bf16.mxu0 %v2658
        %8651 = vmatmul.mubr.bf16.gmra.mrb[0].mxu0 %v2657
        %v8652 = vpop.f32.mrb[0].mxu0
        %v8653 = vadd.f32 %v8612, %v8652
        %v8654 = vpop.f32.mrb[0].mxu0
        %v8655 = vadd.f32 %v8614, %v8654
        %v8656 = vpop.f32.mrb[0].mxu0
        %v8657 = vpop.f32.mrb[0].mxu0
        %8658 = vdwg.mxu0
        %8659 = vmatprep.subr.bf16.mxu0 %v6660
        %8660 = vmatpush1.bf16.msra.mxu0 %v6659
        %8661 = vmatprep.subr.bf16.mxu0 %v6690
        %8662 = vmatpush1.bf16.msra.mxu0 %v6689
        %8663 = vmatprep.subr.bf16.mxu0 %v6720
        %8664 = vmatpush1.bf16.msra.mxu0 %v6719
        %8665 = vmatprep.subr.bf16.mxu0 %v6750
        %8666 = vmatpush1.bf16.msra.mxu0 %v6749
        %8667 = vmatprep.subr.bf16.mxu0 %v6780
        %8668 = vmatpush1.bf16.msra.mxu0 %v6779
        %8669 = vmatprep.subr.bf16.mxu0 %v6810
        %8670 = vmatpush1.bf16.msra.mxu0 %v6809
        %8671 = vmatprep.subr.bf16.mxu0 %v6840
        %8672 = vmatpush1.bf16.msra.mxu0 %v6839
        %8673 = vmatprep.subr.bf16.mxu0 %v6870
        %8674 = vmatpush1.bf16.msra.mxu0 %v6869
        %8675 = vmatprep.subr.bf16.mxu0 %v6900
        %8676 = vmatpush1.bf16.msra.mxu0 %v6899
        %8677 = vmatprep.subr.bf16.mxu0 %v6930
        %8678 = vmatpush1.bf16.msra.mxu0 %v6929
        %8679 = vmatprep.subr.bf16.mxu0 %v6960
        %8680 = vmatpush1.bf16.msra.mxu0 %v6959
        %8681 = vmatprep.subr.bf16.mxu0 %v6990
        %8682 = vmatpush1.bf16.msra.mxu0 %v6989
        %8683 = vmatprep.subr.bf16.mxu0 %v7020
        %8684 = vmatpush1.bf16.msra.mxu0 %v7019
        %8685 = vmatprep.subr.bf16.mxu0 %v7050
        %8686 = vmatpush1.bf16.msra.mxu0 %v7049
        %8687 = vmatprep.subr.bf16.mxu0 %v7080
        %8688 = vmatpush1.bf16.msra.mxu0 %v7079
        %8689 = vmatprep.subr.bf16.mxu0 %v7110
        %8690 = vmatpush1.bf16.msra.mxu0 %v7109
        %8691 = vmatprep.mubr.bf16.mxu0 %v2656
        %8692 = vmatmul.mubr.bf16.gmra.mrb[0].mxu0 %v2655
        %v8693 = vpop.f32.mrb[0].mxu0
        %v8694 = vadd.f32 %v3638, %v8693
        %v8695 = vpop.f32.mrb[0].mxu0
        %v8696 = vadd.f32 %v3642, %v8695
        %v8697 = vpop.f32.mrb[0].mxu0
        %v8698 = vpop.f32.mrb[0].mxu0
        %8699 = vdwg.mxu0
        %8700 = vmatprep.subr.bf16.mxu0 %v7140
        %8701 = vmatpush1.bf16.msra.mxu0 %v7139
        %8702 = vmatprep.subr.bf16.mxu0 %v7170
        %8703 = vmatpush1.bf16.msra.mxu0 %v7169
        %8704 = vmatprep.subr.bf16.mxu0 %v7200
        %8705 = vmatpush1.bf16.msra.mxu0 %v7199
        %8706 = vmatprep.subr.bf16.mxu0 %v7230
        %8707 = vmatpush1.bf16.msra.mxu0 %v7229
        %8708 = vmatprep.subr.bf16.mxu0 %v7260
        %8709 = vmatpush1.bf16.msra.mxu0 %v7259
        %8710 = vmatprep.subr.bf16.mxu0 %v7290
        %8711 = vmatpush1.bf16.msra.mxu0 %v7289
        %8712 = vmatprep.subr.bf16.mxu0 %v7320
        %8713 = vmatpush1.bf16.msra.mxu0 %v7319
        %8714 = vmatprep.subr.bf16.mxu0 %v7350
        %8715 = vmatpush1.bf16.msra.mxu0 %v7349
        %8716 = vmatprep.subr.bf16.mxu0 %v7380
        %8717 = vmatpush1.bf16.msra.mxu0 %v7379
        %8718 = vmatprep.subr.bf16.mxu0 %v7410
        %8719 = vmatpush1.bf16.msra.mxu0 %v7409
        %8720 = vmatprep.subr.bf16.mxu0 %v7440
        %8721 = vmatpush1.bf16.msra.mxu0 %v7439
        %8722 = vmatprep.subr.bf16.mxu0 %v7470
        %8723 = vmatpush1.bf16.msra.mxu0 %v7469
        %8724 = vmatprep.subr.bf16.mxu0 %v7500
        %8725 = vmatpush1.bf16.msra.mxu0 %v7499
        %8726 = vmatprep.subr.bf16.mxu0 %v7530
        %8727 = vmatpush1.bf16.msra.mxu0 %v7529
        %8728 = vmatprep.subr.bf16.mxu0 %v7560
        %8729 = vmatpush1.bf16.msra.mxu0 %v7559
        %8730 = vmatprep.subr.bf16.mxu0 %v7590
        %8731 = vmatpush1.bf16.msra.mxu0 %v7589
        %8732 = vmatprep.mubr.bf16.mxu0 %v2658
        %8733 = vmatmul.mubr.bf16.gmra.mrb[0].mxu0 %v2657
        %v8734 = vpop.f32.mrb[0].mxu0
        %v8735 = vadd.f32 %v8694, %v8734
        %v8736 = vpop.f32.mrb[0].mxu0
        %v8737 = vadd.f32 %v8696, %v8736
        %v8738 = vpop.f32.mrb[0].mxu0
        %v8739 = vpop.f32.mrb[0].mxu0
        %8740 = vdwg.mxu0
        %8741 = vmatprep.subr.bf16.mxu0 %v6662
        %8742 = vmatpush1.bf16.msra.mxu0 %v6661
        %8743 = vmatprep.subr.bf16.mxu0 %v6692
        %8744 = vmatpush1.bf16.msra.mxu0 %v6691
        %8745 = vmatprep.subr.bf16.mxu0 %v6722
        %8746 = vmatpush1.bf16.msra.mxu0 %v6721
        %8747 = vmatprep.subr.bf16.mxu0 %v6752
        %8748 = vmatpush1.bf16.msra.mxu0 %v6751
        %8749 = vmatprep.subr.bf16.mxu0 %v6782
        %8750 = vmatpush1.bf16.msra.mxu0 %v6781
        %8751 = vmatprep.subr.bf16.mxu0 %v6812
        %8752 = vmatpush1.bf16.msra.mxu0 %v6811
        %8753 = vmatprep.subr.bf16.mxu0 %v6842
        %8754 = vmatpush1.bf16.msra.mxu0 %v6841
        %8755 = vmatprep.subr.bf16.mxu0 %v6872
        %8756 = vmatpush1.bf16.msra.mxu0 %v6871
        %8757 = vmatprep.subr.bf16.mxu0 %v6902
        %8758 = vmatpush1.bf16.msra.mxu0 %v6901
        %8759 = vmatprep.subr.bf16.mxu0 %v6932
        %8760 = vmatpush1.bf16.msra.mxu0 %v6931
        %8761 = vmatprep.subr.bf16.mxu0 %v6962
        %8762 = vmatpush1.bf16.msra.mxu0 %v6961
        %8763 = vmatprep.subr.bf16.mxu0 %v6992
        %8764 = vmatpush1.bf16.msra.mxu0 %v6991
        %8765 = vmatprep.subr.bf16.mxu0 %v7022
        %8766 = vmatpush1.bf16.msra.mxu0 %v7021
        %8767 = vmatprep.subr.bf16.mxu0 %v7052
        %8768 = vmatpush1.bf16.msra.mxu0 %v7051
        %8769 = vmatprep.subr.bf16.mxu0 %v7082
        %8770 = vmatpush1.bf16.msra.mxu0 %v7081
        %8771 = vmatprep.subr.bf16.mxu0 %v7112
        %8772 = vmatpush1.bf16.msra.mxu0 %v7111
        %8773 = vmatprep.mubr.bf16.mxu0 %v2656
        %8774 = vmatmul.mubr.bf16.gmra.mrb[0].mxu0 %v2655
        %v8775 = vpop.f32.mrb[0].mxu0
        %v8776 = vadd.f32 %v3646, %v8775
        %v8777 = vpop.f32.mrb[0].mxu0
        %v8778 = vadd.f32 %v3650, %v8777
        %v8779 = vpop.f32.mrb[0].mxu0
        %v8780 = vpop.f32.mrb[0].mxu0
        %8781 = vdwg.mxu0
        %8782 = vmatprep.subr.bf16.mxu0 %v7142
        %8783 = vmatpush1.bf16.msra.mxu0 %v7141
        %8784 = vmatprep.subr.bf16.mxu0 %v7172
        %8785 = vmatpush1.bf16.msra.mxu0 %v7171
        %8786 = vmatprep.subr.bf16.mxu0 %v7202
        %8787 = vmatpush1.bf16.msra.mxu0 %v7201
        %8788 = vmatprep.subr.bf16.mxu0 %v7232
        %8789 = vmatpush1.bf16.msra.mxu0 %v7231
        %8790 = vmatprep.subr.bf16.mxu0 %v7262
        %8791 = vmatpush1.bf16.msra.mxu0 %v7261
        %8792 = vmatprep.subr.bf16.mxu0 %v7292
        %8793 = vmatpush1.bf16.msra.mxu0 %v7291
        %8794 = vmatprep.subr.bf16.mxu0 %v7322
        %8795 = vmatpush1.bf16.msra.mxu0 %v7321
        %8796 = vmatprep.subr.bf16.mxu0 %v7352
        %8797 = vmatpush1.bf16.msra.mxu0 %v7351
        %8798 = vmatprep.subr.bf16.mxu0 %v7382
        %8799 = vmatpush1.bf16.msra.mxu0 %v7381
        %8800 = vmatprep.subr.bf16.mxu0 %v7412
        %8801 = vmatpush1.bf16.msra.mxu0 %v7411
        %8802 = vmatprep.subr.bf16.mxu0 %v7442
        %8803 = vmatpush1.bf16.msra.mxu0 %v7441
        %8804 = vmatprep.subr.bf16.mxu0 %v7472
        %8805 = vmatpush1.bf16.msra.mxu0 %v7471
        %8806 = vmatprep.subr.bf16.mxu0 %v7502
        %8807 = vmatpush1.bf16.msra.mxu0 %v7501
        %8808 = vmatprep.subr.bf16.mxu0 %v7532
        %8809 = vmatpush1.bf16.msra.mxu0 %v7531
        %8810 = vmatprep.subr.bf16.mxu0 %v7562
        %8811 = vmatpush1.bf16.msra.mxu0 %v7561
        %8812 = vmatprep.subr.bf16.mxu0 %v7592
        %8813 = vmatpush1.bf16.msra.mxu0 %v7591
        %8814 = vmatprep.mubr.bf16.mxu0 %v2658
        %8815 = vmatmul.mubr.bf16.gmra.mrb[0].mxu0 %v2657
        %v8816 = vpop.f32.mrb[0].mxu0
        %v8817 = vadd.f32 %v8776, %v8816
        %v8818 = vpop.f32.mrb[0].mxu0
        %v8819 = vadd.f32 %v8778, %v8818
        %v8820 = vpop.f32.mrb[0].mxu0
        %v8821 = vpop.f32.mrb[0].mxu0
        %8822 = vdwg.mxu0
        %8823 = vmatprep.subr.bf16.mxu0 %v6664
        %8824 = vmatpush1.bf16.msra.mxu0 %v6663
        %8825 = vmatprep.subr.bf16.mxu0 %v6694
        %8826 = vmatpush1.bf16.msra.mxu0 %v6693
        %8827 = vmatprep.subr.bf16.mxu0 %v6724
        %8828 = vmatpush1.bf16.msra.mxu0 %v6723
        %8829 = vmatprep.subr.bf16.mxu0 %v6754
        %8830 = vmatpush1.bf16.msra.mxu0 %v6753
        %8831 = vmatprep.subr.bf16.mxu0 %v6784
        %8832 = vmatpush1.bf16.msra.mxu0 %v6783
        %8833 = vmatprep.subr.bf16.mxu0 %v6814
        %8834 = vmatpush1.bf16.msra.mxu0 %v6813
        %8835 = vmatprep.subr.bf16.mxu0 %v6844
        %8836 = vmatpush1.bf16.msra.mxu0 %v6843
        %8837 = vmatprep.subr.bf16.mxu0 %v6874
        %8838 = vmatpush1.bf16.msra.mxu0 %v6873
        %8839 = vmatprep.subr.bf16.mxu0 %v6904
        %8840 = vmatpush1.bf16.msra.mxu0 %v6903
        %8841 = vmatprep.subr.bf16.mxu0 %v6934
        %8842 = vmatpush1.bf16.msra.mxu0 %v6933
        %8843 = vmatprep.subr.bf16.mxu0 %v6964
        %8844 = vmatpush1.bf16.msra.mxu0 %v6963
        %8845 = vmatprep.subr.bf16.mxu0 %v6994
        %8846 = vmatpush1.bf16.msra.mxu0 %v6993
        %8847 = vmatprep.subr.bf16.mxu0 %v7024
        %8848 = vmatpush1.bf16.msra.mxu0 %v7023
        %8849 = vmatprep.subr.bf16.mxu0 %v7054
        %8850 = vmatpush1.bf16.msra.mxu0 %v7053
        %8851 = vmatprep.subr.bf16.mxu0 %v7084
        %8852 = vmatpush1.bf16.msra.mxu0 %v7083
        %8853 = vmatprep.subr.bf16.mxu0 %v7114
        %8854 = vmatpush1.bf16.msra.mxu0 %v7113
        %8855 = vmatprep.mubr.bf16.mxu0 %v2656
        %8856 = vmatmul.mubr.bf16.gmra.mrb[0].mxu0 %v2655
        %v8857 = vpop.f32.mrb[0].mxu0
        %v8858 = vadd.f32 %v3654, %v8857
        %v8859 = vpop.f32.mrb[0].mxu0
        %v8860 = vadd.f32 %v3658, %v8859
        %v8861 = vpop.f32.mrb[0].mxu0
        %v8862 = vpop.f32.mrb[0].mxu0
        %8863 = vdwg.mxu0
        %8864 = vmatprep.subr.bf16.mxu0 %v7144
        %8865 = vmatpush1.bf16.msra.mxu0 %v7143
        %8866 = vmatprep.subr.bf16.mxu0 %v7174
        %8867 = vmatpush1.bf16.msra.mxu0 %v7173
        %8868 = vmatprep.subr.bf16.mxu0 %v7204
        %8869 = vmatpush1.bf16.msra.mxu0 %v7203
        %8870 = vmatprep.subr.bf16.mxu0 %v7234
        %8871 = vmatpush1.bf16.msra.mxu0 %v7233
        %8872 = vmatprep.subr.bf16.mxu0 %v7264
        %8873 = vmatpush1.bf16.msra.mxu0 %v7263
        %8874 = vmatprep.subr.bf16.mxu0 %v7294
        %8875 = vmatpush1.bf16.msra.mxu0 %v7293
        %8876 = vmatprep.subr.bf16.mxu0 %v7324
        %8877 = vmatpush1.bf16.msra.mxu0 %v7323
        %8878 = vmatprep.subr.bf16.mxu0 %v7354
        %8879 = vmatpush1.bf16.msra.mxu0 %v7353
        %8880 = vmatprep.subr.bf16.mxu0 %v7384
        %8881 = vmatpush1.bf16.msra.mxu0 %v7383
        %8882 = vmatprep.subr.bf16.mxu0 %v7414
        %8883 = vmatpush1.bf16.msra.mxu0 %v7413
        %8884 = vmatprep.subr.bf16.mxu0 %v7444
        %8885 = vmatpush1.bf16.msra.mxu0 %v7443
        %8886 = vmatprep.subr.bf16.mxu0 %v7474
        %8887 = vmatpush1.bf16.msra.mxu0 %v7473
        %8888 = vmatprep.subr.bf16.mxu0 %v7504
        %8889 = vmatpush1.bf16.msra.mxu0 %v7503
        %8890 = vmatprep.subr.bf16.mxu0 %v7534
        %8891 = vmatpush1.bf16.msra.mxu0 %v7533
        %8892 = vmatprep.subr.bf16.mxu0 %v7564
        %8893 = vmatpush1.bf16.msra.mxu0 %v7563
        %8894 = vmatprep.subr.bf16.mxu0 %v7594
        %8895 = vmatpush1.bf16.msra.mxu0 %v7593
        %8896 = vmatprep.mubr.bf16.mxu0 %v2658
        %8897 = vmatmul.mubr.bf16.gmra.mrb[0].mxu0 %v2657
        %v8898 = vpop.f32.mrb[0].mxu0
        %v8899 = vadd.f32 %v8858, %v8898
        %v8900 = vpop.f32.mrb[0].mxu0
        %v8901 = vadd.f32 %v8860, %v8900
        %v8902 = vpop.f32.mrb[0].mxu0
        %v8903 = vpop.f32.mrb[0].mxu0
        %8904 = vdwg.mxu0
        %8905 = vmatprep.subr.bf16.mxu0 %v6666
        %8906 = vmatpush1.bf16.msra.mxu0 %v6665
        %8907 = vmatprep.subr.bf16.mxu0 %v6696
        %8908 = vmatpush1.bf16.msra.mxu0 %v6695
        %8909 = vmatprep.subr.bf16.mxu0 %v6726
        %8910 = vmatpush1.bf16.msra.mxu0 %v6725
        %8911 = vmatprep.subr.bf16.mxu0 %v6756
        %8912 = vmatpush1.bf16.msra.mxu0 %v6755
        %8913 = vmatprep.subr.bf16.mxu0 %v6786
        %8914 = vmatpush1.bf16.msra.mxu0 %v6785
        %8915 = vmatprep.subr.bf16.mxu0 %v6816
        %8916 = vmatpush1.bf16.msra.mxu0 %v6815
        %8917 = vmatprep.subr.bf16.mxu0 %v6846
        %8918 = vmatpush1.bf16.msra.mxu0 %v6845
        %8919 = vmatprep.subr.bf16.mxu0 %v6876
        %8920 = vmatpush1.bf16.msra.mxu0 %v6875
        %8921 = vmatprep.subr.bf16.mxu0 %v6906
        %8922 = vmatpush1.bf16.msra.mxu0 %v6905
        %8923 = vmatprep.subr.bf16.mxu0 %v6936
        %8924 = vmatpush1.bf16.msra.mxu0 %v6935
        %8925 = vmatprep.subr.bf16.mxu0 %v6966
        %8926 = vmatpush1.bf16.msra.mxu0 %v6965
        %8927 = vmatprep.subr.bf16.mxu0 %v6996
        %8928 = vmatpush1.bf16.msra.mxu0 %v6995
        %8929 = vmatprep.subr.bf16.mxu0 %v7026
        %8930 = vmatpush1.bf16.msra.mxu0 %v7025
        %8931 = vmatprep.subr.bf16.mxu0 %v7056
        %8932 = vmatpush1.bf16.msra.mxu0 %v7055
        %8933 = vmatprep.subr.bf16.mxu0 %v7086
        %8934 = vmatpush1.bf16.msra.mxu0 %v7085
        %8935 = vmatprep.subr.bf16.mxu0 %v7116
        %8936 = vmatpush1.bf16.msra.mxu0 %v7115
        %8937 = vmatprep.mubr.bf16.mxu0 %v2656
        %8938 = vmatmul.mubr.bf16.gmra.mrb[0].mxu0 %v2655
        %v8939 = vpop.f32.mrb[0].mxu0
        %v8940 = vadd.f32 %v3662, %v8939
        %v8941 = vpop.f32.mrb[0].mxu0
        %v8942 = vadd.f32 %v3666, %v8941
        %v8943 = vpop.f32.mrb[0].mxu0
        %v8944 = vpop.f32.mrb[0].mxu0
        %8945 = vdwg.mxu0
        %8946 = vmatprep.subr.bf16.mxu0 %v7146
        %8947 = vmatpush1.bf16.msra.mxu0 %v7145
        %8948 = vmatprep.subr.bf16.mxu0 %v7176
        %8949 = vmatpush1.bf16.msra.mxu0 %v7175
        %8950 = vmatprep.subr.bf16.mxu0 %v7206
        %8951 = vmatpush1.bf16.msra.mxu0 %v7205
        %8952 = vmatprep.subr.bf16.mxu0 %v7236
        %8953 = vmatpush1.bf16.msra.mxu0 %v7235
        %8954 = vmatprep.subr.bf16.mxu0 %v7266
        %8955 = vmatpush1.bf16.msra.mxu0 %v7265
        %8956 = vmatprep.subr.bf16.mxu0 %v7296
        %8957 = vmatpush1.bf16.msra.mxu0 %v7295
        %8958 = vmatprep.subr.bf16.mxu0 %v7326
        %8959 = vmatpush1.bf16.msra.mxu0 %v7325
        %8960 = vmatprep.subr.bf16.mxu0 %v7356
        %8961 = vmatpush1.bf16.msra.mxu0 %v7355
        %8962 = vmatprep.subr.bf16.mxu0 %v7386
        %8963 = vmatpush1.bf16.msra.mxu0 %v7385
        %8964 = vmatprep.subr.bf16.mxu0 %v7416
        %8965 = vmatpush1.bf16.msra.mxu0 %v7415
        %8966 = vmatprep.subr.bf16.mxu0 %v7446
        %8967 = vmatpush1.bf16.msra.mxu0 %v7445
        %8968 = vmatprep.subr.bf16.mxu0 %v7476
        %8969 = vmatpush1.bf16.msra.mxu0 %v7475
        %8970 = vmatprep.subr.bf16.mxu0 %v7506
        %8971 = vmatpush1.bf16.msra.mxu0 %v7505
        %8972 = vmatprep.subr.bf16.mxu0 %v7536
        %8973 = vmatpush1.bf16.msra.mxu0 %v7535
        %8974 = vmatprep.subr.bf16.mxu0 %v7566
        %8975 = vmatpush1.bf16.msra.mxu0 %v7565
        %8976 = vmatprep.subr.bf16.mxu0 %v7596
        %8977 = vmatpush1.bf16.msra.mxu0 %v7595
        %8978 = vmatprep.mubr.bf16.mxu0 %v2658
        %8979 = vmatmul.mubr.bf16.gmra.mrb[0].mxu0 %v2657
        %v8980 = vpop.f32.mrb[0].mxu0
        %v8981 = vadd.f32 %v8940, %v8980
        %v8982 = vpop.f32.mrb[0].mxu0
        %v8983 = vadd.f32 %v8942, %v8982
        %v8984 = vpop.f32.mrb[0].mxu0
        %v8985 = vpop.f32.mrb[0].mxu0
        %8986 = vdwg.mxu0
        %8987 = vmatprep.subr.bf16.mxu0 %v6668
        %8988 = vmatpush1.bf16.msra.mxu0 %v6667
        %8989 = vmatprep.subr.bf16.mxu0 %v6698
        %8990 = vmatpush1.bf16.msra.mxu0 %v6697
        %8991 = vmatprep.subr.bf16.mxu0 %v6728
        %8992 = vmatpush1.bf16.msra.mxu0 %v6727
        %8993 = vmatprep.subr.bf16.mxu0 %v6758
        %8994 = vmatpush1.bf16.msra.mxu0 %v6757
        %8995 = vmatprep.subr.bf16.mxu0 %v6788
        %8996 = vmatpush1.bf16.msra.mxu0 %v6787
        %8997 = vmatprep.subr.bf16.mxu0 %v6818
        %8998 = vmatpush1.bf16.msra.mxu0 %v6817
        %8999 = vmatprep.subr.bf16.mxu0 %v6848
        %9000 = vmatpush1.bf16.msra.mxu0 %v6847
        %9001 = vmatprep.subr.bf16.mxu0 %v6878
        %9002 = vmatpush1.bf16.msra.mxu0 %v6877
        %9003 = vmatprep.subr.bf16.mxu0 %v6908
        %9004 = vmatpush1.bf16.msra.mxu0 %v6907
        %9005 = vmatprep.subr.bf16.mxu0 %v6938
        %9006 = vmatpush1.bf16.msra.mxu0 %v6937
        %9007 = vmatprep.subr.bf16.mxu0 %v6968
        %9008 = vmatpush1.bf16.msra.mxu0 %v6967
        %9009 = vmatprep.subr.bf16.mxu0 %v6998
        %9010 = vmatpush1.bf16.msra.mxu0 %v6997
        %9011 = vmatprep.subr.bf16.mxu0 %v7028
        %9012 = vmatpush1.bf16.msra.mxu0 %v7027
        %9013 = vmatprep.subr.bf16.mxu0 %v7058
        %9014 = vmatpush1.bf16.msra.mxu0 %v7057
        %9015 = vmatprep.subr.bf16.mxu0 %v7088
        %9016 = vmatpush1.bf16.msra.mxu0 %v7087
        %9017 = vmatprep.subr.bf16.mxu0 %v7118
        %9018 = vmatpush1.bf16.msra.mxu0 %v7117
        %9019 = vmatprep.mubr.bf16.mxu0 %v2656
        %9020 = vmatmul.mubr.bf16.gmra.mrb[0].mxu0 %v2655
        %v9021 = vpop.f32.mrb[0].mxu0
        %v9022 = vadd.f32 %v3670, %v9021
        %v9023 = vpop.f32.mrb[0].mxu0
        %v9024 = vadd.f32 %v3674, %v9023
        %v9025 = vpop.f32.mrb[0].mxu0
        %v9026 = vpop.f32.mrb[0].mxu0
        %9027 = vdwg.mxu0
        %9028 = vmatprep.subr.bf16.mxu0 %v7148
        %9029 = vmatpush1.bf16.msra.mxu0 %v7147
        %9030 = vmatprep.subr.bf16.mxu0 %v7178
        %9031 = vmatpush1.bf16.msra.mxu0 %v7177
        %9032 = vmatprep.subr.bf16.mxu0 %v7208
        %9033 = vmatpush1.bf16.msra.mxu0 %v7207
        %9034 = vmatprep.subr.bf16.mxu0 %v7238
        %9035 = vmatpush1.bf16.msra.mxu0 %v7237
        %9036 = vmatprep.subr.bf16.mxu0 %v7268
        %9037 = vmatpush1.bf16.msra.mxu0 %v7267
        %9038 = vmatprep.subr.bf16.mxu0 %v7298
        %9039 = vmatpush1.bf16.msra.mxu0 %v7297
        %9040 = vmatprep.subr.bf16.mxu0 %v7328
        %9041 = vmatpush1.bf16.msra.mxu0 %v7327
        %9042 = vmatprep.subr.bf16.mxu0 %v7358
        %9043 = vmatpush1.bf16.msra.mxu0 %v7357
        %9044 = vmatprep.subr.bf16.mxu0 %v7388
        %9045 = vmatpush1.bf16.msra.mxu0 %v7387
        %9046 = vmatprep.subr.bf16.mxu0 %v7418
        %9047 = vmatpush1.bf16.msra.mxu0 %v7417
        %9048 = vmatprep.subr.bf16.mxu0 %v7448
        %9049 = vmatpush1.bf16.msra.mxu0 %v7447
        %9050 = vmatprep.subr.bf16.mxu0 %v7478
        %9051 = vmatpush1.bf16.msra.mxu0 %v7477
        %9052 = vmatprep.subr.bf16.mxu0 %v7508
        %9053 = vmatpush1.bf16.msra.mxu0 %v7507
        %9054 = vmatprep.subr.bf16.mxu0 %v7538
        %9055 = vmatpush1.bf16.msra.mxu0 %v7537
        %9056 = vmatprep.subr.bf16.mxu0 %v7568
        %9057 = vmatpush1.bf16.msra.mxu0 %v7567
        %9058 = vmatprep.subr.bf16.mxu0 %v7598
        %9059 = vmatpush1.bf16.msra.mxu0 %v7597
        %9060 = vmatprep.mubr.bf16.mxu0 %v2658
        %9061 = vmatmul.mubr.bf16.gmra.mrb[0].mxu0 %v2657
        %v9062 = vpop.f32.mrb[0].mxu0
        %v9063 = vadd.f32 %v9022, %v9062
        %v9064 = vpop.f32.mrb[0].mxu0
        %v9065 = vadd.f32 %v9024, %v9064
        %v9066 = vpop.f32.mrb[0].mxu0
        %v9067 = vpop.f32.mrb[0].mxu0
        %9068 = vdwg.mxu0
        %9069 = vmatprep.subr.bf16.mxu0 %v6670
        %9070 = vmatpush1.bf16.msra.mxu0 %v6669
        %9071 = vmatprep.subr.bf16.mxu0 %v6700
        %9072 = vmatpush1.bf16.msra.mxu0 %v6699
        %9073 = vmatprep.subr.bf16.mxu0 %v6730
        %9074 = vmatpush1.bf16.msra.mxu0 %v6729
        %9075 = vmatprep.subr.bf16.mxu0 %v6760
        %9076 = vmatpush1.bf16.msra.mxu0 %v6759
        %9077 = vmatprep.subr.bf16.mxu0 %v6790
        %9078 = vmatpush1.bf16.msra.mxu0 %v6789
        %9079 = vmatprep.subr.bf16.mxu0 %v6820
        %9080 = vmatpush1.bf16.msra.mxu0 %v6819
        %9081 = vmatprep.subr.bf16.mxu0 %v6850
        %9082 = vmatpush1.bf16.msra.mxu0 %v6849
        %9083 = vmatprep.subr.bf16.mxu0 %v6880
        %9084 = vmatpush1.bf16.msra.mxu0 %v6879
        %9085 = vmatprep.subr.bf16.mxu0 %v6910
        %9086 = vmatpush1.bf16.msra.mxu0 %v6909
        %9087 = vmatprep.subr.bf16.mxu0 %v6940
        %9088 = vmatpush1.bf16.msra.mxu0 %v6939
        %9089 = vmatprep.subr.bf16.mxu0 %v6970
        %9090 = vmatpush1.bf16.msra.mxu0 %v6969
        %9091 = vmatprep.subr.bf16.mxu0 %v7000
        %9092 = vmatpush1.bf16.msra.mxu0 %v6999
        %9093 = vmatprep.subr.bf16.mxu0 %v7030
        %9094 = vmatpush1.bf16.msra.mxu0 %v7029
        %9095 = vmatprep.subr.bf16.mxu0 %v7060
        %9096 = vmatpush1.bf16.msra.mxu0 %v7059
        %9097 = vmatprep.subr.bf16.mxu0 %v7090
        %9098 = vmatpush1.bf16.msra.mxu0 %v7089
        %9099 = vmatprep.subr.bf16.mxu0 %v7120
        %9100 = vmatpush1.bf16.msra.mxu0 %v7119
        %9101 = vmatprep.mubr.bf16.mxu0 %v2656
        %9102 = vmatmul.mubr.bf16.gmra.mrb[0].mxu0 %v2655
        %v9103 = vpop.f32.mrb[0].mxu0
        %v9104 = vadd.f32 %v3678, %v9103
        %v9105 = vpop.f32.mrb[0].mxu0
        %v9106 = vadd.f32 %v3682, %v9105
        %v9107 = vpop.f32.mrb[0].mxu0
        %v9108 = vpop.f32.mrb[0].mxu0
        %9109 = vdwg.mxu0
        %9110 = vmatprep.subr.bf16.mxu0 %v7150
        %9111 = vmatpush1.bf16.msra.mxu0 %v7149
        %9112 = vmatprep.subr.bf16.mxu0 %v7180
        %9113 = vmatpush1.bf16.msra.mxu0 %v7179
        %9114 = vmatprep.subr.bf16.mxu0 %v7210
        %9115 = vmatpush1.bf16.msra.mxu0 %v7209
        %9116 = vmatprep.subr.bf16.mxu0 %v7240
        %9117 = vmatpush1.bf16.msra.mxu0 %v7239
        %9118 = vmatprep.subr.bf16.mxu0 %v7270
        %9119 = vmatpush1.bf16.msra.mxu0 %v7269
        %9120 = vmatprep.subr.bf16.mxu0 %v7300
        %9121 = vmatpush1.bf16.msra.mxu0 %v7299
        %9122 = vmatprep.subr.bf16.mxu0 %v7330
        %9123 = vmatpush1.bf16.msra.mxu0 %v7329
        %9124 = vmatprep.subr.bf16.mxu0 %v7360
        %9125 = vmatpush1.bf16.msra.mxu0 %v7359
        %9126 = vmatprep.subr.bf16.mxu0 %v7390
        %9127 = vmatpush1.bf16.msra.mxu0 %v7389
        %9128 = vmatprep.subr.bf16.mxu0 %v7420
        %9129 = vmatpush1.bf16.msra.mxu0 %v7419
        %9130 = vmatprep.subr.bf16.mxu0 %v7450
        %9131 = vmatpush1.bf16.msra.mxu0 %v7449
        %9132 = vmatprep.subr.bf16.mxu0 %v7480
        %9133 = vmatpush1.bf16.msra.mxu0 %v7479
        %9134 = vmatprep.subr.bf16.mxu0 %v7510
        %9135 = vmatpush1.bf16.msra.mxu0 %v7509
        %9136 = vmatprep.subr.bf16.mxu0 %v7540
        %9137 = vmatpush1.bf16.msra.mxu0 %v7539
        %9138 = vmatprep.subr.bf16.mxu0 %v7570
        %9139 = vmatpush1.bf16.msra.mxu0 %v7569
        %9140 = vmatprep.subr.bf16.mxu0 %v7600
        %9141 = vmatpush1.bf16.msra.mxu0 %v7599
        %9142 = vmatprep.mubr.bf16.mxu0 %v2658
        %9143 = vmatmul.mubr.bf16.gmra.mrb[0].mxu0 %v2657
        %v9144 = vpop.f32.mrb[0].mxu0
        %v9145 = vadd.f32 %v9104, %v9144
        %v9146 = vpop.f32.mrb[0].mxu0
        %v9147 = vadd.f32 %v9106, %v9146
        %v9148 = vpop.f32.mrb[0].mxu0
        %v9149 = vpop.f32.mrb[0].mxu0
        %9150 = vdwg.mxu0
        %9151 = vmatprep.subr.bf16.mxu0 %v6672
        %9152 = vmatpush1.bf16.msra.mxu0 %v6671
        %9153 = vmatprep.subr.bf16.mxu0 %v6702
        %9154 = vmatpush1.bf16.msra.mxu0 %v6701
        %9155 = vmatprep.subr.bf16.mxu0 %v6732
        %9156 = vmatpush1.bf16.msra.mxu0 %v6731
        %9157 = vmatprep.subr.bf16.mxu0 %v6762
        %9158 = vmatpush1.bf16.msra.mxu0 %v6761
        %9159 = vmatprep.subr.bf16.mxu0 %v6792
        %9160 = vmatpush1.bf16.msra.mxu0 %v6791
        %9161 = vmatprep.subr.bf16.mxu0 %v6822
        %9162 = vmatpush1.bf16.msra.mxu0 %v6821
        %9163 = vmatprep.subr.bf16.mxu0 %v6852
        %9164 = vmatpush1.bf16.msra.mxu0 %v6851
        %9165 = vmatprep.subr.bf16.mxu0 %v6882
        %9166 = vmatpush1.bf16.msra.mxu0 %v6881
        %9167 = vmatprep.subr.bf16.mxu0 %v6912
        %9168 = vmatpush1.bf16.msra.mxu0 %v6911
        %9169 = vmatprep.subr.bf16.mxu0 %v6942
        %9170 = vmatpush1.bf16.msra.mxu0 %v6941
        %9171 = vmatprep.subr.bf16.mxu0 %v6972
        %9172 = vmatpush1.bf16.msra.mxu0 %v6971
        %9173 = vmatprep.subr.bf16.mxu0 %v7002
        %9174 = vmatpush1.bf16.msra.mxu0 %v7001
        %9175 = vmatprep.subr.bf16.mxu0 %v7032
        %9176 = vmatpush1.bf16.msra.mxu0 %v7031
        %9177 = vmatprep.subr.bf16.mxu0 %v7062
        %9178 = vmatpush1.bf16.msra.mxu0 %v7061
        %9179 = vmatprep.subr.bf16.mxu0 %v7092
        %9180 = vmatpush1.bf16.msra.mxu0 %v7091
        %9181 = vmatprep.subr.bf16.mxu0 %v7122
        %9182 = vmatpush1.bf16.msra.mxu0 %v7121
        %9183 = vmatprep.mubr.bf16.mxu0 %v2656
        %9184 = vmatmul.mubr.bf16.gmra.mrb[0].mxu0 %v2655
        %v9185 = vpop.f32.mrb[0].mxu0
        %v9186 = vadd.f32 %v3686, %v9185
        %v9187 = vpop.f32.mrb[0].mxu0
        %v9188 = vadd.f32 %v3690, %v9187
        %v9189 = vpop.f32.mrb[0].mxu0
        %v9190 = vpop.f32.mrb[0].mxu0
        %9191 = vdwg.mxu0
        %9192 = vmatprep.subr.bf16.mxu0 %v7152
        %9193 = vmatpush1.bf16.msra.mxu0 %v7151
        %9194 = vmatprep.subr.bf16.mxu0 %v7182
        %9195 = vmatpush1.bf16.msra.mxu0 %v7181
        %9196 = vmatprep.subr.bf16.mxu0 %v7212
        %9197 = vmatpush1.bf16.msra.mxu0 %v7211
        %9198 = vmatprep.subr.bf16.mxu0 %v7242
        %9199 = vmatpush1.bf16.msra.mxu0 %v7241
        %9200 = vmatprep.subr.bf16.mxu0 %v7272
        %9201 = vmatpush1.bf16.msra.mxu0 %v7271
        %9202 = vmatprep.subr.bf16.mxu0 %v7302
        %9203 = vmatpush1.bf16.msra.mxu0 %v7301
        %9204 = vmatprep.subr.bf16.mxu0 %v7332
        %9205 = vmatpush1.bf16.msra.mxu0 %v7331
        %9206 = vmatprep.subr.bf16.mxu0 %v7362
        %9207 = vmatpush1.bf16.msra.mxu0 %v7361
        %9208 = vmatprep.subr.bf16.mxu0 %v7392
        %9209 = vmatpush1.bf16.msra.mxu0 %v7391
        %9210 = vmatprep.subr.bf16.mxu0 %v7422
        %9211 = vmatpush1.bf16.msra.mxu0 %v7421
        %9212 = vmatprep.subr.bf16.mxu0 %v7452
        %9213 = vmatpush1.bf16.msra.mxu0 %v7451
        %9214 = vmatprep.subr.bf16.mxu0 %v7482
        %9215 = vmatpush1.bf16.msra.mxu0 %v7481
        %9216 = vmatprep.subr.bf16.mxu0 %v7512
        %9217 = vmatpush1.bf16.msra.mxu0 %v7511
        %9218 = vmatprep.subr.bf16.mxu0 %v7542
        %9219 = vmatpush1.bf16.msra.mxu0 %v7541
        %9220 = vmatprep.subr.bf16.mxu0 %v7572
        %9221 = vmatpush1.bf16.msra.mxu0 %v7571
        %9222 = vmatprep.subr.bf16.mxu0 %v7602
        %9223 = vmatpush1.bf16.msra.mxu0 %v7601
        %9224 = vmatprep.mubr.bf16.mxu0 %v2658
        %9225 = vmatmul.mubr.bf16.gmra.mrb[0].mxu0 %v2657
        %v9226 = vpop.f32.mrb[0].mxu0
        %v9227 = vadd.f32 %v9186, %v9226
        %v9228 = vpop.f32.mrb[0].mxu0
        %v9229 = vadd.f32 %v9188, %v9228
        %v9230 = vpop.f32.mrb[0].mxu0
        %v9231 = vpop.f32.mrb[0].mxu0
        %9232 = vdwg.mxu0
        %9233 = vmatprep.subr.bf16.mxu0 %v6674
        %9234 = vmatpush1.bf16.msra.mxu0 %v6673
        %9235 = vmatprep.subr.bf16.mxu0 %v6704
        %9236 = vmatpush1.bf16.msra.mxu0 %v6703
        %9237 = vmatprep.subr.bf16.mxu0 %v6734
        %9238 = vmatpush1.bf16.msra.mxu0 %v6733
        %9239 = vmatprep.subr.bf16.mxu0 %v6764
        %9240 = vmatpush1.bf16.msra.mxu0 %v6763
        %9241 = vmatprep.subr.bf16.mxu0 %v6794
        %9242 = vmatpush1.bf16.msra.mxu0 %v6793
        %9243 = vmatprep.subr.bf16.mxu0 %v6824
        %9244 = vmatpush1.bf16.msra.mxu0 %v6823
        %9245 = vmatprep.subr.bf16.mxu0 %v6854
        %9246 = vmatpush1.bf16.msra.mxu0 %v6853
        %9247 = vmatprep.subr.bf16.mxu0 %v6884
        %9248 = vmatpush1.bf16.msra.mxu0 %v6883
        %9249 = vmatprep.subr.bf16.mxu0 %v6914
        %9250 = vmatpush1.bf16.msra.mxu0 %v6913
        %9251 = vmatprep.subr.bf16.mxu0 %v6944
        %9252 = vmatpush1.bf16.msra.mxu0 %v6943
        %9253 = vmatprep.subr.bf16.mxu0 %v6974
        %9254 = vmatpush1.bf16.msra.mxu0 %v6973
        %9255 = vmatprep.subr.bf16.mxu0 %v7004
        %9256 = vmatpush1.bf16.msra.mxu0 %v7003
        %9257 = vmatprep.subr.bf16.mxu0 %v7034
        %9258 = vmatpush1.bf16.msra.mxu0 %v7033
        %9259 = vmatprep.subr.bf16.mxu0 %v7064
        %9260 = vmatpush1.bf16.msra.mxu0 %v7063
        %9261 = vmatprep.subr.bf16.mxu0 %v7094
        %9262 = vmatpush1.bf16.msra.mxu0 %v7093
        %9263 = vmatprep.subr.bf16.mxu0 %v7124
        %9264 = vmatpush1.bf16.msra.mxu0 %v7123
        %9265 = vmatprep.mubr.bf16.mxu0 %v2656
        %9266 = vmatmul.mubr.bf16.gmra.mrb[0].mxu0 %v2655
        %v9267 = vpop.f32.mrb[0].mxu0
        %v9268 = vadd.f32 %v3694, %v9267
        %v9269 = vpop.f32.mrb[0].mxu0
        %v9270 = vadd.f32 %v3698, %v9269
        %v9271 = vpop.f32.mrb[0].mxu0
        %v9272 = vpop.f32.mrb[0].mxu0
        %9273 = vdwg.mxu0
        %9274 = vmatprep.subr.bf16.mxu0 %v7154
        %9275 = vmatpush1.bf16.msra.mxu0 %v7153
        %9276 = vmatprep.subr.bf16.mxu0 %v7184
        %9277 = vmatpush1.bf16.msra.mxu0 %v7183
        %9278 = vmatprep.subr.bf16.mxu0 %v7214
        %9279 = vmatpush1.bf16.msra.mxu0 %v7213
        %9280 = vmatprep.subr.bf16.mxu0 %v7244
        %9281 = vmatpush1.bf16.msra.mxu0 %v7243
        %9282 = vmatprep.subr.bf16.mxu0 %v7274
        %9283 = vmatpush1.bf16.msra.mxu0 %v7273
        %9284 = vmatprep.subr.bf16.mxu0 %v7304
        %9285 = vmatpush1.bf16.msra.mxu0 %v7303
        %9286 = vmatprep.subr.bf16.mxu0 %v7334
        %9287 = vmatpush1.bf16.msra.mxu0 %v7333
        %9288 = vmatprep.subr.bf16.mxu0 %v7364
        %9289 = vmatpush1.bf16.msra.mxu0 %v7363
        %9290 = vmatprep.subr.bf16.mxu0 %v7394
        %9291 = vmatpush1.bf16.msra.mxu0 %v7393
        %9292 = vmatprep.subr.bf16.mxu0 %v7424
        %9293 = vmatpush1.bf16.msra.mxu0 %v7423
        %9294 = vmatprep.subr.bf16.mxu0 %v7454
        %9295 = vmatpush1.bf16.msra.mxu0 %v7453
        %9296 = vmatprep.subr.bf16.mxu0 %v7484
        %9297 = vmatpush1.bf16.msra.mxu0 %v7483
        %9298 = vmatprep.subr.bf16.mxu0 %v7514
        %9299 = vmatpush1.bf16.msra.mxu0 %v7513
        %9300 = vmatprep.subr.bf16.mxu0 %v7544
        %9301 = vmatpush1.bf16.msra.mxu0 %v7543
        %9302 = vmatprep.subr.bf16.mxu0 %v7574
        %9303 = vmatpush1.bf16.msra.mxu0 %v7573
        %9304 = vmatprep.subr.bf16.mxu0 %v7604
        %9305 = vmatpush1.bf16.msra.mxu0 %v7603
        %9306 = vmatprep.mubr.bf16.mxu0 %v2658
        %9307 = vmatmul.mubr.bf16.gmra.mrb[0].mxu0 %v2657
        %v9308 = vpop.f32.mrb[0].mxu0
        %v9309 = vadd.f32 %v9268, %v9308
        %v9310 = vpop.f32.mrb[0].mxu0
        %v9311 = vadd.f32 %v9270, %v9310
        %v9312 = vpop.f32.mrb[0].mxu0
        %v9313 = vpop.f32.mrb[0].mxu0
        %9314 = vdwg.mxu0
        %9315 = vmatprep.subr.bf16.mxu0 %v6676
        %9316 = vmatpush1.bf16.msra.mxu0 %v6675
        %9317 = vmatprep.subr.bf16.mxu0 %v6706
        %9318 = vmatpush1.bf16.msra.mxu0 %v6705
        %9319 = vmatprep.subr.bf16.mxu0 %v6736
        %9320 = vmatpush1.bf16.msra.mxu0 %v6735
        %9321 = vmatprep.subr.bf16.mxu0 %v6766
        %9322 = vmatpush1.bf16.msra.mxu0 %v6765
        %9323 = vmatprep.subr.bf16.mxu0 %v6796
        %9324 = vmatpush1.bf16.msra.mxu0 %v6795
        %9325 = vmatprep.subr.bf16.mxu0 %v6826
        %9326 = vmatpush1.bf16.msra.mxu0 %v6825
        %9327 = vmatprep.subr.bf16.mxu0 %v6856
        %9328 = vmatpush1.bf16.msra.mxu0 %v6855
        %9329 = vmatprep.subr.bf16.mxu0 %v6886
        %9330 = vmatpush1.bf16.msra.mxu0 %v6885
        %9331 = vmatprep.subr.bf16.mxu0 %v6916
        %9332 = vmatpush1.bf16.msra.mxu0 %v6915
        %9333 = vmatprep.subr.bf16.mxu0 %v6946
        %9334 = vmatpush1.bf16.msra.mxu0 %v6945
        %9335 = vmatprep.subr.bf16.mxu0 %v6976
        %9336 = vmatpush1.bf16.msra.mxu0 %v6975
        %9337 = vmatprep.subr.bf16.mxu0 %v7006
        %9338 = vmatpush1.bf16.msra.mxu0 %v7005
        %9339 = vmatprep.subr.bf16.mxu0 %v7036
        %9340 = vmatpush1.bf16.msra.mxu0 %v7035
        %9341 = vmatprep.subr.bf16.mxu0 %v7066
        %9342 = vmatpush1.bf16.msra.mxu0 %v7065
        %9343 = vmatprep.subr.bf16.mxu0 %v7096
        %9344 = vmatpush1.bf16.msra.mxu0 %v7095
        %9345 = vmatprep.subr.bf16.mxu0 %v7126
        %9346 = vmatpush1.bf16.msra.mxu0 %v7125
        %9347 = vmatprep.mubr.bf16.mxu0 %v2656
        %9348 = vmatmul.mubr.bf16.gmra.mrb[0].mxu0 %v2655
        %v9349 = vpop.f32.mrb[0].mxu0
        %v9350 = vadd.f32 %v3702, %v9349
        %v9351 = vpop.f32.mrb[0].mxu0
        %v9352 = vadd.f32 %v3706, %v9351
        %v9353 = vpop.f32.mrb[0].mxu0
        %v9354 = vpop.f32.mrb[0].mxu0
        %9355 = vdwg.mxu0
        %9356 = vmatprep.subr.bf16.mxu0 %v7156
        %9357 = vmatpush1.bf16.msra.mxu0 %v7155
        %9358 = vmatprep.subr.bf16.mxu0 %v7186
        %9359 = vmatpush1.bf16.msra.mxu0 %v7185
        %9360 = vmatprep.subr.bf16.mxu0 %v7216
        %9361 = vmatpush1.bf16.msra.mxu0 %v7215
        %9362 = vmatprep.subr.bf16.mxu0 %v7246
        %9363 = vmatpush1.bf16.msra.mxu0 %v7245
        %9364 = vmatprep.subr.bf16.mxu0 %v7276
        %9365 = vmatpush1.bf16.msra.mxu0 %v7275
        %9366 = vmatprep.subr.bf16.mxu0 %v7306
        %9367 = vmatpush1.bf16.msra.mxu0 %v7305
        %9368 = vmatprep.subr.bf16.mxu0 %v7336
        %9369 = vmatpush1.bf16.msra.mxu0 %v7335
        %9370 = vmatprep.subr.bf16.mxu0 %v7366
        %9371 = vmatpush1.bf16.msra.mxu0 %v7365
        %9372 = vmatprep.subr.bf16.mxu0 %v7396
        %9373 = vmatpush1.bf16.msra.mxu0 %v7395
        %9374 = vmatprep.subr.bf16.mxu0 %v7426
        %9375 = vmatpush1.bf16.msra.mxu0 %v7425
        %9376 = vmatprep.subr.bf16.mxu0 %v7456
        %9377 = vmatpush1.bf16.msra.mxu0 %v7455
        %9378 = vmatprep.subr.bf16.mxu0 %v7486
        %9379 = vmatpush1.bf16.msra.mxu0 %v7485
        %9380 = vmatprep.subr.bf16.mxu0 %v7516
        %9381 = vmatpush1.bf16.msra.mxu0 %v7515
        %9382 = vmatprep.subr.bf16.mxu0 %v7546
        %9383 = vmatpush1.bf16.msra.mxu0 %v7545
        %9384 = vmatprep.subr.bf16.mxu0 %v7576
        %9385 = vmatpush1.bf16.msra.mxu0 %v7575
        %9386 = vmatprep.subr.bf16.mxu0 %v7606
        %9387 = vmatpush1.bf16.msra.mxu0 %v7605
        %9388 = vmatprep.mubr.bf16.mxu0 %v2658
        %9389 = vmatmul.mubr.bf16.gmra.mrb[0].mxu0 %v2657
        %v9390 = vpop.f32.mrb[0].mxu0
        %v9391 = vadd.f32 %v9350, %v9390
        %v9392 = vpop.f32.mrb[0].mxu0
        %v9393 = vadd.f32 %v9352, %v9392
        %v9394 = vpop.f32.mrb[0].mxu0
        %v9395 = vpop.f32.mrb[0].mxu0
        %9396 = vdwg.mxu0
        %9397 = vmatprep.subr.bf16.mxu0 %v6678
        %9398 = vmatpush1.bf16.msra.mxu0 %v6677
        %9399 = vmatprep.subr.bf16.mxu0 %v6708
        %9400 = vmatpush1.bf16.msra.mxu0 %v6707
        %9401 = vmatprep.subr.bf16.mxu0 %v6738
        %9402 = vmatpush1.bf16.msra.mxu0 %v6737
        %9403 = vmatprep.subr.bf16.mxu0 %v6768
        %9404 = vmatpush1.bf16.msra.mxu0 %v6767
        %9405 = vmatprep.subr.bf16.mxu0 %v6798
        %9406 = vmatpush1.bf16.msra.mxu0 %v6797
        %9407 = vmatprep.subr.bf16.mxu0 %v6828
        %9408 = vmatpush1.bf16.msra.mxu0 %v6827
        %9409 = vmatprep.subr.bf16.mxu0 %v6858
        %9410 = vmatpush1.bf16.msra.mxu0 %v6857
        %9411 = vmatprep.subr.bf16.mxu0 %v6888
        %9412 = vmatpush1.bf16.msra.mxu0 %v6887
        %9413 = vmatprep.subr.bf16.mxu0 %v6918
        %9414 = vmatpush1.bf16.msra.mxu0 %v6917
        %9415 = vmatprep.subr.bf16.mxu0 %v6948
        %9416 = vmatpush1.bf16.msra.mxu0 %v6947
        %9417 = vmatprep.subr.bf16.mxu0 %v6978
        %9418 = vmatpush1.bf16.msra.mxu0 %v6977
        %9419 = vmatprep.subr.bf16.mxu0 %v7008
        %9420 = vmatpush1.bf16.msra.mxu0 %v7007
        %9421 = vmatprep.subr.bf16.mxu0 %v7038
        %9422 = vmatpush1.bf16.msra.mxu0 %v7037
        %9423 = vmatprep.subr.bf16.mxu0 %v7068
        %9424 = vmatpush1.bf16.msra.mxu0 %v7067
        %9425 = vmatprep.subr.bf16.mxu0 %v7098
        %9426 = vmatpush1.bf16.msra.mxu0 %v7097
        %9427 = vmatprep.subr.bf16.mxu0 %v7128
        %9428 = vmatpush1.bf16.msra.mxu0 %v7127
        %9429 = vmatprep.mubr.bf16.mxu0 %v2656
        %9430 = vmatmul.mubr.bf16.gmra.mrb[0].mxu0 %v2655
        %v9431 = vpop.f32.mrb[0].mxu0
        %v9432 = vadd.f32 %v3710, %v9431
        %v9433 = vpop.f32.mrb[0].mxu0
        %v9434 = vadd.f32 %v3714, %v9433
        %v9435 = vpop.f32.mrb[0].mxu0
        %v9436 = vpop.f32.mrb[0].mxu0
        %9437 = vdwg.mxu0
        %9438 = vmatprep.subr.bf16.mxu0 %v7158
        %9439 = vmatpush1.bf16.msra.mxu0 %v7157
        %9440 = vmatprep.subr.bf16.mxu0 %v7188
        %9441 = vmatpush1.bf16.msra.mxu0 %v7187
        %9442 = vmatprep.subr.bf16.mxu0 %v7218
        %9443 = vmatpush1.bf16.msra.mxu0 %v7217
        %9444 = vmatprep.subr.bf16.mxu0 %v7248
        %9445 = vmatpush1.bf16.msra.mxu0 %v7247
        %9446 = vmatprep.subr.bf16.mxu0 %v7278
        %9447 = vmatpush1.bf16.msra.mxu0 %v7277
        %9448 = vmatprep.subr.bf16.mxu0 %v7308
        %9449 = vmatpush1.bf16.msra.mxu0 %v7307
        %9450 = vmatprep.subr.bf16.mxu0 %v7338
        %9451 = vmatpush1.bf16.msra.mxu0 %v7337
        %9452 = vmatprep.subr.bf16.mxu0 %v7368
        %9453 = vmatpush1.bf16.msra.mxu0 %v7367
        %9454 = vmatprep.subr.bf16.mxu0 %v7398
        %9455 = vmatpush1.bf16.msra.mxu0 %v7397
        %9456 = vmatprep.subr.bf16.mxu0 %v7428
        %9457 = vmatpush1.bf16.msra.mxu0 %v7427
        %9458 = vmatprep.subr.bf16.mxu0 %v7458
        %9459 = vmatpush1.bf16.msra.mxu0 %v7457
        %9460 = vmatprep.subr.bf16.mxu0 %v7488
        %9461 = vmatpush1.bf16.msra.mxu0 %v7487
        %9462 = vmatprep.subr.bf16.mxu0 %v7518
        %9463 = vmatpush1.bf16.msra.mxu0 %v7517
        %9464 = vmatprep.subr.bf16.mxu0 %v7548
        %9465 = vmatpush1.bf16.msra.mxu0 %v7547
        %9466 = vmatprep.subr.bf16.mxu0 %v7578
        %9467 = vmatpush1.bf16.msra.mxu0 %v7577
        %9468 = vmatprep.subr.bf16.mxu0 %v7608
        %9469 = vmatpush1.bf16.msra.mxu0 %v7607
        %9470 = vmatprep.mubr.bf16.mxu0 %v2658
        %9471 = vmatmul.mubr.bf16.gmra.mrb[0].mxu0 %v2657
        %v9472 = vpop.f32.mrb[0].mxu0
        %v9473 = vadd.f32 %v9432, %v9472
        %v9474 = vpop.f32.mrb[0].mxu0
        %v9475 = vadd.f32 %v9434, %v9474
        %v9476 = vpop.f32.mrb[0].mxu0
        %v9477 = vpop.f32.mrb[0].mxu0
        %9478 = vdwg.mxu0
        %9479 = vmatprep.subr.bf16.mxu0 %v6680
        %9480 = vmatpush1.bf16.msra.mxu0 %v6679
        %9481 = vmatprep.subr.bf16.mxu0 %v6710
        %9482 = vmatpush1.bf16.msra.mxu0 %v6709
        %9483 = vmatprep.subr.bf16.mxu0 %v6740
        %9484 = vmatpush1.bf16.msra.mxu0 %v6739
        %9485 = vmatprep.subr.bf16.mxu0 %v6770
        %9486 = vmatpush1.bf16.msra.mxu0 %v6769
        %9487 = vmatprep.subr.bf16.mxu0 %v6800
        %9488 = vmatpush1.bf16.msra.mxu0 %v6799
        %9489 = vmatprep.subr.bf16.mxu0 %v6830
        %9490 = vmatpush1.bf16.msra.mxu0 %v6829
        %9491 = vmatprep.subr.bf16.mxu0 %v6860
        %9492 = vmatpush1.bf16.msra.mxu0 %v6859
        %9493 = vmatprep.subr.bf16.mxu0 %v6890
        %9494 = vmatpush1.bf16.msra.mxu0 %v6889
        %9495 = vmatprep.subr.bf16.mxu0 %v6920
        %9496 = vmatpush1.bf16.msra.mxu0 %v6919
        %9497 = vmatprep.subr.bf16.mxu0 %v6950
        %9498 = vmatpush1.bf16.msra.mxu0 %v6949
        %9499 = vmatprep.subr.bf16.mxu0 %v6980
        %9500 = vmatpush1.bf16.msra.mxu0 %v6979
        %9501 = vmatprep.subr.bf16.mxu0 %v7010
        %9502 = vmatpush1.bf16.msra.mxu0 %v7009
        %9503 = vmatprep.subr.bf16.mxu0 %v7040
        %9504 = vmatpush1.bf16.msra.mxu0 %v7039
        %9505 = vmatprep.subr.bf16.mxu0 %v7070
        %9506 = vmatpush1.bf16.msra.mxu0 %v7069
        %9507 = vmatprep.subr.bf16.mxu0 %v7100
        %9508 = vmatpush1.bf16.msra.mxu0 %v7099
        %9509 = vmatprep.subr.bf16.mxu0 %v7130
        %9510 = vmatpush1.bf16.msra.mxu0 %v7129
        %9511 = vmatprep.mubr.bf16.mxu0 %v2656
        %9512 = vmatmul.mubr.bf16.gmra.mrb[0].mxu0 %v2655
        %v9513 = vpop.f32.mrb[0].mxu0
        %v9514 = vadd.f32 %v3718, %v9513
        %v9515 = vpop.f32.mrb[0].mxu0
        %v9516 = vadd.f32 %v3722, %v9515
        %v9517 = vpop.f32.mrb[0].mxu0
        %v9518 = vpop.f32.mrb[0].mxu0
        %9519 = vdwg.mxu0
        %9520 = vmatprep.subr.bf16.mxu0 %v7160
        %9521 = vmatpush1.bf16.msra.mxu0 %v7159
        %9522 = vmatprep.subr.bf16.mxu0 %v7190
        %9523 = vmatpush1.bf16.msra.mxu0 %v7189
        %9524 = vmatprep.subr.bf16.mxu0 %v7220
        %9525 = vmatpush1.bf16.msra.mxu0 %v7219
        %9526 = vmatprep.subr.bf16.mxu0 %v7250
        %9527 = vmatpush1.bf16.msra.mxu0 %v7249
        %9528 = vmatprep.subr.bf16.mxu0 %v7280
        %9529 = vmatpush1.bf16.msra.mxu0 %v7279
        %9530 = vmatprep.subr.bf16.mxu0 %v7310
        %9531 = vmatpush1.bf16.msra.mxu0 %v7309
        %9532 = vmatprep.subr.bf16.mxu0 %v7340
        %9533 = vmatpush1.bf16.msra.mxu0 %v7339
        %9534 = vmatprep.subr.bf16.mxu0 %v7370
        %9535 = vmatpush1.bf16.msra.mxu0 %v7369
        %9536 = vmatprep.subr.bf16.mxu0 %v7400
        %9537 = vmatpush1.bf16.msra.mxu0 %v7399
        %9538 = vmatprep.subr.bf16.mxu0 %v7430
        %9539 = vmatpush1.bf16.msra.mxu0 %v7429
        %9540 = vmatprep.subr.bf16.mxu0 %v7460
        %9541 = vmatpush1.bf16.msra.mxu0 %v7459
        %9542 = vmatprep.subr.bf16.mxu0 %v7490
        %9543 = vmatpush1.bf16.msra.mxu0 %v7489
        %9544 = vmatprep.subr.bf16.mxu0 %v7520
        %9545 = vmatpush1.bf16.msra.mxu0 %v7519
        %9546 = vmatprep.subr.bf16.mxu0 %v7550
        %9547 = vmatpush1.bf16.msra.mxu0 %v7549
        %9548 = vmatprep.subr.bf16.mxu0 %v7580
        %9549 = vmatpush1.bf16.msra.mxu0 %v7579
        %9550 = vmatprep.subr.bf16.mxu0 %v7610
        %9551 = vmatpush1.bf16.msra.mxu0 %v7609
        %9552 = vmatprep.mubr.bf16.mxu0 %v2658
        %9553 = vmatmul.mubr.bf16.gmra.mrb[0].mxu0 %v2657
        %v9554 = vpop.f32.mrb[0].mxu0
        %v9555 = vadd.f32 %v9514, %v9554
        %v9556 = vpop.f32.mrb[0].mxu0
        %v9557 = vadd.f32 %v9516, %v9556
        %v9558 = vpop.f32.mrb[0].mxu0
        %v9559 = vpop.f32.mrb[0].mxu0
        %9560 = vdwg.mxu0
        %9561 = vmatprep.subr.bf16.mxu0 %v6682
        %9562 = vmatpush1.bf16.msra.mxu0 %v6681
        %9563 = vmatprep.subr.bf16.mxu0 %v6712
        %9564 = vmatpush1.bf16.msra.mxu0 %v6711
        %9565 = vmatprep.subr.bf16.mxu0 %v6742
        %9566 = vmatpush1.bf16.msra.mxu0 %v6741
        %9567 = vmatprep.subr.bf16.mxu0 %v6772
        %9568 = vmatpush1.bf16.msra.mxu0 %v6771
        %9569 = vmatprep.subr.bf16.mxu0 %v6802
        %9570 = vmatpush1.bf16.msra.mxu0 %v6801
        %9571 = vmatprep.subr.bf16.mxu0 %v6832
        %9572 = vmatpush1.bf16.msra.mxu0 %v6831
        %9573 = vmatprep.subr.bf16.mxu0 %v6862
        %9574 = vmatpush1.bf16.msra.mxu0 %v6861
        %9575 = vmatprep.subr.bf16.mxu0 %v6892
        %9576 = vmatpush1.bf16.msra.mxu0 %v6891
        %9577 = vmatprep.subr.bf16.mxu0 %v6922
        %9578 = vmatpush1.bf16.msra.mxu0 %v6921
        %9579 = vmatprep.subr.bf16.mxu0 %v6952
        %9580 = vmatpush1.bf16.msra.mxu0 %v6951
        %9581 = vmatprep.subr.bf16.mxu0 %v6982
        %9582 = vmatpush1.bf16.msra.mxu0 %v6981
        %9583 = vmatprep.subr.bf16.mxu0 %v7012
        %9584 = vmatpush1.bf16.msra.mxu0 %v7011
        %9585 = vmatprep.subr.bf16.mxu0 %v7042
        %9586 = vmatpush1.bf16.msra.mxu0 %v7041
        %9587 = vmatprep.subr.bf16.mxu0 %v7072
        %9588 = vmatpush1.bf16.msra.mxu0 %v7071
        %9589 = vmatprep.subr.bf16.mxu0 %v7102
        %9590 = vmatpush1.bf16.msra.mxu0 %v7101
        %9591 = vmatprep.subr.bf16.mxu0 %v7132
        %9592 = vmatpush1.bf16.msra.mxu0 %v7131
        %9593 = vmatprep.mubr.bf16.mxu0 %v2656
        %9594 = vmatmul.mubr.bf16.gmra.mrb[0].mxu0 %v2655
        %v9595 = vpop.f32.mrb[0].mxu0
        %v9596 = vadd.f32 %v3726, %v9595
        %v9597 = vpop.f32.mrb[0].mxu0
        %v9598 = vadd.f32 %v3730, %v9597
        %v9599 = vpop.f32.mrb[0].mxu0
        %v9600 = vpop.f32.mrb[0].mxu0
        %9601 = vdwg.mxu0
        %9602 = vmatprep.subr.bf16.mxu0 %v7162
        %9603 = vmatpush1.bf16.msra.mxu0 %v7161
        %9604 = vmatprep.subr.bf16.mxu0 %v7192
        %9605 = vmatpush1.bf16.msra.mxu0 %v7191
        %9606 = vmatprep.subr.bf16.mxu0 %v7222
        %9607 = vmatpush1.bf16.msra.mxu0 %v7221
        %9608 = vmatprep.subr.bf16.mxu0 %v7252
        %9609 = vmatpush1.bf16.msra.mxu0 %v7251
        %9610 = vmatprep.subr.bf16.mxu0 %v7282
        %9611 = vmatpush1.bf16.msra.mxu0 %v7281
        %9612 = vmatprep.subr.bf16.mxu0 %v7312
        %9613 = vmatpush1.bf16.msra.mxu0 %v7311
        %9614 = vmatprep.subr.bf16.mxu0 %v7342
        %9615 = vmatpush1.bf16.msra.mxu0 %v7341
        %9616 = vmatprep.subr.bf16.mxu0 %v7372
        %9617 = vmatpush1.bf16.msra.mxu0 %v7371
        %9618 = vmatprep.subr.bf16.mxu0 %v7402
        %9619 = vmatpush1.bf16.msra.mxu0 %v7401
        %9620 = vmatprep.subr.bf16.mxu0 %v7432
        %9621 = vmatpush1.bf16.msra.mxu0 %v7431
        %9622 = vmatprep.subr.bf16.mxu0 %v7462
        %9623 = vmatpush1.bf16.msra.mxu0 %v7461
        %9624 = vmatprep.subr.bf16.mxu0 %v7492
        %9625 = vmatpush1.bf16.msra.mxu0 %v7491
        %9626 = vmatprep.subr.bf16.mxu0 %v7522
        %9627 = vmatpush1.bf16.msra.mxu0 %v7521
        %9628 = vmatprep.subr.bf16.mxu0 %v7552
        %9629 = vmatpush1.bf16.msra.mxu0 %v7551
        %9630 = vmatprep.subr.bf16.mxu0 %v7582
        %9631 = vmatpush1.bf16.msra.mxu0 %v7581
        %9632 = vmatprep.subr.bf16.mxu0 %v7612
        %9633 = vmatpush1.bf16.msra.mxu0 %v7611
        %9634 = vmatprep.mubr.bf16.mxu0 %v2658
        %9635 = vmatmul.mubr.bf16.gmra.mrb[0].mxu0 %v2657
        %v9636 = vpop.f32.mrb[0].mxu0
        %v9637 = vadd.f32 %v9596, %v9636
        %v9638 = vpop.f32.mrb[0].mxu0
        %v9639 = vadd.f32 %v9598, %v9638
        %v9640 = vpop.f32.mrb[0].mxu0
        %v9641 = vpop.f32.mrb[0].mxu0
        %9642 = vdwg.mxu0
        %9643 = vmatprep.subr.bf16.mxu0 %v6684
        %9644 = vmatpush1.bf16.msra.mxu0 %v6683
        %9645 = vmatprep.subr.bf16.mxu0 %v6714
        %9646 = vmatpush1.bf16.msra.mxu0 %v6713
        %9647 = vmatprep.subr.bf16.mxu0 %v6744
        %9648 = vmatpush1.bf16.msra.mxu0 %v6743
        %9649 = vmatprep.subr.bf16.mxu0 %v6774
        %9650 = vmatpush1.bf16.msra.mxu0 %v6773
        %9651 = vmatprep.subr.bf16.mxu0 %v6804
        %9652 = vmatpush1.bf16.msra.mxu0 %v6803
        %9653 = vmatprep.subr.bf16.mxu0 %v6834
        %9654 = vmatpush1.bf16.msra.mxu0 %v6833
        %9655 = vmatprep.subr.bf16.mxu0 %v6864
        %9656 = vmatpush1.bf16.msra.mxu0 %v6863
        %9657 = vmatprep.subr.bf16.mxu0 %v6894
        %9658 = vmatpush1.bf16.msra.mxu0 %v6893
        %9659 = vmatprep.subr.bf16.mxu0 %v6924
        %9660 = vmatpush1.bf16.msra.mxu0 %v6923
        %9661 = vmatprep.subr.bf16.mxu0 %v6954
        %9662 = vmatpush1.bf16.msra.mxu0 %v6953
        %9663 = vmatprep.subr.bf16.mxu0 %v6984
        %9664 = vmatpush1.bf16.msra.mxu0 %v6983
        %9665 = vmatprep.subr.bf16.mxu0 %v7014
        %9666 = vmatpush1.bf16.msra.mxu0 %v7013
        %9667 = vmatprep.subr.bf16.mxu0 %v7044
        %9668 = vmatpush1.bf16.msra.mxu0 %v7043
        %9669 = vmatprep.subr.bf16.mxu0 %v7074
        %9670 = vmatpush1.bf16.msra.mxu0 %v7073
        %9671 = vmatprep.subr.bf16.mxu0 %v7104
        %9672 = vmatpush1.bf16.msra.mxu0 %v7103
        %9673 = vmatprep.subr.bf16.mxu0 %v7134
        %9674 = vmatpush1.bf16.msra.mxu0 %v7133
        %9675 = vmatprep.mubr.bf16.mxu0 %v2656
        %9676 = vmatmul.mubr.bf16.gmra.mrb[0].mxu0 %v2655
        %v9677 = vpop.f32.mrb[0].mxu0
        %v9678 = vadd.f32 %v3734, %v9677
        %v9679 = vpop.f32.mrb[0].mxu0
        %v9680 = vadd.f32 %v3738, %v9679
        %v9681 = vpop.f32.mrb[0].mxu0
        %v9682 = vpop.f32.mrb[0].mxu0
        %9683 = vdwg.mxu0
        %9684 = vmatprep.subr.bf16.mxu0 %v7164
        %9685 = vmatpush1.bf16.msra.mxu0 %v7163
        %9686 = vmatprep.subr.bf16.mxu0 %v7194
        %9687 = vmatpush1.bf16.msra.mxu0 %v7193
        %9688 = vmatprep.subr.bf16.mxu0 %v7224
        %9689 = vmatpush1.bf16.msra.mxu0 %v7223
        %9690 = vmatprep.subr.bf16.mxu0 %v7254
        %9691 = vmatpush1.bf16.msra.mxu0 %v7253
        %9692 = vmatprep.subr.bf16.mxu0 %v7284
        %9693 = vmatpush1.bf16.msra.mxu0 %v7283
        %9694 = vmatprep.subr.bf16.mxu0 %v7314
        %9695 = vmatpush1.bf16.msra.mxu0 %v7313
        %9696 = vmatprep.subr.bf16.mxu0 %v7344
        %9697 = vmatpush1.bf16.msra.mxu0 %v7343
        %9698 = vmatprep.subr.bf16.mxu0 %v7374
        %9699 = vmatpush1.bf16.msra.mxu0 %v7373
        %9700 = vmatprep.subr.bf16.mxu0 %v7404
        %9701 = vmatpush1.bf16.msra.mxu0 %v7403
        %9702 = vmatprep.subr.bf16.mxu0 %v7434
        %9703 = vmatpush1.bf16.msra.mxu0 %v7433
        %9704 = vmatprep.subr.bf16.mxu0 %v7464
        %9705 = vmatpush1.bf16.msra.mxu0 %v7463
        %9706 = vmatprep.subr.bf16.mxu0 %v7494
        %9707 = vmatpush1.bf16.msra.mxu0 %v7493
        %9708 = vmatprep.subr.bf16.mxu0 %v7524
        %9709 = vmatpush1.bf16.msra.mxu0 %v7523
        %9710 = vmatprep.subr.bf16.mxu0 %v7554
        %9711 = vmatpush1.bf16.msra.mxu0 %v7553
        %9712 = vmatprep.subr.bf16.mxu0 %v7584
        %9713 = vmatpush1.bf16.msra.mxu0 %v7583
        %9714 = vmatprep.subr.bf16.mxu0 %v7614
        %9715 = vmatpush1.bf16.msra.mxu0 %v7613
        %9716 = vmatprep.mubr.bf16.mxu0 %v2658
        %9717 = vmatmul.mubr.bf16.gmra.mrb[0].mxu0 %v2657
        %v9718 = vpop.f32.mrb[0].mxu0
        %v9719 = vadd.f32 %v9678, %v9718
        %v9720 = vpop.f32.mrb[0].mxu0
        %v9721 = vadd.f32 %v9680, %v9720
        %v9722 = vpop.f32.mrb[0].mxu0
        %v9723 = vpop.f32.mrb[0].mxu0
        %9724 = vdwg.mxu0
        %9725 = vmatprep.subr.bf16.mxu0 %v6686
        %9726 = vmatpush1.bf16.msra.mxu0 %v6685
        %9727 = vmatprep.subr.bf16.mxu0 %v6716
        %9728 = vmatpush1.bf16.msra.mxu0 %v6715
        %9729 = vmatprep.subr.bf16.mxu0 %v6746
        %9730 = vmatpush1.bf16.msra.mxu0 %v6745
        %9731 = vmatprep.subr.bf16.mxu0 %v6776
        %9732 = vmatpush1.bf16.msra.mxu0 %v6775
        %9733 = vmatprep.subr.bf16.mxu0 %v6806
        %9734 = vmatpush1.bf16.msra.mxu0 %v6805
        %9735 = vmatprep.subr.bf16.mxu0 %v6836
        %9736 = vmatpush1.bf16.msra.mxu0 %v6835
        %9737 = vmatprep.subr.bf16.mxu0 %v6866
        %9738 = vmatpush1.bf16.msra.mxu0 %v6865
        %9739 = vmatprep.subr.bf16.mxu0 %v6896
        %9740 = vmatpush1.bf16.msra.mxu0 %v6895
        %9741 = vmatprep.subr.bf16.mxu0 %v6926
        %9742 = vmatpush1.bf16.msra.mxu0 %v6925
        %9743 = vmatprep.subr.bf16.mxu0 %v6956
        %9744 = vmatpush1.bf16.msra.mxu0 %v6955
        %9745 = vmatprep.subr.bf16.mxu0 %v6986
        %9746 = vmatpush1.bf16.msra.mxu0 %v6985
        %9747 = vmatprep.subr.bf16.mxu0 %v7016
        %9748 = vmatpush1.bf16.msra.mxu0 %v7015
        %9749 = vmatprep.subr.bf16.mxu0 %v7046
        %9750 = vmatpush1.bf16.msra.mxu0 %v7045
        %9751 = vmatprep.subr.bf16.mxu0 %v7076
        %9752 = vmatpush1.bf16.msra.mxu0 %v7075
        %9753 = vmatprep.subr.bf16.mxu0 %v7106
        %9754 = vmatpush1.bf16.msra.mxu0 %v7105
        %9755 = vmatprep.subr.bf16.mxu0 %v7136
        %9756 = vmatpush1.bf16.msra.mxu0 %v7135
        %9757 = vmatprep.mubr.bf16.mxu0 %v2656
        %9758 = vmatmul.mubr.bf16.gmra.mrb[0].mxu0 %v2655
        %v9759 = vpop.f32.mrb[0].mxu0
        %v9760 = vadd.f32 %v3742, %v9759
        %v9761 = vpop.f32.mrb[0].mxu0
        %v9762 = vadd.f32 %v3746, %v9761
        %v9763 = vpop.f32.mrb[0].mxu0
        %v9764 = vpop.f32.mrb[0].mxu0
        %9765 = vdwg.mxu0
        %9766 = vmatprep.subr.bf16.mxu0 %v7166
        %9767 = vmatpush1.bf16.msra.mxu0 %v7165
        %9768 = vmatprep.subr.bf16.mxu0 %v7196
        %9769 = vmatpush1.bf16.msra.mxu0 %v7195
        %9770 = vmatprep.subr.bf16.mxu0 %v7226
        %9771 = vmatpush1.bf16.msra.mxu0 %v7225
        %9772 = vmatprep.subr.bf16.mxu0 %v7256
        %9773 = vmatpush1.bf16.msra.mxu0 %v7255
        %9774 = vmatprep.subr.bf16.mxu0 %v7286
        %9775 = vmatpush1.bf16.msra.mxu0 %v7285
        %9776 = vmatprep.subr.bf16.mxu0 %v7316
        %9777 = vmatpush1.bf16.msra.mxu0 %v7315
        %9778 = vmatprep.subr.bf16.mxu0 %v7346
        %9779 = vmatpush1.bf16.msra.mxu0 %v7345
        %9780 = vmatprep.subr.bf16.mxu0 %v7376
        %9781 = vmatpush1.bf16.msra.mxu0 %v7375
        %9782 = vmatprep.subr.bf16.mxu0 %v7406
        %9783 = vmatpush1.bf16.msra.mxu0 %v7405
        %9784 = vmatprep.subr.bf16.mxu0 %v7436
        %9785 = vmatpush1.bf16.msra.mxu0 %v7435
        %9786 = vmatprep.subr.bf16.mxu0 %v7466
        %9787 = vmatpush1.bf16.msra.mxu0 %v7465
        %9788 = vmatprep.subr.bf16.mxu0 %v7496
        %9789 = vmatpush1.bf16.msra.mxu0 %v7495
        %9790 = vmatprep.subr.bf16.mxu0 %v7526
        %9791 = vmatpush1.bf16.msra.mxu0 %v7525
        %9792 = vmatprep.subr.bf16.mxu0 %v7556
        %9793 = vmatpush1.bf16.msra.mxu0 %v7555
        %9794 = vmatprep.subr.bf16.mxu0 %v7586
        %9795 = vmatpush1.bf16.msra.mxu0 %v7585
        %9796 = vmatprep.subr.bf16.mxu0 %v7616
        %9797 = vmatpush1.bf16.msra.mxu0 %v7615
        %9798 = vmatprep.mubr.bf16.mxu0 %v2658
        %9799 = vmatmul.mubr.bf16.gmra.mrb[0].mxu0 %v2657
        %v9800 = vpop.f32.mrb[0].mxu0
        %v9801 = vadd.f32 %v9760, %v9800
        %v9802 = vpop.f32.mrb[0].mxu0
        %v9803 = vadd.f32 %v9762, %v9802
        %v9804 = vpop.f32.mrb[0].mxu0
        %v9805 = vpop.f32.mrb[0].mxu0
        %9806 = vdwg.mxu0
        %9807 = vst [vmem:[%s2228] sm:$0xff] %v8653
        %9808 = vst [vmem:[%s2228 + $0x8] sm:$0xff] %v8655
        %9809 = vst [vmem:[%s2228 + $0x10] sm:$0xff] %v8735
        %9810 = vst [vmem:[%s2228 + $0x18] sm:$0xff] %v8737
        %9811 = vst [vmem:[%s2228 + $0x20] sm:$0xff] %v8817
        %9812 = vst [vmem:[%s2228 + $0x28] sm:$0xff] %v8819
        %9813 = vst [vmem:[%s2228 + $0x30] sm:$0xff] %v8899
        %9814 = vst [vmem:[%s2228 + $0x38] sm:$0xff] %v8901
        %9815 = vst [vmem:[%s2228 + $0x40] sm:$0xff] %v8981
        %9816 = vst [vmem:[%s2228 + $0x48] sm:$0xff] %v8983
        %9817 = vst [vmem:[%s2228 + $0x50] sm:$0xff] %v9063
        %9818 = vst [vmem:[%s2228 + $0x58] sm:$0xff] %v9065
        %9819 = vst [vmem:[%s2228 + $0x60] sm:$0xff] %v9145
        %9820 = vst [vmem:[%s2228 + $0x68] sm:$0xff] %v9147
        %9821 = vst [vmem:[%s2228 + $0x70] sm:$0xff] %v9227
        %9822 = vst [vmem:[%s2228 + $0x78] sm:$0xff] %v9229
        %9823 = vst [vmem:[%s2228 + $0x80] sm:$0xff] %v9309
        %9824 = vst [vmem:[%s2228 + $0x88] sm:$0xff] %v9311
        %9825 = vst [vmem:[%s2228 + $0x90] sm:$0xff] %v9391
        %9826 = vst [vmem:[%s2228 + $0x98] sm:$0xff] %v9393
        %9827 = vst [vmem:[%s2228 + $0xa0] sm:$0xff] %v9473
        %9828 = vst [vmem:[%s2228 + $0xa8] sm:$0xff] %v9475
        %9829 = vst [vmem:[%s2228 + $0xb0] sm:$0xff] %v9555
        %9830 = vst [vmem:[%s2228 + $0xb8] sm:$0xff] %v9557
        %9831 = vst [vmem:[%s2228 + $0xc0] sm:$0xff] %v9637
        %9832 = vst [vmem:[%s2228 + $0xc8] sm:$0xff] %v9639
        %9833 = vst [vmem:[%s2228 + $0xd0] sm:$0xff] %v9719
        %9834 = vst [vmem:[%s2228 + $0xd8] sm:$0xff] %v9721
        %9835 = vst [vmem:[%s2228 + $0xe0] sm:$0xff] %v9801
        %9836 = vst [vmem:[%s2228 + $0xe8] sm:$0xff] %v9803
        %s9837 = sand.u32 %s186, 1
        %s9838 = scalar_lea.sflag [#allocation4], %s9837
        %s9839 = sand.u32 %s186, 1
        %s9840 = smul.addr %s9839, 240
        %s9841 = scalar_lea.vmem [#allocation3], %s9840
        // Predicated region
        $region72: #{_lambda_.1} parent=66 // pred_check
          %p9842 = pneg %p196
        $region73: #{_lambda_.1} parent=66 // pred_check_branch
          %9844 = sbr.rel (%p9842) target = $region75
        $region74: #{_lambda_.1} parent=66 // pred_region
          %s9845 = smul.u32 30, %s21
          %s9847 = ssub.s32 3840, 3840
          %9848 = vsyncadd %s9838, %s9847
          %s9849 = smul.addr %s9845, 128
          %s9850 = scalar_lea.hbm %s7, %s9849
          %s9852 = sshll.u32 %s9841, 4
          %s9853 = int_to_ptr.vmem [resolvable:$true] %s9852
          %9855 = dma.vmem_to_hbm [thread:$0]  %s9853, 3840, %s9850, %s9838
        $region75: #{_lambda_.1} parent=66 // pred_fallthru
          _
      $region67: #{_lambda_.1} parent=5 // pred_fallthru
        _
      %p9856 = scmp.le.s32.totalorder 2, %s16
      // Predicated region
      $region76: #{_lambda_.1} parent=5 // pred_check
        %p9857 = pneg %p9856
      $region77: #{_lambda_.1} parent=5 // pred_check_branch
        %9859 = sbr.rel (%p9857) target = $region79
      $region78: #{_lambda_.1} parent=5 // pred_region
        %s9860 = ssub.s32 %s16, 2
        // Predicated region
        $region80: #{_lambda_.1} parent=78 // pred_check
          %p9861 = pneg %p202
        $region81: #{_lambda_.1} parent=78 // pred_check_branch
          %9863 = sbr.rel (%p9861) target = $region83
        $region82: #{_lambda_.1} parent=78 // pred_region
          %s9864 = sand.u32 %s187, 1
          %s9865 = scalar_lea.sflag [#allocation4], %s9864
          %s9866 = sand.u32 %s187, 1
          %s9867 = smul.addr %s9866, 240
          %s9868 = scalar_lea.vmem [#allocation3], %s9867
          %9869 = dma.done %s9865, 3840
        $region83: #{_lambda_.1} parent=78 // pred_fallthru
          _
      $region79: #{_lambda_.1} parent=5 // pred_fallthru
        _
    $region6: #{_lambda_.1} parent=1 // loop_footer
      %s20 = sadd.s32 1, %s16
    $region7: #{_lambda_.1} parent=1 // loop_footer_branch
      %15 = sbr.rel target = $region3
    $region8: #{_lambda_.1} parent=1 // loop_exit
      _
    %9870 = vsyncpa [#allocation4], 1
    %s9871 = scalar_lea.sflag [#allocation4], 1
    %9872 = vsyncpa %s9871, 1

</llo_original>
